<compile_context>
chip_gen: v5e
topology: v5e:2x2
jax: 0.10.0
libtpu: 0.0.40
codegen_flags: <defaults>
</compile_context>

<pallas_src>
import functools

import jax
import jax.numpy as jnp
from jax.experimental import pallas as pl
from jax.experimental.pallas import tpu as pltpu


# ---------------------------------------------------------------------------
# Pallas kernels
# ---------------------------------------------------------------------------
def _stack_head_kernel(H, W, C1, C2, shift,
                       xw_ref, mask_ref, w1_ref, b1_ref, w2_ref, b2_ref,
                       o_ref, s1pad_ref, acc_ref):
    """Fused BasicConv2d(1x1) -> BasicConv2d(3x3, pad=1); one image per grid step.

    xw_ref   : (1, H*Wp, Cin) bf16  width-padded input rows (Wp = W + 2, flattened)
    mask_ref : (H*Wp, 1)      f32   1.0 on real columns, 0.0 on width padding
    w1_ref   : (Cin, C1)      bf16  1x1 weights, BN scale folded in
    b1_ref   : (1, C1)        f32
    w2_ref   : (9, C1, C2)    bf16  per-tap 3x3 weights, BN scale folded in
    b2_ref   : (1, C2)        f32
    o_ref    : (1, H*Wp, C2)  bf16  (garbage on the 2 pad columns, dropped outside)
    s1pad_ref: VMEM scratch   bf16  zero-padded intermediate activation (flat rows)
    acc_ref  : VMEM scratch   f32   (H*Wp, C2) accumulator
    """
    Wp = W + 2
    HWp = H * Wp

    # ---- 1x1 conv + folded BN + ReLU (computed on the width-padded grid) ----
    a1 = jnp.dot(xw_ref[0], w1_ref[...], preferred_element_type=jnp.float32)
    s1 = jnp.maximum(a1 + b1_ref[...], 0.0) * mask_ref[...]

    # ---- stage the intermediate into a zero-padded flat VMEM buffer ---------
    s1pad_ref[...] = jnp.zeros(s1pad_ref.shape, s1pad_ref.dtype)
    s1pad_ref[shift + Wp:shift + Wp + HWp, :] = s1.astype(s1pad_ref.dtype)

    # ---- 3x3 stride-1 conv as 9 shifted GEMMs (in-kernel im2col) ------------
    acc_ref[...] = jnp.zeros(acc_ref.shape, acc_ref.dtype)
    for t in range(9):
        di, dj = t // 3, t % 3
        off = shift + di * Wp + dj
        win = s1pad_ref[off:off + HWp, :]                       # (H*Wp, C1) bf16
        acc_ref[...] += jnp.dot(win, w2_ref[t],
                                preferred_element_type=jnp.float32)

    o_ref[0] = jnp.maximum(acc_ref[...] + b2_ref[...], 0.0).astype(o_ref.dtype)


def _reduction_kernel(c3, cs, cp,
                      px_ref, w3_ref, b3_ref, ps_ref, ws_ref, bs_ref, pm_ref,
                      o_ref):
    """Fused stride-2 stage; writes the channel-concatenated block output.

    px_ref : (TM, 9*Cin)  bf16  zero-padded 3x3/s2/p1 patches of x (branch3x3)
    w3_ref : (9*Cin, 384) bf16  (BN scale folded)      b3_ref: (1, 384) f32
    ps_ref : (TM, 9*96)   bf16  patches of the stack intermediate
    ws_ref : (9*96, 96)   bf16                          bs_ref: (1, 96)  f32
    pm_ref : (9, TM, Cin) f32   maxpool patches (implicit -inf padding)
    o_ref  : (TM, 384 + 96 + Cin)
    """
    y3 = jnp.dot(px_ref[...], w3_ref[...], preferred_element_type=jnp.float32)
    o_ref[:, 0:c3] = jnp.maximum(y3 + b3_ref[...], 0.0).astype(o_ref.dtype)

    ys = jnp.dot(ps_ref[...], ws_ref[...], preferred_element_type=jnp.float32)
    o_ref[:, c3:c3 + cs] = jnp.maximum(ys + bs_ref[...], 0.0).astype(o_ref.dtype)

    m = pm_ref[0]
    for t in range(1, 9):
        m = jnp.maximum(m, pm_ref[t])
    o_ref[:, c3 + cs:c3 + cs + cp] = m.astype(o_ref.dtype)


# ---------------------------------------------------------------------------
# Parameter / patch preparation (plain JAX glue)
# ---------------------------------------------------------------------------
def _round_up(a, b):
    return (a + b - 1) // b * b


def _fold_gemm_weight(w_oihw, bn_scale):
    """OIHW conv weight -> (KH*KW*Cin, Cout) GEMM matrix with BN scale folded in."""
    cout, cin, kh, kw = w_oihw.shape
    wm = jnp.transpose(w_oihw, (2, 3, 1, 0)).reshape(kh * kw * cin, cout)
    return (wm * bn_scale[None, :]).astype(jnp.bfloat16)


def _fold_tap_weight(w_oihw, bn_scale):
    """OIHW 3x3 conv weight -> (9, Cin, Cout) per-tap matrices with BN scale folded."""
    cout, cin, kh, kw = w_oihw.shape
    wt = jnp.transpose(w_oihw, (2, 3, 1, 0)).reshape(kh * kw, cin, cout)
    return (wt * bn_scale[None, None, :]).astype(jnp.bfloat16)


def _im2col(x, kh, kw, sh, sw, ph, pw, pad_value=0.0):
    """x: (N, H, W, C) -> patches (N*Ho*Wo, kh*kw, C)."""
    N, H, W, C = x.shape
    Ho = (H + 2 * ph - kh) // sh + 1
    Wo = (W + 2 * pw - kw) // sw + 1
    xp = jnp.pad(x, ((0, 0), (ph, ph), (pw, pw), (0, 0)),
                 constant_values=pad_value)
    cols = []
    for i in range(kh):
        for j in range(kw):
            cols.append(
                xp[:, i:i + (Ho - 1) * sh + 1:sh, j:j + (Wo - 1) * sw + 1:sw, :])
    p = jnp.stack(cols, axis=3)  # (N, Ho, Wo, kh*kw, C)
    return p.reshape(N * Ho * Wo, kh * kw, C), (N, Ho, Wo)


# ---------------------------------------------------------------------------
# InceptionB forward
# ---------------------------------------------------------------------------
def inception_b_forward(x, params):
    """x: (N, H, W, Cin) NHWC float32 -> (N, Ho, Wo, 384 + 96 + Cin)."""
    N, H, W, Cin = x.shape
    C1, C2, C3 = 64, 96, 384
    Wp = W + 2
    HWp = H * Wp
    # align the interior store of the intermediate to the bf16 row tile (16)
    shift = (-Wp) % 16
    rows = _round_up(shift + (H + 3) * Wp, 8)
    Ho = (H + 2 - 3) // 2 + 1
    Wo = (W + 2 - 3) // 2 + 1
    M = N * Ho * Wo

    xb = x.astype(jnp.bfloat16)

    # ---------------- kernel 1: fused 1x1 -> 3x3 (stride 1) stack head -------
    xw = jnp.pad(xb, ((0, 0), (0, 0), (1, 1), (0, 0))).reshape(N, HWp, Cin)
    col = jnp.arange(Wp, dtype=jnp.int32)
    mask = jnp.tile(((col >= 1) & (col <= W)).astype(jnp.float32), (H,))
    mask = mask.reshape(HWp, 1)

    w1 = _fold_gemm_weight(params["s1"][0], params["s1"][1])      # (Cin, 64)
    b1 = params["s1"][2].reshape(1, C1).astype(jnp.float32)
    w2 = _fold_tap_weight(params["s2"][0], params["s2"][1])       # (9, 64, 96)
    b2 = params["s2"][2].reshape(1, C2).astype(jnp.float32)

    stack_mid = pl.pallas_call(
        functools.partial(_stack_head_kernel, H, W, C1, C2, shift),
        out_shape=jax.ShapeDtypeStruct((N, HWp, C2), jnp.bfloat16),
        grid=(N,),
        in_specs=[
            pl.BlockSpec((1, HWp, Cin), lambda n: (n, 0, 0)),
            pl.BlockSpec((HWp, 1), lambda n: (0, 0)),
            pl.BlockSpec((Cin, C1), lambda n: (0, 0)),
            pl.BlockSpec((1, C1), lambda n: (0, 0)),
            pl.BlockSpec((9, C1, C2), lambda n: (0, 0, 0)),
            pl.BlockSpec((1, C2), lambda n: (0, 0)),
        ],
        out_specs=pl.BlockSpec((1, HWp, C2), lambda n: (n, 0, 0)),
        scratch_shapes=[
            pltpu.VMEM((rows, C1), jnp.bfloat16),
            pltpu.VMEM((HWp, C2), jnp.float32),
        ],
        compiler_params=pltpu.CompilerParams(
            dimension_semantics=("parallel",)),
    )(xw, mask, w1, b1, w2, b2)
    # drop the two garbage width-pad columns
    s_mid = stack_mid.reshape(N, H, Wp, C2)[:, :, :W, :]          # (N,H,W,96) bf16

    # ---------------- kernel 2: fused stride-2 stage + channel concat --------
    px, _ = _im2col(xb, 3, 3, 2, 2, 1, 1)                         # (M, 9, Cin)
    px = px.reshape(M, 9 * Cin)
    ps, _ = _im2col(s_mid, 3, 3, 2, 2, 1, 1)                      # (M, 9, 96)
    ps = ps.reshape(M, 9 * C2)
    # PyTorch MaxPool2d uses implicit -inf padding; every window contains at
    # least one real element, so a large negative constant is exact.
    pm, _ = _im2col(x.astype(jnp.float32), 3, 3, 2, 2, 1, 1, pad_value=-3e38)
    pm = jnp.transpose(pm, (1, 0, 2))                             # (9, M, Cin)

    w3 = _fold_gemm_weight(params["b3"][0], params["b3"][1])      # (9*Cin, 384)
    b3 = params["b3"][2].reshape(1, C3).astype(jnp.float32)
    ws = _fold_gemm_weight(params["s3"][0], params["s3"][1])      # (9*96, 96)
    bs = params["s3"][2].reshape(1, C2).astype(jnp.float32)

    Ctot = C3 + C2 + Cin
    # tile M (>=2 tiles so the grid shards across megacore / dual TCs); pad the
    # remainder rows instead of masking in-kernel.
    TM = 256 if M >= 512 else _round_up(max(8, pl.cdiv(M, 2)), 8)
    Mp = _round_up(M, TM)
    if Mp != M:
        px = jnp.pad(px, ((0, Mp - M), (0, 0)))
        ps = jnp.pad(ps, ((0, Mp - M), (0, 0)))
        pm = jnp.pad(pm, ((0, 0), (0, Mp - M), (0, 0)))

    out = pl.pallas_call(
        functools.partial(_reduction_kernel, C3, C2, Cin),
        out_shape=jax.ShapeDtypeStruct((Mp, Ctot), x.dtype),
        grid=(Mp // TM,),
        in_specs=[
            pl.BlockSpec((TM, 9 * Cin), lambda i: (i, 0)),
            pl.BlockSpec((9 * Cin, C3), lambda i: (0, 0)),
            pl.BlockSpec((1, C3), lambda i: (0, 0)),
            pl.BlockSpec((TM, 9 * C2), lambda i: (i, 0)),
            pl.BlockSpec((9 * C2, C2), lambda i: (0, 0)),
            pl.BlockSpec((1, C2), lambda i: (0, 0)),
            pl.BlockSpec((9, TM, Cin), lambda i: (0, i, 0)),
        ],
        out_specs=pl.BlockSpec((TM, Ctot), lambda i: (i, 0)),
        compiler_params=pltpu.CompilerParams(
            dimension_semantics=("parallel",)),
    )(px, w3, b3, ps, ws, bs, pm)

    return out[:M].reshape(N, Ho, Wo, Ctot)


# ---------------------------------------------------------------------------
# Pure-JAX reference (for correctness check)
# ---------------------------------------------------------------------------
def _ref_conv_bn_relu(x, w, scale, bias, stride=(1, 1), padding=(0, 0)):
    y = jax.lax.conv_general_dilated(
        x, jnp.transpose(w, (2, 3, 1, 0)),  # OIHW -> HWIO
        window_strides=stride,
        padding=[(padding[0], padding[0]), (padding[1], padding[1])],
        dimension_numbers=("NHWC", "HWIO", "NHWC"))
    return jnp.maximum(y * scale + bias, 0.0)


def _ref_maxpool_3x3_s2_p1(x):
    return jax.lax.reduce_window(
        x, -jnp.inf, jax.lax.max, (1, 3, 3, 1), (1, 2, 2, 1),
        [(0, 0), (1, 1), (1, 1), (0, 0)])


# ---------------------------------------------------------------------------
# Main
# ---------------------------------------------------------------------------
if __name__ == "__main__":
    key = jax.random.PRNGKey(0)
    keys = jax.random.split(key, 12)

    # PyTorch-style NCHW input -> NHWC for the kernels.
    N, Cin, H, W = 2, 4, 16, 16
    x_nchw = jax.random.normal(keys[0], (N, Cin, H, W), jnp.float32)
    x = jnp.transpose(x_nchw, (0, 2, 3, 1))                       # (N, H, W, Cin)

    def init_conv(k, cout, cin, kh, kw):
        fan_in = cin * kh * kw
        return jax.random.normal(k, (cout, cin, kh, kw), jnp.float32) / jnp.sqrt(
            float(fan_in))

    def init_bn_folded(k, c, eps=1e-5):
        k1, k2, k3, k4 = jax.random.split(k, 4)
        gamma = 1.0 + 0.1 * jax.random.normal(k1, (c,), jnp.float32)
        beta = 0.1 * jax.random.normal(k2, (c,), jnp.float32)
        mean = 0.1 * jax.random.normal(k3, (c,), jnp.float32)
        var = 0.5 + 0.1 * jnp.abs(jax.random.normal(k4, (c,), jnp.float32))
        scale = gamma / jnp.sqrt(var + eps)
        bias = beta - mean * scale
        return scale, bias

    conv_specs = {
        "b3": (384, Cin, 3, 3),   # branch3x3:         3x3, stride 2, pad 1
        "s1": (64, Cin, 1, 1),    # branch3x3stack[0]: 1x1
        "s2": (96, 64, 3, 3),     # branch3x3stack[1]: 3x3, pad 1
        "s3": (96, 96, 3, 3),     # branch3x3stack[2]: 3x3, stride 2, pad 1
    }
    params = {}
    ki = 1
    for name, (co, ci, kh, kw) in conv_specs.items():
        w = init_conv(keys[ki], co, ci, kh, kw); ki += 1
        s, b = init_bn_folded(keys[ki], co); ki += 1
        params[name] = (w, s, b)

    out = jax.jit(inception_b_forward)(x, params)
    out = jax.block_until_ready(out)
    assert out.shape == (N, H // 2, W // 2, 384 + 96 + Cin), out.shape

    # reference check (f32 reference vs bf16-GEMM kernels -> bf16-level tolerance)
    r3 = _ref_conv_bn_relu(x, *params["b3"], stride=(2, 2), padding=(1, 1))
    t = _ref_conv_bn_relu(x, *params["s1"])
    t = _ref_conv_bn_relu(t, *params["s2"], padding=(1, 1))
    rs = _ref_conv_bn_relu(t, *params["s3"], stride=(2, 2), padding=(1, 1))
    rp = _ref_maxpool_3x3_s2_p1(x)
    ref = jnp.concatenate([r3, rs, rp], axis=-1)

    max_err = float(jnp.max(jnp.abs(out - ref)))
    assert jnp.allclose(out, ref, rtol=5e-2, atol=1e-1), f"max_err={max_err}"

    print("KERNEL_OK")
</pallas_src>

<mosaic_0001>
module attributes {stable_mosaic.version = 11 : i64} {
  func.func @_stack_head_kernel(%arg0: i32, %arg1: memref<1x288x4xbf16, #tpu.memory_space<vmem>>, %arg2: memref<288x1xf32, #tpu.memory_space<vmem>>, %arg3: memref<4x64xbf16, #tpu.memory_space<vmem>>, %arg4: memref<1x64xf32, #tpu.memory_space<vmem>>, %arg5: memref<9x64x96xbf16, #tpu.memory_space<vmem>>, %arg6: memref<1x96xf32, #tpu.memory_space<vmem>>, %arg7: memref<1x288x96xbf16, #tpu.memory_space<vmem>>, %arg8: memref<360x64xbf16, #tpu.memory_space<vmem>>, %arg9: memref<288x96xf32, #tpu.memory_space<vmem>>) attributes {dimension_semantics = [#tpu.dimension_semantics<parallel>], iteration_bounds = array<i64: 2>, scalar_prefetch = 0 : i64, scratch_operands = 2 : i64, tpu.core_type = #tpu.core_type<tc>, window_params = [{transform_indices = @transform_0, window_bounds = array<i64: 1, 288, 4>}, {pipeline_mode = #tpu.pipeline_mode<synchronous>, transform_indices = @transform_1, window_bounds = array<i64: 288, 1>}, {pipeline_mode = #tpu.pipeline_mode<synchronous>, transform_indices = @transform_2, window_bounds = array<i64: 4, 64>}, {pipeline_mode = #tpu.pipeline_mode<synchronous>, transform_indices = @transform_3, window_bounds = array<i64: 1, 64>}, {pipeline_mode = #tpu.pipeline_mode<synchronous>, transform_indices = @transform_4, window_bounds = array<i64: 9, 64, 96>}, {pipeline_mode = #tpu.pipeline_mode<synchronous>, transform_indices = @transform_5, window_bounds = array<i64: 1, 96>}, {transform_indices = @transform_6, window_bounds = array<i64: 1, 288, 96>}]} {
    %c0 = arith.constant 0 : index
    %c0_0 = arith.constant 0 : index
    %c0_1 = arith.constant 0 : index
    %0 = vector.load %arg1[%c0, %c0_0, %c0_1] : memref<1x288x4xbf16, #tpu.memory_space<vmem>>, vector<1x288x4xbf16>
    %1 = vector.shape_cast %0 : vector<1x288x4xbf16> to vector<288x4xbf16>
    %c0_2 = arith.constant 0 : index
    %c0_3 = arith.constant 0 : index
    %2 = vector.load %arg3[%c0_2, %c0_3] : memref<4x64xbf16, #tpu.memory_space<vmem>>, vector<4x64xbf16>
    %cst = arith.constant dense<0.000000e+00> : vector<288x64xf32>
    %3 = tpu.matmul %1, %2, %cst {dimension_numbers = #tpu.dot_dimension_numbers<[1], [0], [0], [1], [0, 0, 1, 1], [], []>} : vector<288x4xbf16>, vector<4x64xbf16>, vector<288x64xf32> -> vector<288x64xf32>
    %c0_4 = arith.constant 0 : index
    %c0_5 = arith.constant 0 : index
    %4 = vector.load %arg4[%c0_4, %c0_5] : memref<1x64xf32, #tpu.memory_space<vmem>>, vector<1x64xf32>
    %5 = vector.broadcast %4 : vector<1x64xf32> to vector<288x64xf32>
    %6 = arith.addf %3, %5 : vector<288x64xf32>
    %cst_6 = arith.constant 0.000000e+00 : f32
    %7 = vector.broadcast %cst_6 : f32 to vector<288x64xf32>
    %8 = arith.maximumf %6, %7 : vector<288x64xf32>
    %c0_7 = arith.constant 0 : index
    %c0_8 = arith.constant 0 : index
    %9 = vector.load %arg2[%c0_7, %c0_8] : memref<288x1xf32, #tpu.memory_space<vmem>>, vector<288x1xf32>
    %10 = vector.broadcast %9 : vector<288x1xf32> to vector<288x64xf32>
    %11 = arith.mulf %8, %10 : vector<288x64xf32>
    %cst_9 = arith.constant 0.000000e+00 : bf16
    %12 = vector.broadcast %cst_9 : bf16 to vector<360x64xbf16>
    %c0_10 = arith.constant 0 : index
    %c0_11 = arith.constant 0 : index
    %13 = vector.load %arg8[%c0_10, %c0_11] : memref<360x64xbf16, #tpu.memory_space<vmem>>, vector<360x64xbf16>
    tpu.vector_store %arg8[%c0_10, %c0_11], %12 {strides = array<i32>} : memref<360x64xbf16, #tpu.memory_space<vmem>>, vector<360x64xbf16>,
    %14 = arith.truncf %11 : vector<288x64xf32> to vector<288x64xbf16>
    %c32 = arith.constant 32 : index
    %c0_12 = arith.constant 0 : index
    %15 = vector.load %arg8[%c32, %c0_12] : memref<360x64xbf16, #tpu.memory_space<vmem>>, vector<288x64xbf16>
    tpu.vector_store %arg8[%c32, %c0_12], %14 {strides = array<i32>} : memref<360x64xbf16, #tpu.memory_space<vmem>>, vector<288x64xbf16>,
    %cst_13 = arith.constant 0.000000e+00 : f32
    %16 = vector.broadcast %cst_13 : f32 to vector<288x96xf32>
    %c0_14 = arith.constant 0 : index
    %c0_15 = arith.constant 0 : index
    %17 = vector.load %arg9[%c0_14, %c0_15] : memref<288x96xf32, #tpu.memory_space<vmem>>, vector<288x96xf32>
    tpu.vector_store %arg9[%c0_14, %c0_15], %16 {strides = array<i32>} : memref<288x96xf32, #tpu.memory_space<vmem>>, vector<288x96xf32>,
    %c14 = arith.constant 14 : index
    %c0_16 = arith.constant 0 : index
    %18 = vector.load %arg8[%c14, %c0_16] : memref<360x64xbf16, #tpu.memory_space<vmem>>, vector<288x64xbf16>
    %c0_17 = arith.constant 0 : index
    %c0_18 = arith.constant 0 : index
    %19 = vector.load %arg9[%c0_17, %c0_18] : memref<288x96xf32, #tpu.memory_space<vmem>>, vector<288x96xf32>
    %c0_19 = arith.constant 0 : index
    %c0_20 = arith.constant 0 : index
    %c0_21 = arith.constant 0 : index
    %20 = vector.load %arg5[%c0_19, %c0_20, %c0_21] : memref<9x64x96xbf16, #tpu.memory_space<vmem>>, vector<1x64x96xbf16>
    %21 = vector.shape_cast %20 : vector<1x64x96xbf16> to vector<64x96xbf16>
    %cst_22 = arith.constant dense<0.000000e+00> : vector<288x96xf32>
    %22 = tpu.matmul %18, %21, %cst_22 {dimension_numbers = #tpu.dot_dimension_numbers<[1], [0], [0], [1], [0, 0, 1, 1], [], []>} : vector<288x64xbf16>, vector<64x96xbf16>, vector<288x96xf32> -> vector<288x96xf32>
    %23 = arith.addf %19, %22 : vector<288x96xf32>
    %c0_23 = arith.constant 0 : index
    %c0_24 = arith.constant 0 : index
    %24 = vector.load %arg9[%c0_23, %c0_24] : memref<288x96xf32, #tpu.memory_space<vmem>>, vector<288x96xf32>
    tpu.vector_store %arg9[%c0_23, %c0_24], %23 {strides = array<i32>} : memref<288x96xf32, #tpu.memory_space<vmem>>, vector<288x96xf32>,
    %c15 = arith.constant 15 : index
    %c0_25 = arith.constant 0 : index
    %25 = vector.load %arg8[%c15, %c0_25] : memref<360x64xbf16, #tpu.memory_space<vmem>>, vector<288x64xbf16>
    %c0_26 = arith.constant 0 : index
    %c0_27 = arith.constant 0 : index
    %26 = vector.load %arg9[%c0_26, %c0_27] : memref<288x96xf32, #tpu.memory_space<vmem>>, vector<288x96xf32>
    %c1 = arith.constant 1 : index
    %c0_28 = arith.constant 0 : index
    %c0_29 = arith.constant 0 : index
    %27 = vector.load %arg5[%c1, %c0_28, %c0_29] : memref<9x64x96xbf16, #tpu.memory_space<vmem>>, vector<1x64x96xbf16>
    %28 = vector.shape_cast %27 : vector<1x64x96xbf16> to vector<64x96xbf16>
    %cst_30 = arith.constant dense<0.000000e+00> : vector<288x96xf32>
    %29 = tpu.matmul %25, %28, %cst_30 {dimension_numbers = #tpu.dot_dimension_numbers<[1], [0], [0], [1], [0, 0, 1, 1], [], []>} : vector<288x64xbf16>, vector<64x96xbf16>, vector<288x96xf32> -> vector<288x96xf32>
    %30 = arith.addf %26, %29 : vector<288x96xf32>
    %c0_31 = arith.constant 0 : index
    %c0_32 = arith.constant 0 : index
    %31 = vector.load %arg9[%c0_31, %c0_32] : memref<288x96xf32, #tpu.memory_space<vmem>>, vector<288x96xf32>
    tpu.vector_store %arg9[%c0_31, %c0_32], %30 {strides = array<i32>} : memref<288x96xf32, #tpu.memory_space<vmem>>, vector<288x96xf32>,
    %c16 = arith.constant 16 : index
    %c0_33 = arith.constant 0 : index
    %32 = vector.load %arg8[%c16, %c0_33] : memref<360x64xbf16, #tpu.memory_space<vmem>>, vector<288x64xbf16>
    %c0_34 = arith.constant 0 : index
    %c0_35 = arith.constant 0 : index
    %33 = vector.load %arg9[%c0_34, %c0_35] : memref<288x96xf32, #tpu.memory_space<vmem>>, vector<288x96xf32>
    %c2 = arith.constant 2 : index
    %c0_36 = arith.constant 0 : index
    %c0_37 = arith.constant 0 : index
    %34 = vector.load %arg5[%c2, %c0_36, %c0_37] : memref<9x64x96xbf16, #tpu.memory_space<vmem>>, vector<1x64x96xbf16>
    %35 = vector.shape_cast %34 : vector<1x64x96xbf16> to vector<64x96xbf16>
    %cst_38 = arith.constant dense<0.000000e+00> : vector<288x96xf32>
    %36 = tpu.matmul %32, %35, %cst_38 {dimension_numbers = #tpu.dot_dimension_numbers<[1], [0], [0], [1], [0, 0, 1, 1], [], []>} : vector<288x64xbf16>, vector<64x96xbf16>, vector<288x96xf32> -> vector<288x96xf32>
    %37 = arith.addf %33, %36 : vector<288x96xf32>
    %c0_39 = arith.constant 0 : index
    %c0_40 = arith.constant 0 : index
    %38 = vector.load %arg9[%c0_39, %c0_40] : memref<288x96xf32, #tpu.memory_space<vmem>>, vector<288x96xf32>
    tpu.vector_store %arg9[%c0_39, %c0_40], %37 {strides = array<i32>} : memref<288x96xf32, #tpu.memory_space<vmem>>, vector<288x96xf32>,
    %c32_41 = arith.constant 32 : index
    %c0_42 = arith.constant 0 : index
    %39 = vector.load %arg8[%c32_41, %c0_42] : memref<360x64xbf16, #tpu.memory_space<vmem>>, vector<288x64xbf16>
    %c0_43 = arith.constant 0 : index
    %c0_44 = arith.constant 0 : index
    %40 = vector.load %arg9[%c0_43, %c0_44] : memref<288x96xf32, #tpu.memory_space<vmem>>, vector<288x96xf32>
    %c3 = arith.constant 3 : index
    %c0_45 = arith.constant 0 : index
    %c0_46 = arith.constant 0 : index
    %41 = vector.load %arg5[%c3, %c0_45, %c0_46] : memref<9x64x96xbf16, #tpu.memory_space<vmem>>, vector<1x64x96xbf16>
    %42 = vector.shape_cast %41 : vector<1x64x96xbf16> to vector<64x96xbf16>
    %cst_47 = arith.constant dense<0.000000e+00> : vector<288x96xf32>
    %43 = tpu.matmul %39, %42, %cst_47 {dimension_numbers = #tpu.dot_dimension_numbers<[1], [0], [0], [1], [0, 0, 1, 1], [], []>} : vector<288x64xbf16>, vector<64x96xbf16>, vector<288x96xf32> -> vector<288x96xf32>
    %44 = arith.addf %40, %43 : vector<288x96xf32>
    %c0_48 = arith.constant 0 : index
    %c0_49 = arith.constant 0 : index
    %45 = vector.load %arg9[%c0_48, %c0_49] : memref<288x96xf32, #tpu.memory_space<vmem>>, vector<288x96xf32>
    tpu.vector_store %arg9[%c0_48, %c0_49], %44 {strides = array<i32>} : memref<288x96xf32, #tpu.memory_space<vmem>>, vector<288x96xf32>,
    %c33 = arith.constant 33 : index
    %c0_50 = arith.constant 0 : index
    %46 = vector.load %arg8[%c33, %c0_50] : memref<360x64xbf16, #tpu.memory_space<vmem>>, vector<288x64xbf16>
    %c0_51 = arith.constant 0 : index
    %c0_52 = arith.constant 0 : index
    %47 = vector.load %arg9[%c0_51, %c0_52] : memref<288x96xf32, #tpu.memory_space<vmem>>, vector<288x96xf32>
    %c4 = arith.constant 4 : index
    %c0_53 = arith.constant 0 : index
    %c0_54 = arith.constant 0 : index
    %48 = vector.load %arg5[%c4, %c0_53, %c0_54] : memref<9x64x96xbf16, #tpu.memory_space<vmem>>, vector<1x64x96xbf16>
    %49 = vector.shape_cast %48 : vector<1x64x96xbf16> to vector<64x96xbf16>
    %cst_55 = arith.constant dense<0.000000e+00> : vector<288x96xf32>
    %50 = tpu.matmul %46, %49, %cst_55 {dimension_numbers = #tpu.dot_dimension_numbers<[1], [0], [0], [1], [0, 0, 1, 1], [], []>} : vector<288x64xbf16>, vector<64x96xbf16>, vector<288x96xf32> -> vector<288x96xf32>
    %51 = arith.addf %47, %50 : vector<288x96xf32>
    %c0_56 = arith.constant 0 : index
    %c0_57 = arith.constant 0 : index
    %52 = vector.load %arg9[%c0_56, %c0_57] : memref<288x96xf32, #tpu.memory_space<vmem>>, vector<288x96xf32>
    tpu.vector_store %arg9[%c0_56, %c0_57], %51 {strides = array<i32>} : memref<288x96xf32, #tpu.memory_space<vmem>>, vector<288x96xf32>,
    %c34 = arith.constant 34 : index
    %c0_58 = arith.constant 0 : index
    %53 = vector.load %arg8[%c34, %c0_58] : memref<360x64xbf16, #tpu.memory_space<vmem>>, vector<288x64xbf16>
    %c0_59 = arith.constant 0 : index
    %c0_60 = arith.constant 0 : index
    %54 = vector.load %arg9[%c0_59, %c0_60] : memref<288x96xf32, #tpu.memory_space<vmem>>, vector<288x96xf32>
    %c5 = arith.constant 5 : index
    %c0_61 = arith.constant 0 : index
    %c0_62 = arith.constant 0 : index
    %55 = vector.load %arg5[%c5, %c0_61, %c0_62] : memref<9x64x96xbf16, #tpu.memory_space<vmem>>, vector<1x64x96xbf16>
    %56 = vector.shape_cast %55 : vector<1x64x96xbf16> to vector<64x96xbf16>
    %cst_63 = arith.constant dense<0.000000e+00> : vector<288x96xf32>
    %57 = tpu.matmul %53, %56, %cst_63 {dimension_numbers = #tpu.dot_dimension_numbers<[1], [0], [0], [1], [0, 0, 1, 1], [], []>} : vector<288x64xbf16>, vector<64x96xbf16>, vector<288x96xf32> -> vector<288x96xf32>
    %58 = arith.addf %54, %57 : vector<288x96xf32>
    %c0_64 = arith.constant 0 : index
    %c0_65 = arith.constant 0 : index
    %59 = vector.load %arg9[%c0_64, %c0_65] : memref<288x96xf32, #tpu.memory_space<vmem>>, vector<288x96xf32>
    tpu.vector_store %arg9[%c0_64, %c0_65], %58 {strides = array<i32>} : memref<288x96xf32, #tpu.memory_space<vmem>>, vector<288x96xf32>,
    %c50 = arith.constant 50 : index
    %c0_66 = arith.constant 0 : index
    %60 = vector.load %arg8[%c50, %c0_66] : memref<360x64xbf16, #tpu.memory_space<vmem>>, vector<288x64xbf16>
    %c0_67 = arith.constant 0 : index
    %c0_68 = arith.constant 0 : index
    %61 = vector.load %arg9[%c0_67, %c0_68] : memref<288x96xf32, #tpu.memory_space<vmem>>, vector<288x96xf32>
    %c6 = arith.constant 6 : index
    %c0_69 = arith.constant 0 : index
    %c0_70 = arith.constant 0 : index
    %62 = vector.load %arg5[%c6, %c0_69, %c0_70] : memref<9x64x96xbf16, #tpu.memory_space<vmem>>, vector<1x64x96xbf16>
    %63 = vector.shape_cast %62 : vector<1x64x96xbf16> to vector<64x96xbf16>
    %cst_71 = arith.constant dense<0.000000e+00> : vector<288x96xf32>
    %64 = tpu.matmul %60, %63, %cst_71 {dimension_numbers = #tpu.dot_dimension_numbers<[1], [0], [0], [1], [0, 0, 1, 1], [], []>} : vector<288x64xbf16>, vector<64x96xbf16>, vector<288x96xf32> -> vector<288x96xf32>
    %65 = arith.addf %61, %64 : vector<288x96xf32>
    %c0_72 = arith.constant 0 : index
    %c0_73 = arith.constant 0 : index
    %66 = vector.load %arg9[%c0_72, %c0_73] : memref<288x96xf32, #tpu.memory_space<vmem>>, vector<288x96xf32>
    tpu.vector_store %arg9[%c0_72, %c0_73], %65 {strides = array<i32>} : memref<288x96xf32, #tpu.memory_space<vmem>>, vector<288x96xf32>,
    %c51 = arith.constant 51 : index
    %c0_74 = arith.constant 0 : index
    %67 = vector.load %arg8[%c51, %c0_74] : memref<360x64xbf16, #tpu.memory_space<vmem>>, vector<288x64xbf16>
    %c0_75 = arith.constant 0 : index
    %c0_76 = arith.constant 0 : index
    %68 = vector.load %arg9[%c0_75, %c0_76] : memref<288x96xf32, #tpu.memory_space<vmem>>, vector<288x96xf32>
    %c7 = arith.constant 7 : index
    %c0_77 = arith.constant 0 : index
    %c0_78 = arith.constant 0 : index
    %69 = vector.load %arg5[%c7, %c0_77, %c0_78] : memref<9x64x96xbf16, #tpu.memory_space<vmem>>, vector<1x64x96xbf16>
    %70 = vector.shape_cast %69 : vector<1x64x96xbf16> to vector<64x96xbf16>
    %cst_79 = arith.constant dense<0.000000e+00> : vector<288x96xf32>
    %71 = tpu.matmul %67, %70, %cst_79 {dimension_numbers = #tpu.dot_dimension_numbers<[1], [0], [0], [1], [0, 0, 1, 1], [], []>} : vector<288x64xbf16>, vector<64x96xbf16>, vector<288x96xf32> -> vector<288x96xf32>
    %72 = arith.addf %68, %71 : vector<288x96xf32>
    %c0_80 = arith.constant 0 : index
    %c0_81 = arith.constant 0 : index
    %73 = vector.load %arg9[%c0_80, %c0_81] : memref<288x96xf32, #tpu.memory_space<vmem>>, vector<288x96xf32>
    tpu.vector_store %arg9[%c0_80, %c0_81], %72 {strides = array<i32>} : memref<288x96xf32, #tpu.memory_space<vmem>>, vector<288x96xf32>,
    %c52 = arith.constant 52 : index
    %c0_82 = arith.constant 0 : index
    %74 = vector.load %arg8[%c52, %c0_82] : memref<360x64xbf16, #tpu.memory_space<vmem>>, vector<288x64xbf16>
    %c0_83 = arith.constant 0 : index
    %c0_84 = arith.constant 0 : index
    %75 = vector.load %arg9[%c0_83, %c0_84] : memref<288x96xf32, #tpu.memory_space<vmem>>, vector<288x96xf32>
    %c8 = arith.constant 8 : index
    %c0_85 = arith.constant 0 : index
    %c0_86 = arith.constant 0 : index
    %76 = vector.load %arg5[%c8, %c0_85, %c0_86] : memref<9x64x96xbf16, #tpu.memory_space<vmem>>, vector<1x64x96xbf16>
    %77 = vector.shape_cast %76 : vector<1x64x96xbf16> to vector<64x96xbf16>
    %cst_87 = arith.constant dense<0.000000e+00> : vector<288x96xf32>
    %78 = tpu.matmul %74, %77, %cst_87 {dimension_numbers = #tpu.dot_dimension_numbers<[1], [0], [0], [1], [0, 0, 1, 1], [], []>} : vector<288x64xbf16>, vector<64x96xbf16>, vector<288x96xf32> -> vector<288x96xf32>
    %79 = arith.addf %75, %78 : vector<288x96xf32>
    %c0_88 = arith.constant 0 : index
    %c0_89 = arith.constant 0 : index
    %80 = vector.load %arg9[%c0_88, %c0_89] : memref<288x96xf32, #tpu.memory_space<vmem>>, vector<288x96xf32>
    tpu.vector_store %arg9[%c0_88, %c0_89], %79 {strides = array<i32>} : memref<288x96xf32, #tpu.memory_space<vmem>>, vector<288x96xf32>,
    %c0_90 = arith.constant 0 : index
    %c0_91 = arith.constant 0 : index
    %81 = vector.load %arg9[%c0_90, %c0_91] : memref<288x96xf32, #tpu.memory_space<vmem>>, vector<288x96xf32>
    %c0_92 = arith.constant 0 : index
    %c0_93 = arith.constant 0 : index
    %82 = vector.load %arg6[%c0_92, %c0_93] : memref<1x96xf32, #tpu.memory_space<vmem>>, vector<1x96xf32>
    %83 = vector.broadcast %82 : vector<1x96xf32> to vector<288x96xf32>
    %84 = arith.addf %81, %83 : vector<288x96xf32>
    %cst_94 = arith.constant 0.000000e+00 : f32
    %85 = vector.broadcast %cst_94 : f32 to vector<288x96xf32>
    %86 = arith.maximumf %84, %85 : vector<288x96xf32>
    %87 = arith.truncf %86 : vector<288x96xf32> to vector<288x96xbf16>
    %c0_95 = arith.constant 0 : index
    %c0_96 = arith.constant 0 : index
    %c0_97 = arith.constant 0 : index
    %88 = vector.load %arg7[%c0_95, %c0_96, %c0_97] : memref<1x288x96xbf16, #tpu.memory_space<vmem>>, vector<1x288x96xbf16>
    %89 = vector.shape_cast %88 : vector<1x288x96xbf16> to vector<288x96xbf16>
    %90 = vector.shape_cast %87 : vector<288x96xbf16> to vector<1x288x96xbf16>
    tpu.vector_store %arg7[%c0_95, %c0_96, %c0_97], %90 {strides = array<i32>} : memref<1x288x96xbf16, #tpu.memory_space<vmem>>, vector<1x288x96xbf16>,
    return
  }
  func.func @transform_0(%arg0: i32) -> (i32, i32, i32) {
    %c0_i32 = arith.constant 0 : i32
    %c0_i32_0 = arith.constant 0 : i32
    %c0_i32_1 = arith.constant 0 : i32
    return %arg0, %c0_i32, %c0_i32_0 : i32, i32, i32
  }
  func.func @transform_1(%arg0: i32) -> (i32, i32) {
    %c0_i32 = arith.constant 0 : i32
    %c0_i32_0 = arith.constant 0 : i32
    %c0_i32_1 = arith.constant 0 : i32
    return %c0_i32, %c0_i32_0 : i32, i32
  }
  func.func @transform_2(%arg0: i32) -> (i32, i32) {
    %c0_i32 = arith.constant 0 : i32
    %c0_i32_0 = arith.constant 0 : i32
    %c0_i32_1 = arith.constant 0 : i32
    return %c0_i32, %c0_i32_0 : i32, i32
  }
  func.func @transform_3(%arg0: i32) -> (i32, i32) {
    %c0_i32 = arith.constant 0 : i32
    %c0_i32_0 = arith.constant 0 : i32
    %c0_i32_1 = arith.constant 0 : i32
    return %c0_i32, %c0_i32_0 : i32, i32
  }
  func.func @transform_4(%arg0: i32) -> (i32, i32, i32) {
    %c0_i32 = arith.constant 0 : i32
    %c0_i32_0 = arith.constant 0 : i32
    %c0_i32_1 = arith.constant 0 : i32
    %c0_i32_2 = arith.constant 0 : i32
    return %c0_i32, %c0_i32_0, %c0_i32_1 : i32, i32, i32
  }
  func.func @transform_5(%arg0: i32) -> (i32, i32) {
    %c0_i32 = arith.constant 0 : i32
    %c0_i32_0 = arith.constant 0 : i32
    %c0_i32_1 = arith.constant 0 : i32
    return %c0_i32, %c0_i32_0 : i32, i32
  }
  func.func @transform_6(%arg0: i32) -> (i32, i32, i32) {
    %c0_i32 = arith.constant 0 : i32
    %c0_i32_0 = arith.constant 0 : i32
    %c0_i32_1 = arith.constant 0 : i32
    return %arg0, %c0_i32, %c0_i32_0 : i32, i32, i32
  }
}

module attributes {stable_mosaic.version = 11 : i64} {
  func.func @_reduction_kernel(%arg0: i32, %arg1: memref<64x36xbf16, #tpu.memory_space<vmem>>, %arg2: memref<36x384xbf16, #tpu.memory_space<vmem>>, %arg3: memref<1x384xf32, #tpu.memory_space<vmem>>, %arg4: memref<64x864xbf16, #tpu.memory_space<vmem>>, %arg5: memref<864x96xbf16, #tpu.memory_space<vmem>>, %arg6: memref<1x96xf32, #tpu.memory_space<vmem>>, %arg7: memref<9x64x4xf32, #tpu.memory_space<vmem>>, %arg8: memref<64x484xf32, #tpu.memory_space<vmem>>) attributes {dimension_semantics = [#tpu.dimension_semantics<parallel>], iteration_bounds = array<i64: 2>, scalar_prefetch = 0 : i64, scratch_operands = 0 : i64, tpu.core_type = #tpu.core_type<tc>, window_params = [{transform_indices = @transform_0, window_bounds = array<i64: 64, 36>}, {pipeline_mode = #tpu.pipeline_mode<synchronous>, transform_indices = @transform_1, window_bounds = array<i64: 36, 384>}, {pipeline_mode = #tpu.pipeline_mode<synchronous>, transform_indices = @transform_2, window_bounds = array<i64: 1, 384>}, {transform_indices = @transform_3, window_bounds = array<i64: 64, 864>}, {pipeline_mode = #tpu.pipeline_mode<synchronous>, transform_indices = @transform_4, window_bounds = array<i64: 864, 96>}, {pipeline_mode = #tpu.pipeline_mode<synchronous>, transform_indices = @transform_5, window_bounds = array<i64: 1, 96>}, {transform_indices = @transform_6, window_bounds = array<i64: 9, 64, 4>}, {transform_indices = @transform_7, window_bounds = array<i64: 64, 484>}]} {
    %c0 = arith.constant 0 : index
    %c0_0 = arith.constant 0 : index
    %0 = vector.load %arg1[%c0, %c0_0] : memref<64x36xbf16, #tpu.memory_space<vmem>>, vector<64x36xbf16>
    %c0_1 = arith.constant 0 : index
    %c0_2 = arith.constant 0 : index
    %1 = vector.load %arg2[%c0_1, %c0_2] : memref<36x384xbf16, #tpu.memory_space<vmem>>, vector<36x384xbf16>
    %cst = arith.constant dense<0.000000e+00> : vector<64x384xf32>
    %2 = tpu.matmul %0, %1, %cst {dimension_numbers = #tpu.dot_dimension_numbers<[1], [0], [0], [1], [0, 0, 1, 1], [], []>} : vector<64x36xbf16>, vector<36x384xbf16>, vector<64x384xf32> -> vector<64x384xf32>
    %c0_3 = arith.constant 0 : index
    %c0_4 = arith.constant 0 : index
    %3 = vector.load %arg3[%c0_3, %c0_4] : memref<1x384xf32, #tpu.memory_space<vmem>>, vector<1x384xf32>
    %4 = vector.broadcast %3 : vector<1x384xf32> to vector<64x384xf32>
    %5 = arith.addf %2, %4 : vector<64x384xf32>
    %cst_5 = arith.constant 0.000000e+00 : f32
    %6 = vector.broadcast %cst_5 : f32 to vector<64x384xf32>
    %7 = arith.maximumf %5, %6 : vector<64x384xf32>
    %c0_6 = arith.constant 0 : index
    %c0_7 = arith.constant 0 : index
    %8 = vector.load %arg8[%c0_6, %c0_7] : memref<64x484xf32, #tpu.memory_space<vmem>>, vector<64x384xf32>
    tpu.vector_store %arg8[%c0_6, %c0_7], %7 {strides = array<i32>} : memref<64x484xf32, #tpu.memory_space<vmem>>, vector<64x384xf32>,
    %c0_8 = arith.constant 0 : index
    %c0_9 = arith.constant 0 : index
    %9 = vector.load %arg4[%c0_8, %c0_9] : memref<64x864xbf16, #tpu.memory_space<vmem>>, vector<64x864xbf16>
    %c0_10 = arith.constant 0 : index
    %c0_11 = arith.constant 0 : index
    %10 = vector.load %arg5[%c0_10, %c0_11] : memref<864x96xbf16, #tpu.memory_space<vmem>>, vector<864x96xbf16>
    %cst_12 = arith.constant dense<0.000000e+00> : vector<64x96xf32>
    %11 = tpu.matmul %9, %10, %cst_12 {dimension_numbers = #tpu.dot_dimension_numbers<[1], [0], [0], [1], [0, 0, 1, 1], [], []>} : vector<64x864xbf16>, vector<864x96xbf16>, vector<64x96xf32> -> vector<64x96xf32>
    %c0_13 = arith.constant 0 : index
    %c0_14 = arith.constant 0 : index
    %12 = vector.load %arg6[%c0_13, %c0_14] : memref<1x96xf32, #tpu.memory_space<vmem>>, vector<1x96xf32>
    %13 = vector.broadcast %12 : vector<1x96xf32> to vector<64x96xf32>
    %14 = arith.addf %11, %13 : vector<64x96xf32>
    %cst_15 = arith.constant 0.000000e+00 : f32
    %15 = vector.broadcast %cst_15 : f32 to vector<64x96xf32>
    %16 = arith.maximumf %14, %15 : vector<64x96xf32>
    %c0_16 = arith.constant 0 : index
    %c384 = arith.constant 384 : index
    %17 = vector.load %arg8[%c0_16, %c384] : memref<64x484xf32, #tpu.memory_space<vmem>>, vector<64x96xf32>
    tpu.vector_store %arg8[%c0_16, %c384], %16 {strides = array<i32>} : memref<64x484xf32, #tpu.memory_space<vmem>>, vector<64x96xf32>,
    %c0_17 = arith.constant 0 : index
    %c0_18 = arith.constant 0 : index
    %c0_19 = arith.constant 0 : index
    %18 = vector.load %arg7[%c0_17, %c0_18, %c0_19] : memref<9x64x4xf32, #tpu.memory_space<vmem>>, vector<1x64x4xf32>
    %19 = vector.shape_cast %18 : vector<1x64x4xf32> to vector<64x4xf32>
    %c1 = arith.constant 1 : index
    %c0_20 = arith.constant 0 : index
    %c0_21 = arith.constant 0 : index
    %20 = vector.load %arg7[%c1, %c0_20, %c0_21] : memref<9x64x4xf32, #tpu.memory_space<vmem>>, vector<1x64x4xf32>
    %21 = vector.shape_cast %20 : vector<1x64x4xf32> to vector<64x4xf32>
    %22 = arith.maximumf %19, %21 : vector<64x4xf32>
    %c2 = arith.constant 2 : index
    %c0_22 = arith.constant 0 : index
    %c0_23 = arith.constant 0 : index
    %23 = vector.load %arg7[%c2, %c0_22, %c0_23] : memref<9x64x4xf32, #tpu.memory_space<vmem>>, vector<1x64x4xf32>
    %24 = vector.shape_cast %23 : vector<1x64x4xf32> to vector<64x4xf32>
    %25 = arith.maximumf %22, %24 : vector<64x4xf32>
    %c3 = arith.constant 3 : index
    %c0_24 = arith.constant 0 : index
    %c0_25 = arith.constant 0 : index
    %26 = vector.load %arg7[%c3, %c0_24, %c0_25] : memref<9x64x4xf32, #tpu.memory_space<vmem>>, vector<1x64x4xf32>
    %27 = vector.shape_cast %26 : vector<1x64x4xf32> to vector<64x4xf32>
    %28 = arith.maximumf %25, %27 : vector<64x4xf32>
    %c4 = arith.constant 4 : index
    %c0_26 = arith.constant 0 : index
    %c0_27 = arith.constant 0 : index
    %29 = vector.load %arg7[%c4, %c0_26, %c0_27] : memref<9x64x4xf32, #tpu.memory_space<vmem>>, vector<1x64x4xf32>
    %30 = vector.shape_cast %29 : vector<1x64x4xf32> to vector<64x4xf32>
    %31 = arith.maximumf %28, %30 : vector<64x4xf32>
    %c5 = arith.constant 5 : index
    %c0_28 = arith.constant 0 : index
    %c0_29 = arith.constant 0 : index
    %32 = vector.load %arg7[%c5, %c0_28, %c0_29] : memref<9x64x4xf32, #tpu.memory_space<vmem>>, vector<1x64x4xf32>
    %33 = vector.shape_cast %32 : vector<1x64x4xf32> to vector<64x4xf32>
    %34 = arith.maximumf %31, %33 : vector<64x4xf32>
    %c6 = arith.constant 6 : index
    %c0_30 = arith.constant 0 : index
    %c0_31 = arith.constant 0 : index
    %35 = vector.load %arg7[%c6, %c0_30, %c0_31] : memref<9x64x4xf32, #tpu.memory_space<vmem>>, vector<1x64x4xf32>
    %36 = vector.shape_cast %35 : vector<1x64x4xf32> to vector<64x4xf32>
    %37 = arith.maximumf %34, %36 : vector<64x4xf32>
    %c7 = arith.constant 7 : index
    %c0_32 = arith.constant 0 : index
    %c0_33 = arith.constant 0 : index
    %38 = vector.load %arg7[%c7, %c0_32, %c0_33] : memref<9x64x4xf32, #tpu.memory_space<vmem>>, vector<1x64x4xf32>
    %39 = vector.shape_cast %38 : vector<1x64x4xf32> to vector<64x4xf32>
    %40 = arith.maximumf %37, %39 : vector<64x4xf32>
    %c8 = arith.constant 8 : index
    %c0_34 = arith.constant 0 : index
    %c0_35 = arith.constant 0 : index
    %41 = vector.load %arg7[%c8, %c0_34, %c0_35] : memref<9x64x4xf32, #tpu.memory_space<vmem>>, vector<1x64x4xf32>
    %42 = vector.shape_cast %41 : vector<1x64x4xf32> to vector<64x4xf32>
    %43 = arith.maximumf %40, %42 : vector<64x4xf32>
    %c0_36 = arith.constant 0 : index
    %c480 = arith.constant 480 : index
    %44 = vector.load %arg8[%c0_36, %c480] : memref<64x484xf32, #tpu.memory_space<vmem>>, vector<64x4xf32>
    tpu.vector_store %arg8[%c0_36, %c480], %43 {strides = array<i32>} : memref<64x484xf32, #tpu.memory_space<vmem>>, vector<64x4xf32>,
    return
  }
  func.func @transform_0(%arg0: i32) -> (i32, i32) {
    %c0_i32 = arith.constant 0 : i32
    %c0_i32_0 = arith.constant 0 : i32
    return %arg0, %c0_i32 : i32, i32
  }
  func.func @transform_1(%arg0: i32) -> (i32, i32) {
    %c0_i32 = arith.constant 0 : i32
    %c0_i32_0 = arith.constant 0 : i32
    %c0_i32_1 = arith.constant 0 : i32
    return %c0_i32, %c0_i32_0 : i32, i32
  }
  func.func @transform_2(%arg0: i32) -> (i32, i32) {
    %c0_i32 = arith.constant 0 : i32
    %c0_i32_0 = arith.constant 0 : i32
    %c0_i32_1 = arith.constant 0 : i32
    return %c0_i32, %c0_i32_0 : i32, i32
  }
  func.func @transform_3(%arg0: i32) -> (i32, i32) {
    %c0_i32 = arith.constant 0 : i32
    %c0_i32_0 = arith.constant 0 : i32
    return %arg0, %c0_i32 : i32, i32
  }
  func.func @transform_4(%arg0: i32) -> (i32, i32) {
    %c0_i32 = arith.constant 0 : i32
    %c0_i32_0 = arith.constant 0 : i32
    %c0_i32_1 = arith.constant 0 : i32
    return %c0_i32, %c0_i32_0 : i32, i32
  }
  func.func @transform_5(%arg0: i32) -> (i32, i32) {
    %c0_i32 = arith.constant 0 : i32
    %c0_i32_0 = arith.constant 0 : i32
    %c0_i32_1 = arith.constant 0 : i32
    return %c0_i32, %c0_i32_0 : i32, i32
  }
  func.func @transform_6(%arg0: i32) -> (i32, i32, i32) {
    %c0_i32 = arith.constant 0 : i32
    %c0_i32_0 = arith.constant 0 : i32
    %c0_i32_1 = arith.constant 0 : i32
    return %c0_i32, %arg0, %c0_i32_0 : i32, i32, i32
  }
  func.func @transform_7(%arg0: i32) -> (i32, i32) {
    %c0_i32 = arith.constant 0 : i32
    %c0_i32_0 = arith.constant 0 : i32
    return %arg0, %c0_i32 : i32, i32
  }
}

</mosaic_0001>

<llo_original>
// kernel: tile.8
$region0: #{tile.8}
  #allocation0 [shape = 's32[1]{0}', space=sflag, size = 0x4, scoped, tag = 'scoped memory for tile.8']
  %s0 = inlined_call_operand.vmem [shape: f32[18], index: 0, kind: input, shape index: {}]
  %s1 = inlined_call_operand.vmem [shape: f32[16,18], index: 1, kind: output, shape index: {}]
  // Predicated region
  $region2: #{tile.8} parent=0 // pred_check
    _
  $region3: #{tile.8} parent=0 // pred_check_branch
    %3 = sbr.rel (0) target = $region5
  $region4: #{tile.8} parent=0 // pred_region
    _
  $region5: #{tile.8} parent=0 // pred_fallthru
    _
  %v4 = vld [vmem:[%s0] ss:$0 sm:$0xff]
  %5 = vst [vmem:[%s1] sm:$0xff] %v4
  %s6 = scalar_lea.vmem %s1, 8
  %7 = vst [vmem:[%s6] sm:$0xff] %v4

// kernel: tile.0
$region0: #{tile.0}
  %s0 = inlined_call_operand.vmem [shape: f32[16,18], index: 0, kind: input, shape index: {}]
  %s1 = inlined_call_operand.vmem [shape: f32[288,1], index: 1, kind: output, shape index: {}]
  %v2 = vld [vmem:[%s0] sm:$0xff]
  %vm3 = vcmask 7168
  %4 = vst.msk [vmem:[%s1] ss:$18 sm:$0xff] %vm3, %v2
  %s5 = scalar_lea.vmem %s0, 8
  %v6 = vld [vmem:[%s5] sm:$0xff]
  %vm7 = vcmask 7168
  %s8 = scalar_lea.vmem %s1, 144
  %9 = vst.msk [vmem:[%s8] ss:$18 sm:$0xff] %vm7, %v6
  %v10 = vld.sshfl [vmem:[%s0] sm:$0xff pattern:$0xf6d4b290]
  %11 = vrot.lane.b32.xlu0 %v10, 127
  %v12 = vpop.permute.xlu0 %11
  %vm13 = vcmask 7168
  %s14 = scalar_lea.vmem %s1, 1
  %15 = vst.msk [vmem:[%s14] ss:$162 sm:$0x3] %vm13, %v12
  %s16 = scalar_lea.vmem %s1, 4294967009
  %17 = vst.msk [vmem:[%s16] ss:$162 sm:$0xc] %vm13, %v12
  %s18 = scalar_lea.vmem %s1, 4294966721
  %19 = vst.msk [vmem:[%s18] ss:$162 sm:$0x30] %vm13, %v12
  %s20 = scalar_lea.vmem %s1, 4294966433
  %21 = vst.msk [vmem:[%s20] ss:$162 sm:$0xc0] %vm13, %v12
  %s22 = scalar_lea.vmem %s0, 1
  %v23 = vld.sshfl [vmem:[%s22] sm:$0xff pattern:$0x6d4b2907]
  %24 = vrot.lane.b32.xlu0 %v23, 127
  %v25 = vpop.permute.xlu0 %24
  %vm26 = vcmask 7168
  %s27 = scalar_lea.vmem %s1, 145
  %28 = vst.msk [vmem:[%s27] ss:$-126 sm:$0x3] %vm26, %v25
  %s29 = scalar_lea.vmem %s1, 433
  %30 = vst.msk [vmem:[%s29] ss:$-126 sm:$0xc] %vm26, %v25
  %s31 = scalar_lea.vmem %s1, 721
  %32 = vst.msk [vmem:[%s31] ss:$-126 sm:$0x30] %vm26, %v25
  %s33 = scalar_lea.vmem %s1, 1009
  %34 = vst.msk [vmem:[%s33] ss:$-126 sm:$0xc0] %vm26, %v25
  %v35 = vld.sshfl [vmem:[%s0] sm:$0xff pattern:$0x6d4b2907]
  %36 = vrot.lane.b32.xlu0 %v35, 126
  %v37 = vpop.permute.xlu0 %36
  %vm38 = vcmask 7168
  %s39 = scalar_lea.vmem %s1, 128
  %40 = vst.msk [vmem:[%s39] ss:$-126 sm:$0x3] %vm38, %v37
  %s41 = scalar_lea.vmem %s1, 416
  %42 = vst.msk [vmem:[%s41] ss:$-126 sm:$0xc] %vm38, %v37
  %s43 = scalar_lea.vmem %s1, 704
  %44 = vst.msk [vmem:[%s43] ss:$-126 sm:$0x30] %vm38, %v37
  %s45 = scalar_lea.vmem %s1, 992
  %46 = vst.msk [vmem:[%s45] ss:$-126 sm:$0xc0] %vm38, %v37
  %s47 = scalar_lea.vmem %s0, 1
  %v48 = vld.sshfl [vmem:[%s47] sm:$0xff pattern:$0xd4b2907e]
  %49 = vrot.lane.b32.xlu0 %v48, 126
  %v50 = vpop.permute.xlu0 %49
  %vm51 = vcmask 7168
  %s52 = scalar_lea.vmem %s1, 272
  %53 = vst.msk [vmem:[%s52] ss:$-126 sm:$0x7] %vm51, %v50
  %s54 = scalar_lea.vmem %s1, 560
  %55 = vst.msk [vmem:[%s54] ss:$-126 sm:$0x18] %vm51, %v50
  %s56 = scalar_lea.vmem %s1, 848
  %57 = vst.msk [vmem:[%s56] ss:$-126 sm:$0x60] %vm51, %v50
  %s58 = scalar_lea.vmem %s1, 247
  %59 = vst.msk [vmem:[%s58] sm:$0x80] %vm51, %v50
  %v60 = vld.sshfl [vmem:[%s0] sm:$0xff pattern:$0x6d4b2907]
  %61 = vrot.lane.b32.xlu0 %v60, 125
  %v62 = vpop.permute.xlu0 %61
  %vm63 = vcmask 7168
  %s64 = scalar_lea.vmem %s1, 129
  %65 = vst.msk [vmem:[%s64] ss:$-126 sm:$0x3] %vm63, %v62
  %s66 = scalar_lea.vmem %s1, 417
  %67 = vst.msk [vmem:[%s66] ss:$-126 sm:$0xc] %vm63, %v62
  %s68 = scalar_lea.vmem %s1, 705
  %69 = vst.msk [vmem:[%s68] ss:$-126 sm:$0x30] %vm63, %v62
  %s70 = scalar_lea.vmem %s1, 993
  %71 = vst.msk [vmem:[%s70] ss:$-126 sm:$0xc0] %vm63, %v62
  %s72 = scalar_lea.vmem %s0, 1
  %v73 = vld.sshfl [vmem:[%s72] sm:$0xff pattern:$0xd4b2907e]
  %74 = vrot.lane.b32.xlu0 %v73, 125
  %v75 = vpop.permute.xlu0 %74
  %vm76 = vcmask 7168
  %s77 = scalar_lea.vmem %s1, 273
  %78 = vst.msk [vmem:[%s77] ss:$-126 sm:$0x7] %vm76, %v75
  %s79 = scalar_lea.vmem %s1, 561
  %80 = vst.msk [vmem:[%s79] ss:$-126 sm:$0x18] %vm76, %v75
  %s81 = scalar_lea.vmem %s1, 849
  %82 = vst.msk [vmem:[%s81] ss:$-126 sm:$0x60] %vm76, %v75
  %s83 = scalar_lea.vmem %s1, 248
  %84 = vst.msk [vmem:[%s83] sm:$0x80] %vm76, %v75
  %v85 = vld.sshfl [vmem:[%s0] sm:$0xff pattern:$0xd4b2907e]
  %86 = vrot.lane.b32.xlu0 %v85, 124
  %v87 = vpop.permute.xlu0 %86
  %vm88 = vcmask 7168
  %s89 = scalar_lea.vmem %s1, 256
  %90 = vst.msk [vmem:[%s89] ss:$-126 sm:$0x7] %vm88, %v87
  %s91 = scalar_lea.vmem %s1, 544
  %92 = vst.msk [vmem:[%s91] ss:$-126 sm:$0x18] %vm88, %v87
  %s93 = scalar_lea.vmem %s1, 832
  %94 = vst.msk [vmem:[%s93] ss:$-126 sm:$0x60] %vm88, %v87
  %s95 = scalar_lea.vmem %s1, 231
  %96 = vst.msk [vmem:[%s95] sm:$0x80] %vm88, %v87
  %s97 = scalar_lea.vmem %s0, 1
  %v98 = vld.sshfl [vmem:[%s97] sm:$0xff pattern:$0x4b2907e5]
  %99 = vrot.lane.b32.xlu0 %v98, 124
  %v100 = vpop.permute.xlu0 %99
  %vm101 = vcmask 7168
  %s102 = scalar_lea.vmem %s1, 112
  %103 = vst.msk [vmem:[%s102] ss:$162 sm:$0x3] %vm101, %v100
  %s104 = scalar_lea.vmem %s1, 400
  %105 = vst.msk [vmem:[%s104] ss:$-126 sm:$0xc] %vm101, %v100
  %s106 = scalar_lea.vmem %s1, 688
  %107 = vst.msk [vmem:[%s106] ss:$-126 sm:$0x30] %vm101, %v100
  %s108 = scalar_lea.vmem %s1, 976
  %109 = vst.msk [vmem:[%s108] ss:$-126 sm:$0xc0] %vm101, %v100
  %v110 = vld.sshfl [vmem:[%s0] sm:$0xff pattern:$0xd4b2907e]
  %111 = vrot.lane.b32.xlu0 %v110, 123
  %v112 = vpop.permute.xlu0 %111
  %vm113 = vcmask 7168
  %s114 = scalar_lea.vmem %s1, 257
  %115 = vst.msk [vmem:[%s114] ss:$-126 sm:$0x7] %vm113, %v112
  %s116 = scalar_lea.vmem %s1, 545
  %117 = vst.msk [vmem:[%s116] ss:$-126 sm:$0x18] %vm113, %v112
  %s118 = scalar_lea.vmem %s1, 833
  %119 = vst.msk [vmem:[%s118] ss:$-126 sm:$0x60] %vm113, %v112
  %s120 = scalar_lea.vmem %s1, 232
  %121 = vst.msk [vmem:[%s120] sm:$0x80] %vm113, %v112
  %s122 = scalar_lea.vmem %s0, 1
  %v123 = vld.sshfl [vmem:[%s122] sm:$0xff pattern:$0x4b2907e5]
  %124 = vrot.lane.b32.xlu0 %v123, 123
  %v125 = vpop.permute.xlu0 %124
  %vm126 = vcmask 7168
  %s127 = scalar_lea.vmem %s1, 113
  %128 = vst.msk [vmem:[%s127] ss:$162 sm:$0x3] %vm126, %v125
  %s129 = scalar_lea.vmem %s1, 401
  %130 = vst.msk [vmem:[%s129] ss:$-126 sm:$0xc] %vm126, %v125
  %s131 = scalar_lea.vmem %s1, 689
  %132 = vst.msk [vmem:[%s131] ss:$-126 sm:$0x30] %vm126, %v125
  %s133 = scalar_lea.vmem %s1, 977
  %134 = vst.msk [vmem:[%s133] ss:$-126 sm:$0xc0] %vm126, %v125
  %v135 = vld.sshfl [vmem:[%s0] sm:$0xff pattern:$0x4b2907e5]
  %136 = vrot.lane.b32.xlu0 %v135, 122
  %v137 = vpop.permute.xlu0 %136
  %vm138 = vcmask 7168
  %s139 = scalar_lea.vmem %s1, 96
  %140 = vst.msk [vmem:[%s139] ss:$162 sm:$0x3] %vm138, %v137
  %s141 = scalar_lea.vmem %s1, 384
  %142 = vst.msk [vmem:[%s141] ss:$-126 sm:$0xc] %vm138, %v137
  %s143 = scalar_lea.vmem %s1, 672
  %144 = vst.msk [vmem:[%s143] ss:$-126 sm:$0x30] %vm138, %v137
  %s145 = scalar_lea.vmem %s1, 960
  %146 = vst.msk [vmem:[%s145] ss:$-126 sm:$0xc0] %vm138, %v137
  %s147 = scalar_lea.vmem %s0, 1
  %v148 = vld.sshfl [vmem:[%s147] sm:$0xff pattern:$0xb2907e5c]
  %149 = vrot.lane.b32.xlu0 %v148, 122
  %v150 = vpop.permute.xlu0 %149
  %vm151 = vcmask 7168
  %s152 = scalar_lea.vmem %s1, 240
  %153 = vst.msk [vmem:[%s152] ss:$-126 sm:$0x3] %vm151, %v150
  %s154 = scalar_lea.vmem %s1, 528
  %155 = vst.msk [vmem:[%s154] ss:$-126 sm:$0x1c] %vm151, %v150
  %s156 = scalar_lea.vmem %s1, 816
  %157 = vst.msk [vmem:[%s156] ss:$-126 sm:$0x60] %vm151, %v150
  %s158 = scalar_lea.vmem %s1, 215
  %159 = vst.msk [vmem:[%s158] sm:$0x80] %vm151, %v150
  %v160 = vld.sshfl [vmem:[%s0] sm:$0xff pattern:$0x4b2907e5]
  %161 = vrot.lane.b32.xlu0 %v160, 121
  %v162 = vpop.permute.xlu0 %161
  %vm163 = vcmask 7168
  %s164 = scalar_lea.vmem %s1, 97
  %165 = vst.msk [vmem:[%s164] ss:$162 sm:$0x3] %vm163, %v162
  %s166 = scalar_lea.vmem %s1, 385
  %167 = vst.msk [vmem:[%s166] ss:$-126 sm:$0xc] %vm163, %v162
  %s168 = scalar_lea.vmem %s1, 673
  %169 = vst.msk [vmem:[%s168] ss:$-126 sm:$0x30] %vm163, %v162
  %s170 = scalar_lea.vmem %s1, 961
  %171 = vst.msk [vmem:[%s170] ss:$-126 sm:$0xc0] %vm163, %v162
  %s172 = scalar_lea.vmem %s0, 1
  %v173 = vld.sshfl [vmem:[%s172] sm:$0xff pattern:$0xb2907e5c]
  %174 = vrot.lane.b32.xlu0 %v173, 121
  %v175 = vpop.permute.xlu0 %174
  %vm176 = vcmask 7168
  %s177 = scalar_lea.vmem %s1, 241
  %178 = vst.msk [vmem:[%s177] ss:$-126 sm:$0x3] %vm176, %v175
  %s179 = scalar_lea.vmem %s1, 529
  %180 = vst.msk [vmem:[%s179] ss:$-126 sm:$0x1c] %vm176, %v175
  %s181 = scalar_lea.vmem %s1, 817
  %182 = vst.msk [vmem:[%s181] ss:$-126 sm:$0x60] %vm176, %v175
  %s183 = scalar_lea.vmem %s1, 216
  %184 = vst.msk [vmem:[%s183] sm:$0x80] %vm176, %v175
  %v185 = vld.sshfl [vmem:[%s0] sm:$0xff pattern:$0xb2907e5c]
  %186 = vrot.lane.b32.xlu0 %v185, 120
  %v187 = vpop.permute.xlu0 %186
  %vm188 = vcmask 7168
  %s189 = scalar_lea.vmem %s1, 224
  %190 = vst.msk [vmem:[%s189] ss:$-126 sm:$0x3] %vm188, %v187
  %s191 = scalar_lea.vmem %s1, 512
  %192 = vst.msk [vmem:[%s191] ss:$-126 sm:$0x1c] %vm188, %v187
  %s193 = scalar_lea.vmem %s1, 800
  %194 = vst.msk [vmem:[%s193] ss:$-126 sm:$0x60] %vm188, %v187
  %s195 = scalar_lea.vmem %s1, 199
  %196 = vst.msk [vmem:[%s195] sm:$0x80] %vm188, %v187
  %s197 = scalar_lea.vmem %s0, 1
  %v198 = vld.sshfl [vmem:[%s197] sm:$0xff pattern:$0x2907e5c3]
  %199 = vrot.lane.b32.xlu0 %v198, 120
  %v200 = vpop.permute.xlu0 %199
  %vm201 = vcmask 7168
  %s202 = scalar_lea.vmem %s1, 80
  %203 = vst.msk [vmem:[%s202] ss:$162 sm:$0x3] %vm201, %v200
  %s204 = scalar_lea.vmem %s1, 4294967088
  %205 = vst.msk [vmem:[%s204] ss:$162 sm:$0xc] %vm201, %v200
  %s206 = scalar_lea.vmem %s1, 656
  %207 = vst.msk [vmem:[%s206] ss:$-126 sm:$0x30] %vm201, %v200
  %s208 = scalar_lea.vmem %s1, 944
  %209 = vst.msk [vmem:[%s208] ss:$-126 sm:$0xc0] %vm201, %v200
  %v210 = vld.sshfl [vmem:[%s0] sm:$0xff pattern:$0xb2907e5c]
  %211 = vrot.lane.b32.xlu0 %v210, 119
  %v212 = vpop.permute.xlu0 %211
  %vm213 = vcmask 7168
  %s214 = scalar_lea.vmem %s1, 225
  %215 = vst.msk [vmem:[%s214] ss:$-126 sm:$0x3] %vm213, %v212
  %s216 = scalar_lea.vmem %s1, 513
  %217 = vst.msk [vmem:[%s216] ss:$-126 sm:$0x1c] %vm213, %v212
  %s218 = scalar_lea.vmem %s1, 801
  %219 = vst.msk [vmem:[%s218] ss:$-126 sm:$0x60] %vm213, %v212
  %s220 = scalar_lea.vmem %s1, 200
  %221 = vst.msk [vmem:[%s220] sm:$0x80] %vm213, %v212
  %s222 = scalar_lea.vmem %s0, 1
  %v223 = vld.sshfl [vmem:[%s222] sm:$0xff pattern:$0x2907e5c3]
  %224 = vrot.lane.b32.xlu0 %v223, 119
  %v225 = vpop.permute.xlu0 %224
  %vm226 = vcmask 7168
  %s227 = scalar_lea.vmem %s1, 81
  %228 = vst.msk [vmem:[%s227] ss:$162 sm:$0x3] %vm226, %v225
  %s229 = scalar_lea.vmem %s1, 4294967089
  %230 = vst.msk [vmem:[%s229] ss:$162 sm:$0xc] %vm226, %v225
  %s231 = scalar_lea.vmem %s1, 657
  %232 = vst.msk [vmem:[%s231] ss:$-126 sm:$0x30] %vm226, %v225
  %s233 = scalar_lea.vmem %s1, 945
  %234 = vst.msk [vmem:[%s233] ss:$-126 sm:$0xc0] %vm226, %v225
  %v235 = vld.sshfl [vmem:[%s0] sm:$0xff pattern:$0x2907e5c3]
  %236 = vrot.lane.b32.xlu0 %v235, 118
  %v237 = vpop.permute.xlu0 %236
  %vm238 = vcmask 7168
  %s239 = scalar_lea.vmem %s1, 64
  %240 = vst.msk [vmem:[%s239] ss:$162 sm:$0x3] %vm238, %v237
  %s241 = scalar_lea.vmem %s1, 4294967072
  %242 = vst.msk [vmem:[%s241] ss:$162 sm:$0xc] %vm238, %v237
  %s243 = scalar_lea.vmem %s1, 640
  %244 = vst.msk [vmem:[%s243] ss:$-126 sm:$0x30] %vm238, %v237
  %s245 = scalar_lea.vmem %s1, 928
  %246 = vst.msk [vmem:[%s245] ss:$-126 sm:$0xc0] %vm238, %v237
  %s247 = scalar_lea.vmem %s0, 1
  %v248 = vld.sshfl [vmem:[%s247] sm:$0xff pattern:$0x907e5c3a]
  %249 = vrot.lane.b32.xlu0 %v248, 118
  %v250 = vpop.permute.xlu0 %249
  %vm251 = vcmask 7168
  %s252 = scalar_lea.vmem %s1, 208
  %253 = vst.msk [vmem:[%s252] ss:$-126 sm:$0x3] %vm251, %v250
  %s254 = scalar_lea.vmem %s1, 496
  %255 = vst.msk [vmem:[%s254] ss:$-126 sm:$0xc] %vm251, %v250
  %s256 = scalar_lea.vmem %s1, 784
  %257 = vst.msk [vmem:[%s256] ss:$-126 sm:$0x70] %vm251, %v250
  %s258 = scalar_lea.vmem %s1, 183
  %259 = vst.msk [vmem:[%s258] sm:$0x80] %vm251, %v250
  %v260 = vld.sshfl [vmem:[%s0] sm:$0xff pattern:$0x2907e5c3]
  %261 = vrot.lane.b32.xlu0 %v260, 117
  %v262 = vpop.permute.xlu0 %261
  %vm263 = vcmask 7168
  %s264 = scalar_lea.vmem %s1, 65
  %265 = vst.msk [vmem:[%s264] ss:$162 sm:$0x3] %vm263, %v262
  %s266 = scalar_lea.vmem %s1, 4294967073
  %267 = vst.msk [vmem:[%s266] ss:$162 sm:$0xc] %vm263, %v262
  %s268 = scalar_lea.vmem %s1, 641
  %269 = vst.msk [vmem:[%s268] ss:$-126 sm:$0x30] %vm263, %v262
  %s270 = scalar_lea.vmem %s1, 929
  %271 = vst.msk [vmem:[%s270] ss:$-126 sm:$0xc0] %vm263, %v262
  %s272 = scalar_lea.vmem %s0, 1
  %v273 = vld.sshfl [vmem:[%s272] sm:$0xff pattern:$0x907e5c3a]
  %274 = vrot.lane.b32.xlu0 %v273, 117
  %v275 = vpop.permute.xlu0 %274
  %vm276 = vcmask 7168
  %s277 = scalar_lea.vmem %s1, 209
  %278 = vst.msk [vmem:[%s277] ss:$-126 sm:$0x3] %vm276, %v275
  %s279 = scalar_lea.vmem %s1, 497
  %280 = vst.msk [vmem:[%s279] ss:$-126 sm:$0xc] %vm276, %v275
  %s281 = scalar_lea.vmem %s1, 785
  %282 = vst.msk [vmem:[%s281] ss:$-126 sm:$0x70] %vm276, %v275
  %s283 = scalar_lea.vmem %s1, 184
  %284 = vst.msk [vmem:[%s283] sm:$0x80] %vm276, %v275
  %v285 = vld.sshfl [vmem:[%s0] sm:$0xff pattern:$0x907e5c3a]
  %286 = vrot.lane.b32.xlu0 %v285, 116
  %v287 = vpop.permute.xlu0 %286
  %vm288 = vcmask 7168
  %s289 = scalar_lea.vmem %s1, 192
  %290 = vst.msk [vmem:[%s289] ss:$-126 sm:$0x3] %vm288, %v287
  %s291 = scalar_lea.vmem %s1, 480
  %292 = vst.msk [vmem:[%s291] ss:$-126 sm:$0xc] %vm288, %v287
  %s293 = scalar_lea.vmem %s1, 768
  %294 = vst.msk [vmem:[%s293] ss:$-126 sm:$0x70] %vm288, %v287
  %s295 = scalar_lea.vmem %s1, 167
  %296 = vst.msk [vmem:[%s295] sm:$0x80] %vm288, %v287
  %s297 = scalar_lea.vmem %s0, 1
  %v298 = vld.sshfl [vmem:[%s297] sm:$0xff pattern:$0x7e5c3a1]
  %299 = vrot.lane.b32.xlu0 %v298, 116
  %v300 = vpop.permute.xlu0 %299
  %vm301 = vcmask 7168
  %s302 = scalar_lea.vmem %s1, 48
  %303 = vst.msk [vmem:[%s302] ss:$162 sm:$0x3] %vm301, %v300
  %s304 = scalar_lea.vmem %s1, 4294967056
  %305 = vst.msk [vmem:[%s304] ss:$162 sm:$0xc] %vm301, %v300
  %s306 = scalar_lea.vmem %s1, 4294966768
  %307 = vst.msk [vmem:[%s306] ss:$162 sm:$0x30] %vm301, %v300
  %s308 = scalar_lea.vmem %s1, 912
  %309 = vst.msk [vmem:[%s308] ss:$-126 sm:$0xc0] %vm301, %v300
  %v310 = vld.sshfl [vmem:[%s0] sm:$0xff pattern:$0x907e5c3a]
  %311 = vrot.lane.b32.xlu0 %v310, 115
  %v312 = vpop.permute.xlu0 %311
  %vm313 = vcmask 7168
  %s314 = scalar_lea.vmem %s1, 193
  %315 = vst.msk [vmem:[%s314] ss:$-126 sm:$0x3] %vm313, %v312
  %s316 = scalar_lea.vmem %s1, 481
  %317 = vst.msk [vmem:[%s316] ss:$-126 sm:$0xc] %vm313, %v312
  %s318 = scalar_lea.vmem %s1, 769
  %319 = vst.msk [vmem:[%s318] ss:$-126 sm:$0x70] %vm313, %v312
  %s320 = scalar_lea.vmem %s1, 168
  %321 = vst.msk [vmem:[%s320] sm:$0x80] %vm313, %v312
  %s322 = scalar_lea.vmem %s0, 1
  %v323 = vld.sshfl [vmem:[%s322] sm:$0xff pattern:$0x7e5c3a1]
  %324 = vrot.lane.b32.xlu0 %v323, 115
  %v325 = vpop.permute.xlu0 %324
  %vm326 = vcmask 7168
  %s327 = scalar_lea.vmem %s1, 49
  %328 = vst.msk [vmem:[%s327] ss:$162 sm:$0x3] %vm326, %v325
  %s329 = scalar_lea.vmem %s1, 4294967057
  %330 = vst.msk [vmem:[%s329] ss:$162 sm:$0xc] %vm326, %v325
  %s331 = scalar_lea.vmem %s1, 4294966769
  %332 = vst.msk [vmem:[%s331] ss:$162 sm:$0x30] %vm326, %v325
  %s333 = scalar_lea.vmem %s1, 913
  %334 = vst.msk [vmem:[%s333] ss:$-126 sm:$0xc0] %vm326, %v325
  %v335 = vld.sshfl [vmem:[%s0] sm:$0xff pattern:$0x7e5c3a1]
  %336 = vrot.lane.b32.xlu0 %v335, 114
  %v337 = vpop.permute.xlu0 %336
  %vm338 = vcmask 7168
  %s339 = scalar_lea.vmem %s1, 32
  %340 = vst.msk [vmem:[%s339] ss:$162 sm:$0x3] %vm338, %v337
  %s341 = scalar_lea.vmem %s1, 4294967040
  %342 = vst.msk [vmem:[%s341] ss:$162 sm:$0xc] %vm338, %v337
  %s343 = scalar_lea.vmem %s1, 4294966752
  %344 = vst.msk [vmem:[%s343] ss:$162 sm:$0x30] %vm338, %v337
  %s345 = scalar_lea.vmem %s1, 896
  %346 = vst.msk [vmem:[%s345] ss:$-126 sm:$0xc0] %vm338, %v337
  %s347 = scalar_lea.vmem %s0, 2
  %v348 = vld.sshfl [vmem:[%s347] sm:$0xff pattern:$0x6d4b2907]
  %349 = vrot.lane.b32.xlu0 %v348, 114
  %v350 = vpop.permute.xlu0 %349
  %vm351 = vcmask 7168
  %s352 = scalar_lea.vmem %s1, 176
  %353 = vst.msk [vmem:[%s352] ss:$-126 sm:$0x3] %vm351, %v350
  %s354 = scalar_lea.vmem %s1, 464
  %355 = vst.msk [vmem:[%s354] ss:$-126 sm:$0xc] %vm351, %v350
  %s356 = scalar_lea.vmem %s1, 752
  %357 = vst.msk [vmem:[%s356] ss:$-126 sm:$0x30] %vm351, %v350
  %s358 = scalar_lea.vmem %s1, 1040
  %359 = vst.msk [vmem:[%s358] ss:$-126 sm:$0xc0] %vm351, %v350
  %v360 = vld.sshfl [vmem:[%s0] sm:$0xff pattern:$0x7e5c3a1]
  %361 = vrot.lane.b32.xlu0 %v360, 113
  %v362 = vpop.permute.xlu0 %361
  %vm363 = vcmask 7168
  %s364 = scalar_lea.vmem %s1, 33
  %365 = vst.msk [vmem:[%s364] ss:$162 sm:$0x3] %vm363, %v362
  %s366 = scalar_lea.vmem %s1, 4294967041
  %367 = vst.msk [vmem:[%s366] ss:$162 sm:$0xc] %vm363, %v362
  %s368 = scalar_lea.vmem %s1, 4294966753
  %369 = vst.msk [vmem:[%s368] ss:$162 sm:$0x30] %vm363, %v362
  %s370 = scalar_lea.vmem %s1, 897
  %371 = vst.msk [vmem:[%s370] ss:$-126 sm:$0xc0] %vm363, %v362
  %s372 = scalar_lea.vmem %s0, 2
  %v373 = vld.sshfl [vmem:[%s372] sm:$0xff pattern:$0x6d4b2907]
  %374 = vrot.lane.b32.xlu0 %v373, 113
  %v375 = vpop.permute.xlu0 %374
  %vm376 = vcmask 7168
  %s377 = scalar_lea.vmem %s1, 177
  %378 = vst.msk [vmem:[%s377] ss:$-126 sm:$0x3] %vm376, %v375
  %s379 = scalar_lea.vmem %s1, 465
  %380 = vst.msk [vmem:[%s379] ss:$-126 sm:$0xc] %vm376, %v375
  %s381 = scalar_lea.vmem %s1, 753
  %382 = vst.msk [vmem:[%s381] ss:$-126 sm:$0x30] %vm376, %v375
  %s383 = scalar_lea.vmem %s1, 1041
  %384 = vst.msk [vmem:[%s383] ss:$-126 sm:$0xc0] %vm376, %v375
  %s385 = scalar_lea.vmem %s0, 1
  %v386 = vld.sshfl [vmem:[%s385] sm:$0xff pattern:$0x6d4b2907]
  %387 = vrot.lane.b32.xlu0 %v386, 112
  %v388 = vpop.permute.xlu0 %387
  %vm389 = vcmask 7168
  %s390 = scalar_lea.vmem %s1, 160
  %391 = vst.msk [vmem:[%s390] ss:$-126 sm:$0x3] %vm389, %v388
  %s392 = scalar_lea.vmem %s1, 448
  %393 = vst.msk [vmem:[%s392] ss:$-126 sm:$0xc] %vm389, %v388
  %s394 = scalar_lea.vmem %s1, 736
  %395 = vst.msk [vmem:[%s394] ss:$-126 sm:$0x30] %vm389, %v388
  %s396 = scalar_lea.vmem %s1, 1024
  %397 = vst.msk [vmem:[%s396] ss:$-126 sm:$0xc0] %vm389, %v388
  %v398 = vld.sshfl [vmem:[%s0] sm:$0xff pattern:$0xf6d4b290]
  %399 = vrot.lane.b32.xlu0 %v398, 112
  %v400 = vpop.permute.xlu0 %399
  %vm401 = vcmask 7168
  %s402 = scalar_lea.vmem %s1, 16
  %403 = vst.msk [vmem:[%s402] ss:$162 sm:$0x3] %vm401, %v400
  %s404 = scalar_lea.vmem %s1, 4294967024
  %405 = vst.msk [vmem:[%s404] ss:$162 sm:$0xc] %vm401, %v400
  %s406 = scalar_lea.vmem %s1, 4294966736
  %407 = vst.msk [vmem:[%s406] ss:$162 sm:$0x30] %vm401, %v400
  %s408 = scalar_lea.vmem %s1, 4294966448
  %409 = vst.msk [vmem:[%s408] ss:$162 sm:$0xc0] %vm401, %v400
  %s410 = scalar_lea.vmem %s0, 1
  %v411 = vld.sshfl [vmem:[%s410] sm:$0xff pattern:$0x6d4b2907]
  %412 = vrot.lane.b32.xlu0 %v411, 111
  %v413 = vpop.permute.xlu0 %412
  %vm414 = vcmask 7168
  %s415 = scalar_lea.vmem %s1, 161
  %416 = vst.msk [vmem:[%s415] ss:$-126 sm:$0x3] %vm414, %v413
  %s417 = scalar_lea.vmem %s1, 449
  %418 = vst.msk [vmem:[%s417] ss:$-126 sm:$0xc] %vm414, %v413
  %s419 = scalar_lea.vmem %s1, 737
  %420 = vst.msk [vmem:[%s419] ss:$-126 sm:$0x30] %vm414, %v413
  %s421 = scalar_lea.vmem %s1, 1025
  %422 = vst.msk [vmem:[%s421] ss:$-126 sm:$0xc0] %vm414, %v413
  %v423 = vld.sshfl [vmem:[%s0] sm:$0xff pattern:$0xf6d4b290]
  %424 = vrot.lane.b32.xlu0 %v423, 111
  %v425 = vpop.permute.xlu0 %424
  %vm426 = vcmask 7168
  %s427 = scalar_lea.vmem %s1, 17
  %428 = vst.msk [vmem:[%s427] ss:$162 sm:$0x3] %vm426, %v425
  %s429 = scalar_lea.vmem %s1, 4294967025
  %430 = vst.msk [vmem:[%s429] ss:$162 sm:$0xc] %vm426, %v425
  %s431 = scalar_lea.vmem %s1, 4294966737
  %432 = vst.msk [vmem:[%s431] ss:$162 sm:$0x30] %vm426, %v425
  %s433 = scalar_lea.vmem %s1, 4294966449
  %434 = vst.msk [vmem:[%s433] ss:$162 sm:$0xc0] %vm426, %v425

// kernel: inception_b_forward.3
$region0: #{inception_b_forward.3}
  #allocation0 [shape = 'u32[]', space=smem, size = 0x4, offset = 0x4, fixed_abs, tag = 'smem constant byte address 0x4 - core index']
  #allocation1 [shape = 'u32[72,128]{1,0:T(1,128)}', space=vmem, size = 0x9000, scoped, tag = 'internal scratch']
  %s0 = inlined_call_operand.vmem [shape: bf16[128,36], index: 0, kind: input, shape index: {}]
  %s1 = inlined_call_operand.vmem [shape: bf16[36,384], index: 1, kind: input, shape index: {}]
  %s2 = inlined_call_operand.vmem [shape: f32[1,384], index: 2, kind: input, shape index: {}]
  %s3 = inlined_call_operand.vmem [shape: bf16[128,864], index: 3, kind: input, shape index: {}]
  %s4 = inlined_call_operand.vmem [shape: bf16[864,96], index: 4, kind: input, shape index: {}]
  %s5 = inlined_call_operand.vmem [shape: f32[1,96], index: 5, kind: input, shape index: {}]
  %s6 = inlined_call_operand.vmem [shape: f32[9,128,4], index: 6, kind: input, shape index: {}]
  %s7 = inlined_call_operand.hbm [shape: f32[128,484], index: 7, kind: output, shape index: {}]
  %s8 = sld [smem:[#allocation0]]
  $region99: #{inception_b_forward.3} parent=0
    _
  %s10 = ssub.s32 1, %s8
  %s11 = scalar_select 0, %s10, %s8
  $region1: #{inception_b_forward.3} parent=0
    #allocation2 [shape = 'u8[589824]{0}', space=vmem, size = 0x90000, scoped, tag = 'input window, operand 6']
    #allocation3 [shape = 'u8[262144]{0}', space=vmem, size = 0x40000, scoped, tag = 'output window, operand 0']
    #allocation4 [shape = 's32[2]{0}', space=sflag, size = 0x8, scoped, tag = 'scoped memory for inception_b_forward.3']
    %12 = vsyncpa [#allocation4], 0
    %s13 = scalar_lea.sflag [#allocation4], 1
    %14 = vsyncpa %s13, 0
    loop: start=0, step=1, limit=4
    $region2: #{inception_b_forward.3} parent=1 // loop_pre_header
      _
    $region3: #{inception_b_forward.3} parent=1 // loop_header
      %s16 = sphi 0, %s20
      %p17 = scmp.ge.s32.totalorder %s16, 4
      %s26 = sphi 0, %s28
      %s29 = sphi 0, %s26
      %s30 = sphi 0, %s29
      %s46 = sphi 0, %s30
      %s50 = sphi 0, %s50
      %s52 = sphi 0, %s50
      %s53 = sphi 0, %s52
      %s67 = sphi 0, %s53
      %s71 = sphi 0, %s71
      %s73 = sphi 0, %s71
      %s74 = sphi 0, %s73
      %s88 = sphi 0, %s74
      %s94 = sphi 0, %s96
      %s97 = sphi 0, %s94
      %s98 = sphi 0, %s97
      %s114 = sphi 0, %s98
      %s118 = sphi 0, %s118
      %s120 = sphi 0, %s118
      %s121 = sphi 0, %s120
      %s135 = sphi 0, %s121
      %s139 = sphi 0, %s139
      %s141 = sphi 0, %s139
      %s142 = sphi 0, %s141
      %s156 = sphi 0, %s142
      %s162 = sphi 0, %s164
      %s165 = sphi 0, %s162
      %s166 = sphi 0, %s165
      %s182 = sphi 0, %s166
      %s188 = sphi 0, %s190
      %s191 = sphi 0, %s188
      %s192 = sphi 0, %s191
      %s208 = sphi 0, %s192
    $region4: #{inception_b_forward.3} parent=1 // loop_header_branch
      %19 = sbr.rel (%p17) target = $region8
    $region5: #{inception_b_forward.3} parent=1 // loop_body
      %s21 = ssub.s32 %s16, 1
      %s22 = ssub.s32 %s16, 2
      %s23 = sadd.s32 %s16, 1
      %s24 = ssub.s32 %s16, %s23
      %p25 = scmp.eq.s32.totalorder %s24, 0
      %s27 = sadd.s32 %s26, 1
      %s28 = scalar_select %p25, %s26, %s27
      %p31 = pneg %p25
      %p32 = scmp.eq.s32.totalorder %s16, 1
      %p33 = por %p31, %p32
      %p34 = scmp.ne.s32.totalorder %s26, %s29
      %p35 = scmp.eq.s32.totalorder %s16, 0
      %p36 = por %p34, %p35
      %p37 = scmp.ne.s32.totalorder %s26, %s29
      %p38 = scmp.eq.s32.totalorder %s21, 1
      %p39 = por %p37, %p38
      %p40 = scmp.ne.s32.totalorder %s29, %s30
      %p41 = scmp.eq.s32.totalorder %s21, 0
      %p42 = por %p40, %p41
      %p43 = scmp.ne.s32.totalorder %s29, %s30
      %p44 = scmp.eq.s32.totalorder %s22, 1
      %p45 = por %p43, %p44
      %p47 = scmp.ne.s32.totalorder %s30, %s46
      %p48 = scmp.eq.s32.totalorder %s22, 0
      %p49 = por %p47, %p48
      %s51 = sadd.s32 %s50, 1
      %p54 = scmp.eq.s32.totalorder %s16, 1
      %p55 = scmp.ne.s32.totalorder %s50, %s52
      %p56 = scmp.eq.s32.totalorder %s16, 0
      %p57 = por %p55, %p56
      %p58 = scmp.ne.s32.totalorder %s50, %s52
      %p59 = scmp.eq.s32.totalorder %s21, 1
      %p60 = por %p58, %p59
      %p61 = scmp.ne.s32.totalorder %s52, %s53
      %p62 = scmp.eq.s32.totalorder %s21, 0
      %p63 = por %p61, %p62
      %p64 = scmp.ne.s32.totalorder %s52, %s53
      %p65 = scmp.eq.s32.totalorder %s22, 1
      %p66 = por %p64, %p65
      %p68 = scmp.ne.s32.totalorder %s53, %s67
      %p69 = scmp.eq.s32.totalorder %s22, 0
      %p70 = por %p68, %p69
      %s72 = sadd.s32 %s71, 1
      %p75 = scmp.eq.s32.totalorder %s16, 1
      %p76 = scmp.ne.s32.totalorder %s71, %s73
      %p77 = scmp.eq.s32.totalorder %s16, 0
      %p78 = por %p76, %p77
      %p79 = scmp.ne.s32.totalorder %s71, %s73
      %p80 = scmp.eq.s32.totalorder %s21, 1
      %p81 = por %p79, %p80
      %p82 = scmp.ne.s32.totalorder %s73, %s74
      %p83 = scmp.eq.s32.totalorder %s21, 0
      %p84 = por %p82, %p83
      %p85 = scmp.ne.s32.totalorder %s73, %s74
      %p86 = scmp.eq.s32.totalorder %s22, 1
      %p87 = por %p85, %p86
      %p89 = scmp.ne.s32.totalorder %s74, %s88
      %p90 = scmp.eq.s32.totalorder %s22, 0
      %p91 = por %p89, %p90
      %s92 = ssub.s32 %s16, %s23
      %p93 = scmp.eq.s32.totalorder %s92, 0
      %s95 = sadd.s32 %s94, 1
      %s96 = scalar_select %p93, %s94, %s95
      %p99 = pneg %p93
      %p100 = scmp.eq.s32.totalorder %s16, 1
      %p101 = por %p99, %p100
      %p102 = scmp.ne.s32.totalorder %s94, %s97
      %p103 = scmp.eq.s32.totalorder %s16, 0
      %p104 = por %p102, %p103
      %p105 = scmp.ne.s32.totalorder %s94, %s97
      %p106 = scmp.eq.s32.totalorder %s21, 1
      %p107 = por %p105, %p106
      %p108 = scmp.ne.s32.totalorder %s97, %s98
      %p109 = scmp.eq.s32.totalorder %s21, 0
      %p110 = por %p108, %p109
      %p111 = scmp.ne.s32.totalorder %s97, %s98
      %p112 = scmp.eq.s32.totalorder %s22, 1
      %p113 = por %p111, %p112
      %p115 = scmp.ne.s32.totalorder %s98, %s114
      %p116 = scmp.eq.s32.totalorder %s22, 0
      %p117 = por %p115, %p116
      %s119 = sadd.s32 %s118, 1
      %p122 = scmp.eq.s32.totalorder %s16, 1
      %p123 = scmp.ne.s32.totalorder %s118, %s120
      %p124 = scmp.eq.s32.totalorder %s16, 0
      %p125 = por %p123, %p124
      %p126 = scmp.ne.s32.totalorder %s118, %s120
      %p127 = scmp.eq.s32.totalorder %s21, 1
      %p128 = por %p126, %p127
      %p129 = scmp.ne.s32.totalorder %s120, %s121
      %p130 = scmp.eq.s32.totalorder %s21, 0
      %p131 = por %p129, %p130
      %p132 = scmp.ne.s32.totalorder %s120, %s121
      %p133 = scmp.eq.s32.totalorder %s22, 1
      %p134 = por %p132, %p133
      %p136 = scmp.ne.s32.totalorder %s121, %s135
      %p137 = scmp.eq.s32.totalorder %s22, 0
      %p138 = por %p136, %p137
      %s140 = sadd.s32 %s139, 1
      %p143 = scmp.eq.s32.totalorder %s16, 1
      %p144 = scmp.ne.s32.totalorder %s139, %s141
      %p145 = scmp.eq.s32.totalorder %s16, 0
      %p146 = por %p144, %p145
      %p147 = scmp.ne.s32.totalorder %s139, %s141
      %p148 = scmp.eq.s32.totalorder %s21, 1
      %p149 = por %p147, %p148
      %p150 = scmp.ne.s32.totalorder %s141, %s142
      %p151 = scmp.eq.s32.totalorder %s21, 0
      %p152 = por %p150, %p151
      %p153 = scmp.ne.s32.totalorder %s141, %s142
      %p154 = scmp.eq.s32.totalorder %s22, 1
      %p155 = por %p153, %p154
      %p157 = scmp.ne.s32.totalorder %s142, %s156
      %p158 = scmp.eq.s32.totalorder %s22, 0
      %p159 = por %p157, %p158
      %s160 = ssub.s32 %s16, %s23
      %p161 = scmp.eq.s32.totalorder %s160, 0
      %s163 = sadd.s32 %s162, 1
      %s164 = scalar_select %p161, %s162, %s163
      %p167 = pneg %p161
      %p168 = scmp.eq.s32.totalorder %s16, 1
      %p169 = por %p167, %p168
      %p170 = scmp.ne.s32.totalorder %s162, %s165
      %p171 = scmp.eq.s32.totalorder %s16, 0
      %p172 = por %p170, %p171
      %p173 = scmp.ne.s32.totalorder %s162, %s165
      %p174 = scmp.eq.s32.totalorder %s21, 1
      %p175 = por %p173, %p174
      %p176 = scmp.ne.s32.totalorder %s165, %s166
      %p177 = scmp.eq.s32.totalorder %s21, 0
      %p178 = por %p176, %p177
      %p179 = scmp.ne.s32.totalorder %s165, %s166
      %p180 = scmp.eq.s32.totalorder %s22, 1
      %p181 = por %p179, %p180
      %p183 = scmp.ne.s32.totalorder %s166, %s182
      %p184 = scmp.eq.s32.totalorder %s22, 0
      %p185 = por %p183, %p184
      %s186 = ssub.s32 %s16, %s23
      %p187 = scmp.eq.s32.totalorder %s186, 0
      %s189 = sadd.s32 %s188, 1
      %s190 = scalar_select %p187, %s188, %s189
      %p193 = pneg %p187
      %p194 = scmp.eq.s32.totalorder %s16, 1
      %p195 = por %p193, %p194
      %p196 = scmp.ne.s32.totalorder %s188, %s191
      %p197 = scmp.eq.s32.totalorder %s16, 0
      %p198 = por %p196, %p197
      %p199 = scmp.ne.s32.totalorder %s188, %s191
      %p200 = scmp.eq.s32.totalorder %s21, 1
      %p201 = por %p199, %p200
      %p202 = scmp.ne.s32.totalorder %s191, %s192
      %p203 = scmp.eq.s32.totalorder %s21, 0
      %p204 = por %p202, %p203
      %p205 = scmp.ne.s32.totalorder %s191, %s192
      %p206 = scmp.eq.s32.totalorder %s22, 1
      %p207 = por %p205, %p206
      %p209 = scmp.ne.s32.totalorder %s192, %s208
      %p210 = scmp.eq.s32.totalorder %s22, 0
      %p211 = por %p209, %p210
      %p212 = scmp.le.s32.totalorder 1, %s16
      %p213 = scmp.lt.s32.totalorder %s16, 3
      %p214 = pnand %p212, %p213
      %p215 = pneg %p214
      // Predicated region
      $region9: #{inception_b_forward.3} parent=5 // pred_check
        _
      $region10: #{inception_b_forward.3} parent=5 // pred_check_branch
        %217 = sbr.rel (%p214) target = $region12
      $region11: #{inception_b_forward.3} parent=5 // pred_region
        %s218 = ssub.s32 %s16, 1
        // Predicated region
        $region13: #{inception_b_forward.3} parent=11 // pred_check
          %p219 = pneg %p63
        $region14: #{inception_b_forward.3} parent=11 // pred_check_branch
          %221 = sbr.rel (%p219) target = $region16
        $region15: #{inception_b_forward.3} parent=11 // pred_region
          _
        $region16: #{inception_b_forward.3} parent=11 // pred_fallthru
          _
        // Predicated region
        $region17: #{inception_b_forward.3} parent=11 // pred_check
          %p222 = pneg %p84
        $region18: #{inception_b_forward.3} parent=11 // pred_check_branch
          %224 = sbr.rel (%p222) target = $region20
        $region19: #{inception_b_forward.3} parent=11 // pred_region
          _
        $region20: #{inception_b_forward.3} parent=11 // pred_fallthru
          _
        // Predicated region
        $region21: #{inception_b_forward.3} parent=11 // pred_check
          %p225 = pneg %p131
        $region22: #{inception_b_forward.3} parent=11 // pred_check_branch
          %227 = sbr.rel (%p225) target = $region24
        $region23: #{inception_b_forward.3} parent=11 // pred_region
          _
        $region24: #{inception_b_forward.3} parent=11 // pred_fallthru
          _
        // Predicated region
        $region25: #{inception_b_forward.3} parent=11 // pred_check
          %p228 = pneg %p152
        $region26: #{inception_b_forward.3} parent=11 // pred_check_branch
          %230 = sbr.rel (%p228) target = $region28
        $region27: #{inception_b_forward.3} parent=11 // pred_region
          _
        $region28: #{inception_b_forward.3} parent=11 // pred_fallthru
          _
      $region12: #{inception_b_forward.3} parent=5 // pred_fallthru
        _
      %p231 = scmp.lt.s32.totalorder %s16, 2
      // Predicated region
      $region29: #{inception_b_forward.3} parent=5 // pred_check
        %p232 = pneg %p231
      $region30: #{inception_b_forward.3} parent=5 // pred_check_branch
        %234 = sbr.rel (%p232) target = $region32
      $region31: #{inception_b_forward.3} parent=5 // pred_region
        // Predicated region
        $region33: #{inception_b_forward.3} parent=31 // pred_check
          %p235 = pneg %p36
        $region34: #{inception_b_forward.3} parent=31 // pred_check_branch
          %237 = sbr.rel (%p235) target = $region36
        $region35: #{inception_b_forward.3} parent=31 // pred_region
          %s238 = smul.u32 8, %s16
          %p239 = scmp.lt.s32.totalorder %s238, 15
          %s240 = scalar_select %p239, %s238, 15
          %s241 = smul.addr %s240, 4
          %s242 = scalar_lea.vmem %s0, %s241
          %s243 = smul.u32 8, %s16
        $region36: #{inception_b_forward.3} parent=31 // pred_fallthru
          _
        // Predicated region
        $region37: #{inception_b_forward.3} parent=31 // pred_check
          %p244 = pneg %p104
        $region38: #{inception_b_forward.3} parent=31 // pred_check_branch
          %246 = sbr.rel (%p244) target = $region40
        $region39: #{inception_b_forward.3} parent=31 // pred_region
          %s247 = smul.u32 8, %s16
          %p248 = scmp.lt.s32.totalorder %s247, 15
          %s249 = scalar_select %p248, %s247, 15
          %s250 = smul.addr %s249, 7
          %s251 = smul.addr %s250, 4
          %s252 = scalar_lea.vmem %s3, %s251
          %s253 = smul.u32 8, %s16
        $region40: #{inception_b_forward.3} parent=31 // pred_fallthru
          _
        // Predicated region
        $region41: #{inception_b_forward.3} parent=31 // pred_check
          %p254 = pneg %p172
        $region42: #{inception_b_forward.3} parent=31 // pred_check_branch
          %256 = sbr.rel (%p254) target = $region44
        $region43: #{inception_b_forward.3} parent=31 // pred_region
          %s257 = sand.u32 %s162, 1
          %s258 = sand.u32 %s162, 1
          %s259 = smul.addr %s258, 576
          %s260 = scalar_lea.vmem [#allocation2], %s259
          %s261 = smul.u32 8, %s16
          %s262 = smul.addr %s261, 8
          %s263 = scalar_lea.vmem %s6, %s262
          // Predicated region
          $region45: #{inception_b_forward.3} parent=43 // pred_check
            _
          $region46: #{inception_b_forward.3} parent=43 // pred_check_branch
            %265 = sbr.rel (0) target = $region48
          $region47: #{inception_b_forward.3} parent=43 // pred_region
            // Predicated region
            $region49: #{inception_b_forward.3} parent=47 // pred_check
              _
            $region50: #{inception_b_forward.3} parent=47 // pred_check_branch
              %267 = sbr.rel (0) target = $region52
            $region51: #{inception_b_forward.3} parent=47 // pred_region
              // Predicated region
              $region64: #{inception_b_forward.3} parent=51 // pred_check
                _
              $region65: #{inception_b_forward.3} parent=51 // pred_check_branch
                %425 = sbr.rel (0) target = $region67
              $region66: #{inception_b_forward.3} parent=51 // pred_region
                loop: start=0, step=1, limit=1
                $region68: #{inception_b_forward.3} parent=66 // loop_pre_header
                  _
                $region69: #{inception_b_forward.3} parent=66 // loop_header
                  %s427 = sphi 0, %s431
                  %p428 = scmp.ge.s32.totalorder %s427, 1
                  %s432 = sphi %s263, %s263
                  %s433 = sphi %s260, %s260
                $region70: #{inception_b_forward.3} parent=66 // loop_header_branch
                  %430 = sbr.rel (%p428) target = $region74
                $region71: #{inception_b_forward.3} parent=66 // loop_body
                  %v434 = vld [vmem:[%s432] sm:$0xff]
                  %435 = vst [vmem:[%s433] sm:$0xff] %v434
                  %v436 = vld [vmem:[%s432 + $0x8] sm:$0xff]
                  %437 = vst [vmem:[%s433 + $0x8] sm:$0xff] %v436
                  %v438 = vld [vmem:[%s432 + $0x10] sm:$0xff]
                  %439 = vst [vmem:[%s433 + $0x10] sm:$0xff] %v438
                  %v440 = vld [vmem:[%s432 + $0x18] sm:$0xff]
                  %441 = vst [vmem:[%s433 + $0x18] sm:$0xff] %v440
                  %v442 = vld [vmem:[%s432 + $0x20] sm:$0xff]
                  %443 = vst [vmem:[%s433 + $0x20] sm:$0xff] %v442
                  %v444 = vld [vmem:[%s432 + $0x28] sm:$0xff]
                  %445 = vst [vmem:[%s433 + $0x28] sm:$0xff] %v444
                  %v446 = vld [vmem:[%s432 + $0x30] sm:$0xff]
                  %447 = vst [vmem:[%s433 + $0x30] sm:$0xff] %v446
                  %v448 = vld [vmem:[%s432 + $0x38] sm:$0xff]
                  %449 = vst [vmem:[%s433 + $0x38] sm:$0xff] %v448
                  %v450 = vld [vmem:[%s432 + $0x80] sm:$0xff]
                  %451 = vst [vmem:[%s433 + $0x40] sm:$0xff] %v450
                  %v452 = vld [vmem:[%s432 + $0x88] sm:$0xff]
                  %453 = vst [vmem:[%s433 + $0x48] sm:$0xff] %v452
                  %v454 = vld [vmem:[%s432 + $0x90] sm:$0xff]
                  %455 = vst [vmem:[%s433 + $0x50] sm:$0xff] %v454
                  %v456 = vld [vmem:[%s432 + $0x98] sm:$0xff]
                  %457 = vst [vmem:[%s433 + $0x58] sm:$0xff] %v456
                  %v458 = vld [vmem:[%s432 + $0xa0] sm:$0xff]
                  %459 = vst [vmem:[%s433 + $0x60] sm:$0xff] %v458
                  %v460 = vld [vmem:[%s432 + $0xa8] sm:$0xff]
                  %461 = vst [vmem:[%s433 + $0x68] sm:$0xff] %v460
                  %v462 = vld [vmem:[%s432 + $0xb0] sm:$0xff]
                  %463 = vst [vmem:[%s433 + $0x70] sm:$0xff] %v462
                  %v464 = vld [vmem:[%s432 + $0xb8] sm:$0xff]
                  %465 = vst [vmem:[%s433 + $0x78] sm:$0xff] %v464
                  %v466 = vld [vmem:[%s432 + $0x100] sm:$0xff]
                  %467 = vst [vmem:[%s433 + $0x80] sm:$0xff] %v466
                  %v468 = vld [vmem:[%s432 + $0x108] sm:$0xff]
                  %469 = vst [vmem:[%s433 + $0x88] sm:$0xff] %v468
                  %v470 = vld [vmem:[%s432 + $0x110] sm:$0xff]
                  %471 = vst [vmem:[%s433 + $0x90] sm:$0xff] %v470
                  %v472 = vld [vmem:[%s432 + $0x118] sm:$0xff]
                  %473 = vst [vmem:[%s433 + $0x98] sm:$0xff] %v472
                  %v474 = vld [vmem:[%s432 + $0x120] sm:$0xff]
                  %475 = vst [vmem:[%s433 + $0xa0] sm:$0xff] %v474
                  %v476 = vld [vmem:[%s432 + $0x128] sm:$0xff]
                  %477 = vst [vmem:[%s433 + $0xa8] sm:$0xff] %v476
                  %v478 = vld [vmem:[%s432 + $0x130] sm:$0xff]
                  %479 = vst [vmem:[%s433 + $0xb0] sm:$0xff] %v478
                  %v480 = vld [vmem:[%s432 + $0x138] sm:$0xff]
                  %481 = vst [vmem:[%s433 + $0xb8] sm:$0xff] %v480
                  %v482 = vld [vmem:[%s432 + $0x180] sm:$0xff]
                  %483 = vst [vmem:[%s433 + $0xc0] sm:$0xff] %v482
                  %v484 = vld [vmem:[%s432 + $0x188] sm:$0xff]
                  %485 = vst [vmem:[%s433 + $0xc8] sm:$0xff] %v484
                  %v486 = vld [vmem:[%s432 + $0x190] sm:$0xff]
                  %487 = vst [vmem:[%s433 + $0xd0] sm:$0xff] %v486
                  %v488 = vld [vmem:[%s432 + $0x198] sm:$0xff]
                  %489 = vst [vmem:[%s433 + $0xd8] sm:$0xff] %v488
                  %v490 = vld [vmem:[%s432 + $0x1a0] sm:$0xff]
                  %491 = vst [vmem:[%s433 + $0xe0] sm:$0xff] %v490
                  %v492 = vld [vmem:[%s432 + $0x1a8] sm:$0xff]
                  %493 = vst [vmem:[%s433 + $0xe8] sm:$0xff] %v492
                  %v494 = vld [vmem:[%s432 + $0x1b0] sm:$0xff]
                  %495 = vst [vmem:[%s433 + $0xf0] sm:$0xff] %v494
                  %v496 = vld [vmem:[%s432 + $0x1b8] sm:$0xff]
                  %497 = vst [vmem:[%s433 + $0xf8] sm:$0xff] %v496
                  %v498 = vld [vmem:[%s432 + $0x200] sm:$0xff]
                  %499 = vst [vmem:[%s433 + $0x100] sm:$0xff] %v498
                  %v500 = vld [vmem:[%s432 + $0x208] sm:$0xff]
                  %501 = vst [vmem:[%s433 + $0x108] sm:$0xff] %v500
                  %v502 = vld [vmem:[%s432 + $0x210] sm:$0xff]
                  %503 = vst [vmem:[%s433 + $0x110] sm:$0xff] %v502
                  %v504 = vld [vmem:[%s432 + $0x218] sm:$0xff]
                  %505 = vst [vmem:[%s433 + $0x118] sm:$0xff] %v504
                  %v506 = vld [vmem:[%s432 + $0x220] sm:$0xff]
                  %507 = vst [vmem:[%s433 + $0x120] sm:$0xff] %v506
                  %v508 = vld [vmem:[%s432 + $0x228] sm:$0xff]
                  %509 = vst [vmem:[%s433 + $0x128] sm:$0xff] %v508
                  %v510 = vld [vmem:[%s432 + $0x230] sm:$0xff]
                  %511 = vst [vmem:[%s433 + $0x130] sm:$0xff] %v510
                  %v512 = vld [vmem:[%s432 + $0x238] sm:$0xff]
                  %513 = vst [vmem:[%s433 + $0x138] sm:$0xff] %v512
                  %v514 = vld [vmem:[%s432 + $0x280] sm:$0xff]
                  %515 = vst [vmem:[%s433 + $0x140] sm:$0xff] %v514
                  %v516 = vld [vmem:[%s432 + $0x288] sm:$0xff]
                  %517 = vst [vmem:[%s433 + $0x148] sm:$0xff] %v516
                  %v518 = vld [vmem:[%s432 + $0x290] sm:$0xff]
                  %519 = vst [vmem:[%s433 + $0x150] sm:$0xff] %v518
                  %v520 = vld [vmem:[%s432 + $0x298] sm:$0xff]
                  %521 = vst [vmem:[%s433 + $0x158] sm:$0xff] %v520
                  %v522 = vld [vmem:[%s432 + $0x2a0] sm:$0xff]
                  %523 = vst [vmem:[%s433 + $0x160] sm:$0xff] %v522
                  %v524 = vld [vmem:[%s432 + $0x2a8] sm:$0xff]
                  %525 = vst [vmem:[%s433 + $0x168] sm:$0xff] %v524
                  %v526 = vld [vmem:[%s432 + $0x2b0] sm:$0xff]
                  %527 = vst [vmem:[%s433 + $0x170] sm:$0xff] %v526
                  %v528 = vld [vmem:[%s432 + $0x2b8] sm:$0xff]
                  %529 = vst [vmem:[%s433 + $0x178] sm:$0xff] %v528
                  %v530 = vld [vmem:[%s432 + $0x300] sm:$0xff]
                  %531 = vst [vmem:[%s433 + $0x180] sm:$0xff] %v530
                  %v532 = vld [vmem:[%s432 + $0x308] sm:$0xff]
                  %533 = vst [vmem:[%s433 + $0x188] sm:$0xff] %v532
                  %v534 = vld [vmem:[%s432 + $0x310] sm:$0xff]
                  %535 = vst [vmem:[%s433 + $0x190] sm:$0xff] %v534
                  %v536 = vld [vmem:[%s432 + $0x318] sm:$0xff]
                  %537 = vst [vmem:[%s433 + $0x198] sm:$0xff] %v536
                  %v538 = vld [vmem:[%s432 + $0x320] sm:$0xff]
                  %539 = vst [vmem:[%s433 + $0x1a0] sm:$0xff] %v538
                  %v540 = vld [vmem:[%s432 + $0x328] sm:$0xff]
                  %541 = vst [vmem:[%s433 + $0x1a8] sm:$0xff] %v540
                  %v542 = vld [vmem:[%s432 + $0x330] sm:$0xff]
                  %543 = vst [vmem:[%s433 + $0x1b0] sm:$0xff] %v542
                  %v544 = vld [vmem:[%s432 + $0x338] sm:$0xff]
                  %545 = vst [vmem:[%s433 + $0x1b8] sm:$0xff] %v544
                  %v546 = vld [vmem:[%s432 + $0x380] sm:$0xff]
                  %547 = vst [vmem:[%s433 + $0x1c0] sm:$0xff] %v546
                  %v548 = vld [vmem:[%s432 + $0x388] sm:$0xff]
                  %549 = vst [vmem:[%s433 + $0x1c8] sm:$0xff] %v548
                  %v550 = vld [vmem:[%s432 + $0x390] sm:$0xff]
                  %551 = vst [vmem:[%s433 + $0x1d0] sm:$0xff] %v550
                  %v552 = vld [vmem:[%s432 + $0x398] sm:$0xff]
                  %553 = vst [vmem:[%s433 + $0x1d8] sm:$0xff] %v552
                  %v554 = vld [vmem:[%s432 + $0x3a0] sm:$0xff]
                  %555 = vst [vmem:[%s433 + $0x1e0] sm:$0xff] %v554
                  %v556 = vld [vmem:[%s432 + $0x3a8] sm:$0xff]
                  %557 = vst [vmem:[%s433 + $0x1e8] sm:$0xff] %v556
                  %v558 = vld [vmem:[%s432 + $0x3b0] sm:$0xff]
                  %559 = vst [vmem:[%s433 + $0x1f0] sm:$0xff] %v558
                  %v560 = vld [vmem:[%s432 + $0x3b8] sm:$0xff]
                  %561 = vst [vmem:[%s433 + $0x1f8] sm:$0xff] %v560
                  %v562 = vld [vmem:[%s432 + $0x400] sm:$0xff]
                  %563 = vst [vmem:[%s433 + $0x200] sm:$0xff] %v562
                  %v564 = vld [vmem:[%s432 + $0x408] sm:$0xff]
                  %565 = vst [vmem:[%s433 + $0x208] sm:$0xff] %v564
                  %v566 = vld [vmem:[%s432 + $0x410] sm:$0xff]
                  %567 = vst [vmem:[%s433 + $0x210] sm:$0xff] %v566
                  %v568 = vld [vmem:[%s432 + $0x418] sm:$0xff]
                  %569 = vst [vmem:[%s433 + $0x218] sm:$0xff] %v568
                  %v570 = vld [vmem:[%s432 + $0x420] sm:$0xff]
                  %571 = vst [vmem:[%s433 + $0x220] sm:$0xff] %v570
                  %v572 = vld [vmem:[%s432 + $0x428] sm:$0xff]
                  %573 = vst [vmem:[%s433 + $0x228] sm:$0xff] %v572
                  %v574 = vld [vmem:[%s432 + $0x430] sm:$0xff]
                  %575 = vst [vmem:[%s433 + $0x230] sm:$0xff] %v574
                  %v576 = vld [vmem:[%s432 + $0x438] sm:$0xff]
                  %577 = vst [vmem:[%s433 + $0x238] sm:$0xff] %v576
                $region72: #{inception_b_forward.3} parent=66 // loop_footer
                  %s431 = sadd.s32 1, %s427
                $region73: #{inception_b_forward.3} parent=66 // loop_footer_branch
                  %426 = sbr.rel target = $region69
                $region74: #{inception_b_forward.3} parent=66 // loop_exit
                  _
              $region67: #{inception_b_forward.3} parent=51 // pred_fallthru
                _
              // Predicated region
              $region75: #{inception_b_forward.3} parent=51 // pred_check
                _
              $region76: #{inception_b_forward.3} parent=51 // pred_check_branch
                %579 = sbr.rel target = $region78
              $region77: #{inception_b_forward.3} parent=51 // pred_region
                _
              $region78: #{inception_b_forward.3} parent=51 // pred_fallthru
                _
            $region52: #{inception_b_forward.3} parent=47 // pred_fallthru
              _
            // Predicated region
            $region53: #{inception_b_forward.3} parent=47 // pred_check
              _
            $region54: #{inception_b_forward.3} parent=47 // pred_check_branch
              %269 = sbr.rel target = $region56
            $region55: #{inception_b_forward.3} parent=47 // pred_region
              %s271 = ssub.s32 256, 1
              loop: start=0, step=1, limit=1
              $region57: #{inception_b_forward.3} parent=55 // loop_pre_header
                _
              $region58: #{inception_b_forward.3} parent=55 // loop_header
                %s273 = sphi 0, %s277
                %p274 = scmp.ge.s32.totalorder %s273, 1
                %s278 = sphi %s263, %s263
                %s279 = sphi %s260, %s260
              $region59: #{inception_b_forward.3} parent=55 // loop_header_branch
                %276 = sbr.rel (%p274) target = $region63
              $region60: #{inception_b_forward.3} parent=55 // loop_body
                %v280 = vld [vmem:[%s278] sm:%s271]
                %281 = vst [vmem:[%s279] sm:%s271] %v280
                %v282 = vld [vmem:[%s278 + $0x8] sm:%s271]
                %283 = vst [vmem:[%s279 + $0x8] sm:%s271] %v282
                %v284 = vld [vmem:[%s278 + $0x10] sm:%s271]
                %285 = vst [vmem:[%s279 + $0x10] sm:%s271] %v284
                %v286 = vld [vmem:[%s278 + $0x18] sm:%s271]
                %287 = vst [vmem:[%s279 + $0x18] sm:%s271] %v286
                %v288 = vld [vmem:[%s278 + $0x20] sm:%s271]
                %289 = vst [vmem:[%s279 + $0x20] sm:%s271] %v288
                %v290 = vld [vmem:[%s278 + $0x28] sm:%s271]
                %291 = vst [vmem:[%s279 + $0x28] sm:%s271] %v290
                %v292 = vld [vmem:[%s278 + $0x30] sm:%s271]
                %293 = vst [vmem:[%s279 + $0x30] sm:%s271] %v292
                %v294 = vld [vmem:[%s278 + $0x38] sm:%s271]
                %295 = vst [vmem:[%s279 + $0x38] sm:%s271] %v294
                %v296 = vld [vmem:[%s278 + $0x80] sm:%s271]
                %297 = vst [vmem:[%s279 + $0x40] sm:%s271] %v296
                %v298 = vld [vmem:[%s278 + $0x88] sm:%s271]
                %299 = vst [vmem:[%s279 + $0x48] sm:%s271] %v298
                %v300 = vld [vmem:[%s278 + $0x90] sm:%s271]
                %301 = vst [vmem:[%s279 + $0x50] sm:%s271] %v300
                %v302 = vld [vmem:[%s278 + $0x98] sm:%s271]
                %303 = vst [vmem:[%s279 + $0x58] sm:%s271] %v302
                %v304 = vld [vmem:[%s278 + $0xa0] sm:%s271]
                %305 = vst [vmem:[%s279 + $0x60] sm:%s271] %v304
                %v306 = vld [vmem:[%s278 + $0xa8] sm:%s271]
                %307 = vst [vmem:[%s279 + $0x68] sm:%s271] %v306
                %v308 = vld [vmem:[%s278 + $0xb0] sm:%s271]
                %309 = vst [vmem:[%s279 + $0x70] sm:%s271] %v308
                %v310 = vld [vmem:[%s278 + $0xb8] sm:%s271]
                %311 = vst [vmem:[%s279 + $0x78] sm:%s271] %v310
                %v312 = vld [vmem:[%s278 + $0x100] sm:%s271]
                %313 = vst [vmem:[%s279 + $0x80] sm:%s271] %v312
                %v314 = vld [vmem:[%s278 + $0x108] sm:%s271]
                %315 = vst [vmem:[%s279 + $0x88] sm:%s271] %v314
                %v316 = vld [vmem:[%s278 + $0x110] sm:%s271]
                %317 = vst [vmem:[%s279 + $0x90] sm:%s271] %v316
                %v318 = vld [vmem:[%s278 + $0x118] sm:%s271]
                %319 = vst [vmem:[%s279 + $0x98] sm:%s271] %v318
                %v320 = vld [vmem:[%s278 + $0x120] sm:%s271]
                %321 = vst [vmem:[%s279 + $0xa0] sm:%s271] %v320
                %v322 = vld [vmem:[%s278 + $0x128] sm:%s271]
                %323 = vst [vmem:[%s279 + $0xa8] sm:%s271] %v322
                %v324 = vld [vmem:[%s278 + $0x130] sm:%s271]
                %325 = vst [vmem:[%s279 + $0xb0] sm:%s271] %v324
                %v326 = vld [vmem:[%s278 + $0x138] sm:%s271]
                %327 = vst [vmem:[%s279 + $0xb8] sm:%s271] %v326
                %v328 = vld [vmem:[%s278 + $0x180] sm:%s271]
                %329 = vst [vmem:[%s279 + $0xc0] sm:%s271] %v328
                %v330 = vld [vmem:[%s278 + $0x188] sm:%s271]
                %331 = vst [vmem:[%s279 + $0xc8] sm:%s271] %v330
                %v332 = vld [vmem:[%s278 + $0x190] sm:%s271]
                %333 = vst [vmem:[%s279 + $0xd0] sm:%s271] %v332
                %v334 = vld [vmem:[%s278 + $0x198] sm:%s271]
                %335 = vst [vmem:[%s279 + $0xd8] sm:%s271] %v334
                %v336 = vld [vmem:[%s278 + $0x1a0] sm:%s271]
                %337 = vst [vmem:[%s279 + $0xe0] sm:%s271] %v336
                %v338 = vld [vmem:[%s278 + $0x1a8] sm:%s271]
                %339 = vst [vmem:[%s279 + $0xe8] sm:%s271] %v338
                %v340 = vld [vmem:[%s278 + $0x1b0] sm:%s271]
                %341 = vst [vmem:[%s279 + $0xf0] sm:%s271] %v340
                %v342 = vld [vmem:[%s278 + $0x1b8] sm:%s271]
                %343 = vst [vmem:[%s279 + $0xf8] sm:%s271] %v342
                %v344 = vld [vmem:[%s278 + $0x200] sm:%s271]
                %345 = vst [vmem:[%s279 + $0x100] sm:%s271] %v344
                %v346 = vld [vmem:[%s278 + $0x208] sm:%s271]
                %347 = vst [vmem:[%s279 + $0x108] sm:%s271] %v346
                %v348 = vld [vmem:[%s278 + $0x210] sm:%s271]
                %349 = vst [vmem:[%s279 + $0x110] sm:%s271] %v348
                %v350 = vld [vmem:[%s278 + $0x218] sm:%s271]
                %351 = vst [vmem:[%s279 + $0x118] sm:%s271] %v350
                %v352 = vld [vmem:[%s278 + $0x220] sm:%s271]
                %353 = vst [vmem:[%s279 + $0x120] sm:%s271] %v352
                %v354 = vld [vmem:[%s278 + $0x228] sm:%s271]
                %355 = vst [vmem:[%s279 + $0x128] sm:%s271] %v354
                %v356 = vld [vmem:[%s278 + $0x230] sm:%s271]
                %357 = vst [vmem:[%s279 + $0x130] sm:%s271] %v356
                %v358 = vld [vmem:[%s278 + $0x238] sm:%s271]
                %359 = vst [vmem:[%s279 + $0x138] sm:%s271] %v358
                %v360 = vld [vmem:[%s278 + $0x280] sm:%s271]
                %361 = vst [vmem:[%s279 + $0x140] sm:%s271] %v360
                %v362 = vld [vmem:[%s278 + $0x288] sm:%s271]
                %363 = vst [vmem:[%s279 + $0x148] sm:%s271] %v362
                %v364 = vld [vmem:[%s278 + $0x290] sm:%s271]
                %365 = vst [vmem:[%s279 + $0x150] sm:%s271] %v364
                %v366 = vld [vmem:[%s278 + $0x298] sm:%s271]
                %367 = vst [vmem:[%s279 + $0x158] sm:%s271] %v366
                %v368 = vld [vmem:[%s278 + $0x2a0] sm:%s271]
                %369 = vst [vmem:[%s279 + $0x160] sm:%s271] %v368
                %v370 = vld [vmem:[%s278 + $0x2a8] sm:%s271]
                %371 = vst [vmem:[%s279 + $0x168] sm:%s271] %v370
                %v372 = vld [vmem:[%s278 + $0x2b0] sm:%s271]
                %373 = vst [vmem:[%s279 + $0x170] sm:%s271] %v372
                %v374 = vld [vmem:[%s278 + $0x2b8] sm:%s271]
                %375 = vst [vmem:[%s279 + $0x178] sm:%s271] %v374
                %v376 = vld [vmem:[%s278 + $0x300] sm:%s271]
                %377 = vst [vmem:[%s279 + $0x180] sm:%s271] %v376
                %v378 = vld [vmem:[%s278 + $0x308] sm:%s271]
                %379 = vst [vmem:[%s279 + $0x188] sm:%s271] %v378
                %v380 = vld [vmem:[%s278 + $0x310] sm:%s271]
                %381 = vst [vmem:[%s279 + $0x190] sm:%s271] %v380
                %v382 = vld [vmem:[%s278 + $0x318] sm:%s271]
                %383 = vst [vmem:[%s279 + $0x198] sm:%s271] %v382
                %v384 = vld [vmem:[%s278 + $0x320] sm:%s271]
                %385 = vst [vmem:[%s279 + $0x1a0] sm:%s271] %v384
                %v386 = vld [vmem:[%s278 + $0x328] sm:%s271]
                %387 = vst [vmem:[%s279 + $0x1a8] sm:%s271] %v386
                %v388 = vld [vmem:[%s278 + $0x330] sm:%s271]
                %389 = vst [vmem:[%s279 + $0x1b0] sm:%s271] %v388
                %v390 = vld [vmem:[%s278 + $0x338] sm:%s271]
                %391 = vst [vmem:[%s279 + $0x1b8] sm:%s271] %v390
                %v392 = vld [vmem:[%s278 + $0x380] sm:%s271]
                %393 = vst [vmem:[%s279 + $0x1c0] sm:%s271] %v392
                %v394 = vld [vmem:[%s278 + $0x388] sm:%s271]
                %395 = vst [vmem:[%s279 + $0x1c8] sm:%s271] %v394
                %v396 = vld [vmem:[%s278 + $0x390] sm:%s271]
                %397 = vst [vmem:[%s279 + $0x1d0] sm:%s271] %v396
                %v398 = vld [vmem:[%s278 + $0x398] sm:%s271]
                %399 = vst [vmem:[%s279 + $0x1d8] sm:%s271] %v398
                %v400 = vld [vmem:[%s278 + $0x3a0] sm:%s271]
                %401 = vst [vmem:[%s279 + $0x1e0] sm:%s271] %v400
                %v402 = vld [vmem:[%s278 + $0x3a8] sm:%s271]
                %403 = vst [vmem:[%s279 + $0x1e8] sm:%s271] %v402
                %v404 = vld [vmem:[%s278 + $0x3b0] sm:%s271]
                %405 = vst [vmem:[%s279 + $0x1f0] sm:%s271] %v404
                %v406 = vld [vmem:[%s278 + $0x3b8] sm:%s271]
                %407 = vst [vmem:[%s279 + $0x1f8] sm:%s271] %v406
                %v408 = vld [vmem:[%s278 + $0x400] sm:%s271]
                %409 = vst [vmem:[%s279 + $0x200] sm:%s271] %v408
                %v410 = vld [vmem:[%s278 + $0x408] sm:%s271]
                %411 = vst [vmem:[%s279 + $0x208] sm:%s271] %v410
                %v412 = vld [vmem:[%s278 + $0x410] sm:%s271]
                %413 = vst [vmem:[%s279 + $0x210] sm:%s271] %v412
                %v414 = vld [vmem:[%s278 + $0x418] sm:%s271]
                %415 = vst [vmem:[%s279 + $0x218] sm:%s271] %v414
                %v416 = vld [vmem:[%s278 + $0x420] sm:%s271]
                %417 = vst [vmem:[%s279 + $0x220] sm:%s271] %v416
                %v418 = vld [vmem:[%s278 + $0x428] sm:%s271]
                %419 = vst [vmem:[%s279 + $0x228] sm:%s271] %v418
                %v420 = vld [vmem:[%s278 + $0x430] sm:%s271]
                %421 = vst [vmem:[%s279 + $0x230] sm:%s271] %v420
                %v422 = vld [vmem:[%s278 + $0x438] sm:%s271]
                %423 = vst [vmem:[%s279 + $0x238] sm:%s271] %v422
              $region61: #{inception_b_forward.3} parent=55 // loop_footer
                %s277 = sadd.s32 1, %s273
              $region62: #{inception_b_forward.3} parent=55 // loop_footer_branch
                %272 = sbr.rel target = $region58
              $region63: #{inception_b_forward.3} parent=55 // loop_exit
                _
            $region56: #{inception_b_forward.3} parent=47 // pred_fallthru
              _
          $region48: #{inception_b_forward.3} parent=43 // pred_fallthru
            _
          %580 = vnop
        $region44: #{inception_b_forward.3} parent=31 // pred_fallthru
          _
      $region32: #{inception_b_forward.3} parent=5 // pred_fallthru
        _
      %p581 = scmp.le.s32.totalorder 1, %s16
      %p582 = scmp.lt.s32.totalorder %s16, 3
      %p583 = pnand %p581, %p582
      %p584 = pneg %p583
      // Predicated region
      $region79: #{inception_b_forward.3} parent=5 // pred_check
        _
      $region80: #{inception_b_forward.3} parent=5 // pred_check_branch
        %586 = sbr.rel (%p583) target = $region82
      $region81: #{inception_b_forward.3} parent=5 // pred_region
        %s587 = ssub.s32 %s16, 1
        %s588 = sand.u32 %s165, 1
        %s589 = sand.u32 %s165, 1
        %s590 = smul.addr %s589, 576
        %s591 = scalar_lea.vmem [#allocation2], %s590
        // Predicated region
        $region83: #{inception_b_forward.3} parent=81 // pred_check
          %p592 = pneg %p178
        $region84: #{inception_b_forward.3} parent=81 // pred_check_branch
          %594 = sbr.rel (%p592) target = $region86
        $region85: #{inception_b_forward.3} parent=81 // pred_region
          _
        $region86: #{inception_b_forward.3} parent=81 // pred_fallthru
          _
        %s595 = smul.u32 8, %s21
        %p596 = scmp.lt.s32.totalorder %s595, 15
        %s597 = scalar_select %p596, %s595, 15
        %s598 = smul.addr %s597, 4
        %s599 = scalar_lea.vmem %s0, %s598
        %p600 = pneg %p42
        %p601 = pneg %p39
        %p602 = pneg %p63
        %p603 = pneg %p60
        %p604 = pneg %p84
        %p605 = pneg %p81
        %s606 = smul.u32 8, %s21
        %p607 = scmp.lt.s32.totalorder %s606, 15
        %s608 = scalar_select %p607, %s606, 15
        %s609 = smul.addr %s608, 7
        %s610 = smul.addr %s609, 4
        %s611 = scalar_lea.vmem %s3, %s610
        %p612 = pneg %p110
        %p613 = pneg %p107
        %p614 = pneg %p131
        %p615 = pneg %p128
        %p616 = pneg %p152
        %p617 = pneg %p149
        %s618 = sand.u32 %s165, 1
        %s619 = sand.u32 %s165, 1
        %s620 = smul.addr %s619, 576
        %s621 = scalar_lea.vmem [#allocation2], %s620
        %p622 = pneg %p178
        %p623 = pneg %p175
        %p624 = pneg %p204
        %p625 = pneg %p201
        %s626 = sand.u32 %s191, 1
        %s627 = scalar_lea.sflag [#allocation4], %s626
        %s628 = sand.u32 %s191, 1
        %s629 = smul.addr %s628, 256
        %s630 = scalar_lea.vmem [#allocation3], %s629
        %s631 = smul.u32 8, %s21
        %p632 = scmp.lt.s32.totalorder %s631, 15
        %s633 = scalar_select %p632, %s631, 15
        %s634 = smul.addr %s633, 4
        %s635 = scalar_lea.vmem %s0, %s634
        %s636 = smul.u32 8, %s21
        %s637 = smul.u32 8, %s21
        %p638 = scmp.lt.s32.totalorder %s637, 15
        %s639 = scalar_select %p638, %s637, 15
        %s640 = smul.addr %s639, 7
        %s641 = smul.addr %s640, 4
        %s642 = scalar_lea.vmem %s3, %s641
        %s643 = smul.u32 8, %s21
        %s644 = smul.u32 8, %s21
        %s645 = smul.u32 8, %s21
        %v647 = vld [vmem:[%s635] sm:$0xf]
        %v648 = vld [vmem:[%s635 + $0x4] sm:$0xf]
        %v649 = vld [vmem:[%s635 + $0x8] sm:$0xf]
        %v650 = vld [vmem:[%s635 + $0xc] sm:$0xf]
        %v651 = vld [vmem:[%s635 + $0x10] sm:$0xf]
        %v652 = vld [vmem:[%s635 + $0x14] sm:$0xf]
        %v653 = vld [vmem:[%s635 + $0x18] sm:$0xf]
        %v654 = vld [vmem:[%s635 + $0x1c] sm:$0xf]
        %v655 = vld [vmem:[%s1] sm:$0xff]
        %v656 = vld [vmem:[%s1 + $0x8] sm:$0xf]
        %v657 = vld [vmem:[%s1 + $0xc] sm:$0xff]
        %v658 = vld [vmem:[%s1 + $0x14] sm:$0xf]
        %v659 = vld [vmem:[%s1 + $0x18] sm:$0xff]
        %v660 = vld [vmem:[%s1 + $0x20] sm:$0xf]
        %v661 = vld [vmem:[%s1 + $0x24] sm:$0xff]
        %v662 = vld [vmem:[%s1 + $0x2c] sm:$0xf]
        %v663 = vld [vmem:[%s1 + $0x30] sm:$0x33]
        %v664 = vld [vmem:[%s1 + $0x38] sm:$0x3]
        %v665 = vld [vmem:[%s2] sm:$0x7]
        %v667 = vperm.slane %v665, 0
        %v668 = vperm.slane %v665, 1
        %v669 = vperm.slane %v665, 2
        %v681 = vunpack.c.l.b16 %v647
        %v682 = vunpack.c.l.b16 %v648
        %v683 = vunpack.c.l.b16 %v649
        %v684 = vunpack.c.l.b16 %v650
        %v685 = vunpack.c.l.b16 %v651
        %v686 = vunpack.c.l.b16 %v652
        %v687 = vunpack.c.l.b16 %v653
        %v688 = vunpack.c.l.b16 %v654
        %v689 = vpack.c.b16 %v682, %v681
        %v690 = vpack.c.b16 %v684, %v683
        %v691 = vpack.c.b16 %v686, %v685
        %v692 = vpack.c.b16 %v688, %v687
        %v703 = vunpack.c.l.b16 %v655
        %v704 = vunpack.c.h.b16 %v655
        %v705 = vunpack.c.l.b16 %v656
        %v706 = vunpack.c.l.b16 %v657
        %v707 = vunpack.c.h.b16 %v657
        %v708 = vunpack.c.l.b16 %v658
        %v709 = vunpack.c.l.b16 %v659
        %v710 = vunpack.c.h.b16 %v659
        %v711 = vunpack.c.l.b16 %v660
        %v712 = vunpack.c.l.b16 %v661
        %v713 = vunpack.c.h.b16 %v661
        %v714 = vunpack.c.l.b16 %v662
        %v715 = vunpack.c.l.b16 %v663
        %v716 = vunpack.c.h.b16 %v663
        %v717 = vunpack.c.l.b16 %v664
        %v718 = vpack.c.b16 %v706, %v703
        %v719 = vpack.c.b16 %v707, %v704
        %v720 = vpack.c.b16 %v708, %v705
        %v721 = vpack.c.b16 %v712, %v709
        %v722 = vpack.c.b16 %v713, %v710
        %v723 = vpack.c.b16 %v714, %v711
        %v724 = vpack.c.b16 %v715, %v715
        %v725 = vpack.c.b16 %v716, %v716
        %v726 = vpack.c.b16 %v717, %v717
        %vm733 = vcmask 293888
        %v735 = vsel %vm733, %v689, 0
        %v738 = vsel %vm733, %v690, 0
        %v741 = vsel %vm733, %v691, 0
        %v744 = vsel %vm733, %v692, 0
        %vm746 = vcmask 1041408
        %v748 = vsel %vm746, %v724, 0
        %v751 = vsel %vm746, %v725, 0
        %v754 = vsel %vm746, %v726, 0
        %756 = vmatpush.bf16.msra.mxu0 0
        %757 = vmatpush.bf16.msra.mxu0 0
        %758 = vmatpush.bf16.msra.mxu0 0
        %759 = vmatpush.bf16.msra.mxu0 0
        %760 = vmatpush.bf16.msra.mxu0 0
        %761 = vmatpush.bf16.msra.mxu0 %v748
        %762 = vmatpush.bf16.msra.mxu0 %v721
        %763 = vmatpush.bf16.msra.mxu0 %v718
        %764 = vmatmul.bf16.gmra.mxu0 %v735
        %v765 = vpop.f32.mrf.mxu0
        %v766 = vadd.f32 %v667, %v765
        %v767 = vpop.f32.mrf.mxu0
        %v768 = vadd.f32 %v667, %v767
        %769 = vmatmul.bf16.gmra.mxu0 %v738
        %v770 = vpop.f32.mrf.mxu0
        %v771 = vadd.f32 %v667, %v770
        %v772 = vpop.f32.mrf.mxu0
        %v773 = vadd.f32 %v667, %v772
        %774 = vmatmul.bf16.gmra.mxu0 %v741
        %v775 = vpop.f32.mrf.mxu0
        %v776 = vadd.f32 %v667, %v775
        %v777 = vpop.f32.mrf.mxu0
        %v778 = vadd.f32 %v667, %v777
        %779 = vmatmul.bf16.gmra.mxu0 %v744
        %v780 = vpop.f32.mrf.mxu0
        %v781 = vadd.f32 %v667, %v780
        %v782 = vpop.f32.mrf.mxu0
        %v783 = vadd.f32 %v667, %v782
        %784 = vdwg.mxu0
        %785 = vmatpush.bf16.msra.mxu0 0
        %786 = vmatpush.bf16.msra.mxu0 0
        %787 = vmatpush.bf16.msra.mxu0 0
        %788 = vmatpush.bf16.msra.mxu0 0
        %789 = vmatpush.bf16.msra.mxu0 0
        %790 = vmatpush.bf16.msra.mxu0 %v751
        %791 = vmatpush.bf16.msra.mxu0 %v722
        %792 = vmatpush.bf16.msra.mxu0 %v719
        %793 = vmatmul.bf16.gmra.mxu0 %v735
        %v794 = vpop.f32.mrf.mxu0
        %v795 = vadd.f32 %v668, %v794
        %v796 = vpop.f32.mrf.mxu0
        %v797 = vadd.f32 %v668, %v796
        %798 = vmatmul.bf16.gmra.mxu0 %v738
        %v799 = vpop.f32.mrf.mxu0
        %v800 = vadd.f32 %v668, %v799
        %v801 = vpop.f32.mrf.mxu0
        %v802 = vadd.f32 %v668, %v801
        %803 = vmatmul.bf16.gmra.mxu0 %v741
        %v804 = vpop.f32.mrf.mxu0
        %v805 = vadd.f32 %v668, %v804
        %v806 = vpop.f32.mrf.mxu0
        %v807 = vadd.f32 %v668, %v806
        %808 = vmatmul.bf16.gmra.mxu0 %v744
        %v809 = vpop.f32.mrf.mxu0
        %v810 = vadd.f32 %v668, %v809
        %v811 = vpop.f32.mrf.mxu0
        %v812 = vadd.f32 %v668, %v811
        %813 = vdwg.mxu0
        %814 = vmatpush.bf16.msra.mxu0 0
        %815 = vmatpush.bf16.msra.mxu0 0
        %816 = vmatpush.bf16.msra.mxu0 0
        %817 = vmatpush.bf16.msra.mxu0 0
        %818 = vmatpush.bf16.msra.mxu0 0
        %819 = vmatpush.bf16.msra.mxu0 %v754
        %820 = vmatpush.bf16.msra.mxu0 %v723
        %821 = vmatpush.bf16.msra.mxu0 %v720
        %822 = vmatmul.bf16.gmra.mxu0 %v735
        %v823 = vpop.f32.mrf.mxu0
        %v824 = vadd.f32 %v669, %v823
        %v825 = vpop.f32.mrf.mxu0
        %v826 = vadd.f32 %v669, %v825
        %827 = vmatmul.bf16.gmra.mxu0 %v738
        %v828 = vpop.f32.mrf.mxu0
        %v829 = vadd.f32 %v669, %v828
        %v830 = vpop.f32.mrf.mxu0
        %v831 = vadd.f32 %v669, %v830
        %832 = vmatmul.bf16.gmra.mxu0 %v741
        %v833 = vpop.f32.mrf.mxu0
        %v834 = vadd.f32 %v669, %v833
        %v835 = vpop.f32.mrf.mxu0
        %v836 = vadd.f32 %v669, %v835
        %837 = vmatmul.bf16.gmra.mxu0 %v744
        %v838 = vpop.f32.mrf.mxu0
        %v839 = vadd.f32 %v669, %v838
        %v840 = vpop.f32.mrf.mxu0
        %v841 = vadd.f32 %v669, %v840
        %842 = vdwg.mxu0
        %v843 = vmax.f32 %v766, 0.0
        %v844 = vmax.f32 %v795, 0.0
        %v845 = vmax.f32 %v824, 0.0
        %v846 = vmax.f32 %v768, 0.0
        %v847 = vmax.f32 %v797, 0.0
        %v848 = vmax.f32 %v826, 0.0
        %v849 = vmax.f32 %v771, 0.0
        %v850 = vmax.f32 %v800, 0.0
        %v851 = vmax.f32 %v829, 0.0
        %v852 = vmax.f32 %v773, 0.0
        %v853 = vmax.f32 %v802, 0.0
        %v854 = vmax.f32 %v831, 0.0
        %v855 = vmax.f32 %v776, 0.0
        %v856 = vmax.f32 %v805, 0.0
        %v857 = vmax.f32 %v834, 0.0
        %v858 = vmax.f32 %v778, 0.0
        %v859 = vmax.f32 %v807, 0.0
        %v860 = vmax.f32 %v836, 0.0
        %v861 = vmax.f32 %v781, 0.0
        %v862 = vmax.f32 %v810, 0.0
        %v863 = vmax.f32 %v839, 0.0
        %v864 = vmax.f32 %v783, 0.0
        %v865 = vmax.f32 %v812, 0.0
        %v866 = vmax.f32 %v841, 0.0
        %867 = vst [vmem:[%s630] sm:$0xff] %v843
        %868 = vst [vmem:[%s630 + $0x8] sm:$0xff] %v844
        %869 = vst [vmem:[%s630 + $0x10] sm:$0xff] %v845
        %870 = vst [vmem:[%s630 + $0x20] sm:$0xff] %v846
        %871 = vst [vmem:[%s630 + $0x28] sm:$0xff] %v847
        %872 = vst [vmem:[%s630 + $0x30] sm:$0xff] %v848
        %873 = vst [vmem:[%s630 + $0x40] sm:$0xff] %v849
        %874 = vst [vmem:[%s630 + $0x48] sm:$0xff] %v850
        %875 = vst [vmem:[%s630 + $0x50] sm:$0xff] %v851
        %876 = vst [vmem:[%s630 + $0x60] sm:$0xff] %v852
        %877 = vst [vmem:[%s630 + $0x68] sm:$0xff] %v853
        %878 = vst [vmem:[%s630 + $0x70] sm:$0xff] %v854
        %879 = vst [vmem:[%s630 + $0x80] sm:$0xff] %v855
        %880 = vst [vmem:[%s630 + $0x88] sm:$0xff] %v856
        %881 = vst [vmem:[%s630 + $0x90] sm:$0xff] %v857
        %882 = vst [vmem:[%s630 + $0xa0] sm:$0xff] %v858
        %883 = vst [vmem:[%s630 + $0xa8] sm:$0xff] %v859
        %884 = vst [vmem:[%s630 + $0xb0] sm:$0xff] %v860
        %885 = vst [vmem:[%s630 + $0xc0] sm:$0xff] %v861
        %886 = vst [vmem:[%s630 + $0xc8] sm:$0xff] %v862
        %887 = vst [vmem:[%s630 + $0xd0] sm:$0xff] %v863
        %888 = vst [vmem:[%s630 + $0xe0] sm:$0xff] %v864
        %889 = vst [vmem:[%s630 + $0xe8] sm:$0xff] %v865
        %890 = vst [vmem:[%s630 + $0xf0] sm:$0xff] %v866
        %v891 = vld [vmem:[%s642] sm:$0xff]
        %v892 = vld [vmem:[%s642 + $0x8] sm:$0xff]
        %v893 = vld [vmem:[%s642 + $0x10] sm:$0xff]
        %v894 = vld [vmem:[%s642 + $0x18] sm:$0xf]
        %v895 = vld [vmem:[%s642 + $0x1c] sm:$0xff]
        %v896 = vld [vmem:[%s642 + $0x24] sm:$0xff]
        %v897 = vld [vmem:[%s642 + $0x2c] sm:$0xff]
        %v898 = vld [vmem:[%s642 + $0x34] sm:$0xf]
        %v899 = vld [vmem:[%s642 + $0x38] sm:$0xff]
        %v900 = vld [vmem:[%s642 + $0x40] sm:$0xff]
        %v901 = vld [vmem:[%s642 + $0x48] sm:$0xff]
        %v902 = vld [vmem:[%s642 + $0x50] sm:$0xf]
        %v903 = vld [vmem:[%s642 + $0x54] sm:$0xff]
        %v904 = vld [vmem:[%s642 + $0x5c] sm:$0xff]
        %v905 = vld [vmem:[%s642 + $0x64] sm:$0xff]
        %v906 = vld [vmem:[%s642 + $0x6c] sm:$0xf]
        %v907 = vld [vmem:[%s642 + $0x70] sm:$0xff]
        %v908 = vld [vmem:[%s642 + $0x78] sm:$0xff]
        %v909 = vld [vmem:[%s642 + $0x80] sm:$0xff]
        %v910 = vld [vmem:[%s642 + $0x88] sm:$0xf]
        %v911 = vld [vmem:[%s642 + $0x8c] sm:$0xff]
        %v912 = vld [vmem:[%s642 + $0x94] sm:$0xff]
        %v913 = vld [vmem:[%s642 + $0x9c] sm:$0xff]
        %v914 = vld [vmem:[%s642 + $0xa4] sm:$0xf]
        %v915 = vld [vmem:[%s642 + $0xa8] sm:$0xff]
        %v916 = vld [vmem:[%s642 + $0xb0] sm:$0xff]
        %v917 = vld [vmem:[%s642 + $0xb8] sm:$0xff]
        %v918 = vld [vmem:[%s642 + $0xc0] sm:$0xf]
        %v919 = vld [vmem:[%s642 + $0xc4] sm:$0xff]
        %v920 = vld [vmem:[%s642 + $0xcc] sm:$0xff]
        %v921 = vld [vmem:[%s642 + $0xd4] sm:$0xff]
        %v922 = vld [vmem:[%s642 + $0xdc] sm:$0xf]
        %v923 = vld [vmem:[%s4] sm:$0xf]
        %v924 = vld [vmem:[%s4 + $0x4] sm:$0xf]
        %v925 = vld [vmem:[%s4 + $0x8] sm:$0xf]
        %v926 = vld [vmem:[%s4 + $0xc] sm:$0xf]
        %v927 = vld [vmem:[%s4 + $0x10] sm:$0xf]
        %v928 = vld [vmem:[%s4 + $0x14] sm:$0xf]
        %v929 = vld [vmem:[%s4 + $0x18] sm:$0xf]
        %v930 = vld [vmem:[%s4 + $0x1c] sm:$0xf]
        %v931 = vld [vmem:[%s4 + $0x20] sm:$0xf]
        %v932 = vld [vmem:[%s4 + $0x24] sm:$0xf]
        %v933 = vld [vmem:[%s4 + $0x28] sm:$0xf]
        %v934 = vld [vmem:[%s4 + $0x2c] sm:$0xf]
        %v935 = vld [vmem:[%s4 + $0x30] sm:$0xf]
        %v936 = vld [vmem:[%s4 + $0x34] sm:$0xf]
        %v937 = vld [vmem:[%s4 + $0x38] sm:$0xf]
        %v938 = vld [vmem:[%s4 + $0x3c] sm:$0xf]
        %v939 = vld [vmem:[%s4 + $0x40] sm:$0xf]
        %v940 = vld [vmem:[%s4 + $0x44] sm:$0xf]
        %v941 = vld [vmem:[%s4 + $0x48] sm:$0xf]
        %v942 = vld [vmem:[%s4 + $0x4c] sm:$0xf]
        %v943 = vld [vmem:[%s4 + $0x50] sm:$0xf]
        %v944 = vld [vmem:[%s4 + $0x54] sm:$0xf]
        %v945 = vld [vmem:[%s4 + $0x58] sm:$0xf]
        %v946 = vld [vmem:[%s4 + $0x5c] sm:$0xf]
        %v947 = vld [vmem:[%s4 + $0x60] sm:$0xf]
        %v948 = vld [vmem:[%s4 + $0x64] sm:$0xf]
        %v949 = vld [vmem:[%s4 + $0x68] sm:$0xf]
        %v950 = vld [vmem:[%s4 + $0x6c] sm:$0xf]
        %v951 = vld [vmem:[%s4 + $0x70] sm:$0xf]
        %v952 = vld [vmem:[%s4 + $0x74] sm:$0xf]
        %v953 = vld [vmem:[%s4 + $0x78] sm:$0xf]
        %v954 = vld [vmem:[%s4 + $0x7c] sm:$0xf]
        %v955 = vld [vmem:[%s4 + $0x80] sm:$0xf]
        %v956 = vld [vmem:[%s4 + $0x84] sm:$0xf]
        %v957 = vld [vmem:[%s4 + $0x88] sm:$0xf]
        %v958 = vld [vmem:[%s4 + $0x8c] sm:$0xf]
        %v959 = vld [vmem:[%s4 + $0x90] sm:$0xf]
        %v960 = vld [vmem:[%s4 + $0x94] sm:$0xf]
        %v961 = vld [vmem:[%s4 + $0x98] sm:$0xf]
        %v962 = vld [vmem:[%s4 + $0x9c] sm:$0xf]
        %v963 = vld [vmem:[%s4 + $0xa0] sm:$0xf]
        %v964 = vld [vmem:[%s4 + $0xa4] sm:$0xf]
        %v965 = vld [vmem:[%s4 + $0xa8] sm:$0xf]
        %v966 = vld [vmem:[%s4 + $0xac] sm:$0xf]
        %v967 = vld [vmem:[%s4 + $0xb0] sm:$0xf]
        %v968 = vld [vmem:[%s4 + $0xb4] sm:$0xf]
        %v969 = vld [vmem:[%s4 + $0xb8] sm:$0xf]
        %v970 = vld [vmem:[%s4 + $0xbc] sm:$0xf]
        %v971 = vld [vmem:[%s4 + $0xc0] sm:$0xf]
        %v972 = vld [vmem:[%s4 + $0xc4] sm:$0xf]
        %v973 = vld [vmem:[%s4 + $0xc8] sm:$0xf]
        %v974 = vld [vmem:[%s4 + $0xcc] sm:$0xf]
        %v975 = vld [vmem:[%s4 + $0xd0] sm:$0xf]
        %v976 = vld [vmem:[%s4 + $0xd4] sm:$0xf]
        %v977 = vld [vmem:[%s4 + $0xd8] sm:$0xf]
        %v978 = vld [vmem:[%s4 + $0xdc] sm:$0xf]
        %v979 = vld [vmem:[%s4 + $0xe0] sm:$0xf]
        %v980 = vld [vmem:[%s4 + $0xe4] sm:$0xf]
        %v981 = vld [vmem:[%s4 + $0xe8] sm:$0xf]
        %v982 = vld [vmem:[%s4 + $0xec] sm:$0xf]
        %v983 = vld [vmem:[%s4 + $0xf0] sm:$0xf]
        %v984 = vld [vmem:[%s4 + $0xf4] sm:$0xf]
        %v985 = vld [vmem:[%s4 + $0xf8] sm:$0xf]
        %v986 = vld [vmem:[%s4 + $0xfc] sm:$0xf]
        %v987 = vld [vmem:[%s4 + $0x100] sm:$0xf]
        %v988 = vld [vmem:[%s4 + $0x104] sm:$0xf]
        %v989 = vld [vmem:[%s4 + $0x108] sm:$0xf]
        %v990 = vld [vmem:[%s4 + $0x10c] sm:$0xf]
        %v991 = vld [vmem:[%s4 + $0x110] sm:$0xf]
        %v992 = vld [vmem:[%s4 + $0x114] sm:$0xf]
        %v993 = vld [vmem:[%s4 + $0x118] sm:$0xf]
        %v994 = vld [vmem:[%s4 + $0x11c] sm:$0xf]
        %v995 = vld [vmem:[%s4 + $0x120] sm:$0xf]
        %v996 = vld [vmem:[%s4 + $0x124] sm:$0xf]
        %v997 = vld [vmem:[%s4 + $0x128] sm:$0xf]
        %v998 = vld [vmem:[%s4 + $0x12c] sm:$0xf]
        %v999 = vld [vmem:[%s4 + $0x130] sm:$0xf]
        %v1000 = vld [vmem:[%s4 + $0x134] sm:$0xf]
        %v1001 = vld [vmem:[%s4 + $0x138] sm:$0xf]
        %v1002 = vld [vmem:[%s4 + $0x13c] sm:$0xf]
        %v1003 = vld [vmem:[%s4 + $0x140] sm:$0xf]
        %v1004 = vld [vmem:[%s4 + $0x144] sm:$0xf]
        %v1005 = vld [vmem:[%s4 + $0x148] sm:$0xf]
        %v1006 = vld [vmem:[%s4 + $0x14c] sm:$0xf]
        %v1007 = vld [vmem:[%s4 + $0x150] sm:$0xf]
        %v1008 = vld [vmem:[%s4 + $0x154] sm:$0xf]
        %v1009 = vld [vmem:[%s4 + $0x158] sm:$0xf]
        %v1010 = vld [vmem:[%s4 + $0x15c] sm:$0xf]
        %v1011 = vld [vmem:[%s4 + $0x160] sm:$0xf]
        %v1012 = vld [vmem:[%s4 + $0x164] sm:$0xf]
        %v1013 = vld [vmem:[%s4 + $0x168] sm:$0xf]
        %v1014 = vld [vmem:[%s4 + $0x16c] sm:$0xf]
        %v1015 = vld [vmem:[%s4 + $0x170] sm:$0xf]
        %v1016 = vld [vmem:[%s4 + $0x174] sm:$0xf]
        %v1017 = vld [vmem:[%s4 + $0x178] sm:$0xf]
        %v1018 = vld [vmem:[%s4 + $0x17c] sm:$0xf]
        %v1019 = vld [vmem:[%s4 + $0x180] sm:$0xf]
        %v1020 = vld [vmem:[%s4 + $0x184] sm:$0xf]
        %v1021 = vld [vmem:[%s4 + $0x188] sm:$0xf]
        %v1022 = vld [vmem:[%s4 + $0x18c] sm:$0xf]
        %v1023 = vld [vmem:[%s4 + $0x190] sm:$0xf]
        %v1024 = vld [vmem:[%s4 + $0x194] sm:$0xf]
        %v1025 = vld [vmem:[%s4 + $0x198] sm:$0xf]
        %v1026 = vld [vmem:[%s4 + $0x19c] sm:$0xf]
        %v1027 = vld [vmem:[%s4 + $0x1a0] sm:$0xf]
        %v1028 = vld [vmem:[%s4 + $0x1a4] sm:$0xf]
        %v1029 = vld [vmem:[%s4 + $0x1a8] sm:$0xf]
        %v1030 = vld [vmem:[%s4 + $0x1ac] sm:$0xf]
        %v1031 = vld [vmem:[%s5] sm:$0x1]
        %v1033 = vperm.slane %v1031, 0
        %v1067 = vunpack.c.l.b16 %v891
        %v1068 = vunpack.c.h.b16 %v891
        %v1069 = vunpack.c.l.b16 %v892
        %v1070 = vunpack.c.h.b16 %v892
        %v1071 = vunpack.c.l.b16 %v893
        %v1072 = vunpack.c.h.b16 %v893
        %v1073 = vunpack.c.l.b16 %v894
        %v1074 = vunpack.c.l.b16 %v895
        %v1075 = vunpack.c.h.b16 %v895
        %v1076 = vunpack.c.l.b16 %v896
        %v1077 = vunpack.c.h.b16 %v896
        %v1078 = vunpack.c.l.b16 %v897
        %v1079 = vunpack.c.h.b16 %v897
        %v1080 = vunpack.c.l.b16 %v898
        %v1081 = vunpack.c.l.b16 %v899
        %v1082 = vunpack.c.h.b16 %v899
        %v1083 = vunpack.c.l.b16 %v900
        %v1084 = vunpack.c.h.b16 %v900
        %v1085 = vunpack.c.l.b16 %v901
        %v1086 = vunpack.c.h.b16 %v901
        %v1087 = vunpack.c.l.b16 %v902
        %v1088 = vunpack.c.l.b16 %v903
        %v1089 = vunpack.c.h.b16 %v903
        %v1090 = vunpack.c.l.b16 %v904
        %v1091 = vunpack.c.h.b16 %v904
        %v1092 = vunpack.c.l.b16 %v905
        %v1093 = vunpack.c.h.b16 %v905
        %v1094 = vunpack.c.l.b16 %v906
        %v1095 = vunpack.c.l.b16 %v907
        %v1096 = vunpack.c.h.b16 %v907
        %v1097 = vunpack.c.l.b16 %v908
        %v1098 = vunpack.c.h.b16 %v908
        %v1099 = vunpack.c.l.b16 %v909
        %v1100 = vunpack.c.h.b16 %v909
        %v1101 = vunpack.c.l.b16 %v910
        %v1102 = vunpack.c.l.b16 %v911
        %v1103 = vunpack.c.h.b16 %v911
        %v1104 = vunpack.c.l.b16 %v912
        %v1105 = vunpack.c.h.b16 %v912
        %v1106 = vunpack.c.l.b16 %v913
        %v1107 = vunpack.c.h.b16 %v913
        %v1108 = vunpack.c.l.b16 %v914
        %v1109 = vunpack.c.l.b16 %v915
        %v1110 = vunpack.c.h.b16 %v915
        %v1111 = vunpack.c.l.b16 %v916
        %v1112 = vunpack.c.h.b16 %v916
        %v1113 = vunpack.c.l.b16 %v917
        %v1114 = vunpack.c.h.b16 %v917
        %v1115 = vunpack.c.l.b16 %v918
        %v1116 = vunpack.c.l.b16 %v919
        %v1117 = vunpack.c.h.b16 %v919
        %v1118 = vunpack.c.l.b16 %v920
        %v1119 = vunpack.c.h.b16 %v920
        %v1120 = vunpack.c.l.b16 %v921
        %v1121 = vunpack.c.h.b16 %v921
        %v1122 = vunpack.c.l.b16 %v922
        %v1123 = vpack.c.b16 %v1074, %v1067
        %v1124 = vpack.c.b16 %v1075, %v1068
        %v1125 = vpack.c.b16 %v1076, %v1069
        %v1126 = vpack.c.b16 %v1077, %v1070
        %v1127 = vpack.c.b16 %v1078, %v1071
        %v1128 = vpack.c.b16 %v1079, %v1072
        %v1129 = vpack.c.b16 %v1080, %v1073
        %v1130 = vpack.c.b16 %v1088, %v1081
        %v1131 = vpack.c.b16 %v1089, %v1082
        %v1132 = vpack.c.b16 %v1090, %v1083
        %v1133 = vpack.c.b16 %v1091, %v1084
        %v1134 = vpack.c.b16 %v1092, %v1085
        %v1135 = vpack.c.b16 %v1093, %v1086
        %v1136 = vpack.c.b16 %v1094, %v1087
        %v1137 = vpack.c.b16 %v1102, %v1095
        %v1138 = vpack.c.b16 %v1103, %v1096
        %v1139 = vpack.c.b16 %v1104, %v1097
        %v1140 = vpack.c.b16 %v1105, %v1098
        %v1141 = vpack.c.b16 %v1106, %v1099
        %v1142 = vpack.c.b16 %v1107, %v1100
        %v1143 = vpack.c.b16 %v1108, %v1101
        %v1144 = vpack.c.b16 %v1116, %v1109
        %v1145 = vpack.c.b16 %v1117, %v1110
        %v1146 = vpack.c.b16 %v1118, %v1111
        %v1147 = vpack.c.b16 %v1119, %v1112
        %v1148 = vpack.c.b16 %v1120, %v1113
        %v1149 = vpack.c.b16 %v1121, %v1114
        %v1150 = vpack.c.b16 %v1122, %v1115
        %v1283 = vunpack.c.l.b16 %v923
        %v1284 = vunpack.c.l.b16 %v924
        %v1285 = vunpack.c.l.b16 %v925
        %v1286 = vunpack.c.l.b16 %v926
        %v1287 = vunpack.c.l.b16 %v927
        %v1288 = vunpack.c.l.b16 %v928
        %v1289 = vunpack.c.l.b16 %v929
        %v1290 = vunpack.c.l.b16 %v930
        %v1291 = vunpack.c.l.b16 %v931
        %v1292 = vunpack.c.l.b16 %v932
        %v1293 = vunpack.c.l.b16 %v933
        %v1294 = vunpack.c.l.b16 %v934
        %v1295 = vunpack.c.l.b16 %v935
        %v1296 = vunpack.c.l.b16 %v936
        %v1297 = vunpack.c.l.b16 %v937
        %v1298 = vunpack.c.l.b16 %v938
        %v1299 = vunpack.c.l.b16 %v939
        %v1300 = vunpack.c.l.b16 %v940
        %v1301 = vunpack.c.l.b16 %v941
        %v1302 = vunpack.c.l.b16 %v942
        %v1303 = vunpack.c.l.b16 %v943
        %v1304 = vunpack.c.l.b16 %v944
        %v1305 = vunpack.c.l.b16 %v945
        %v1306 = vunpack.c.l.b16 %v946
        %v1307 = vunpack.c.l.b16 %v947
        %v1308 = vunpack.c.l.b16 %v948
        %v1309 = vunpack.c.l.b16 %v949
        %v1310 = vunpack.c.l.b16 %v950
        %v1311 = vunpack.c.l.b16 %v951
        %v1312 = vunpack.c.l.b16 %v952
        %v1313 = vunpack.c.l.b16 %v953
        %v1314 = vunpack.c.l.b16 %v954
        %v1315 = vunpack.c.l.b16 %v955
        %v1316 = vunpack.c.l.b16 %v956
        %v1317 = vunpack.c.l.b16 %v957
        %v1318 = vunpack.c.l.b16 %v958
        %v1319 = vunpack.c.l.b16 %v959
        %v1320 = vunpack.c.l.b16 %v960
        %v1321 = vunpack.c.l.b16 %v961
        %v1322 = vunpack.c.l.b16 %v962
        %v1323 = vunpack.c.l.b16 %v963
        %v1324 = vunpack.c.l.b16 %v964
        %v1325 = vunpack.c.l.b16 %v965
        %v1326 = vunpack.c.l.b16 %v966
        %v1327 = vunpack.c.l.b16 %v967
        %v1328 = vunpack.c.l.b16 %v968
        %v1329 = vunpack.c.l.b16 %v969
        %v1330 = vunpack.c.l.b16 %v970
        %v1331 = vunpack.c.l.b16 %v971
        %v1332 = vunpack.c.l.b16 %v972
        %v1333 = vunpack.c.l.b16 %v973
        %v1334 = vunpack.c.l.b16 %v974
        %v1335 = vunpack.c.l.b16 %v975
        %v1336 = vunpack.c.l.b16 %v976
        %v1337 = vunpack.c.l.b16 %v977
        %v1338 = vunpack.c.l.b16 %v978
        %v1339 = vunpack.c.l.b16 %v979
        %v1340 = vunpack.c.l.b16 %v980
        %v1341 = vunpack.c.l.b16 %v981
        %v1342 = vunpack.c.l.b16 %v982
        %v1343 = vunpack.c.l.b16 %v983
        %v1344 = vunpack.c.l.b16 %v984
        %v1345 = vunpack.c.l.b16 %v985
        %v1346 = vunpack.c.l.b16 %v986
        %v1347 = vunpack.c.l.b16 %v987
        %v1348 = vunpack.c.l.b16 %v988
        %v1349 = vunpack.c.l.b16 %v989
        %v1350 = vunpack.c.l.b16 %v990
        %v1351 = vunpack.c.l.b16 %v991
        %v1352 = vunpack.c.l.b16 %v992
        %v1353 = vunpack.c.l.b16 %v993
        %v1354 = vunpack.c.l.b16 %v994
        %v1355 = vunpack.c.l.b16 %v995
        %v1356 = vunpack.c.l.b16 %v996
        %v1357 = vunpack.c.l.b16 %v997
        %v1358 = vunpack.c.l.b16 %v998
        %v1359 = vunpack.c.l.b16 %v999
        %v1360 = vunpack.c.l.b16 %v1000
        %v1361 = vunpack.c.l.b16 %v1001
        %v1362 = vunpack.c.l.b16 %v1002
        %v1363 = vunpack.c.l.b16 %v1003
        %v1364 = vunpack.c.l.b16 %v1004
        %v1365 = vunpack.c.l.b16 %v1005
        %v1366 = vunpack.c.l.b16 %v1006
        %v1367 = vunpack.c.l.b16 %v1007
        %v1368 = vunpack.c.l.b16 %v1008
        %v1369 = vunpack.c.l.b16 %v1009
        %v1370 = vunpack.c.l.b16 %v1010
        %v1371 = vunpack.c.l.b16 %v1011
        %v1372 = vunpack.c.l.b16 %v1012
        %v1373 = vunpack.c.l.b16 %v1013
        %v1374 = vunpack.c.l.b16 %v1014
        %v1375 = vunpack.c.l.b16 %v1015
        %v1376 = vunpack.c.l.b16 %v1016
        %v1377 = vunpack.c.l.b16 %v1017
        %v1378 = vunpack.c.l.b16 %v1018
        %v1379 = vunpack.c.l.b16 %v1019
        %v1380 = vunpack.c.l.b16 %v1020
        %v1381 = vunpack.c.l.b16 %v1021
        %v1382 = vunpack.c.l.b16 %v1022
        %v1383 = vunpack.c.l.b16 %v1023
        %v1384 = vunpack.c.l.b16 %v1024
        %v1385 = vunpack.c.l.b16 %v1025
        %v1386 = vunpack.c.l.b16 %v1026
        %v1387 = vunpack.c.l.b16 %v1027
        %v1388 = vunpack.c.l.b16 %v1028
        %v1389 = vunpack.c.l.b16 %v1029
        %v1390 = vunpack.c.l.b16 %v1030
        %v1391 = vpack.c.b16 %v1284, %v1283
        %v1392 = vpack.c.b16 %v1286, %v1285
        %v1393 = vpack.c.b16 %v1288, %v1287
        %v1394 = vpack.c.b16 %v1290, %v1289
        %v1395 = vpack.c.b16 %v1292, %v1291
        %v1396 = vpack.c.b16 %v1294, %v1293
        %v1397 = vpack.c.b16 %v1296, %v1295
        %v1398 = vpack.c.b16 %v1298, %v1297
        %v1399 = vpack.c.b16 %v1300, %v1299
        %v1400 = vpack.c.b16 %v1302, %v1301
        %v1401 = vpack.c.b16 %v1304, %v1303
        %v1402 = vpack.c.b16 %v1306, %v1305
        %v1403 = vpack.c.b16 %v1308, %v1307
        %v1404 = vpack.c.b16 %v1310, %v1309
        %v1405 = vpack.c.b16 %v1312, %v1311
        %v1406 = vpack.c.b16 %v1314, %v1313
        %v1407 = vpack.c.b16 %v1316, %v1315
        %v1408 = vpack.c.b16 %v1318, %v1317
        %v1409 = vpack.c.b16 %v1320, %v1319
        %v1410 = vpack.c.b16 %v1322, %v1321
        %v1411 = vpack.c.b16 %v1324, %v1323
        %v1412 = vpack.c.b16 %v1326, %v1325
        %v1413 = vpack.c.b16 %v1328, %v1327
        %v1414 = vpack.c.b16 %v1330, %v1329
        %v1415 = vpack.c.b16 %v1332, %v1331
        %v1416 = vpack.c.b16 %v1334, %v1333
        %v1417 = vpack.c.b16 %v1336, %v1335
        %v1418 = vpack.c.b16 %v1338, %v1337
        %v1419 = vpack.c.b16 %v1340, %v1339
        %v1420 = vpack.c.b16 %v1342, %v1341
        %v1421 = vpack.c.b16 %v1344, %v1343
        %v1422 = vpack.c.b16 %v1346, %v1345
        %v1423 = vpack.c.b16 %v1348, %v1347
        %v1424 = vpack.c.b16 %v1350, %v1349
        %v1425 = vpack.c.b16 %v1352, %v1351
        %v1426 = vpack.c.b16 %v1354, %v1353
        %v1427 = vpack.c.b16 %v1356, %v1355
        %v1428 = vpack.c.b16 %v1358, %v1357
        %v1429 = vpack.c.b16 %v1360, %v1359
        %v1430 = vpack.c.b16 %v1362, %v1361
        %v1431 = vpack.c.b16 %v1364, %v1363
        %v1432 = vpack.c.b16 %v1366, %v1365
        %v1433 = vpack.c.b16 %v1368, %v1367
        %v1434 = vpack.c.b16 %v1370, %v1369
        %v1435 = vpack.c.b16 %v1372, %v1371
        %v1436 = vpack.c.b16 %v1374, %v1373
        %v1437 = vpack.c.b16 %v1376, %v1375
        %v1438 = vpack.c.b16 %v1378, %v1377
        %v1439 = vpack.c.b16 %v1380, %v1379
        %v1440 = vpack.c.b16 %v1382, %v1381
        %v1441 = vpack.c.b16 %v1384, %v1383
        %v1442 = vpack.c.b16 %v1386, %v1385
        %v1443 = vpack.c.b16 %v1388, %v1387
        %v1444 = vpack.c.b16 %v1390, %v1389
        %vm1499 = vcmask 785408
        %v1501 = vsel %vm1499, %v1129, 0
        %v1504 = vsel %vm1499, %v1136, 0
        %v1507 = vsel %vm1499, %v1143, 0
        %v1510 = vsel %vm1499, %v1150, 0
        %1512 = vmatpush.bf16.msra.mxu0 %v1398
        %1513 = vmatpush.bf16.msra.mxu0 %v1397
        %1514 = vmatpush.bf16.msra.mxu0 %v1396
        %1515 = vmatpush.bf16.msra.mxu0 %v1395
        %1516 = vmatpush.bf16.msra.mxu0 %v1394
        %1517 = vmatpush.bf16.msra.mxu0 %v1393
        %1518 = vmatpush.bf16.msra.mxu0 %v1392
        %1519 = vmatpush.bf16.msra.mxu0 %v1391
        %1520 = vmatmul.bf16.gmra.mxu0 %v1123
        %v1521 = vpop.f32.mrf.mxu0
        %v1522 = vadd.f32 %v1033, %v1521
        %v1523 = vpop.f32.mrf.mxu0
        %v1524 = vadd.f32 %v1033, %v1523
        %1525 = vmatmul.bf16.gmra.mxu0 %v1130
        %v1526 = vpop.f32.mrf.mxu0
        %v1527 = vadd.f32 %v1033, %v1526
        %v1528 = vpop.f32.mrf.mxu0
        %v1529 = vadd.f32 %v1033, %v1528
        %1530 = vmatmul.bf16.gmra.mxu0 %v1137
        %v1531 = vpop.f32.mrf.mxu0
        %v1532 = vadd.f32 %v1033, %v1531
        %v1533 = vpop.f32.mrf.mxu0
        %v1534 = vadd.f32 %v1033, %v1533
        %1535 = vmatmul.bf16.gmra.mxu0 %v1144
        %v1536 = vpop.f32.mrf.mxu0
        %v1537 = vadd.f32 %v1033, %v1536
        %v1538 = vpop.f32.mrf.mxu0
        %v1539 = vadd.f32 %v1033, %v1538
        %1540 = vdwg.mxu0
        %1541 = vmatpush.bf16.msra.mxu0 %v1406
        %1542 = vmatpush.bf16.msra.mxu0 %v1405
        %1543 = vmatpush.bf16.msra.mxu0 %v1404
        %1544 = vmatpush.bf16.msra.mxu0 %v1403
        %1545 = vmatpush.bf16.msra.mxu0 %v1402
        %1546 = vmatpush.bf16.msra.mxu0 %v1401
        %1547 = vmatpush.bf16.msra.mxu0 %v1400
        %1548 = vmatpush.bf16.msra.mxu0 %v1399
        %1549 = vmatmul.bf16.gmra.mxu0 %v1124
        %v1550 = vpop.f32.mrf.mxu0
        %v1551 = vadd.f32 %v1522, %v1550
        %v1552 = vpop.f32.mrf.mxu0
        %v1553 = vadd.f32 %v1524, %v1552
        %1554 = vmatmul.bf16.gmra.mxu0 %v1131
        %v1555 = vpop.f32.mrf.mxu0
        %v1556 = vadd.f32 %v1527, %v1555
        %v1557 = vpop.f32.mrf.mxu0
        %v1558 = vadd.f32 %v1529, %v1557
        %1559 = vmatmul.bf16.gmra.mxu0 %v1138
        %v1560 = vpop.f32.mrf.mxu0
        %v1561 = vadd.f32 %v1532, %v1560
        %v1562 = vpop.f32.mrf.mxu0
        %v1563 = vadd.f32 %v1534, %v1562
        %1564 = vmatmul.bf16.gmra.mxu0 %v1145
        %v1565 = vpop.f32.mrf.mxu0
        %v1566 = vadd.f32 %v1537, %v1565
        %v1567 = vpop.f32.mrf.mxu0
        %v1568 = vadd.f32 %v1539, %v1567
        %1569 = vdwg.mxu0
        %1570 = vmatpush.bf16.msra.mxu0 %v1414
        %1571 = vmatpush.bf16.msra.mxu0 %v1413
        %1572 = vmatpush.bf16.msra.mxu0 %v1412
        %1573 = vmatpush.bf16.msra.mxu0 %v1411
        %1574 = vmatpush.bf16.msra.mxu0 %v1410
        %1575 = vmatpush.bf16.msra.mxu0 %v1409
        %1576 = vmatpush.bf16.msra.mxu0 %v1408
        %1577 = vmatpush.bf16.msra.mxu0 %v1407
        %1578 = vmatmul.bf16.gmra.mxu0 %v1125
        %v1579 = vpop.f32.mrf.mxu0
        %v1580 = vadd.f32 %v1551, %v1579
        %v1581 = vpop.f32.mrf.mxu0
        %v1582 = vadd.f32 %v1553, %v1581
        %1583 = vmatmul.bf16.gmra.mxu0 %v1132
        %v1584 = vpop.f32.mrf.mxu0
        %v1585 = vadd.f32 %v1556, %v1584
        %v1586 = vpop.f32.mrf.mxu0
        %v1587 = vadd.f32 %v1558, %v1586
        %1588 = vmatmul.bf16.gmra.mxu0 %v1139
        %v1589 = vpop.f32.mrf.mxu0
        %v1590 = vadd.f32 %v1561, %v1589
        %v1591 = vpop.f32.mrf.mxu0
        %v1592 = vadd.f32 %v1563, %v1591
        %1593 = vmatmul.bf16.gmra.mxu0 %v1146
        %v1594 = vpop.f32.mrf.mxu0
        %v1595 = vadd.f32 %v1566, %v1594
        %v1596 = vpop.f32.mrf.mxu0
        %v1597 = vadd.f32 %v1568, %v1596
        %1598 = vdwg.mxu0
        %1599 = vmatpush.bf16.msra.mxu0 %v1422
        %1600 = vmatpush.bf16.msra.mxu0 %v1421
        %1601 = vmatpush.bf16.msra.mxu0 %v1420
        %1602 = vmatpush.bf16.msra.mxu0 %v1419
        %1603 = vmatpush.bf16.msra.mxu0 %v1418
        %1604 = vmatpush.bf16.msra.mxu0 %v1417
        %1605 = vmatpush.bf16.msra.mxu0 %v1416
        %1606 = vmatpush.bf16.msra.mxu0 %v1415
        %1607 = vmatmul.bf16.gmra.mxu0 %v1126
        %v1608 = vpop.f32.mrf.mxu0
        %v1609 = vadd.f32 %v1580, %v1608
        %v1610 = vpop.f32.mrf.mxu0
        %v1611 = vadd.f32 %v1582, %v1610
        %1612 = vmatmul.bf16.gmra.mxu0 %v1133
        %v1613 = vpop.f32.mrf.mxu0
        %v1614 = vadd.f32 %v1585, %v1613
        %v1615 = vpop.f32.mrf.mxu0
        %v1616 = vadd.f32 %v1587, %v1615
        %1617 = vmatmul.bf16.gmra.mxu0 %v1140
        %v1618 = vpop.f32.mrf.mxu0
        %v1619 = vadd.f32 %v1590, %v1618
        %v1620 = vpop.f32.mrf.mxu0
        %v1621 = vadd.f32 %v1592, %v1620
        %1622 = vmatmul.bf16.gmra.mxu0 %v1147
        %v1623 = vpop.f32.mrf.mxu0
        %v1624 = vadd.f32 %v1595, %v1623
        %v1625 = vpop.f32.mrf.mxu0
        %v1626 = vadd.f32 %v1597, %v1625
        %1627 = vdwg.mxu0
        %1628 = vmatpush.bf16.msra.mxu0 %v1430
        %1629 = vmatpush.bf16.msra.mxu0 %v1429
        %1630 = vmatpush.bf16.msra.mxu0 %v1428
        %1631 = vmatpush.bf16.msra.mxu0 %v1427
        %1632 = vmatpush.bf16.msra.mxu0 %v1426
        %1633 = vmatpush.bf16.msra.mxu0 %v1425
        %1634 = vmatpush.bf16.msra.mxu0 %v1424
        %1635 = vmatpush.bf16.msra.mxu0 %v1423
        %1636 = vmatmul.bf16.gmra.mxu0 %v1127
        %v1637 = vpop.f32.mrf.mxu0
        %v1638 = vadd.f32 %v1609, %v1637
        %v1639 = vpop.f32.mrf.mxu0
        %v1640 = vadd.f32 %v1611, %v1639
        %1641 = vmatmul.bf16.gmra.mxu0 %v1134
        %v1642 = vpop.f32.mrf.mxu0
        %v1643 = vadd.f32 %v1614, %v1642
        %v1644 = vpop.f32.mrf.mxu0
        %v1645 = vadd.f32 %v1616, %v1644
        %1646 = vmatmul.bf16.gmra.mxu0 %v1141
        %v1647 = vpop.f32.mrf.mxu0
        %v1648 = vadd.f32 %v1619, %v1647
        %v1649 = vpop.f32.mrf.mxu0
        %v1650 = vadd.f32 %v1621, %v1649
        %1651 = vmatmul.bf16.gmra.mxu0 %v1148
        %v1652 = vpop.f32.mrf.mxu0
        %v1653 = vadd.f32 %v1624, %v1652
        %v1654 = vpop.f32.mrf.mxu0
        %v1655 = vadd.f32 %v1626, %v1654
        %1656 = vdwg.mxu0
        %1657 = vmatpush.bf16.msra.mxu0 %v1438
        %1658 = vmatpush.bf16.msra.mxu0 %v1437
        %1659 = vmatpush.bf16.msra.mxu0 %v1436
        %1660 = vmatpush.bf16.msra.mxu0 %v1435
        %1661 = vmatpush.bf16.msra.mxu0 %v1434
        %1662 = vmatpush.bf16.msra.mxu0 %v1433
        %1663 = vmatpush.bf16.msra.mxu0 %v1432
        %1664 = vmatpush.bf16.msra.mxu0 %v1431
        %1665 = vmatmul.bf16.gmra.mxu0 %v1128
        %v1666 = vpop.f32.mrf.mxu0
        %v1667 = vadd.f32 %v1638, %v1666
        %v1668 = vpop.f32.mrf.mxu0
        %v1669 = vadd.f32 %v1640, %v1668
        %1670 = vmatmul.bf16.gmra.mxu0 %v1135
        %v1671 = vpop.f32.mrf.mxu0
        %v1672 = vadd.f32 %v1643, %v1671
        %v1673 = vpop.f32.mrf.mxu0
        %v1674 = vadd.f32 %v1645, %v1673
        %1675 = vmatmul.bf16.gmra.mxu0 %v1142
        %v1676 = vpop.f32.mrf.mxu0
        %v1677 = vadd.f32 %v1648, %v1676
        %v1678 = vpop.f32.mrf.mxu0
        %v1679 = vadd.f32 %v1650, %v1678
        %1680 = vmatmul.bf16.gmra.mxu0 %v1149
        %v1681 = vpop.f32.mrf.mxu0
        %v1682 = vadd.f32 %v1653, %v1681
        %v1683 = vpop.f32.mrf.mxu0
        %v1684 = vadd.f32 %v1655, %v1683
        %1685 = vdwg.mxu0
        %1686 = vmatpush.bf16.msra.mxu0 0
        %1687 = vmatpush.bf16.msra.mxu0 0
        %1688 = vmatpush.bf16.msra.mxu0 %v1444
        %1689 = vmatpush.bf16.msra.mxu0 %v1443
        %1690 = vmatpush.bf16.msra.mxu0 %v1442
        %1691 = vmatpush.bf16.msra.mxu0 %v1441
        %1692 = vmatpush.bf16.msra.mxu0 %v1440
        %1693 = vmatpush.bf16.msra.mxu0 %v1439
        %1694 = vmatmul.bf16.gmra.mxu0 %v1501
        %v1695 = vpop.f32.mrf.mxu0
        %v1696 = vadd.f32 %v1667, %v1695
        %v1697 = vpop.f32.mrf.mxu0
        %v1698 = vadd.f32 %v1669, %v1697
        %1699 = vmatmul.bf16.gmra.mxu0 %v1504
        %v1700 = vpop.f32.mrf.mxu0
        %v1701 = vadd.f32 %v1672, %v1700
        %v1702 = vpop.f32.mrf.mxu0
        %v1703 = vadd.f32 %v1674, %v1702
        %1704 = vmatmul.bf16.gmra.mxu0 %v1507
        %v1705 = vpop.f32.mrf.mxu0
        %v1706 = vadd.f32 %v1677, %v1705
        %v1707 = vpop.f32.mrf.mxu0
        %v1708 = vadd.f32 %v1679, %v1707
        %1709 = vmatmul.bf16.gmra.mxu0 %v1510
        %v1710 = vpop.f32.mrf.mxu0
        %v1711 = vadd.f32 %v1682, %v1710
        %v1712 = vpop.f32.mrf.mxu0
        %v1713 = vadd.f32 %v1684, %v1712
        %1714 = vdwg.mxu0
        %v1715 = vmax.f32 %v1696, 0.0
        %v1716 = vmax.f32 %v1698, 0.0
        %v1717 = vmax.f32 %v1701, 0.0
        %v1718 = vmax.f32 %v1703, 0.0
        %v1719 = vmax.f32 %v1706, 0.0
        %v1720 = vmax.f32 %v1708, 0.0
        %v1721 = vmax.f32 %v1711, 0.0
        %v1722 = vmax.f32 %v1713, 0.0
        %1723 = vst.msk [vmem:[%s630 + $0x18] sm:$0xff] %vm1499, %v1715
        %1724 = vst.msk [vmem:[%s630 + $0x38] sm:$0xff] %vm1499, %v1716
        %1725 = vst.msk [vmem:[%s630 + $0x58] sm:$0xff] %vm1499, %v1717
        %1726 = vst.msk [vmem:[%s630 + $0x78] sm:$0xff] %vm1499, %v1718
        %1727 = vst.msk [vmem:[%s630 + $0x98] sm:$0xff] %vm1499, %v1719
        %1728 = vst.msk [vmem:[%s630 + $0xb8] sm:$0xff] %vm1499, %v1720
        %1729 = vst.msk [vmem:[%s630 + $0xd8] sm:$0xff] %vm1499, %v1721
        %1730 = vst.msk [vmem:[%s630 + $0xf8] sm:$0xff] %vm1499, %v1722
        %v1731 = vld [vmem:[%s591] sm:$0xff]
        %v1732 = vld [vmem:[%s591 + $0x8] sm:$0xff]
        %v1733 = vld [vmem:[%s591 + $0x10] sm:$0xff]
        %v1734 = vld [vmem:[%s591 + $0x18] sm:$0xff]
        %v1735 = vld [vmem:[%s591 + $0x20] sm:$0xff]
        %v1736 = vld [vmem:[%s591 + $0x28] sm:$0xff]
        %v1737 = vld [vmem:[%s591 + $0x30] sm:$0xff]
        %v1738 = vld [vmem:[%s591 + $0x38] sm:$0xff]
        %s1739 = scalar_lea.vmem %s591, 64 [#allocation2]
        %v1740 = vld [vmem:[%s1739] sm:$0xff]
        %v1741 = vld [vmem:[%s1739 + $0x8] sm:$0xff]
        %v1742 = vld [vmem:[%s1739 + $0x10] sm:$0xff]
        %v1743 = vld [vmem:[%s1739 + $0x18] sm:$0xff]
        %v1744 = vld [vmem:[%s1739 + $0x20] sm:$0xff]
        %v1745 = vld [vmem:[%s1739 + $0x28] sm:$0xff]
        %v1746 = vld [vmem:[%s1739 + $0x30] sm:$0xff]
        %v1747 = vld [vmem:[%s1739 + $0x38] sm:$0xff]
        %v1748 = vmax.f32 %v1731, %v1740
        %v1749 = vmax.f32 %v1732, %v1741
        %v1750 = vmax.f32 %v1733, %v1742
        %v1751 = vmax.f32 %v1734, %v1743
        %v1752 = vmax.f32 %v1735, %v1744
        %v1753 = vmax.f32 %v1736, %v1745
        %v1754 = vmax.f32 %v1737, %v1746
        %v1755 = vmax.f32 %v1738, %v1747
        %s1756 = scalar_lea.vmem %s591, 128 [#allocation2]
        %v1757 = vld [vmem:[%s1756] sm:$0xff]
        %v1758 = vld [vmem:[%s1756 + $0x8] sm:$0xff]
        %v1759 = vld [vmem:[%s1756 + $0x10] sm:$0xff]
        %v1760 = vld [vmem:[%s1756 + $0x18] sm:$0xff]
        %v1761 = vld [vmem:[%s1756 + $0x20] sm:$0xff]
        %v1762 = vld [vmem:[%s1756 + $0x28] sm:$0xff]
        %v1763 = vld [vmem:[%s1756 + $0x30] sm:$0xff]
        %v1764 = vld [vmem:[%s1756 + $0x38] sm:$0xff]
        %v1765 = vmax.f32 %v1748, %v1757
        %v1766 = vmax.f32 %v1749, %v1758
        %v1767 = vmax.f32 %v1750, %v1759
        %v1768 = vmax.f32 %v1751, %v1760
        %v1769 = vmax.f32 %v1752, %v1761
        %v1770 = vmax.f32 %v1753, %v1762
        %v1771 = vmax.f32 %v1754, %v1763
        %v1772 = vmax.f32 %v1755, %v1764
        %s1773 = scalar_lea.vmem %s591, 192 [#allocation2]
        %v1774 = vld [vmem:[%s1773] sm:$0xff]
        %v1775 = vld [vmem:[%s1773 + $0x8] sm:$0xff]
        %v1776 = vld [vmem:[%s1773 + $0x10] sm:$0xff]
        %v1777 = vld [vmem:[%s1773 + $0x18] sm:$0xff]
        %v1778 = vld [vmem:[%s1773 + $0x20] sm:$0xff]
        %v1779 = vld [vmem:[%s1773 + $0x28] sm:$0xff]
        %v1780 = vld [vmem:[%s1773 + $0x30] sm:$0xff]
        %v1781 = vld [vmem:[%s1773 + $0x38] sm:$0xff]
        %v1782 = vmax.f32 %v1765, %v1774
        %v1783 = vmax.f32 %v1766, %v1775
        %v1784 = vmax.f32 %v1767, %v1776
        %v1785 = vmax.f32 %v1768, %v1777
        %v1786 = vmax.f32 %v1769, %v1778
        %v1787 = vmax.f32 %v1770, %v1779
        %v1788 = vmax.f32 %v1771, %v1780
        %v1789 = vmax.f32 %v1772, %v1781
        %s1790 = scalar_lea.vmem %s591, 256 [#allocation2]
        %v1791 = vld [vmem:[%s1790] sm:$0xff]
        %v1792 = vld [vmem:[%s1790 + $0x8] sm:$0xff]
        %v1793 = vld [vmem:[%s1790 + $0x10] sm:$0xff]
        %v1794 = vld [vmem:[%s1790 + $0x18] sm:$0xff]
        %v1795 = vld [vmem:[%s1790 + $0x20] sm:$0xff]
        %v1796 = vld [vmem:[%s1790 + $0x28] sm:$0xff]
        %v1797 = vld [vmem:[%s1790 + $0x30] sm:$0xff]
        %v1798 = vld [vmem:[%s1790 + $0x38] sm:$0xff]
        %v1799 = vmax.f32 %v1782, %v1791
        %v1800 = vmax.f32 %v1783, %v1792
        %v1801 = vmax.f32 %v1784, %v1793
        %v1802 = vmax.f32 %v1785, %v1794
        %v1803 = vmax.f32 %v1786, %v1795
        %v1804 = vmax.f32 %v1787, %v1796
        %v1805 = vmax.f32 %v1788, %v1797
        %v1806 = vmax.f32 %v1789, %v1798
        %s1807 = scalar_lea.vmem %s591, 320 [#allocation2]
        %v1808 = vld [vmem:[%s1807] sm:$0xff]
        %v1809 = vld [vmem:[%s1807 + $0x8] sm:$0xff]
        %v1810 = vld [vmem:[%s1807 + $0x10] sm:$0xff]
        %v1811 = vld [vmem:[%s1807 + $0x18] sm:$0xff]
        %v1812 = vld [vmem:[%s1807 + $0x20] sm:$0xff]
        %v1813 = vld [vmem:[%s1807 + $0x28] sm:$0xff]
        %v1814 = vld [vmem:[%s1807 + $0x30] sm:$0xff]
        %v1815 = vld [vmem:[%s1807 + $0x38] sm:$0xff]
        %v1816 = vmax.f32 %v1799, %v1808
        %v1817 = vmax.f32 %v1800, %v1809
        %v1818 = vmax.f32 %v1801, %v1810
        %v1819 = vmax.f32 %v1802, %v1811
        %v1820 = vmax.f32 %v1803, %v1812
        %v1821 = vmax.f32 %v1804, %v1813
        %v1822 = vmax.f32 %v1805, %v1814
        %v1823 = vmax.f32 %v1806, %v1815
        %s1824 = scalar_lea.vmem %s591, 384 [#allocation2]
        %v1825 = vld [vmem:[%s1824] sm:$0xff]
        %v1826 = vld [vmem:[%s1824 + $0x8] sm:$0xff]
        %v1827 = vld [vmem:[%s1824 + $0x10] sm:$0xff]
        %v1828 = vld [vmem:[%s1824 + $0x18] sm:$0xff]
        %v1829 = vld [vmem:[%s1824 + $0x20] sm:$0xff]
        %v1830 = vld [vmem:[%s1824 + $0x28] sm:$0xff]
        %v1831 = vld [vmem:[%s1824 + $0x30] sm:$0xff]
        %v1832 = vld [vmem:[%s1824 + $0x38] sm:$0xff]
        %v1833 = vmax.f32 %v1816, %v1825
        %v1834 = vmax.f32 %v1817, %v1826
        %v1835 = vmax.f32 %v1818, %v1827
        %v1836 = vmax.f32 %v1819, %v1828
        %v1837 = vmax.f32 %v1820, %v1829
        %v1838 = vmax.f32 %v1821, %v1830
        %v1839 = vmax.f32 %v1822, %v1831
        %v1840 = vmax.f32 %v1823, %v1832
        %s1841 = scalar_lea.vmem %s591, 448 [#allocation2]
        %v1842 = vld [vmem:[%s1841] sm:$0xff]
        %v1843 = vld [vmem:[%s1841 + $0x8] sm:$0xff]
        %v1844 = vld [vmem:[%s1841 + $0x10] sm:$0xff]
        %v1845 = vld [vmem:[%s1841 + $0x18] sm:$0xff]
        %v1846 = vld [vmem:[%s1841 + $0x20] sm:$0xff]
        %v1847 = vld [vmem:[%s1841 + $0x28] sm:$0xff]
        %v1848 = vld [vmem:[%s1841 + $0x30] sm:$0xff]
        %v1849 = vld [vmem:[%s1841 + $0x38] sm:$0xff]
        %v1850 = vmax.f32 %v1833, %v1842
        %v1851 = vmax.f32 %v1834, %v1843
        %v1852 = vmax.f32 %v1835, %v1844
        %v1853 = vmax.f32 %v1836, %v1845
        %v1854 = vmax.f32 %v1837, %v1846
        %v1855 = vmax.f32 %v1838, %v1847
        %v1856 = vmax.f32 %v1839, %v1848
        %v1857 = vmax.f32 %v1840, %v1849
        %s1858 = scalar_lea.vmem %s591, 512 [#allocation2]
        %v1859 = vld [vmem:[%s1858] sm:$0xff]
        %v1860 = vld [vmem:[%s1858 + $0x8] sm:$0xff]
        %v1861 = vld [vmem:[%s1858 + $0x10] sm:$0xff]
        %v1862 = vld [vmem:[%s1858 + $0x18] sm:$0xff]
        %v1863 = vld [vmem:[%s1858 + $0x20] sm:$0xff]
        %v1864 = vld [vmem:[%s1858 + $0x28] sm:$0xff]
        %v1865 = vld [vmem:[%s1858 + $0x30] sm:$0xff]
        %v1866 = vld [vmem:[%s1858 + $0x38] sm:$0xff]
        %v1867 = vmax.f32 %v1850, %v1859
        %v1868 = vmax.f32 %v1851, %v1860
        %v1869 = vmax.f32 %v1852, %v1861
        %v1870 = vmax.f32 %v1853, %v1862
        %v1871 = vmax.f32 %v1854, %v1863
        %v1872 = vmax.f32 %v1855, %v1864
        %v1873 = vmax.f32 %v1856, %v1865
        %v1874 = vmax.f32 %v1857, %v1866
        %1883 = vrot.lane.b32.xlu0 %v1867, 96
        %v1884 = vpop.permute.xlu0 %1883
        %1885 = vrot.lane.b32.xlu0 %v1868, 96
        %v1886 = vpop.permute.xlu0 %1885
        %1887 = vrot.lane.b32.xlu0 %v1869, 96
        %v1888 = vpop.permute.xlu0 %1887
        %1889 = vrot.lane.b32.xlu0 %v1870, 96
        %v1890 = vpop.permute.xlu0 %1889
        %1891 = vrot.lane.b32.xlu0 %v1871, 96
        %v1892 = vpop.permute.xlu0 %1891
        %1893 = vrot.lane.b32.xlu0 %v1872, 96
        %v1894 = vpop.permute.xlu0 %1893
        %1895 = vrot.lane.b32.xlu0 %v1873, 96
        %v1896 = vpop.permute.xlu0 %1895
        %1897 = vrot.lane.b32.xlu0 %v1874, 96
        %v1898 = vpop.permute.xlu0 %1897
        %vm1907 = vcmask 818944
        %1908 = vst.msk [vmem:[%s630 + $0x18] sm:$0xff] %vm1907, %v1884
        %1909 = vst.msk [vmem:[%s630 + $0x38] sm:$0xff] %vm1907, %v1886
        %1910 = vst.msk [vmem:[%s630 + $0x58] sm:$0xff] %vm1907, %v1888
        %1911 = vst.msk [vmem:[%s630 + $0x78] sm:$0xff] %vm1907, %v1890
        %1912 = vst.msk [vmem:[%s630 + $0x98] sm:$0xff] %vm1907, %v1892
        %1913 = vst.msk [vmem:[%s630 + $0xb8] sm:$0xff] %vm1907, %v1894
        %1914 = vst.msk [vmem:[%s630 + $0xd8] sm:$0xff] %vm1907, %v1896
        %1915 = vst.msk [vmem:[%s630 + $0xf8] sm:$0xff] %vm1907, %v1898
        %s1916 = sand.u32 %s191, 1
        %s1917 = scalar_lea.sflag [#allocation4], %s1916
        %s1918 = sand.u32 %s191, 1
        %s1919 = smul.addr %s1918, 256
        %s1920 = scalar_lea.vmem [#allocation3], %s1919
        // Predicated region
        $region87: #{inception_b_forward.3} parent=81 // pred_check
          %p1921 = pneg %p201
        $region88: #{inception_b_forward.3} parent=81 // pred_check_branch
          %1923 = sbr.rel (%p1921) target = $region90
        $region89: #{inception_b_forward.3} parent=81 // pred_region
          %s1924 = smul.u32 8, %s21
          %1926 = vsyncadd %s1917, 0
          %s1927 = smul.addr %s1924, 4
          %s1928 = smul.addr %s1927, 8
          %s1929 = scalar_lea.hbm %s7, %s1928
          %s1930 = sshll.u32 %s1920, 4
          %s1931 = int_to_ptr.vmem [resolvable:$true] %s1930
          %s1932 = sshll.u32 %s1929, 4
          %s1933 = int_to_ptr.hbm [resolvable:$true] %s1932
          %1938 = dma.vmem_to_hbm [thread:$0]  %s1931, 4096, %s1933, %s1917, 512, 512, 32
        $region90: #{inception_b_forward.3} parent=81 // pred_fallthru
          _
      $region82: #{inception_b_forward.3} parent=5 // pred_fallthru
        _
      %p1939 = scmp.le.s32.totalorder 2, %s16
      // Predicated region
      $region91: #{inception_b_forward.3} parent=5 // pred_check
        %p1940 = pneg %p1939
      $region92: #{inception_b_forward.3} parent=5 // pred_check_branch
        %1942 = sbr.rel (%p1940) target = $region94
      $region93: #{inception_b_forward.3} parent=5 // pred_region
        %s1943 = ssub.s32 %s16, 2
        // Predicated region
        $region95: #{inception_b_forward.3} parent=93 // pred_check
          %p1944 = pneg %p207
        $region96: #{inception_b_forward.3} parent=93 // pred_check_branch
          %1946 = sbr.rel (%p1944) target = $region98
        $region97: #{inception_b_forward.3} parent=93 // pred_region
          %s1947 = sand.u32 %s192, 1
          %s1948 = scalar_lea.sflag [#allocation4], %s1947
          %s1949 = sand.u32 %s192, 1
          %s1950 = smul.addr %s1949, 256
          %s1951 = scalar_lea.vmem [#allocation3], %s1950
          %1953 = dma.done %s1948, 4096
        $region98: #{inception_b_forward.3} parent=93 // pred_fallthru
          _
      $region94: #{inception_b_forward.3} parent=5 // pred_fallthru
        _
    $region6: #{inception_b_forward.3} parent=1 // loop_footer
      %s20 = sadd.s32 1, %s16
    $region7: #{inception_b_forward.3} parent=1 // loop_footer_branch
      %15 = sbr.rel target = $region3
    $region8: #{inception_b_forward.3} parent=1 // loop_exit
      _
    %1954 = vsyncpa [#allocation4], 1
    %s1955 = scalar_lea.sflag [#allocation4], 1
    %1956 = vsyncpa %s1955, 1

// kernel: inception_b_forward.2
$region0: #{inception_b_forward.2}
  #allocation0 [shape = 'u32[]', space=smem, size = 0x4, offset = 0x4, fixed_abs, tag = 'smem constant byte address 0x4 - core index']
  #allocation1 [shape = 'u32[72,128]{1,0:T(1,128)}', space=vmem, size = 0x9000, scoped, tag = 'internal scratch']
  #allocation2 [shape = 'bf16[360,64]{1,0:T(8,128)(2,1)}', space=vmem, size = 0x16800, scoped, tag = 'scratch operand']
  #allocation3 [shape = 'f32[288,96]{1,0:T(8,128)}', space=vmem, size = 0x24000, scoped, tag = 'scratch operand']
  %s0 = inlined_call_operand.vmem [shape: bf16[2,288,4], index: 0, kind: input, shape index: {}]
  %s1 = inlined_call_operand.vmem [shape: f32[288,1], index: 1, kind: input, shape index: {}]
  %s2 = inlined_call_operand.vmem [shape: bf16[4,64], index: 2, kind: input, shape index: {}]
  %s3 = inlined_call_operand.vmem [shape: f32[1,64], index: 3, kind: input, shape index: {}]
  %s4 = inlined_call_operand.vmem [shape: bf16[9,64,96], index: 4, kind: input, shape index: {}]
  %s5 = inlined_call_operand.vmem [shape: f32[1,96], index: 5, kind: input, shape index: {}]
  %s6 = inlined_call_operand.vmem [shape: bf16[2,288,96], index: 6, kind: output, shape index: {}]
  %s7 = sld [smem:[#allocation0]]
  $region57: #{inception_b_forward.2} parent=0
    _
  %s9 = ssub.s32 1, %s7
  %s10 = scalar_select 0, %s9, %s7
  loop: start=0, step=1, limit=4
  $region2: #{inception_b_forward.2} parent=0 // loop_pre_header
    _
  $region3: #{inception_b_forward.2} parent=0 // loop_header
    %s12 = sphi 0, %s16
    %p13 = scmp.ge.s32.totalorder %s12, 4
    %s22 = sphi 0, %s24
    %s25 = sphi 0, %s22
    %s26 = sphi 0, %s25
    %s42 = sphi 0, %s26
    %s46 = sphi 0, %s46
    %s48 = sphi 0, %s46
    %s49 = sphi 0, %s48
    %s63 = sphi 0, %s49
    %s67 = sphi 0, %s67
    %s69 = sphi 0, %s67
    %s70 = sphi 0, %s69
    %s84 = sphi 0, %s70
    %s88 = sphi 0, %s88
    %s90 = sphi 0, %s88
    %s91 = sphi 0, %s90
    %s105 = sphi 0, %s91
    %s109 = sphi 0, %s109
    %s111 = sphi 0, %s109
    %s112 = sphi 0, %s111
    %s126 = sphi 0, %s112
    %s130 = sphi 0, %s130
    %s132 = sphi 0, %s130
    %s133 = sphi 0, %s132
    %s147 = sphi 0, %s133
    %s153 = sphi 0, %s155
    %s156 = sphi 0, %s153
    %s157 = sphi 0, %s156
    %s173 = sphi 0, %s157
  $region4: #{inception_b_forward.2} parent=0 // loop_header_branch
    %15 = sbr.rel (%p13) target = $region8
  $region5: #{inception_b_forward.2} parent=0 // loop_body
    %s17 = ssub.s32 %s12, 1
    %s18 = ssub.s32 %s12, 2
    %s19 = sadd.s32 %s12, 1
    %s20 = ssub.s32 %s12, %s19
    %p21 = scmp.eq.s32.totalorder %s20, 0
    %s23 = sadd.s32 %s22, 1
    %s24 = scalar_select %p21, %s22, %s23
    %p27 = pneg %p21
    %p28 = scmp.eq.s32.totalorder %s12, 1
    %p29 = por %p27, %p28
    %p30 = scmp.ne.s32.totalorder %s22, %s25
    %p31 = scmp.eq.s32.totalorder %s12, 0
    %p32 = por %p30, %p31
    %p33 = scmp.ne.s32.totalorder %s22, %s25
    %p34 = scmp.eq.s32.totalorder %s17, 1
    %p35 = por %p33, %p34
    %p36 = scmp.ne.s32.totalorder %s25, %s26
    %p37 = scmp.eq.s32.totalorder %s17, 0
    %p38 = por %p36, %p37
    %p39 = scmp.ne.s32.totalorder %s25, %s26
    %p40 = scmp.eq.s32.totalorder %s18, 1
    %p41 = por %p39, %p40
    %p43 = scmp.ne.s32.totalorder %s26, %s42
    %p44 = scmp.eq.s32.totalorder %s18, 0
    %p45 = por %p43, %p44
    %s47 = sadd.s32 %s46, 1
    %p50 = scmp.eq.s32.totalorder %s12, 1
    %p51 = scmp.ne.s32.totalorder %s46, %s48
    %p52 = scmp.eq.s32.totalorder %s12, 0
    %p53 = por %p51, %p52
    %p54 = scmp.ne.s32.totalorder %s46, %s48
    %p55 = scmp.eq.s32.totalorder %s17, 1
    %p56 = por %p54, %p55
    %p57 = scmp.ne.s32.totalorder %s48, %s49
    %p58 = scmp.eq.s32.totalorder %s17, 0
    %p59 = por %p57, %p58
    %p60 = scmp.ne.s32.totalorder %s48, %s49
    %p61 = scmp.eq.s32.totalorder %s18, 1
    %p62 = por %p60, %p61
    %p64 = scmp.ne.s32.totalorder %s49, %s63
    %p65 = scmp.eq.s32.totalorder %s18, 0
    %p66 = por %p64, %p65
    %s68 = sadd.s32 %s67, 1
    %p71 = scmp.eq.s32.totalorder %s12, 1
    %p72 = scmp.ne.s32.totalorder %s67, %s69
    %p73 = scmp.eq.s32.totalorder %s12, 0
    %p74 = por %p72, %p73
    %p75 = scmp.ne.s32.totalorder %s67, %s69
    %p76 = scmp.eq.s32.totalorder %s17, 1
    %p77 = por %p75, %p76
    %p78 = scmp.ne.s32.totalorder %s69, %s70
    %p79 = scmp.eq.s32.totalorder %s17, 0
    %p80 = por %p78, %p79
    %p81 = scmp.ne.s32.totalorder %s69, %s70
    %p82 = scmp.eq.s32.totalorder %s18, 1
    %p83 = por %p81, %p82
    %p85 = scmp.ne.s32.totalorder %s70, %s84
    %p86 = scmp.eq.s32.totalorder %s18, 0
    %p87 = por %p85, %p86
    %s89 = sadd.s32 %s88, 1
    %p92 = scmp.eq.s32.totalorder %s12, 1
    %p93 = scmp.ne.s32.totalorder %s88, %s90
    %p94 = scmp.eq.s32.totalorder %s12, 0
    %p95 = por %p93, %p94
    %p96 = scmp.ne.s32.totalorder %s88, %s90
    %p97 = scmp.eq.s32.totalorder %s17, 1
    %p98 = por %p96, %p97
    %p99 = scmp.ne.s32.totalorder %s90, %s91
    %p100 = scmp.eq.s32.totalorder %s17, 0
    %p101 = por %p99, %p100
    %p102 = scmp.ne.s32.totalorder %s90, %s91
    %p103 = scmp.eq.s32.totalorder %s18, 1
    %p104 = por %p102, %p103
    %p106 = scmp.ne.s32.totalorder %s91, %s105
    %p107 = scmp.eq.s32.totalorder %s18, 0
    %p108 = por %p106, %p107
    %s110 = sadd.s32 %s109, 1
    %p113 = scmp.eq.s32.totalorder %s12, 1
    %p114 = scmp.ne.s32.totalorder %s109, %s111
    %p115 = scmp.eq.s32.totalorder %s12, 0
    %p116 = por %p114, %p115
    %p117 = scmp.ne.s32.totalorder %s109, %s111
    %p118 = scmp.eq.s32.totalorder %s17, 1
    %p119 = por %p117, %p118
    %p120 = scmp.ne.s32.totalorder %s111, %s112
    %p121 = scmp.eq.s32.totalorder %s17, 0
    %p122 = por %p120, %p121
    %p123 = scmp.ne.s32.totalorder %s111, %s112
    %p124 = scmp.eq.s32.totalorder %s18, 1
    %p125 = por %p123, %p124
    %p127 = scmp.ne.s32.totalorder %s112, %s126
    %p128 = scmp.eq.s32.totalorder %s18, 0
    %p129 = por %p127, %p128
    %s131 = sadd.s32 %s130, 1
    %p134 = scmp.eq.s32.totalorder %s12, 1
    %p135 = scmp.ne.s32.totalorder %s130, %s132
    %p136 = scmp.eq.s32.totalorder %s12, 0
    %p137 = por %p135, %p136
    %p138 = scmp.ne.s32.totalorder %s130, %s132
    %p139 = scmp.eq.s32.totalorder %s17, 1
    %p140 = por %p138, %p139
    %p141 = scmp.ne.s32.totalorder %s132, %s133
    %p142 = scmp.eq.s32.totalorder %s17, 0
    %p143 = por %p141, %p142
    %p144 = scmp.ne.s32.totalorder %s132, %s133
    %p145 = scmp.eq.s32.totalorder %s18, 1
    %p146 = por %p144, %p145
    %p148 = scmp.ne.s32.totalorder %s133, %s147
    %p149 = scmp.eq.s32.totalorder %s18, 0
    %p150 = por %p148, %p149
    %s151 = ssub.s32 %s12, %s19
    %p152 = scmp.eq.s32.totalorder %s151, 0
    %s154 = sadd.s32 %s153, 1
    %s155 = scalar_select %p152, %s153, %s154
    %p158 = pneg %p152
    %p159 = scmp.eq.s32.totalorder %s12, 1
    %p160 = por %p158, %p159
    %p161 = scmp.ne.s32.totalorder %s153, %s156
    %p162 = scmp.eq.s32.totalorder %s12, 0
    %p163 = por %p161, %p162
    %p164 = scmp.ne.s32.totalorder %s153, %s156
    %p165 = scmp.eq.s32.totalorder %s17, 1
    %p166 = por %p164, %p165
    %p167 = scmp.ne.s32.totalorder %s156, %s157
    %p168 = scmp.eq.s32.totalorder %s17, 0
    %p169 = por %p167, %p168
    %p170 = scmp.ne.s32.totalorder %s156, %s157
    %p171 = scmp.eq.s32.totalorder %s18, 1
    %p172 = por %p170, %p171
    %p174 = scmp.ne.s32.totalorder %s157, %s173
    %p175 = scmp.eq.s32.totalorder %s18, 0
    %p176 = por %p174, %p175
    %p177 = scmp.le.s32.totalorder 1, %s12
    %p178 = scmp.lt.s32.totalorder %s12, 3
    %p179 = pnand %p177, %p178
    %p180 = pneg %p179
    // Predicated region
    $region9: #{inception_b_forward.2} parent=5 // pred_check
      _
    $region10: #{inception_b_forward.2} parent=5 // pred_check_branch
      %182 = sbr.rel (%p179) target = $region12
    $region11: #{inception_b_forward.2} parent=5 // pred_region
      %s183 = ssub.s32 %s12, 1
      // Predicated region
      $region13: #{inception_b_forward.2} parent=11 // pred_check
        %p184 = pneg %p59
      $region14: #{inception_b_forward.2} parent=11 // pred_check_branch
        %186 = sbr.rel (%p184) target = $region16
      $region15: #{inception_b_forward.2} parent=11 // pred_region
        _
      $region16: #{inception_b_forward.2} parent=11 // pred_fallthru
        _
      // Predicated region
      $region17: #{inception_b_forward.2} parent=11 // pred_check
        %p187 = pneg %p80
      $region18: #{inception_b_forward.2} parent=11 // pred_check_branch
        %189 = sbr.rel (%p187) target = $region20
      $region19: #{inception_b_forward.2} parent=11 // pred_region
        _
      $region20: #{inception_b_forward.2} parent=11 // pred_fallthru
        _
      // Predicated region
      $region21: #{inception_b_forward.2} parent=11 // pred_check
        %p190 = pneg %p101
      $region22: #{inception_b_forward.2} parent=11 // pred_check_branch
        %192 = sbr.rel (%p190) target = $region24
      $region23: #{inception_b_forward.2} parent=11 // pred_region
        _
      $region24: #{inception_b_forward.2} parent=11 // pred_fallthru
        _
      // Predicated region
      $region25: #{inception_b_forward.2} parent=11 // pred_check
        %p193 = pneg %p122
      $region26: #{inception_b_forward.2} parent=11 // pred_check_branch
        %195 = sbr.rel (%p193) target = $region28
      $region27: #{inception_b_forward.2} parent=11 // pred_region
        _
      $region28: #{inception_b_forward.2} parent=11 // pred_fallthru
        _
      // Predicated region
      $region29: #{inception_b_forward.2} parent=11 // pred_check
        %p196 = pneg %p143
      $region30: #{inception_b_forward.2} parent=11 // pred_check_branch
        %198 = sbr.rel (%p196) target = $region32
      $region31: #{inception_b_forward.2} parent=11 // pred_region
        _
      $region32: #{inception_b_forward.2} parent=11 // pred_fallthru
        _
    $region12: #{inception_b_forward.2} parent=5 // pred_fallthru
      _
    %p199 = scmp.lt.s32.totalorder %s12, 2
    // Predicated region
    $region33: #{inception_b_forward.2} parent=5 // pred_check
      %p200 = pneg %p199
    $region34: #{inception_b_forward.2} parent=5 // pred_check_branch
      %202 = sbr.rel (%p200) target = $region36
    $region35: #{inception_b_forward.2} parent=5 // pred_region
      // Predicated region
      $region37: #{inception_b_forward.2} parent=35 // pred_check
        %p203 = pneg %p32
      $region38: #{inception_b_forward.2} parent=35 // pred_check_branch
        %205 = sbr.rel (%p203) target = $region40
      $region39: #{inception_b_forward.2} parent=35 // pred_region
        %p206 = scmp.lt.s32.totalorder %s12, 1
        %s207 = scalar_select %p206, %s12, 1
        %s208 = smul.addr %s207, 36
        %s209 = smul.addr %s208, 4
        %s210 = scalar_lea.vmem %s0, %s209
      $region40: #{inception_b_forward.2} parent=35 // pred_fallthru
        _
    $region36: #{inception_b_forward.2} parent=5 // pred_fallthru
      _
    %p211 = scmp.le.s32.totalorder 1, %s12
    %p212 = scmp.lt.s32.totalorder %s12, 3
    %p213 = pnand %p211, %p212
    %p214 = pneg %p213
    // Predicated region
    $region41: #{inception_b_forward.2} parent=5 // pred_check
      _
    $region42: #{inception_b_forward.2} parent=5 // pred_check_branch
      %216 = sbr.rel (%p213) target = $region44
    $region43: #{inception_b_forward.2} parent=5 // pred_region
      %s217 = ssub.s32 %s12, 1
      %p218 = scmp.lt.s32.totalorder %s17, 1
      %s219 = scalar_select %p218, %s17, 1
      %s220 = smul.addr %s219, 36
      %s221 = smul.addr %s220, 4
      %s222 = scalar_lea.vmem %s0, %s221
      %p223 = pneg %p38
      %p224 = pneg %p35
      %p225 = pneg %p59
      %p226 = pneg %p56
      %p227 = pneg %p80
      %p228 = pneg %p77
      %p229 = pneg %p101
      %p230 = pneg %p98
      %p231 = pneg %p122
      %p232 = pneg %p119
      %p233 = pneg %p143
      %p234 = pneg %p140
      %p235 = pneg %p169
      %p236 = pneg %p166
      %p237 = scmp.lt.s32.totalorder %s17, 1
      %s238 = scalar_select %p237, %s17, 1
      %s239 = smul.addr %s238, 36
      %s240 = smul.addr %s239, 4
      %s241 = scalar_lea.vmem %s6, %s240
      %p242 = scmp.lt.s32.totalorder %s17, 1
      %s243 = scalar_select %p242, %s17, 1
      %s244 = smul.addr %s243, 36
      %s245 = smul.addr %s244, 4
      %s246 = scalar_lea.vmem %s0, %s245
      %p247 = scmp.lt.s32.totalorder %s17, 1
      %s248 = scalar_select %p247, %s17, 1
      %s249 = smul.addr %s248, 36
      %s250 = smul.addr %s249, 4
      %s251 = scalar_lea.vmem %s6, %s250
      %v253 = vld [vmem:[%s246] sm:$0xf]
      %v254 = vld [vmem:[%s246 + $0x4] sm:$0xf]
      %v255 = vld [vmem:[%s246 + $0x8] sm:$0xf]
      %v256 = vld [vmem:[%s246 + $0xc] sm:$0xf]
      %v257 = vld [vmem:[%s246 + $0x10] sm:$0xf]
      %v258 = vld [vmem:[%s246 + $0x14] sm:$0xf]
      %v259 = vld [vmem:[%s246 + $0x18] sm:$0xf]
      %v260 = vld [vmem:[%s246 + $0x1c] sm:$0xf]
      %v261 = vld [vmem:[%s246 + $0x20] sm:$0xf]
      %v262 = vld [vmem:[%s246 + $0x24] sm:$0xf]
      %v263 = vld [vmem:[%s246 + $0x28] sm:$0xf]
      %v264 = vld [vmem:[%s246 + $0x2c] sm:$0xf]
      %v265 = vld [vmem:[%s246 + $0x30] sm:$0xf]
      %v266 = vld [vmem:[%s246 + $0x34] sm:$0xf]
      %v267 = vld [vmem:[%s246 + $0x38] sm:$0xf]
      %v268 = vld [vmem:[%s246 + $0x3c] sm:$0xf]
      %v269 = vld [vmem:[%s246 + $0x40] sm:$0xf]
      %v270 = vld [vmem:[%s246 + $0x44] sm:$0xf]
      %v271 = vld [vmem:[%s246 + $0x48] sm:$0xf]
      %v272 = vld [vmem:[%s246 + $0x4c] sm:$0xf]
      %v273 = vld [vmem:[%s246 + $0x50] sm:$0xf]
      %v274 = vld [vmem:[%s246 + $0x54] sm:$0xf]
      %v275 = vld [vmem:[%s246 + $0x58] sm:$0xf]
      %v276 = vld [vmem:[%s246 + $0x5c] sm:$0xf]
      %v277 = vld [vmem:[%s246 + $0x60] sm:$0xf]
      %v278 = vld [vmem:[%s246 + $0x64] sm:$0xf]
      %v279 = vld [vmem:[%s246 + $0x68] sm:$0xf]
      %v280 = vld [vmem:[%s246 + $0x6c] sm:$0xf]
      %v281 = vld [vmem:[%s246 + $0x70] sm:$0xf]
      %v282 = vld [vmem:[%s246 + $0x74] sm:$0xf]
      %v283 = vld [vmem:[%s246 + $0x78] sm:$0xf]
      %v284 = vld [vmem:[%s246 + $0x7c] sm:$0xf]
      %v285 = vld [vmem:[%s246 + $0x80] sm:$0xf]
      %v286 = vld [vmem:[%s246 + $0x84] sm:$0xf]
      %v287 = vld [vmem:[%s246 + $0x88] sm:$0xf]
      %v288 = vld [vmem:[%s246 + $0x8c] sm:$0xf]
      %v289 = vld [vmem:[%s2] sm:$0x3]
      %v290 = vld [vmem:[%s3] sm:$0x1]
      %v292 = vperm.slane %v290, 0
      %v330 = vunpack.c.l.b16 %v253
      %v331 = vunpack.c.l.b16 %v254
      %v332 = vunpack.c.l.b16 %v255
      %v333 = vunpack.c.l.b16 %v256
      %v334 = vunpack.c.l.b16 %v257
      %v335 = vunpack.c.l.b16 %v258
      %v336 = vunpack.c.l.b16 %v259
      %v337 = vunpack.c.l.b16 %v260
      %v338 = vunpack.c.l.b16 %v261
      %v339 = vunpack.c.l.b16 %v262
      %v340 = vunpack.c.l.b16 %v263
      %v341 = vunpack.c.l.b16 %v264
      %v342 = vunpack.c.l.b16 %v265
      %v343 = vunpack.c.l.b16 %v266
      %v344 = vunpack.c.l.b16 %v267
      %v345 = vunpack.c.l.b16 %v268
      %v346 = vunpack.c.l.b16 %v269
      %v347 = vunpack.c.l.b16 %v270
      %v348 = vunpack.c.l.b16 %v271
      %v349 = vunpack.c.l.b16 %v272
      %v350 = vunpack.c.l.b16 %v273
      %v351 = vunpack.c.l.b16 %v274
      %v352 = vunpack.c.l.b16 %v275
      %v353 = vunpack.c.l.b16 %v276
      %v354 = vunpack.c.l.b16 %v277
      %v355 = vunpack.c.l.b16 %v278
      %v356 = vunpack.c.l.b16 %v279
      %v357 = vunpack.c.l.b16 %v280
      %v358 = vunpack.c.l.b16 %v281
      %v359 = vunpack.c.l.b16 %v282
      %v360 = vunpack.c.l.b16 %v283
      %v361 = vunpack.c.l.b16 %v284
      %v362 = vunpack.c.l.b16 %v285
      %v363 = vunpack.c.l.b16 %v286
      %v364 = vunpack.c.l.b16 %v287
      %v365 = vunpack.c.l.b16 %v288
      %v366 = vpack.c.b16 %v331, %v330
      %v367 = vpack.c.b16 %v333, %v332
      %v368 = vpack.c.b16 %v335, %v334
      %v369 = vpack.c.b16 %v337, %v336
      %v370 = vpack.c.b16 %v339, %v338
      %v371 = vpack.c.b16 %v341, %v340
      %v372 = vpack.c.b16 %v343, %v342
      %v373 = vpack.c.b16 %v345, %v344
      %v374 = vpack.c.b16 %v347, %v346
      %v375 = vpack.c.b16 %v349, %v348
      %v376 = vpack.c.b16 %v351, %v350
      %v377 = vpack.c.b16 %v353, %v352
      %v378 = vpack.c.b16 %v355, %v354
      %v379 = vpack.c.b16 %v357, %v356
      %v380 = vpack.c.b16 %v359, %v358
      %v381 = vpack.c.b16 %v361, %v360
      %v382 = vpack.c.b16 %v363, %v362
      %v383 = vpack.c.b16 %v365, %v364
      %vm384 = vcmask 31744
      %v386 = vsel %vm384, %v366, 0
      %v389 = vsel %vm384, %v367, 0
      %v392 = vsel %vm384, %v368, 0
      %v395 = vsel %vm384, %v369, 0
      %v398 = vsel %vm384, %v370, 0
      %v401 = vsel %vm384, %v371, 0
      %v404 = vsel %vm384, %v372, 0
      %v407 = vsel %vm384, %v373, 0
      %v410 = vsel %vm384, %v374, 0
      %v413 = vsel %vm384, %v375, 0
      %v416 = vsel %vm384, %v376, 0
      %v419 = vsel %vm384, %v377, 0
      %v422 = vsel %vm384, %v378, 0
      %v425 = vsel %vm384, %v379, 0
      %v428 = vsel %vm384, %v380, 0
      %v431 = vsel %vm384, %v381, 0
      %v434 = vsel %vm384, %v382, 0
      %v437 = vsel %vm384, %v383, 0
      %vm439 = vcmask 1041408
      %v441 = vsel %vm439, %v289, 0
      %443 = vmatpush.bf16.msra.mxu0 0
      %444 = vmatpush.bf16.msra.mxu0 0
      %445 = vmatpush.bf16.msra.mxu0 0
      %446 = vmatpush.bf16.msra.mxu0 0
      %447 = vmatpush.bf16.msra.mxu0 0
      %448 = vmatpush.bf16.msra.mxu0 0
      %449 = vmatpush.bf16.msra.mxu0 0
      %450 = vmatpush.bf16.msra.mxu0 %v441
      %451 = vmatmul.bf16.gmra.mxu0 %v386
      %v452 = vpop.f32.mrf.mxu0
      %v453 = vadd.f32 %v292, %v452
      %v454 = vpop.f32.mrf.mxu0
      %v455 = vadd.f32 %v292, %v454
      %456 = vmatmul.bf16.gmra.mxu0 %v389
      %v457 = vpop.f32.mrf.mxu0
      %v458 = vadd.f32 %v292, %v457
      %v459 = vpop.f32.mrf.mxu0
      %v460 = vadd.f32 %v292, %v459
      %461 = vmatmul.bf16.gmra.mxu0 %v392
      %v462 = vpop.f32.mrf.mxu0
      %v463 = vadd.f32 %v292, %v462
      %v464 = vpop.f32.mrf.mxu0
      %v465 = vadd.f32 %v292, %v464
      %466 = vmatmul.bf16.gmra.mxu0 %v395
      %v467 = vpop.f32.mrf.mxu0
      %v468 = vadd.f32 %v292, %v467
      %v469 = vpop.f32.mrf.mxu0
      %v470 = vadd.f32 %v292, %v469
      %471 = vmatmul.bf16.gmra.mxu0 %v398
      %v472 = vpop.f32.mrf.mxu0
      %v473 = vadd.f32 %v292, %v472
      %v474 = vpop.f32.mrf.mxu0
      %v475 = vadd.f32 %v292, %v474
      %476 = vmatmul.bf16.gmra.mxu0 %v401
      %v477 = vpop.f32.mrf.mxu0
      %v478 = vadd.f32 %v292, %v477
      %v479 = vpop.f32.mrf.mxu0
      %v480 = vadd.f32 %v292, %v479
      %481 = vmatmul.bf16.gmra.mxu0 %v404
      %v482 = vpop.f32.mrf.mxu0
      %v483 = vadd.f32 %v292, %v482
      %v484 = vpop.f32.mrf.mxu0
      %v485 = vadd.f32 %v292, %v484
      %486 = vmatmul.bf16.gmra.mxu0 %v407
      %v487 = vpop.f32.mrf.mxu0
      %v488 = vadd.f32 %v292, %v487
      %v489 = vpop.f32.mrf.mxu0
      %v490 = vadd.f32 %v292, %v489
      %491 = vmatmul.bf16.gmra.mxu0 %v410
      %v492 = vpop.f32.mrf.mxu0
      %v493 = vadd.f32 %v292, %v492
      %v494 = vpop.f32.mrf.mxu0
      %v495 = vadd.f32 %v292, %v494
      %496 = vmatmul.bf16.gmra.mxu0 %v413
      %v497 = vpop.f32.mrf.mxu0
      %v498 = vadd.f32 %v292, %v497
      %v499 = vpop.f32.mrf.mxu0
      %v500 = vadd.f32 %v292, %v499
      %501 = vmatmul.bf16.gmra.mxu0 %v416
      %v502 = vpop.f32.mrf.mxu0
      %v503 = vadd.f32 %v292, %v502
      %v504 = vpop.f32.mrf.mxu0
      %v505 = vadd.f32 %v292, %v504
      %506 = vmatmul.bf16.gmra.mxu0 %v419
      %v507 = vpop.f32.mrf.mxu0
      %v508 = vadd.f32 %v292, %v507
      %v509 = vpop.f32.mrf.mxu0
      %v510 = vadd.f32 %v292, %v509
      %511 = vmatmul.bf16.gmra.mxu0 %v422
      %v512 = vpop.f32.mrf.mxu0
      %v513 = vadd.f32 %v292, %v512
      %v514 = vpop.f32.mrf.mxu0
      %v515 = vadd.f32 %v292, %v514
      %516 = vmatmul.bf16.gmra.mxu0 %v425
      %v517 = vpop.f32.mrf.mxu0
      %v518 = vadd.f32 %v292, %v517
      %v519 = vpop.f32.mrf.mxu0
      %v520 = vadd.f32 %v292, %v519
      %521 = vmatmul.bf16.gmra.mxu0 %v428
      %v522 = vpop.f32.mrf.mxu0
      %v523 = vadd.f32 %v292, %v522
      %v524 = vpop.f32.mrf.mxu0
      %v525 = vadd.f32 %v292, %v524
      %526 = vmatmul.bf16.gmra.mxu0 %v431
      %v527 = vpop.f32.mrf.mxu0
      %v528 = vadd.f32 %v292, %v527
      %v529 = vpop.f32.mrf.mxu0
      %v530 = vadd.f32 %v292, %v529
      %531 = vmatmul.bf16.gmra.mxu0 %v434
      %v532 = vpop.f32.mrf.mxu0
      %v533 = vadd.f32 %v292, %v532
      %v534 = vpop.f32.mrf.mxu0
      %v535 = vadd.f32 %v292, %v534
      %536 = vmatmul.bf16.gmra.mxu0 %v437
      %v537 = vpop.f32.mrf.mxu0
      %v538 = vadd.f32 %v292, %v537
      %v539 = vpop.f32.mrf.mxu0
      %v540 = vadd.f32 %v292, %v539
      %541 = vdwg.mxu0
      %v542 = vmax.f32 %v453, 0.0
      %v543 = vmax.f32 %v455, 0.0
      %v544 = vmax.f32 %v458, 0.0
      %v545 = vmax.f32 %v460, 0.0
      %v546 = vmax.f32 %v463, 0.0
      %v547 = vmax.f32 %v465, 0.0
      %v548 = vmax.f32 %v468, 0.0
      %v549 = vmax.f32 %v470, 0.0
      %v550 = vmax.f32 %v473, 0.0
      %v551 = vmax.f32 %v475, 0.0
      %v552 = vmax.f32 %v478, 0.0
      %v553 = vmax.f32 %v480, 0.0
      %v554 = vmax.f32 %v483, 0.0
      %v555 = vmax.f32 %v485, 0.0
      %v556 = vmax.f32 %v488, 0.0
      %v557 = vmax.f32 %v490, 0.0
      %v558 = vmax.f32 %v493, 0.0
      %v559 = vmax.f32 %v495, 0.0
      %v560 = vmax.f32 %v498, 0.0
      %v561 = vmax.f32 %v500, 0.0
      %v562 = vmax.f32 %v503, 0.0
      %v563 = vmax.f32 %v505, 0.0
      %v564 = vmax.f32 %v508, 0.0
      %v565 = vmax.f32 %v510, 0.0
      %v566 = vmax.f32 %v513, 0.0
      %v567 = vmax.f32 %v515, 0.0
      %v568 = vmax.f32 %v518, 0.0
      %v569 = vmax.f32 %v520, 0.0
      %v570 = vmax.f32 %v523, 0.0
      %v571 = vmax.f32 %v525, 0.0
      %v572 = vmax.f32 %v528, 0.0
      %v573 = vmax.f32 %v530, 0.0
      %v574 = vmax.f32 %v533, 0.0
      %v575 = vmax.f32 %v535, 0.0
      %v576 = vmax.f32 %v538, 0.0
      %v577 = vmax.f32 %v540, 0.0
      %v578 = vld [vmem:[%s1] sm:$0xff]
      %v579 = vld [vmem:[%s1 + $0x8] sm:$0xff]
      %v580 = vld [vmem:[%s1 + $0x10] sm:$0xff]
      %v581 = vld [vmem:[%s1 + $0x18] sm:$0xff]
      %v582 = vld [vmem:[%s1 + $0x20] sm:$0xff]
      %v583 = vld [vmem:[%s1 + $0x28] sm:$0xff]
      %v584 = vld [vmem:[%s1 + $0x30] sm:$0xff]
      %v585 = vld [vmem:[%s1 + $0x38] sm:$0xff]
      %v586 = vld [vmem:[%s1 + $0x40] sm:$0xff]
      %v587 = vld [vmem:[%s1 + $0x48] sm:$0xff]
      %v588 = vld [vmem:[%s1 + $0x50] sm:$0xff]
      %v589 = vld [vmem:[%s1 + $0x58] sm:$0xff]
      %v590 = vld [vmem:[%s1 + $0x60] sm:$0xff]
      %v591 = vld [vmem:[%s1 + $0x68] sm:$0xff]
      %v592 = vld [vmem:[%s1 + $0x70] sm:$0xff]
      %v593 = vld [vmem:[%s1 + $0x78] sm:$0xff]
      %v594 = vld [vmem:[%s1 + $0x80] sm:$0xff]
      %v595 = vld [vmem:[%s1 + $0x88] sm:$0xff]
      %v596 = vld [vmem:[%s1 + $0x90] sm:$0xff]
      %v597 = vld [vmem:[%s1 + $0x98] sm:$0xff]
      %v598 = vld [vmem:[%s1 + $0xa0] sm:$0xff]
      %v599 = vld [vmem:[%s1 + $0xa8] sm:$0xff]
      %v600 = vld [vmem:[%s1 + $0xb0] sm:$0xff]
      %v601 = vld [vmem:[%s1 + $0xb8] sm:$0xff]
      %v602 = vld [vmem:[%s1 + $0xc0] sm:$0xff]
      %v603 = vld [vmem:[%s1 + $0xc8] sm:$0xff]
      %v604 = vld [vmem:[%s1 + $0xd0] sm:$0xff]
      %v605 = vld [vmem:[%s1 + $0xd8] sm:$0xff]
      %v606 = vld [vmem:[%s1 + $0xe0] sm:$0xff]
      %v607 = vld [vmem:[%s1 + $0xe8] sm:$0xff]
      %v608 = vld [vmem:[%s1 + $0xf0] sm:$0xff]
      %v609 = vld [vmem:[%s1 + $0xf8] sm:$0xff]
      %v610 = vld [vmem:[%s1 + $0x100] sm:$0xff]
      %v611 = vld [vmem:[%s1 + $0x108] sm:$0xff]
      %v612 = vld [vmem:[%s1 + $0x110] sm:$0xff]
      %v613 = vld [vmem:[%s1 + $0x118] sm:$0xff]
      %615 = vset.pattern.permute.xlu0 0
      %616 = vperm.xlu0 %615, %v578
      %v617 = vpop.permute.xlu0 %616
      %620 = vset.pattern.permute.xlu0 0
      %621 = vperm.xlu0 %620, %v579
      %v622 = vpop.permute.xlu0 %621
      %625 = vset.pattern.permute.xlu0 0
      %626 = vperm.xlu0 %625, %v580
      %v627 = vpop.permute.xlu0 %626
      %630 = vset.pattern.permute.xlu0 0
      %631 = vperm.xlu0 %630, %v581
      %v632 = vpop.permute.xlu0 %631
      %635 = vset.pattern.permute.xlu0 0
      %636 = vperm.xlu0 %635, %v582
      %v637 = vpop.permute.xlu0 %636
      %640 = vset.pattern.permute.xlu0 0
      %641 = vperm.xlu0 %640, %v583
      %v642 = vpop.permute.xlu0 %641
      %645 = vset.pattern.permute.xlu0 0
      %646 = vperm.xlu0 %645, %v584
      %v647 = vpop.permute.xlu0 %646
      %650 = vset.pattern.permute.xlu0 0
      %651 = vperm.xlu0 %650, %v585
      %v652 = vpop.permute.xlu0 %651
      %655 = vset.pattern.permute.xlu0 0
      %656 = vperm.xlu0 %655, %v586
      %v657 = vpop.permute.xlu0 %656
      %660 = vset.pattern.permute.xlu0 0
      %661 = vperm.xlu0 %660, %v587
      %v662 = vpop.permute.xlu0 %661
      %665 = vset.pattern.permute.xlu0 0
      %666 = vperm.xlu0 %665, %v588
      %v667 = vpop.permute.xlu0 %666
      %670 = vset.pattern.permute.xlu0 0
      %671 = vperm.xlu0 %670, %v589
      %v672 = vpop.permute.xlu0 %671
      %675 = vset.pattern.permute.xlu0 0
      %676 = vperm.xlu0 %675, %v590
      %v677 = vpop.permute.xlu0 %676
      %680 = vset.pattern.permute.xlu0 0
      %681 = vperm.xlu0 %680, %v591
      %v682 = vpop.permute.xlu0 %681
      %685 = vset.pattern.permute.xlu0 0
      %686 = vperm.xlu0 %685, %v592
      %v687 = vpop.permute.xlu0 %686
      %690 = vset.pattern.permute.xlu0 0
      %691 = vperm.xlu0 %690, %v593
      %v692 = vpop.permute.xlu0 %691
      %695 = vset.pattern.permute.xlu0 0
      %696 = vperm.xlu0 %695, %v594
      %v697 = vpop.permute.xlu0 %696
      %700 = vset.pattern.permute.xlu0 0
      %701 = vperm.xlu0 %700, %v595
      %v702 = vpop.permute.xlu0 %701
      %705 = vset.pattern.permute.xlu0 0
      %706 = vperm.xlu0 %705, %v596
      %v707 = vpop.permute.xlu0 %706
      %710 = vset.pattern.permute.xlu0 0
      %711 = vperm.xlu0 %710, %v597
      %v712 = vpop.permute.xlu0 %711
      %715 = vset.pattern.permute.xlu0 0
      %716 = vperm.xlu0 %715, %v598
      %v717 = vpop.permute.xlu0 %716
      %720 = vset.pattern.permute.xlu0 0
      %721 = vperm.xlu0 %720, %v599
      %v722 = vpop.permute.xlu0 %721
      %725 = vset.pattern.permute.xlu0 0
      %726 = vperm.xlu0 %725, %v600
      %v727 = vpop.permute.xlu0 %726
      %730 = vset.pattern.permute.xlu0 0
      %731 = vperm.xlu0 %730, %v601
      %v732 = vpop.permute.xlu0 %731
      %735 = vset.pattern.permute.xlu0 0
      %736 = vperm.xlu0 %735, %v602
      %v737 = vpop.permute.xlu0 %736
      %740 = vset.pattern.permute.xlu0 0
      %741 = vperm.xlu0 %740, %v603
      %v742 = vpop.permute.xlu0 %741
      %745 = vset.pattern.permute.xlu0 0
      %746 = vperm.xlu0 %745, %v604
      %v747 = vpop.permute.xlu0 %746
      %750 = vset.pattern.permute.xlu0 0
      %751 = vperm.xlu0 %750, %v605
      %v752 = vpop.permute.xlu0 %751
      %755 = vset.pattern.permute.xlu0 0
      %756 = vperm.xlu0 %755, %v606
      %v757 = vpop.permute.xlu0 %756
      %760 = vset.pattern.permute.xlu0 0
      %761 = vperm.xlu0 %760, %v607
      %v762 = vpop.permute.xlu0 %761
      %765 = vset.pattern.permute.xlu0 0
      %766 = vperm.xlu0 %765, %v608
      %v767 = vpop.permute.xlu0 %766
      %770 = vset.pattern.permute.xlu0 0
      %771 = vperm.xlu0 %770, %v609
      %v772 = vpop.permute.xlu0 %771
      %775 = vset.pattern.permute.xlu0 0
      %776 = vperm.xlu0 %775, %v610
      %v777 = vpop.permute.xlu0 %776
      %780 = vset.pattern.permute.xlu0 0
      %781 = vperm.xlu0 %780, %v611
      %v782 = vpop.permute.xlu0 %781
      %785 = vset.pattern.permute.xlu0 0
      %786 = vperm.xlu0 %785, %v612
      %v787 = vpop.permute.xlu0 %786
      %790 = vset.pattern.permute.xlu0 0
      %791 = vperm.xlu0 %790, %v613
      %v792 = vpop.permute.xlu0 %791
      %v794 = vmul.f32 %v542, %v617
      %v795 = vmul.f32 %v543, %v622
      %v796 = vmul.f32 %v544, %v627
      %v797 = vmul.f32 %v545, %v632
      %v798 = vmul.f32 %v546, %v637
      %v799 = vmul.f32 %v547, %v642
      %v800 = vmul.f32 %v548, %v647
      %v801 = vmul.f32 %v549, %v652
      %v802 = vmul.f32 %v550, %v657
      %v803 = vmul.f32 %v551, %v662
      %v804 = vmul.f32 %v552, %v667
      %v805 = vmul.f32 %v553, %v672
      %v806 = vmul.f32 %v554, %v677
      %v807 = vmul.f32 %v555, %v682
      %v808 = vmul.f32 %v556, %v687
      %v809 = vmul.f32 %v557, %v692
      %v810 = vmul.f32 %v558, %v697
      %v811 = vmul.f32 %v559, %v702
      %v812 = vmul.f32 %v560, %v707
      %v813 = vmul.f32 %v561, %v712
      %v814 = vmul.f32 %v562, %v717
      %v815 = vmul.f32 %v563, %v722
      %v816 = vmul.f32 %v564, %v727
      %v817 = vmul.f32 %v565, %v732
      %v818 = vmul.f32 %v566, %v737
      %v819 = vmul.f32 %v567, %v742
      %v820 = vmul.f32 %v568, %v747
      %v821 = vmul.f32 %v569, %v752
      %v822 = vmul.f32 %v570, %v757
      %v823 = vmul.f32 %v571, %v762
      %v824 = vmul.f32 %v572, %v767
      %v825 = vmul.f32 %v573, %v772
      %v826 = vmul.f32 %v574, %v777
      %v827 = vmul.f32 %v575, %v782
      %v828 = vmul.f32 %v576, %v787
      %v829 = vmul.f32 %v577, %v792
      %vm830 = vcmask 519168
      %831 = vst.msk [vmem:[#allocation2] sm:$0xf] %vm830, 0
      %832 = vst.msk [vmem:[#allocation2 + $0x4] sm:$0xf] %vm830, 0
      %833 = vst.msk [vmem:[#allocation2 + $0x8] sm:$0xf] %vm830, 0
      %834 = vst.msk [vmem:[#allocation2 + $0xc] sm:$0xf] %vm830, 0
      %835 = vst.msk [vmem:[#allocation2 + $0x10] sm:$0xf] %vm830, 0
      %836 = vst.msk [vmem:[#allocation2 + $0x14] sm:$0xf] %vm830, 0
      %837 = vst.msk [vmem:[#allocation2 + $0x18] sm:$0xf] %vm830, 0
      %838 = vst.msk [vmem:[#allocation2 + $0x1c] sm:$0xf] %vm830, 0
      %839 = vst.msk [vmem:[#allocation2 + $0x20] sm:$0xf] %vm830, 0
      %840 = vst.msk [vmem:[#allocation2 + $0x24] sm:$0xf] %vm830, 0
      %841 = vst.msk [vmem:[#allocation2 + $0x28] sm:$0xf] %vm830, 0
      %842 = vst.msk [vmem:[#allocation2 + $0x2c] sm:$0xf] %vm830, 0
      %843 = vst.msk [vmem:[#allocation2 + $0x30] sm:$0xf] %vm830, 0
      %844 = vst.msk [vmem:[#allocation2 + $0x34] sm:$0xf] %vm830, 0
      %845 = vst.msk [vmem:[#allocation2 + $0x38] sm:$0xf] %vm830, 0
      %846 = vst.msk [vmem:[#allocation2 + $0x3c] sm:$0xf] %vm830, 0
      %847 = vst.msk [vmem:[#allocation2 + $0x40] sm:$0xf] %vm830, 0
      %848 = vst.msk [vmem:[#allocation2 + $0x44] sm:$0xf] %vm830, 0
      %849 = vst.msk [vmem:[#allocation2 + $0x48] sm:$0xf] %vm830, 0
      %850 = vst.msk [vmem:[#allocation2 + $0x4c] sm:$0xf] %vm830, 0
      %851 = vst.msk [vmem:[#allocation2 + $0x50] sm:$0xf] %vm830, 0
      %852 = vst.msk [vmem:[#allocation2 + $0x54] sm:$0xf] %vm830, 0
      %853 = vst.msk [vmem:[#allocation2 + $0x58] sm:$0xf] %vm830, 0
      %854 = vst.msk [vmem:[#allocation2 + $0x5c] sm:$0xf] %vm830, 0
      %855 = vst.msk [vmem:[#allocation2 + $0x60] sm:$0xf] %vm830, 0
      %856 = vst.msk [vmem:[#allocation2 + $0x64] sm:$0xf] %vm830, 0
      %857 = vst.msk [vmem:[#allocation2 + $0x68] sm:$0xf] %vm830, 0
      %858 = vst.msk [vmem:[#allocation2 + $0x6c] sm:$0xf] %vm830, 0
      %859 = vst.msk [vmem:[#allocation2 + $0x70] sm:$0xf] %vm830, 0
      %860 = vst.msk [vmem:[#allocation2 + $0x74] sm:$0xf] %vm830, 0
      %861 = vst.msk [vmem:[#allocation2 + $0x78] sm:$0xf] %vm830, 0
      %862 = vst.msk [vmem:[#allocation2 + $0x7c] sm:$0xf] %vm830, 0
      %863 = vst.msk [vmem:[#allocation2 + $0x80] sm:$0xf] %vm830, 0
      %864 = vst.msk [vmem:[#allocation2 + $0x84] sm:$0xf] %vm830, 0
      %865 = vst.msk [vmem:[#allocation2 + $0x88] sm:$0xf] %vm830, 0
      %866 = vst.msk [vmem:[#allocation2 + $0x8c] sm:$0xf] %vm830, 0
      %867 = vst.msk [vmem:[#allocation2 + $0x90] sm:$0xf] %vm830, 0
      %868 = vst.msk [vmem:[#allocation2 + $0x94] sm:$0xf] %vm830, 0
      %869 = vst.msk [vmem:[#allocation2 + $0x98] sm:$0xf] %vm830, 0
      %870 = vst.msk [vmem:[#allocation2 + $0x9c] sm:$0xf] %vm830, 0
      %871 = vst.msk [vmem:[#allocation2 + $0xa0] sm:$0xf] %vm830, 0
      %872 = vst.msk [vmem:[#allocation2 + $0xa4] sm:$0xf] %vm830, 0
      %873 = vst.msk [vmem:[#allocation2 + $0xa8] sm:$0xf] %vm830, 0
      %874 = vst.msk [vmem:[#allocation2 + $0xac] sm:$0xf] %vm830, 0
      %875 = vst.msk [vmem:[#allocation2 + $0xb0] sm:$0xf] %vm830, 0
      %v876 = vpack.c.bf16 %v794, %v794
      %v877 = vpack.c.bf16 %v795, %v795
      %v878 = vpack.c.bf16 %v796, %v796
      %v879 = vpack.c.bf16 %v797, %v797
      %v880 = vpack.c.bf16 %v798, %v798
      %v881 = vpack.c.bf16 %v799, %v799
      %v882 = vpack.c.bf16 %v800, %v800
      %v883 = vpack.c.bf16 %v801, %v801
      %v884 = vpack.c.bf16 %v802, %v802
      %v885 = vpack.c.bf16 %v803, %v803
      %v886 = vpack.c.bf16 %v804, %v804
      %v887 = vpack.c.bf16 %v805, %v805
      %v888 = vpack.c.bf16 %v806, %v806
      %v889 = vpack.c.bf16 %v807, %v807
      %v890 = vpack.c.bf16 %v808, %v808
      %v891 = vpack.c.bf16 %v809, %v809
      %v892 = vpack.c.bf16 %v810, %v810
      %v893 = vpack.c.bf16 %v811, %v811
      %v894 = vpack.c.bf16 %v812, %v812
      %v895 = vpack.c.bf16 %v813, %v813
      %v896 = vpack.c.bf16 %v814, %v814
      %v897 = vpack.c.bf16 %v815, %v815
      %v898 = vpack.c.bf16 %v816, %v816
      %v899 = vpack.c.bf16 %v817, %v817
      %v900 = vpack.c.bf16 %v818, %v818
      %v901 = vpack.c.bf16 %v819, %v819
      %v902 = vpack.c.bf16 %v820, %v820
      %v903 = vpack.c.bf16 %v821, %v821
      %v904 = vpack.c.bf16 %v822, %v822
      %v905 = vpack.c.bf16 %v823, %v823
      %v906 = vpack.c.bf16 %v824, %v824
      %v907 = vpack.c.bf16 %v825, %v825
      %v908 = vpack.c.bf16 %v826, %v826
      %v909 = vpack.c.bf16 %v827, %v827
      %v910 = vpack.c.bf16 %v828, %v828
      %v911 = vpack.c.bf16 %v829, %v829
      %912 = vst.msk [vmem:[#allocation2 + $0x10] sm:$0xf] %vm830, %v876
      %913 = vst.msk [vmem:[#allocation2 + $0x14] sm:$0xf] %vm830, %v877
      %914 = vst.msk [vmem:[#allocation2 + $0x18] sm:$0xf] %vm830, %v878
      %915 = vst.msk [vmem:[#allocation2 + $0x1c] sm:$0xf] %vm830, %v879
      %916 = vst.msk [vmem:[#allocation2 + $0x20] sm:$0xf] %vm830, %v880
      %917 = vst.msk [vmem:[#allocation2 + $0x24] sm:$0xf] %vm830, %v881
      %918 = vst.msk [vmem:[#allocation2 + $0x28] sm:$0xf] %vm830, %v882
      %919 = vst.msk [vmem:[#allocation2 + $0x2c] sm:$0xf] %vm830, %v883
      %920 = vst.msk [vmem:[#allocation2 + $0x30] sm:$0xf] %vm830, %v884
      %921 = vst.msk [vmem:[#allocation2 + $0x34] sm:$0xf] %vm830, %v885
      %922 = vst.msk [vmem:[#allocation2 + $0x38] sm:$0xf] %vm830, %v886
      %923 = vst.msk [vmem:[#allocation2 + $0x3c] sm:$0xf] %vm830, %v887
      %924 = vst.msk [vmem:[#allocation2 + $0x40] sm:$0xf] %vm830, %v888
      %925 = vst.msk [vmem:[#allocation2 + $0x44] sm:$0xf] %vm830, %v889
      %926 = vst.msk [vmem:[#allocation2 + $0x48] sm:$0xf] %vm830, %v890
      %927 = vst.msk [vmem:[#allocation2 + $0x4c] sm:$0xf] %vm830, %v891
      %928 = vst.msk [vmem:[#allocation2 + $0x50] sm:$0xf] %vm830, %v892
      %929 = vst.msk [vmem:[#allocation2 + $0x54] sm:$0xf] %vm830, %v893
      %930 = vst.msk [vmem:[#allocation2 + $0x58] sm:$0xf] %vm830, %v894
      %931 = vst.msk [vmem:[#allocation2 + $0x5c] sm:$0xf] %vm830, %v895
      %932 = vst.msk [vmem:[#allocation2 + $0x60] sm:$0xf] %vm830, %v896
      %933 = vst.msk [vmem:[#allocation2 + $0x64] sm:$0xf] %vm830, %v897
      %934 = vst.msk [vmem:[#allocation2 + $0x68] sm:$0xf] %vm830, %v898
      %935 = vst.msk [vmem:[#allocation2 + $0x6c] sm:$0xf] %vm830, %v899
      %936 = vst.msk [vmem:[#allocation2 + $0x70] sm:$0xf] %vm830, %v900
      %937 = vst.msk [vmem:[#allocation2 + $0x74] sm:$0xf] %vm830, %v901
      %938 = vst.msk [vmem:[#allocation2 + $0x78] sm:$0xf] %vm830, %v902
      %939 = vst.msk [vmem:[#allocation2 + $0x7c] sm:$0xf] %vm830, %v903
      %940 = vst.msk [vmem:[#allocation2 + $0x80] sm:$0xf] %vm830, %v904
      %941 = vst.msk [vmem:[#allocation2 + $0x84] sm:$0xf] %vm830, %v905
      %942 = vst.msk [vmem:[#allocation2 + $0x88] sm:$0xf] %vm830, %v906
      %943 = vst.msk [vmem:[#allocation2 + $0x8c] sm:$0xf] %vm830, %v907
      %944 = vst.msk [vmem:[#allocation2 + $0x90] sm:$0xf] %vm830, %v908
      %945 = vst.msk [vmem:[#allocation2 + $0x94] sm:$0xf] %vm830, %v909
      %946 = vst.msk [vmem:[#allocation2 + $0x98] sm:$0xf] %vm830, %v910
      %947 = vst.msk [vmem:[#allocation2 + $0x9c] sm:$0xf] %vm830, %v911
      %vm948 = vcmask 785408
      %949 = vst.msk [vmem:[#allocation3] sm:$0xff] %vm948, 0.0
      %950 = vst.msk [vmem:[#allocation3 + $0x8] sm:$0xff] %vm948, 0.0
      %951 = vst.msk [vmem:[#allocation3 + $0x10] sm:$0xff] %vm948, 0.0
      %952 = vst.msk [vmem:[#allocation3 + $0x18] sm:$0xff] %vm948, 0.0
      %953 = vst.msk [vmem:[#allocation3 + $0x20] sm:$0xff] %vm948, 0.0
      %954 = vst.msk [vmem:[#allocation3 + $0x28] sm:$0xff] %vm948, 0.0
      %955 = vst.msk [vmem:[#allocation3 + $0x30] sm:$0xff] %vm948, 0.0
      %956 = vst.msk [vmem:[#allocation3 + $0x38] sm:$0xff] %vm948, 0.0
      %957 = vst.msk [vmem:[#allocation3 + $0x40] sm:$0xff] %vm948, 0.0
      %958 = vst.msk [vmem:[#allocation3 + $0x48] sm:$0xff] %vm948, 0.0
      %959 = vst.msk [vmem:[#allocation3 + $0x50] sm:$0xff] %vm948, 0.0
      %960 = vst.msk [vmem:[#allocation3 + $0x58] sm:$0xff] %vm948, 0.0
      %961 = vst.msk [vmem:[#allocation3 + $0x60] sm:$0xff] %vm948, 0.0
      %962 = vst.msk [vmem:[#allocation3 + $0x68] sm:$0xff] %vm948, 0.0
      %963 = vst.msk [vmem:[#allocation3 + $0x70] sm:$0xff] %vm948, 0.0
      %964 = vst.msk [vmem:[#allocation3 + $0x78] sm:$0xff] %vm948, 0.0
      %965 = vst.msk [vmem:[#allocation3 + $0x80] sm:$0xff] %vm948, 0.0
      %966 = vst.msk [vmem:[#allocation3 + $0x88] sm:$0xff] %vm948, 0.0
      %967 = vst.msk [vmem:[#allocation3 + $0x90] sm:$0xff] %vm948, 0.0
      %968 = vst.msk [vmem:[#allocation3 + $0x98] sm:$0xff] %vm948, 0.0
      %969 = vst.msk [vmem:[#allocation3 + $0xa0] sm:$0xff] %vm948, 0.0
      %970 = vst.msk [vmem:[#allocation3 + $0xa8] sm:$0xff] %vm948, 0.0
      %971 = vst.msk [vmem:[#allocation3 + $0xb0] sm:$0xff] %vm948, 0.0
      %972 = vst.msk [vmem:[#allocation3 + $0xb8] sm:$0xff] %vm948, 0.0
      %973 = vst.msk [vmem:[#allocation3 + $0xc0] sm:$0xff] %vm948, 0.0
      %974 = vst.msk [vmem:[#allocation3 + $0xc8] sm:$0xff] %vm948, 0.0
      %975 = vst.msk [vmem:[#allocation3 + $0xd0] sm:$0xff] %vm948, 0.0
      %976 = vst.msk [vmem:[#allocation3 + $0xd8] sm:$0xff] %vm948, 0.0
      %977 = vst.msk [vmem:[#allocation3 + $0xe0] sm:$0xff] %vm948, 0.0
      %978 = vst.msk [vmem:[#allocation3 + $0xe8] sm:$0xff] %vm948, 0.0
      %979 = vst.msk [vmem:[#allocation3 + $0xf0] sm:$0xff] %vm948, 0.0
      %980 = vst.msk [vmem:[#allocation3 + $0xf8] sm:$0xff] %vm948, 0.0
      %981 = vst.msk [vmem:[#allocation3 + $0x100] sm:$0xff] %vm948, 0.0
      %982 = vst.msk [vmem:[#allocation3 + $0x108] sm:$0xff] %vm948, 0.0
      %983 = vst.msk [vmem:[#allocation3 + $0x110] sm:$0xff] %vm948, 0.0
      %984 = vst.msk [vmem:[#allocation3 + $0x118] sm:$0xff] %vm948, 0.0
      %v985 = vld [vmem:[#allocation2 + $0x4] sm:$0x8]
      %v986 = vld [vmem:[#allocation2 + $0x8] sm:$0xf]
      %v987 = vld [vmem:[#allocation2 + $0xc] sm:$0xf]
      %v988 = vld [vmem:[#allocation2 + $0x10] sm:$0xf]
      %v989 = vld [vmem:[#allocation2 + $0x14] sm:$0xf]
      %v990 = vld [vmem:[#allocation2 + $0x18] sm:$0xf]
      %v991 = vld [vmem:[#allocation2 + $0x1c] sm:$0xf]
      %v992 = vld [vmem:[#allocation2 + $0x20] sm:$0xf]
      %v993 = vld [vmem:[#allocation2 + $0x24] sm:$0xf]
      %v994 = vld [vmem:[#allocation2 + $0x28] sm:$0xf]
      %v995 = vld [vmem:[#allocation2 + $0x2c] sm:$0xf]
      %v996 = vld [vmem:[#allocation2 + $0x30] sm:$0xf]
      %v997 = vld [vmem:[#allocation2 + $0x34] sm:$0xf]
      %v998 = vld [vmem:[#allocation2 + $0x38] sm:$0xf]
      %v999 = vld [vmem:[#allocation2 + $0x3c] sm:$0xf]
      %v1000 = vld [vmem:[#allocation2 + $0x40] sm:$0xf]
      %v1001 = vld [vmem:[#allocation2 + $0x44] sm:$0xf]
      %v1002 = vld [vmem:[#allocation2 + $0x48] sm:$0xf]
      %v1003 = vld [vmem:[#allocation2 + $0x4c] sm:$0xf]
      %v1004 = vld [vmem:[#allocation2 + $0x50] sm:$0xf]
      %v1005 = vld [vmem:[#allocation2 + $0x54] sm:$0xf]
      %v1006 = vld [vmem:[#allocation2 + $0x58] sm:$0xf]
      %v1007 = vld [vmem:[#allocation2 + $0x5c] sm:$0xf]
      %v1008 = vld [vmem:[#allocation2 + $0x60] sm:$0xf]
      %v1009 = vld [vmem:[#allocation2 + $0x64] sm:$0xf]
      %v1010 = vld [vmem:[#allocation2 + $0x68] sm:$0xf]
      %v1011 = vld [vmem:[#allocation2 + $0x6c] sm:$0xf]
      %v1012 = vld [vmem:[#allocation2 + $0x70] sm:$0xf]
      %v1013 = vld [vmem:[#allocation2 + $0x74] sm:$0xf]
      %v1014 = vld [vmem:[#allocation2 + $0x78] sm:$0xf]
      %v1015 = vld [vmem:[#allocation2 + $0x7c] sm:$0xf]
      %v1016 = vld [vmem:[#allocation2 + $0x80] sm:$0xf]
      %v1017 = vld [vmem:[#allocation2 + $0x84] sm:$0xf]
      %v1018 = vld [vmem:[#allocation2 + $0x88] sm:$0xf]
      %v1019 = vld [vmem:[#allocation2 + $0x8c] sm:$0xf]
      %v1020 = vld [vmem:[#allocation2 + $0x90] sm:$0xf]
      %v1021 = vld [vmem:[#allocation2 + $0x94] sm:$0x7]
      %v1022 = vld [vmem:[#allocation3] sm:$0xff]
      %v1023 = vld [vmem:[#allocation3 + $0x8] sm:$0xff]
      %v1024 = vld [vmem:[#allocation3 + $0x10] sm:$0xff]
      %v1025 = vld [vmem:[#allocation3 + $0x18] sm:$0xff]
      %v1026 = vld [vmem:[#allocation3 + $0x20] sm:$0xff]
      %v1027 = vld [vmem:[#allocation3 + $0x28] sm:$0xff]
      %v1028 = vld [vmem:[#allocation3 + $0x30] sm:$0xff]
      %v1029 = vld [vmem:[#allocation3 + $0x38] sm:$0xff]
      %v1030 = vld [vmem:[#allocation3 + $0x40] sm:$0xff]
      %v1031 = vld [vmem:[#allocation3 + $0x48] sm:$0xff]
      %v1032 = vld [vmem:[#allocation3 + $0x50] sm:$0xff]
      %v1033 = vld [vmem:[#allocation3 + $0x58] sm:$0xff]
      %v1034 = vld [vmem:[#allocation3 + $0x60] sm:$0xff]
      %v1035 = vld [vmem:[#allocation3 + $0x68] sm:$0xff]
      %v1036 = vld [vmem:[#allocation3 + $0x70] sm:$0xff]
      %v1037 = vld [vmem:[#allocation3 + $0x78] sm:$0xff]
      %v1038 = vld [vmem:[#allocation3 + $0x80] sm:$0xff]
      %v1039 = vld [vmem:[#allocation3 + $0x88] sm:$0xff]
      %v1040 = vld [vmem:[#allocation3 + $0x90] sm:$0xff]
      %v1041 = vld [vmem:[#allocation3 + $0x98] sm:$0xff]
      %v1042 = vld [vmem:[#allocation3 + $0xa0] sm:$0xff]
      %v1043 = vld [vmem:[#allocation3 + $0xa8] sm:$0xff]
      %v1044 = vld [vmem:[#allocation3 + $0xb0] sm:$0xff]
      %v1045 = vld [vmem:[#allocation3 + $0xb8] sm:$0xff]
      %v1046 = vld [vmem:[#allocation3 + $0xc0] sm:$0xff]
      %v1047 = vld [vmem:[#allocation3 + $0xc8] sm:$0xff]
      %v1048 = vld [vmem:[#allocation3 + $0xd0] sm:$0xff]
      %v1049 = vld [vmem:[#allocation3 + $0xd8] sm:$0xff]
      %v1050 = vld [vmem:[#allocation3 + $0xe0] sm:$0xff]
      %v1051 = vld [vmem:[#allocation3 + $0xe8] sm:$0xff]
      %v1052 = vld [vmem:[#allocation3 + $0xf0] sm:$0xff]
      %v1053 = vld [vmem:[#allocation3 + $0xf8] sm:$0xff]
      %v1054 = vld [vmem:[#allocation3 + $0x100] sm:$0xff]
      %v1055 = vld [vmem:[#allocation3 + $0x108] sm:$0xff]
      %v1056 = vld [vmem:[#allocation3 + $0x110] sm:$0xff]
      %v1057 = vld [vmem:[#allocation3 + $0x118] sm:$0xff]
      %v1058 = vld [vmem:[%s4] sm:$0xf]
      %v1059 = vld [vmem:[%s4 + $0x4] sm:$0xf]
      %v1060 = vld [vmem:[%s4 + $0x8] sm:$0xf]
      %v1061 = vld [vmem:[%s4 + $0xc] sm:$0xf]
      %v1062 = vld [vmem:[%s4 + $0x10] sm:$0xf]
      %v1063 = vld [vmem:[%s4 + $0x14] sm:$0xf]
      %v1064 = vld [vmem:[%s4 + $0x18] sm:$0xf]
      %v1065 = vld [vmem:[%s4 + $0x1c] sm:$0xf]
      %v1103 = vunpack.c.l.b16 %v985
      %v1104 = vunpack.c.l.b16 %v986
      %v1105 = vunpack.c.l.b16 %v987
      %v1106 = vunpack.c.l.b16 %v988
      %v1107 = vunpack.c.l.b16 %v989
      %v1108 = vunpack.c.l.b16 %v990
      %v1109 = vunpack.c.l.b16 %v991
      %v1110 = vunpack.c.l.b16 %v992
      %v1111 = vunpack.c.l.b16 %v993
      %v1112 = vunpack.c.l.b16 %v994
      %v1113 = vunpack.c.l.b16 %v995
      %v1114 = vunpack.c.l.b16 %v996
      %v1115 = vunpack.c.l.b16 %v997
      %v1116 = vunpack.c.l.b16 %v998
      %v1117 = vunpack.c.l.b16 %v999
      %v1118 = vunpack.c.l.b16 %v1000
      %v1119 = vunpack.c.l.b16 %v1001
      %v1120 = vunpack.c.l.b16 %v1002
      %v1121 = vunpack.c.l.b16 %v1003
      %v1122 = vunpack.c.l.b16 %v1004
      %v1123 = vunpack.c.l.b16 %v1005
      %v1124 = vunpack.c.l.b16 %v1006
      %v1125 = vunpack.c.l.b16 %v1007
      %v1126 = vunpack.c.l.b16 %v1008
      %v1127 = vunpack.c.l.b16 %v1009
      %v1128 = vunpack.c.l.b16 %v1010
      %v1129 = vunpack.c.l.b16 %v1011
      %v1130 = vunpack.c.l.b16 %v1012
      %v1131 = vunpack.c.l.b16 %v1013
      %v1132 = vunpack.c.l.b16 %v1014
      %v1133 = vunpack.c.l.b16 %v1015
      %v1134 = vunpack.c.l.b16 %v1016
      %v1135 = vunpack.c.l.b16 %v1017
      %v1136 = vunpack.c.l.b16 %v1018
      %v1137 = vunpack.c.l.b16 %v1019
      %v1138 = vunpack.c.l.b16 %v1020
      %v1139 = vunpack.c.l.b16 %v1021
      %v1140 = vpack.c.b16 %v1104, %v1103
      %v1141 = vpack.c.b16 %v1106, %v1105
      %v1142 = vpack.c.b16 %v1108, %v1107
      %v1143 = vpack.c.b16 %v1110, %v1109
      %v1144 = vpack.c.b16 %v1112, %v1111
      %v1145 = vpack.c.b16 %v1114, %v1113
      %v1146 = vpack.c.b16 %v1116, %v1115
      %v1147 = vpack.c.b16 %v1118, %v1117
      %v1148 = vpack.c.b16 %v1120, %v1119
      %v1149 = vpack.c.b16 %v1122, %v1121
      %v1150 = vpack.c.b16 %v1124, %v1123
      %v1151 = vpack.c.b16 %v1126, %v1125
      %v1152 = vpack.c.b16 %v1128, %v1127
      %v1153 = vpack.c.b16 %v1130, %v1129
      %v1154 = vpack.c.b16 %v1132, %v1131
      %v1155 = vpack.c.b16 %v1134, %v1133
      %v1156 = vpack.c.b16 %v1136, %v1135
      %v1157 = vpack.c.b16 %v1138, %v1137
      %v1158 = vpack.c.b16 %v1139, %v1139
      %vm1159 = vcmask 1044480
      %v1160 = vrot.slane %v1140, 3
      %v1161 = vrot.slane %v1141, 3
      %v1162 = vsel %vm1159, %v1160, %v1161
      %v1163 = vrot.slane %v1142, 3
      %v1164 = vsel %vm1159, %v1161, %v1163
      %v1165 = vrot.slane %v1143, 3
      %v1166 = vsel %vm1159, %v1163, %v1165
      %v1167 = vrot.slane %v1144, 3
      %v1168 = vsel %vm1159, %v1165, %v1167
      %v1169 = vrot.slane %v1145, 3
      %v1170 = vsel %vm1159, %v1167, %v1169
      %v1171 = vrot.slane %v1146, 3
      %v1172 = vsel %vm1159, %v1169, %v1171
      %v1173 = vrot.slane %v1147, 3
      %v1174 = vsel %vm1159, %v1171, %v1173
      %v1175 = vrot.slane %v1148, 3
      %v1176 = vsel %vm1159, %v1173, %v1175
      %v1177 = vrot.slane %v1149, 3
      %v1178 = vsel %vm1159, %v1175, %v1177
      %v1179 = vrot.slane %v1150, 3
      %v1180 = vsel %vm1159, %v1177, %v1179
      %v1181 = vrot.slane %v1151, 3
      %v1182 = vsel %vm1159, %v1179, %v1181
      %v1183 = vrot.slane %v1152, 3
      %v1184 = vsel %vm1159, %v1181, %v1183
      %v1185 = vrot.slane %v1153, 3
      %v1186 = vsel %vm1159, %v1183, %v1185
      %v1187 = vrot.slane %v1154, 3
      %v1188 = vsel %vm1159, %v1185, %v1187
      %v1189 = vrot.slane %v1155, 3
      %v1190 = vsel %vm1159, %v1187, %v1189
      %v1191 = vrot.slane %v1156, 3
      %v1192 = vsel %vm1159, %v1189, %v1191
      %v1193 = vrot.slane %v1157, 3
      %v1194 = vsel %vm1159, %v1191, %v1193
      %v1195 = vrot.slane %v1158, 3
      %v1196 = vsel %vm1159, %v1193, %v1195
      %v1205 = vunpack.c.l.b16 %v1058
      %v1206 = vunpack.c.l.b16 %v1059
      %v1207 = vunpack.c.l.b16 %v1060
      %v1208 = vunpack.c.l.b16 %v1061
      %v1209 = vunpack.c.l.b16 %v1062
      %v1210 = vunpack.c.l.b16 %v1063
      %v1211 = vunpack.c.l.b16 %v1064
      %v1212 = vunpack.c.l.b16 %v1065
      %v1213 = vpack.c.b16 %v1206, %v1205
      %v1214 = vpack.c.b16 %v1208, %v1207
      %v1215 = vpack.c.b16 %v1210, %v1209
      %v1216 = vpack.c.b16 %v1212, %v1211
      %vm1221 = vcmask 523264
      %v1223 = vsel %vm1221, %v1162, 0
      %v1226 = vsel %vm1221, %v1164, 0
      %v1229 = vsel %vm1221, %v1166, 0
      %v1232 = vsel %vm1221, %v1168, 0
      %v1235 = vsel %vm1221, %v1170, 0
      %v1238 = vsel %vm1221, %v1172, 0
      %v1241 = vsel %vm1221, %v1174, 0
      %v1244 = vsel %vm1221, %v1176, 0
      %v1247 = vsel %vm1221, %v1178, 0
      %v1250 = vsel %vm1221, %v1180, 0
      %v1253 = vsel %vm1221, %v1182, 0
      %v1256 = vsel %vm1221, %v1184, 0
      %v1259 = vsel %vm1221, %v1186, 0
      %v1262 = vsel %vm1221, %v1188, 0
      %v1265 = vsel %vm1221, %v1190, 0
      %v1268 = vsel %vm1221, %v1192, 0
      %v1271 = vsel %vm1221, %v1194, 0
      %v1274 = vsel %vm1221, %v1196, 0
      %1276 = vmatpush.bf16.msra.mxu0 0
      %1277 = vmatpush.bf16.msra.mxu0 0
      %1278 = vmatpush.bf16.msra.mxu0 0
      %1279 = vmatpush.bf16.msra.mxu0 0
      %1280 = vmatpush.bf16.msra.mxu0 %v1216
      %1281 = vmatpush.bf16.msra.mxu0 %v1215
      %1282 = vmatpush.bf16.msra.mxu0 %v1214
      %1283 = vmatpush.bf16.msra.mxu0 %v1213
      %1284 = vmatmul.bf16.gmra.mxu0 %v1223
      %v1285 = vpop.f32.mrf.mxu0
      %v1286 = vadd.f32 0.0, %v1285
      %v1287 = vpop.f32.mrf.mxu0
      %v1288 = vadd.f32 0.0, %v1287
      %1289 = vmatmul.bf16.gmra.mxu0 %v1226
      %v1290 = vpop.f32.mrf.mxu0
      %v1291 = vadd.f32 0.0, %v1290
      %v1292 = vpop.f32.mrf.mxu0
      %v1293 = vadd.f32 0.0, %v1292
      %1294 = vmatmul.bf16.gmra.mxu0 %v1229
      %v1295 = vpop.f32.mrf.mxu0
      %v1296 = vadd.f32 0.0, %v1295
      %v1297 = vpop.f32.mrf.mxu0
      %v1298 = vadd.f32 0.0, %v1297
      %1299 = vmatmul.bf16.gmra.mxu0 %v1232
      %v1300 = vpop.f32.mrf.mxu0
      %v1301 = vadd.f32 0.0, %v1300
      %v1302 = vpop.f32.mrf.mxu0
      %v1303 = vadd.f32 0.0, %v1302
      %1304 = vmatmul.bf16.gmra.mxu0 %v1235
      %v1305 = vpop.f32.mrf.mxu0
      %v1306 = vadd.f32 0.0, %v1305
      %v1307 = vpop.f32.mrf.mxu0
      %v1308 = vadd.f32 0.0, %v1307
      %1309 = vmatmul.bf16.gmra.mxu0 %v1238
      %v1310 = vpop.f32.mrf.mxu0
      %v1311 = vadd.f32 0.0, %v1310
      %v1312 = vpop.f32.mrf.mxu0
      %v1313 = vadd.f32 0.0, %v1312
      %1314 = vmatmul.bf16.gmra.mxu0 %v1241
      %v1315 = vpop.f32.mrf.mxu0
      %v1316 = vadd.f32 0.0, %v1315
      %v1317 = vpop.f32.mrf.mxu0
      %v1318 = vadd.f32 0.0, %v1317
      %1319 = vmatmul.bf16.gmra.mxu0 %v1244
      %v1320 = vpop.f32.mrf.mxu0
      %v1321 = vadd.f32 0.0, %v1320
      %v1322 = vpop.f32.mrf.mxu0
      %v1323 = vadd.f32 0.0, %v1322
      %1324 = vmatmul.bf16.gmra.mxu0 %v1247
      %v1325 = vpop.f32.mrf.mxu0
      %v1326 = vadd.f32 0.0, %v1325
      %v1327 = vpop.f32.mrf.mxu0
      %v1328 = vadd.f32 0.0, %v1327
      %1329 = vmatmul.bf16.gmra.mxu0 %v1250
      %v1330 = vpop.f32.mrf.mxu0
      %v1331 = vadd.f32 0.0, %v1330
      %v1332 = vpop.f32.mrf.mxu0
      %v1333 = vadd.f32 0.0, %v1332
      %1334 = vmatmul.bf16.gmra.mxu0 %v1253
      %v1335 = vpop.f32.mrf.mxu0
      %v1336 = vadd.f32 0.0, %v1335
      %v1337 = vpop.f32.mrf.mxu0
      %v1338 = vadd.f32 0.0, %v1337
      %1339 = vmatmul.bf16.gmra.mxu0 %v1256
      %v1340 = vpop.f32.mrf.mxu0
      %v1341 = vadd.f32 0.0, %v1340
      %v1342 = vpop.f32.mrf.mxu0
      %v1343 = vadd.f32 0.0, %v1342
      %1344 = vmatmul.bf16.gmra.mxu0 %v1259
      %v1345 = vpop.f32.mrf.mxu0
      %v1346 = vadd.f32 0.0, %v1345
      %v1347 = vpop.f32.mrf.mxu0
      %v1348 = vadd.f32 0.0, %v1347
      %1349 = vmatmul.bf16.gmra.mxu0 %v1262
      %v1350 = vpop.f32.mrf.mxu0
      %v1351 = vadd.f32 0.0, %v1350
      %v1352 = vpop.f32.mrf.mxu0
      %v1353 = vadd.f32 0.0, %v1352
      %1354 = vmatmul.bf16.gmra.mxu0 %v1265
      %v1355 = vpop.f32.mrf.mxu0
      %v1356 = vadd.f32 0.0, %v1355
      %v1357 = vpop.f32.mrf.mxu0
      %v1358 = vadd.f32 0.0, %v1357
      %1359 = vmatmul.bf16.gmra.mxu0 %v1268
      %v1360 = vpop.f32.mrf.mxu0
      %v1361 = vadd.f32 0.0, %v1360
      %v1362 = vpop.f32.mrf.mxu0
      %v1363 = vadd.f32 0.0, %v1362
      %1364 = vmatmul.bf16.gmra.mxu0 %v1271
      %v1365 = vpop.f32.mrf.mxu0
      %v1366 = vadd.f32 0.0, %v1365
      %v1367 = vpop.f32.mrf.mxu0
      %v1368 = vadd.f32 0.0, %v1367
      %1369 = vmatmul.bf16.gmra.mxu0 %v1274
      %v1370 = vpop.f32.mrf.mxu0
      %v1371 = vadd.f32 0.0, %v1370
      %v1372 = vpop.f32.mrf.mxu0
      %v1373 = vadd.f32 0.0, %v1372
      %1374 = vdwg.mxu0
      %v1375 = vadd.f32 %v1022, %v1286
      %v1376 = vadd.f32 %v1023, %v1288
      %v1377 = vadd.f32 %v1024, %v1291
      %v1378 = vadd.f32 %v1025, %v1293
      %v1379 = vadd.f32 %v1026, %v1296
      %v1380 = vadd.f32 %v1027, %v1298
      %v1381 = vadd.f32 %v1028, %v1301
      %v1382 = vadd.f32 %v1029, %v1303
      %v1383 = vadd.f32 %v1030, %v1306
      %v1384 = vadd.f32 %v1031, %v1308
      %v1385 = vadd.f32 %v1032, %v1311
      %v1386 = vadd.f32 %v1033, %v1313
      %v1387 = vadd.f32 %v1034, %v1316
      %v1388 = vadd.f32 %v1035, %v1318
      %v1389 = vadd.f32 %v1036, %v1321
      %v1390 = vadd.f32 %v1037, %v1323
      %v1391 = vadd.f32 %v1038, %v1326
      %v1392 = vadd.f32 %v1039, %v1328
      %v1393 = vadd.f32 %v1040, %v1331
      %v1394 = vadd.f32 %v1041, %v1333
      %v1395 = vadd.f32 %v1042, %v1336
      %v1396 = vadd.f32 %v1043, %v1338
      %v1397 = vadd.f32 %v1044, %v1341
      %v1398 = vadd.f32 %v1045, %v1343
      %v1399 = vadd.f32 %v1046, %v1346
      %v1400 = vadd.f32 %v1047, %v1348
      %v1401 = vadd.f32 %v1048, %v1351
      %v1402 = vadd.f32 %v1049, %v1353
      %v1403 = vadd.f32 %v1050, %v1356
      %v1404 = vadd.f32 %v1051, %v1358
      %v1405 = vadd.f32 %v1052, %v1361
      %v1406 = vadd.f32 %v1053, %v1363
      %v1407 = vadd.f32 %v1054, %v1366
      %v1408 = vadd.f32 %v1055, %v1368
      %v1409 = vadd.f32 %v1056, %v1371
      %v1410 = vadd.f32 %v1057, %v1373
      %1411 = vst.msk [vmem:[#allocation3] sm:$0xff] %vm948, %v1375
      %1412 = vst.msk [vmem:[#allocation3 + $0x8] sm:$0xff] %vm948, %v1376
      %1413 = vst.msk [vmem:[#allocation3 + $0x10] sm:$0xff] %vm948, %v1377
      %1414 = vst.msk [vmem:[#allocation3 + $0x18] sm:$0xff] %vm948, %v1378
      %1415 = vst.msk [vmem:[#allocation3 + $0x20] sm:$0xff] %vm948, %v1379
      %1416 = vst.msk [vmem:[#allocation3 + $0x28] sm:$0xff] %vm948, %v1380
      %1417 = vst.msk [vmem:[#allocation3 + $0x30] sm:$0xff] %vm948, %v1381
      %1418 = vst.msk [vmem:[#allocation3 + $0x38] sm:$0xff] %vm948, %v1382
      %1419 = vst.msk [vmem:[#allocation3 + $0x40] sm:$0xff] %vm948, %v1383
      %1420 = vst.msk [vmem:[#allocation3 + $0x48] sm:$0xff] %vm948, %v1384
      %1421 = vst.msk [vmem:[#allocation3 + $0x50] sm:$0xff] %vm948, %v1385
      %1422 = vst.msk [vmem:[#allocation3 + $0x58] sm:$0xff] %vm948, %v1386
      %1423 = vst.msk [vmem:[#allocation3 + $0x60] sm:$0xff] %vm948, %v1387
      %1424 = vst.msk [vmem:[#allocation3 + $0x68] sm:$0xff] %vm948, %v1388
      %1425 = vst.msk [vmem:[#allocation3 + $0x70] sm:$0xff] %vm948, %v1389
      %1426 = vst.msk [vmem:[#allocation3 + $0x78] sm:$0xff] %vm948, %v1390
      %1427 = vst.msk [vmem:[#allocation3 + $0x80] sm:$0xff] %vm948, %v1391
      %1428 = vst.msk [vmem:[#allocation3 + $0x88] sm:$0xff] %vm948, %v1392
      %1429 = vst.msk [vmem:[#allocation3 + $0x90] sm:$0xff] %vm948, %v1393
      %1430 = vst.msk [vmem:[#allocation3 + $0x98] sm:$0xff] %vm948, %v1394
      %1431 = vst.msk [vmem:[#allocation3 + $0xa0] sm:$0xff] %vm948, %v1395
      %1432 = vst.msk [vmem:[#allocation3 + $0xa8] sm:$0xff] %vm948, %v1396
      %1433 = vst.msk [vmem:[#allocation3 + $0xb0] sm:$0xff] %vm948, %v1397
      %1434 = vst.msk [vmem:[#allocation3 + $0xb8] sm:$0xff] %vm948, %v1398
      %1435 = vst.msk [vmem:[#allocation3 + $0xc0] sm:$0xff] %vm948, %v1399
      %1436 = vst.msk [vmem:[#allocation3 + $0xc8] sm:$0xff] %vm948, %v1400
      %1437 = vst.msk [vmem:[#allocation3 + $0xd0] sm:$0xff] %vm948, %v1401
      %1438 = vst.msk [vmem:[#allocation3 + $0xd8] sm:$0xff] %vm948, %v1402
      %1439 = vst.msk [vmem:[#allocation3 + $0xe0] sm:$0xff] %vm948, %v1403
      %1440 = vst.msk [vmem:[#allocation3 + $0xe8] sm:$0xff] %vm948, %v1404
      %1441 = vst.msk [vmem:[#allocation3 + $0xf0] sm:$0xff] %vm948, %v1405
      %1442 = vst.msk [vmem:[#allocation3 + $0xf8] sm:$0xff] %vm948, %v1406
      %1443 = vst.msk [vmem:[#allocation3 + $0x100] sm:$0xff] %vm948, %v1407
      %1444 = vst.msk [vmem:[#allocation3 + $0x108] sm:$0xff] %vm948, %v1408
      %1445 = vst.msk [vmem:[#allocation3 + $0x110] sm:$0xff] %vm948, %v1409
      %1446 = vst.msk [vmem:[#allocation3 + $0x118] sm:$0xff] %vm948, %v1410
      %v1447 = vld [vmem:[#allocation2 + $0x4] sm:$0x8]
      %v1448 = vld [vmem:[#allocation2 + $0x8] sm:$0xf]
      %v1449 = vld [vmem:[#allocation2 + $0xc] sm:$0xf]
      %v1450 = vld [vmem:[#allocation2 + $0x10] sm:$0xf]
      %v1451 = vld [vmem:[#allocation2 + $0x14] sm:$0xf]
      %v1452 = vld [vmem:[#allocation2 + $0x18] sm:$0xf]
      %v1453 = vld [vmem:[#allocation2 + $0x1c] sm:$0xf]
      %v1454 = vld [vmem:[#allocation2 + $0x20] sm:$0xf]
      %v1455 = vld [vmem:[#allocation2 + $0x24] sm:$0xf]
      %v1456 = vld [vmem:[#allocation2 + $0x28] sm:$0xf]
      %v1457 = vld [vmem:[#allocation2 + $0x2c] sm:$0xf]
      %v1458 = vld [vmem:[#allocation2 + $0x30] sm:$0xf]
      %v1459 = vld [vmem:[#allocation2 + $0x34] sm:$0xf]
      %v1460 = vld [vmem:[#allocation2 + $0x38] sm:$0xf]
      %v1461 = vld [vmem:[#allocation2 + $0x3c] sm:$0xf]
      %v1462 = vld [vmem:[#allocation2 + $0x40] sm:$0xf]
      %v1463 = vld [vmem:[#allocation2 + $0x44] sm:$0xf]
      %v1464 = vld [vmem:[#allocation2 + $0x48] sm:$0xf]
      %v1465 = vld [vmem:[#allocation2 + $0x4c] sm:$0xf]
      %v1466 = vld [vmem:[#allocation2 + $0x50] sm:$0xf]
      %v1467 = vld [vmem:[#allocation2 + $0x54] sm:$0xf]
      %v1468 = vld [vmem:[#allocation2 + $0x58] sm:$0xf]
      %v1469 = vld [vmem:[#allocation2 + $0x5c] sm:$0xf]
      %v1470 = vld [vmem:[#allocation2 + $0x60] sm:$0xf]
      %v1471 = vld [vmem:[#allocation2 + $0x64] sm:$0xf]
      %v1472 = vld [vmem:[#allocation2 + $0x68] sm:$0xf]
      %v1473 = vld [vmem:[#allocation2 + $0x6c] sm:$0xf]
      %v1474 = vld [vmem:[#allocation2 + $0x70] sm:$0xf]
      %v1475 = vld [vmem:[#allocation2 + $0x74] sm:$0xf]
      %v1476 = vld [vmem:[#allocation2 + $0x78] sm:$0xf]
      %v1477 = vld [vmem:[#allocation2 + $0x7c] sm:$0xf]
      %v1478 = vld [vmem:[#allocation2 + $0x80] sm:$0xf]
      %v1479 = vld [vmem:[#allocation2 + $0x84] sm:$0xf]
      %v1480 = vld [vmem:[#allocation2 + $0x88] sm:$0xf]
      %v1481 = vld [vmem:[#allocation2 + $0x8c] sm:$0xf]
      %v1482 = vld [vmem:[#allocation2 + $0x90] sm:$0xf]
      %v1483 = vld [vmem:[#allocation2 + $0x94] sm:$0xf]
      %v1484 = vld [vmem:[#allocation3] sm:$0xff]
      %v1485 = vld [vmem:[#allocation3 + $0x8] sm:$0xff]
      %v1486 = vld [vmem:[#allocation3 + $0x10] sm:$0xff]
      %v1487 = vld [vmem:[#allocation3 + $0x18] sm:$0xff]
      %v1488 = vld [vmem:[#allocation3 + $0x20] sm:$0xff]
      %v1489 = vld [vmem:[#allocation3 + $0x28] sm:$0xff]
      %v1490 = vld [vmem:[#allocation3 + $0x30] sm:$0xff]
      %v1491 = vld [vmem:[#allocation3 + $0x38] sm:$0xff]
      %v1492 = vld [vmem:[#allocation3 + $0x40] sm:$0xff]
      %v1493 = vld [vmem:[#allocation3 + $0x48] sm:$0xff]
      %v1494 = vld [vmem:[#allocation3 + $0x50] sm:$0xff]
      %v1495 = vld [vmem:[#allocation3 + $0x58] sm:$0xff]
      %v1496 = vld [vmem:[#allocation3 + $0x60] sm:$0xff]
      %v1497 = vld [vmem:[#allocation3 + $0x68] sm:$0xff]
      %v1498 = vld [vmem:[#allocation3 + $0x70] sm:$0xff]
      %v1499 = vld [vmem:[#allocation3 + $0x78] sm:$0xff]
      %v1500 = vld [vmem:[#allocation3 + $0x80] sm:$0xff]
      %v1501 = vld [vmem:[#allocation3 + $0x88] sm:$0xff]
      %v1502 = vld [vmem:[#allocation3 + $0x90] sm:$0xff]
      %v1503 = vld [vmem:[#allocation3 + $0x98] sm:$0xff]
      %v1504 = vld [vmem:[#allocation3 + $0xa0] sm:$0xff]
      %v1505 = vld [vmem:[#allocation3 + $0xa8] sm:$0xff]
      %v1506 = vld [vmem:[#allocation3 + $0xb0] sm:$0xff]
      %v1507 = vld [vmem:[#allocation3 + $0xb8] sm:$0xff]
      %v1508 = vld [vmem:[#allocation3 + $0xc0] sm:$0xff]
      %v1509 = vld [vmem:[#allocation3 + $0xc8] sm:$0xff]
      %v1510 = vld [vmem:[#allocation3 + $0xd0] sm:$0xff]
      %v1511 = vld [vmem:[#allocation3 + $0xd8] sm:$0xff]
      %v1512 = vld [vmem:[#allocation3 + $0xe0] sm:$0xff]
      %v1513 = vld [vmem:[#allocation3 + $0xe8] sm:$0xff]
      %v1514 = vld [vmem:[#allocation3 + $0xf0] sm:$0xff]
      %v1515 = vld [vmem:[#allocation3 + $0xf8] sm:$0xff]
      %v1516 = vld [vmem:[#allocation3 + $0x100] sm:$0xff]
      %v1517 = vld [vmem:[#allocation3 + $0x108] sm:$0xff]
      %v1518 = vld [vmem:[#allocation3 + $0x110] sm:$0xff]
      %v1519 = vld [vmem:[#allocation3 + $0x118] sm:$0xff]
      %s1520 = scalar_lea.vmem %s4, 32
      %v1521 = vld [vmem:[%s1520] sm:$0xf]
      %v1522 = vld [vmem:[%s1520 + $0x4] sm:$0xf]
      %v1523 = vld [vmem:[%s1520 + $0x8] sm:$0xf]
      %v1524 = vld [vmem:[%s1520 + $0xc] sm:$0xf]
      %v1525 = vld [vmem:[%s1520 + $0x10] sm:$0xf]
      %v1526 = vld [vmem:[%s1520 + $0x14] sm:$0xf]
      %v1527 = vld [vmem:[%s1520 + $0x18] sm:$0xf]
      %v1528 = vld [vmem:[%s1520 + $0x1c] sm:$0xf]
      %v1566 = vunpack.c.l.b16 %v1447
      %v1567 = vunpack.c.l.b16 %v1448
      %v1568 = vunpack.c.l.b16 %v1449
      %v1569 = vunpack.c.l.b16 %v1450
      %v1570 = vunpack.c.l.b16 %v1451
      %v1571 = vunpack.c.l.b16 %v1452
      %v1572 = vunpack.c.l.b16 %v1453
      %v1573 = vunpack.c.l.b16 %v1454
      %v1574 = vunpack.c.l.b16 %v1455
      %v1575 = vunpack.c.l.b16 %v1456
      %v1576 = vunpack.c.l.b16 %v1457
      %v1577 = vunpack.c.l.b16 %v1458
      %v1578 = vunpack.c.l.b16 %v1459
      %v1579 = vunpack.c.l.b16 %v1460
      %v1580 = vunpack.c.l.b16 %v1461
      %v1581 = vunpack.c.l.b16 %v1462
      %v1582 = vunpack.c.l.b16 %v1463
      %v1583 = vunpack.c.l.b16 %v1464
      %v1584 = vunpack.c.l.b16 %v1465
      %v1585 = vunpack.c.l.b16 %v1466
      %v1586 = vunpack.c.l.b16 %v1467
      %v1587 = vunpack.c.l.b16 %v1468
      %v1588 = vunpack.c.l.b16 %v1469
      %v1589 = vunpack.c.l.b16 %v1470
      %v1590 = vunpack.c.l.b16 %v1471
      %v1591 = vunpack.c.l.b16 %v1472
      %v1592 = vunpack.c.l.b16 %v1473
      %v1593 = vunpack.c.l.b16 %v1474
      %v1594 = vunpack.c.l.b16 %v1475
      %v1595 = vunpack.c.l.b16 %v1476
      %v1596 = vunpack.c.l.b16 %v1477
      %v1597 = vunpack.c.l.b16 %v1478
      %v1598 = vunpack.c.l.b16 %v1479
      %v1599 = vunpack.c.l.b16 %v1480
      %v1600 = vunpack.c.l.b16 %v1481
      %v1601 = vunpack.c.l.b16 %v1482
      %v1602 = vunpack.c.l.b16 %v1483
      %v1603 = vpack.c.b16 %v1567, %v1566
      %v1604 = vpack.c.b16 %v1569, %v1568
      %v1605 = vpack.c.b16 %v1571, %v1570
      %v1606 = vpack.c.b16 %v1573, %v1572
      %v1607 = vpack.c.b16 %v1575, %v1574
      %v1608 = vpack.c.b16 %v1577, %v1576
      %v1609 = vpack.c.b16 %v1579, %v1578
      %v1610 = vpack.c.b16 %v1581, %v1580
      %v1611 = vpack.c.b16 %v1583, %v1582
      %v1612 = vpack.c.b16 %v1585, %v1584
      %v1613 = vpack.c.b16 %v1587, %v1586
      %v1614 = vpack.c.b16 %v1589, %v1588
      %v1615 = vpack.c.b16 %v1591, %v1590
      %v1616 = vpack.c.b16 %v1593, %v1592
      %v1617 = vpack.c.b16 %v1595, %v1594
      %v1618 = vpack.c.b16 %v1597, %v1596
      %v1619 = vpack.c.b16 %v1599, %v1598
      %v1620 = vpack.c.b16 %v1601, %v1600
      %v1621 = vpack.c.b16 %v1602, %v1602
      %vm1622 = vsmask.f32 4352
      %v1624 = vshrl.u32 %v1603, 16
      %v1626 = vrot.slane %v1624, 3
      %v1627 = vshll.u32 %v1603, 16
      %v1629 = vrot.slane %v1627, 4
      %v1630 = vor.u32 %v1626, %v1629
      %v1632 = vshrl.u32 %v1604, 16
      %v1634 = vrot.slane %v1632, 3
      %v1635 = vshll.u32 %v1604, 16
      %v1637 = vrot.slane %v1635, 4
      %v1638 = vor.u32 %v1634, %v1637
      %v1639 = vsel %vm1622, %v1630, %v1638
      %v1641 = vshrl.u32 %v1605, 16
      %v1643 = vrot.slane %v1641, 3
      %v1644 = vshll.u32 %v1605, 16
      %v1646 = vrot.slane %v1644, 4
      %v1647 = vor.u32 %v1643, %v1646
      %v1648 = vsel %vm1622, %v1638, %v1647
      %v1650 = vshrl.u32 %v1606, 16
      %v1652 = vrot.slane %v1650, 3
      %v1653 = vshll.u32 %v1606, 16
      %v1655 = vrot.slane %v1653, 4
      %v1656 = vor.u32 %v1652, %v1655
      %v1657 = vsel %vm1622, %v1647, %v1656
      %v1659 = vshrl.u32 %v1607, 16
      %v1661 = vrot.slane %v1659, 3
      %v1662 = vshll.u32 %v1607, 16
      %v1664 = vrot.slane %v1662, 4
      %v1665 = vor.u32 %v1661, %v1664
      %v1666 = vsel %vm1622, %v1656, %v1665
      %v1668 = vshrl.u32 %v1608, 16
      %v1670 = vrot.slane %v1668, 3
      %v1671 = vshll.u32 %v1608, 16
      %v1673 = vrot.slane %v1671, 4
      %v1674 = vor.u32 %v1670, %v1673
      %v1675 = vsel %vm1622, %v1665, %v1674
      %v1677 = vshrl.u32 %v1609, 16
      %v1679 = vrot.slane %v1677, 3
      %v1680 = vshll.u32 %v1609, 16
      %v1682 = vrot.slane %v1680, 4
      %v1683 = vor.u32 %v1679, %v1682
      %v1684 = vsel %vm1622, %v1674, %v1683
      %v1686 = vshrl.u32 %v1610, 16
      %v1688 = vrot.slane %v1686, 3
      %v1689 = vshll.u32 %v1610, 16
      %v1691 = vrot.slane %v1689, 4
      %v1692 = vor.u32 %v1688, %v1691
      %v1693 = vsel %vm1622, %v1683, %v1692
      %v1695 = vshrl.u32 %v1611, 16
      %v1697 = vrot.slane %v1695, 3
      %v1698 = vshll.u32 %v1611, 16
      %v1700 = vrot.slane %v1698, 4
      %v1701 = vor.u32 %v1697, %v1700
      %v1702 = vsel %vm1622, %v1692, %v1701
      %v1704 = vshrl.u32 %v1612, 16
      %v1706 = vrot.slane %v1704, 3
      %v1707 = vshll.u32 %v1612, 16
      %v1709 = vrot.slane %v1707, 4
      %v1710 = vor.u32 %v1706, %v1709
      %v1711 = vsel %vm1622, %v1701, %v1710
      %v1713 = vshrl.u32 %v1613, 16
      %v1715 = vrot.slane %v1713, 3
      %v1716 = vshll.u32 %v1613, 16
      %v1718 = vrot.slane %v1716, 4
      %v1719 = vor.u32 %v1715, %v1718
      %v1720 = vsel %vm1622, %v1710, %v1719
      %v1722 = vshrl.u32 %v1614, 16
      %v1724 = vrot.slane %v1722, 3
      %v1725 = vshll.u32 %v1614, 16
      %v1727 = vrot.slane %v1725, 4
      %v1728 = vor.u32 %v1724, %v1727
      %v1729 = vsel %vm1622, %v1719, %v1728
      %v1731 = vshrl.u32 %v1615, 16
      %v1733 = vrot.slane %v1731, 3
      %v1734 = vshll.u32 %v1615, 16
      %v1736 = vrot.slane %v1734, 4
      %v1737 = vor.u32 %v1733, %v1736
      %v1738 = vsel %vm1622, %v1728, %v1737
      %v1740 = vshrl.u32 %v1616, 16
      %v1742 = vrot.slane %v1740, 3
      %v1743 = vshll.u32 %v1616, 16
      %v1745 = vrot.slane %v1743, 4
      %v1746 = vor.u32 %v1742, %v1745
      %v1747 = vsel %vm1622, %v1737, %v1746
      %v1749 = vshrl.u32 %v1617, 16
      %v1751 = vrot.slane %v1749, 3
      %v1752 = vshll.u32 %v1617, 16
      %v1754 = vrot.slane %v1752, 4
      %v1755 = vor.u32 %v1751, %v1754
      %v1756 = vsel %vm1622, %v1746, %v1755
      %v1758 = vshrl.u32 %v1618, 16
      %v1760 = vrot.slane %v1758, 3
      %v1761 = vshll.u32 %v1618, 16
      %v1763 = vrot.slane %v1761, 4
      %v1764 = vor.u32 %v1760, %v1763
      %v1765 = vsel %vm1622, %v1755, %v1764
      %v1767 = vshrl.u32 %v1619, 16
      %v1769 = vrot.slane %v1767, 3
      %v1770 = vshll.u32 %v1619, 16
      %v1772 = vrot.slane %v1770, 4
      %v1773 = vor.u32 %v1769, %v1772
      %v1774 = vsel %vm1622, %v1764, %v1773
      %v1776 = vshrl.u32 %v1620, 16
      %v1778 = vrot.slane %v1776, 3
      %v1779 = vshll.u32 %v1620, 16
      %v1781 = vrot.slane %v1779, 4
      %v1782 = vor.u32 %v1778, %v1781
      %v1783 = vsel %vm1622, %v1773, %v1782
      %v1785 = vshrl.u32 %v1621, 16
      %v1787 = vrot.slane %v1785, 3
      %v1788 = vshll.u32 %v1621, 16
      %v1790 = vrot.slane %v1788, 4
      %v1791 = vor.u32 %v1787, %v1790
      %v1792 = vsel %vm1622, %v1782, %v1791
      %v1801 = vunpack.c.l.b16 %v1521
      %v1802 = vunpack.c.l.b16 %v1522
      %v1803 = vunpack.c.l.b16 %v1523
      %v1804 = vunpack.c.l.b16 %v1524
      %v1805 = vunpack.c.l.b16 %v1525
      %v1806 = vunpack.c.l.b16 %v1526
      %v1807 = vunpack.c.l.b16 %v1527
      %v1808 = vunpack.c.l.b16 %v1528
      %v1809 = vpack.c.b16 %v1802, %v1801
      %v1810 = vpack.c.b16 %v1804, %v1803
      %v1811 = vpack.c.b16 %v1806, %v1805
      %v1812 = vpack.c.b16 %v1808, %v1807
      %v1818 = vsel %vm1221, %v1639, 0
      %v1821 = vsel %vm1221, %v1648, 0
      %v1824 = vsel %vm1221, %v1657, 0
      %v1827 = vsel %vm1221, %v1666, 0
      %v1830 = vsel %vm1221, %v1675, 0
      %v1833 = vsel %vm1221, %v1684, 0
      %v1836 = vsel %vm1221, %v1693, 0
      %v1839 = vsel %vm1221, %v1702, 0
      %v1842 = vsel %vm1221, %v1711, 0
      %v1845 = vsel %vm1221, %v1720, 0
      %v1848 = vsel %vm1221, %v1729, 0
      %v1851 = vsel %vm1221, %v1738, 0
      %v1854 = vsel %vm1221, %v1747, 0
      %v1857 = vsel %vm1221, %v1756, 0
      %v1860 = vsel %vm1221, %v1765, 0
      %v1863 = vsel %vm1221, %v1774, 0
      %v1866 = vsel %vm1221, %v1783, 0
      %v1869 = vsel %vm1221, %v1792, 0
      %1871 = vmatpush.bf16.msra.mxu0 0
      %1872 = vmatpush.bf16.msra.mxu0 0
      %1873 = vmatpush.bf16.msra.mxu0 0
      %1874 = vmatpush.bf16.msra.mxu0 0
      %1875 = vmatpush.bf16.msra.mxu0 %v1812
      %1876 = vmatpush.bf16.msra.mxu0 %v1811
      %1877 = vmatpush.bf16.msra.mxu0 %v1810
      %1878 = vmatpush.bf16.msra.mxu0 %v1809
      %1879 = vmatmul.bf16.gmra.mxu0 %v1818
      %v1880 = vpop.f32.mrf.mxu0
      %v1881 = vadd.f32 0.0, %v1880
      %v1882 = vpop.f32.mrf.mxu0
      %v1883 = vadd.f32 0.0, %v1882
      %1884 = vmatmul.bf16.gmra.mxu0 %v1821
      %v1885 = vpop.f32.mrf.mxu0
      %v1886 = vadd.f32 0.0, %v1885
      %v1887 = vpop.f32.mrf.mxu0
      %v1888 = vadd.f32 0.0, %v1887
      %1889 = vmatmul.bf16.gmra.mxu0 %v1824
      %v1890 = vpop.f32.mrf.mxu0
      %v1891 = vadd.f32 0.0, %v1890
      %v1892 = vpop.f32.mrf.mxu0
      %v1893 = vadd.f32 0.0, %v1892
      %1894 = vmatmul.bf16.gmra.mxu0 %v1827
      %v1895 = vpop.f32.mrf.mxu0
      %v1896 = vadd.f32 0.0, %v1895
      %v1897 = vpop.f32.mrf.mxu0
      %v1898 = vadd.f32 0.0, %v1897
      %1899 = vmatmul.bf16.gmra.mxu0 %v1830
      %v1900 = vpop.f32.mrf.mxu0
      %v1901 = vadd.f32 0.0, %v1900
      %v1902 = vpop.f32.mrf.mxu0
      %v1903 = vadd.f32 0.0, %v1902
      %1904 = vmatmul.bf16.gmra.mxu0 %v1833
      %v1905 = vpop.f32.mrf.mxu0
      %v1906 = vadd.f32 0.0, %v1905
      %v1907 = vpop.f32.mrf.mxu0
      %v1908 = vadd.f32 0.0, %v1907
      %1909 = vmatmul.bf16.gmra.mxu0 %v1836
      %v1910 = vpop.f32.mrf.mxu0
      %v1911 = vadd.f32 0.0, %v1910
      %v1912 = vpop.f32.mrf.mxu0
      %v1913 = vadd.f32 0.0, %v1912
      %1914 = vmatmul.bf16.gmra.mxu0 %v1839
      %v1915 = vpop.f32.mrf.mxu0
      %v1916 = vadd.f32 0.0, %v1915
      %v1917 = vpop.f32.mrf.mxu0
      %v1918 = vadd.f32 0.0, %v1917
      %1919 = vmatmul.bf16.gmra.mxu0 %v1842
      %v1920 = vpop.f32.mrf.mxu0
      %v1921 = vadd.f32 0.0, %v1920
      %v1922 = vpop.f32.mrf.mxu0
      %v1923 = vadd.f32 0.0, %v1922
      %1924 = vmatmul.bf16.gmra.mxu0 %v1845
      %v1925 = vpop.f32.mrf.mxu0
      %v1926 = vadd.f32 0.0, %v1925
      %v1927 = vpop.f32.mrf.mxu0
      %v1928 = vadd.f32 0.0, %v1927
      %1929 = vmatmul.bf16.gmra.mxu0 %v1848
      %v1930 = vpop.f32.mrf.mxu0
      %v1931 = vadd.f32 0.0, %v1930
      %v1932 = vpop.f32.mrf.mxu0
      %v1933 = vadd.f32 0.0, %v1932
      %1934 = vmatmul.bf16.gmra.mxu0 %v1851
      %v1935 = vpop.f32.mrf.mxu0
      %v1936 = vadd.f32 0.0, %v1935
      %v1937 = vpop.f32.mrf.mxu0
      %v1938 = vadd.f32 0.0, %v1937
      %1939 = vmatmul.bf16.gmra.mxu0 %v1854
      %v1940 = vpop.f32.mrf.mxu0
      %v1941 = vadd.f32 0.0, %v1940
      %v1942 = vpop.f32.mrf.mxu0
      %v1943 = vadd.f32 0.0, %v1942
      %1944 = vmatmul.bf16.gmra.mxu0 %v1857
      %v1945 = vpop.f32.mrf.mxu0
      %v1946 = vadd.f32 0.0, %v1945
      %v1947 = vpop.f32.mrf.mxu0
      %v1948 = vadd.f32 0.0, %v1947
      %1949 = vmatmul.bf16.gmra.mxu0 %v1860
      %v1950 = vpop.f32.mrf.mxu0
      %v1951 = vadd.f32 0.0, %v1950
      %v1952 = vpop.f32.mrf.mxu0
      %v1953 = vadd.f32 0.0, %v1952
      %1954 = vmatmul.bf16.gmra.mxu0 %v1863
      %v1955 = vpop.f32.mrf.mxu0
      %v1956 = vadd.f32 0.0, %v1955
      %v1957 = vpop.f32.mrf.mxu0
      %v1958 = vadd.f32 0.0, %v1957
      %1959 = vmatmul.bf16.gmra.mxu0 %v1866
      %v1960 = vpop.f32.mrf.mxu0
      %v1961 = vadd.f32 0.0, %v1960
      %v1962 = vpop.f32.mrf.mxu0
      %v1963 = vadd.f32 0.0, %v1962
      %1964 = vmatmul.bf16.gmra.mxu0 %v1869
      %v1965 = vpop.f32.mrf.mxu0
      %v1966 = vadd.f32 0.0, %v1965
      %v1967 = vpop.f32.mrf.mxu0
      %v1968 = vadd.f32 0.0, %v1967
      %1969 = vdwg.mxu0
      %v1970 = vadd.f32 %v1484, %v1881
      %v1971 = vadd.f32 %v1485, %v1883
      %v1972 = vadd.f32 %v1486, %v1886
      %v1973 = vadd.f32 %v1487, %v1888
      %v1974 = vadd.f32 %v1488, %v1891
      %v1975 = vadd.f32 %v1489, %v1893
      %v1976 = vadd.f32 %v1490, %v1896
      %v1977 = vadd.f32 %v1491, %v1898
      %v1978 = vadd.f32 %v1492, %v1901
      %v1979 = vadd.f32 %v1493, %v1903
      %v1980 = vadd.f32 %v1494, %v1906
      %v1981 = vadd.f32 %v1495, %v1908
      %v1982 = vadd.f32 %v1496, %v1911
      %v1983 = vadd.f32 %v1497, %v1913
      %v1984 = vadd.f32 %v1498, %v1916
      %v1985 = vadd.f32 %v1499, %v1918
      %v1986 = vadd.f32 %v1500, %v1921
      %v1987 = vadd.f32 %v1501, %v1923
      %v1988 = vadd.f32 %v1502, %v1926
      %v1989 = vadd.f32 %v1503, %v1928
      %v1990 = vadd.f32 %v1504, %v1931
      %v1991 = vadd.f32 %v1505, %v1933
      %v1992 = vadd.f32 %v1506, %v1936
      %v1993 = vadd.f32 %v1507, %v1938
      %v1994 = vadd.f32 %v1508, %v1941
      %v1995 = vadd.f32 %v1509, %v1943
      %v1996 = vadd.f32 %v1510, %v1946
      %v1997 = vadd.f32 %v1511, %v1948
      %v1998 = vadd.f32 %v1512, %v1951
      %v1999 = vadd.f32 %v1513, %v1953
      %v2000 = vadd.f32 %v1514, %v1956
      %v2001 = vadd.f32 %v1515, %v1958
      %v2002 = vadd.f32 %v1516, %v1961
      %v2003 = vadd.f32 %v1517, %v1963
      %v2004 = vadd.f32 %v1518, %v1966
      %v2005 = vadd.f32 %v1519, %v1968
      %2006 = vst.msk [vmem:[#allocation3] sm:$0xff] %vm948, %v1970
      %2007 = vst.msk [vmem:[#allocation3 + $0x8] sm:$0xff] %vm948, %v1971
      %2008 = vst.msk [vmem:[#allocation3 + $0x10] sm:$0xff] %vm948, %v1972
      %2009 = vst.msk [vmem:[#allocation3 + $0x18] sm:$0xff] %vm948, %v1973
      %2010 = vst.msk [vmem:[#allocation3 + $0x20] sm:$0xff] %vm948, %v1974
      %2011 = vst.msk [vmem:[#allocation3 + $0x28] sm:$0xff] %vm948, %v1975
      %2012 = vst.msk [vmem:[#allocation3 + $0x30] sm:$0xff] %vm948, %v1976
      %2013 = vst.msk [vmem:[#allocation3 + $0x38] sm:$0xff] %vm948, %v1977
      %2014 = vst.msk [vmem:[#allocation3 + $0x40] sm:$0xff] %vm948, %v1978
      %2015 = vst.msk [vmem:[#allocation3 + $0x48] sm:$0xff] %vm948, %v1979
      %2016 = vst.msk [vmem:[#allocation3 + $0x50] sm:$0xff] %vm948, %v1980
      %2017 = vst.msk [vmem:[#allocation3 + $0x58] sm:$0xff] %vm948, %v1981
      %2018 = vst.msk [vmem:[#allocation3 + $0x60] sm:$0xff] %vm948, %v1982
      %2019 = vst.msk [vmem:[#allocation3 + $0x68] sm:$0xff] %vm948, %v1983
      %2020 = vst.msk [vmem:[#allocation3 + $0x70] sm:$0xff] %vm948, %v1984
      %2021 = vst.msk [vmem:[#allocation3 + $0x78] sm:$0xff] %vm948, %v1985
      %2022 = vst.msk [vmem:[#allocation3 + $0x80] sm:$0xff] %vm948, %v1986
      %2023 = vst.msk [vmem:[#allocation3 + $0x88] sm:$0xff] %vm948, %v1987
      %2024 = vst.msk [vmem:[#allocation3 + $0x90] sm:$0xff] %vm948, %v1988
      %2025 = vst.msk [vmem:[#allocation3 + $0x98] sm:$0xff] %vm948, %v1989
      %2026 = vst.msk [vmem:[#allocation3 + $0xa0] sm:$0xff] %vm948, %v1990
      %2027 = vst.msk [vmem:[#allocation3 + $0xa8] sm:$0xff] %vm948, %v1991
      %2028 = vst.msk [vmem:[#allocation3 + $0xb0] sm:$0xff] %vm948, %v1992
      %2029 = vst.msk [vmem:[#allocation3 + $0xb8] sm:$0xff] %vm948, %v1993
      %2030 = vst.msk [vmem:[#allocation3 + $0xc0] sm:$0xff] %vm948, %v1994
      %2031 = vst.msk [vmem:[#allocation3 + $0xc8] sm:$0xff] %vm948, %v1995
      %2032 = vst.msk [vmem:[#allocation3 + $0xd0] sm:$0xff] %vm948, %v1996
      %2033 = vst.msk [vmem:[#allocation3 + $0xd8] sm:$0xff] %vm948, %v1997
      %2034 = vst.msk [vmem:[#allocation3 + $0xe0] sm:$0xff] %vm948, %v1998
      %2035 = vst.msk [vmem:[#allocation3 + $0xe8] sm:$0xff] %vm948, %v1999
      %2036 = vst.msk [vmem:[#allocation3 + $0xf0] sm:$0xff] %vm948, %v2000
      %2037 = vst.msk [vmem:[#allocation3 + $0xf8] sm:$0xff] %vm948, %v2001
      %2038 = vst.msk [vmem:[#allocation3 + $0x100] sm:$0xff] %vm948, %v2002
      %2039 = vst.msk [vmem:[#allocation3 + $0x108] sm:$0xff] %vm948, %v2003
      %2040 = vst.msk [vmem:[#allocation3 + $0x110] sm:$0xff] %vm948, %v2004
      %2041 = vst.msk [vmem:[#allocation3 + $0x118] sm:$0xff] %vm948, %v2005
      %v2042 = vld [vmem:[#allocation2 + $0x8] sm:$0xf]
      %v2043 = vld [vmem:[#allocation2 + $0xc] sm:$0xf]
      %v2044 = vld [vmem:[#allocation2 + $0x10] sm:$0xf]
      %v2045 = vld [vmem:[#allocation2 + $0x14] sm:$0xf]
      %v2046 = vld [vmem:[#allocation2 + $0x18] sm:$0xf]
      %v2047 = vld [vmem:[#allocation2 + $0x1c] sm:$0xf]
      %v2048 = vld [vmem:[#allocation2 + $0x20] sm:$0xf]
      %v2049 = vld [vmem:[#allocation2 + $0x24] sm:$0xf]
      %v2050 = vld [vmem:[#allocation2 + $0x28] sm:$0xf]
      %v2051 = vld [vmem:[#allocation2 + $0x2c] sm:$0xf]
      %v2052 = vld [vmem:[#allocation2 + $0x30] sm:$0xf]
      %v2053 = vld [vmem:[#allocation2 + $0x34] sm:$0xf]
      %v2054 = vld [vmem:[#allocation2 + $0x38] sm:$0xf]
      %v2055 = vld [vmem:[#allocation2 + $0x3c] sm:$0xf]
      %v2056 = vld [vmem:[#allocation2 + $0x40] sm:$0xf]
      %v2057 = vld [vmem:[#allocation2 + $0x44] sm:$0xf]
      %v2058 = vld [vmem:[#allocation2 + $0x48] sm:$0xf]
      %v2059 = vld [vmem:[#allocation2 + $0x4c] sm:$0xf]
      %v2060 = vld [vmem:[#allocation2 + $0x50] sm:$0xf]
      %v2061 = vld [vmem:[#allocation2 + $0x54] sm:$0xf]
      %v2062 = vld [vmem:[#allocation2 + $0x58] sm:$0xf]
      %v2063 = vld [vmem:[#allocation2 + $0x5c] sm:$0xf]
      %v2064 = vld [vmem:[#allocation2 + $0x60] sm:$0xf]
      %v2065 = vld [vmem:[#allocation2 + $0x64] sm:$0xf]
      %v2066 = vld [vmem:[#allocation2 + $0x68] sm:$0xf]
      %v2067 = vld [vmem:[#allocation2 + $0x6c] sm:$0xf]
      %v2068 = vld [vmem:[#allocation2 + $0x70] sm:$0xf]
      %v2069 = vld [vmem:[#allocation2 + $0x74] sm:$0xf]
      %v2070 = vld [vmem:[#allocation2 + $0x78] sm:$0xf]
      %v2071 = vld [vmem:[#allocation2 + $0x7c] sm:$0xf]
      %v2072 = vld [vmem:[#allocation2 + $0x80] sm:$0xf]
      %v2073 = vld [vmem:[#allocation2 + $0x84] sm:$0xf]
      %v2074 = vld [vmem:[#allocation2 + $0x88] sm:$0xf]
      %v2075 = vld [vmem:[#allocation2 + $0x8c] sm:$0xf]
      %v2076 = vld [vmem:[#allocation2 + $0x90] sm:$0xf]
      %v2077 = vld [vmem:[#allocation2 + $0x94] sm:$0xf]
      %v2078 = vld [vmem:[#allocation3] sm:$0xff]
      %v2079 = vld [vmem:[#allocation3 + $0x8] sm:$0xff]
      %v2080 = vld [vmem:[#allocation3 + $0x10] sm:$0xff]
      %v2081 = vld [vmem:[#allocation3 + $0x18] sm:$0xff]
      %v2082 = vld [vmem:[#allocation3 + $0x20] sm:$0xff]
      %v2083 = vld [vmem:[#allocation3 + $0x28] sm:$0xff]
      %v2084 = vld [vmem:[#allocation3 + $0x30] sm:$0xff]
      %v2085 = vld [vmem:[#allocation3 + $0x38] sm:$0xff]
      %v2086 = vld [vmem:[#allocation3 + $0x40] sm:$0xff]
      %v2087 = vld [vmem:[#allocation3 + $0x48] sm:$0xff]
      %v2088 = vld [vmem:[#allocation3 + $0x50] sm:$0xff]
      %v2089 = vld [vmem:[#allocation3 + $0x58] sm:$0xff]
      %v2090 = vld [vmem:[#allocation3 + $0x60] sm:$0xff]
      %v2091 = vld [vmem:[#allocation3 + $0x68] sm:$0xff]
      %v2092 = vld [vmem:[#allocation3 + $0x70] sm:$0xff]
      %v2093 = vld [vmem:[#allocation3 + $0x78] sm:$0xff]
      %v2094 = vld [vmem:[#allocation3 + $0x80] sm:$0xff]
      %v2095 = vld [vmem:[#allocation3 + $0x88] sm:$0xff]
      %v2096 = vld [vmem:[#allocation3 + $0x90] sm:$0xff]
      %v2097 = vld [vmem:[#allocation3 + $0x98] sm:$0xff]
      %v2098 = vld [vmem:[#allocation3 + $0xa0] sm:$0xff]
      %v2099 = vld [vmem:[#allocation3 + $0xa8] sm:$0xff]
      %v2100 = vld [vmem:[#allocation3 + $0xb0] sm:$0xff]
      %v2101 = vld [vmem:[#allocation3 + $0xb8] sm:$0xff]
      %v2102 = vld [vmem:[#allocation3 + $0xc0] sm:$0xff]
      %v2103 = vld [vmem:[#allocation3 + $0xc8] sm:$0xff]
      %v2104 = vld [vmem:[#allocation3 + $0xd0] sm:$0xff]
      %v2105 = vld [vmem:[#allocation3 + $0xd8] sm:$0xff]
      %v2106 = vld [vmem:[#allocation3 + $0xe0] sm:$0xff]
      %v2107 = vld [vmem:[#allocation3 + $0xe8] sm:$0xff]
      %v2108 = vld [vmem:[#allocation3 + $0xf0] sm:$0xff]
      %v2109 = vld [vmem:[#allocation3 + $0xf8] sm:$0xff]
      %v2110 = vld [vmem:[#allocation3 + $0x100] sm:$0xff]
      %v2111 = vld [vmem:[#allocation3 + $0x108] sm:$0xff]
      %v2112 = vld [vmem:[#allocation3 + $0x110] sm:$0xff]
      %v2113 = vld [vmem:[#allocation3 + $0x118] sm:$0xff]
      %s2114 = scalar_lea.vmem %s4, 64
      %v2115 = vld [vmem:[%s2114] sm:$0xf]
      %v2116 = vld [vmem:[%s2114 + $0x4] sm:$0xf]
      %v2117 = vld [vmem:[%s2114 + $0x8] sm:$0xf]
      %v2118 = vld [vmem:[%s2114 + $0xc] sm:$0xf]
      %v2119 = vld [vmem:[%s2114 + $0x10] sm:$0xf]
      %v2120 = vld [vmem:[%s2114 + $0x14] sm:$0xf]
      %v2121 = vld [vmem:[%s2114 + $0x18] sm:$0xf]
      %v2122 = vld [vmem:[%s2114 + $0x1c] sm:$0xf]
      %v2159 = vunpack.c.l.b16 %v2042
      %v2160 = vunpack.c.l.b16 %v2043
      %v2161 = vunpack.c.l.b16 %v2044
      %v2162 = vunpack.c.l.b16 %v2045
      %v2163 = vunpack.c.l.b16 %v2046
      %v2164 = vunpack.c.l.b16 %v2047
      %v2165 = vunpack.c.l.b16 %v2048
      %v2166 = vunpack.c.l.b16 %v2049
      %v2167 = vunpack.c.l.b16 %v2050
      %v2168 = vunpack.c.l.b16 %v2051
      %v2169 = vunpack.c.l.b16 %v2052
      %v2170 = vunpack.c.l.b16 %v2053
      %v2171 = vunpack.c.l.b16 %v2054
      %v2172 = vunpack.c.l.b16 %v2055
      %v2173 = vunpack.c.l.b16 %v2056
      %v2174 = vunpack.c.l.b16 %v2057
      %v2175 = vunpack.c.l.b16 %v2058
      %v2176 = vunpack.c.l.b16 %v2059
      %v2177 = vunpack.c.l.b16 %v2060
      %v2178 = vunpack.c.l.b16 %v2061
      %v2179 = vunpack.c.l.b16 %v2062
      %v2180 = vunpack.c.l.b16 %v2063
      %v2181 = vunpack.c.l.b16 %v2064
      %v2182 = vunpack.c.l.b16 %v2065
      %v2183 = vunpack.c.l.b16 %v2066
      %v2184 = vunpack.c.l.b16 %v2067
      %v2185 = vunpack.c.l.b16 %v2068
      %v2186 = vunpack.c.l.b16 %v2069
      %v2187 = vunpack.c.l.b16 %v2070
      %v2188 = vunpack.c.l.b16 %v2071
      %v2189 = vunpack.c.l.b16 %v2072
      %v2190 = vunpack.c.l.b16 %v2073
      %v2191 = vunpack.c.l.b16 %v2074
      %v2192 = vunpack.c.l.b16 %v2075
      %v2193 = vunpack.c.l.b16 %v2076
      %v2194 = vunpack.c.l.b16 %v2077
      %v2195 = vpack.c.b16 %v2160, %v2159
      %v2196 = vpack.c.b16 %v2162, %v2161
      %v2197 = vpack.c.b16 %v2164, %v2163
      %v2198 = vpack.c.b16 %v2166, %v2165
      %v2199 = vpack.c.b16 %v2168, %v2167
      %v2200 = vpack.c.b16 %v2170, %v2169
      %v2201 = vpack.c.b16 %v2172, %v2171
      %v2202 = vpack.c.b16 %v2174, %v2173
      %v2203 = vpack.c.b16 %v2176, %v2175
      %v2204 = vpack.c.b16 %v2178, %v2177
      %v2205 = vpack.c.b16 %v2180, %v2179
      %v2206 = vpack.c.b16 %v2182, %v2181
      %v2207 = vpack.c.b16 %v2184, %v2183
      %v2208 = vpack.c.b16 %v2186, %v2185
      %v2209 = vpack.c.b16 %v2188, %v2187
      %v2210 = vpack.c.b16 %v2190, %v2189
      %v2211 = vpack.c.b16 %v2192, %v2191
      %v2212 = vpack.c.b16 %v2194, %v2193
      %v2221 = vunpack.c.l.b16 %v2115
      %v2222 = vunpack.c.l.b16 %v2116
      %v2223 = vunpack.c.l.b16 %v2117
      %v2224 = vunpack.c.l.b16 %v2118
      %v2225 = vunpack.c.l.b16 %v2119
      %v2226 = vunpack.c.l.b16 %v2120
      %v2227 = vunpack.c.l.b16 %v2121
      %v2228 = vunpack.c.l.b16 %v2122
      %v2229 = vpack.c.b16 %v2222, %v2221
      %v2230 = vpack.c.b16 %v2224, %v2223
      %v2231 = vpack.c.b16 %v2226, %v2225
      %v2232 = vpack.c.b16 %v2228, %v2227
      %v2238 = vsel %vm1221, %v2195, 0
      %v2241 = vsel %vm1221, %v2196, 0
      %v2244 = vsel %vm1221, %v2197, 0
      %v2247 = vsel %vm1221, %v2198, 0
      %v2250 = vsel %vm1221, %v2199, 0
      %v2253 = vsel %vm1221, %v2200, 0
      %v2256 = vsel %vm1221, %v2201, 0
      %v2259 = vsel %vm1221, %v2202, 0
      %v2262 = vsel %vm1221, %v2203, 0
      %v2265 = vsel %vm1221, %v2204, 0
      %v2268 = vsel %vm1221, %v2205, 0
      %v2271 = vsel %vm1221, %v2206, 0
      %v2274 = vsel %vm1221, %v2207, 0
      %v2277 = vsel %vm1221, %v2208, 0
      %v2280 = vsel %vm1221, %v2209, 0
      %v2283 = vsel %vm1221, %v2210, 0
      %v2286 = vsel %vm1221, %v2211, 0
      %v2289 = vsel %vm1221, %v2212, 0
      %2291 = vmatpush.bf16.msra.mxu0 0
      %2292 = vmatpush.bf16.msra.mxu0 0
      %2293 = vmatpush.bf16.msra.mxu0 0
      %2294 = vmatpush.bf16.msra.mxu0 0
      %2295 = vmatpush.bf16.msra.mxu0 %v2232
      %2296 = vmatpush.bf16.msra.mxu0 %v2231
      %2297 = vmatpush.bf16.msra.mxu0 %v2230
      %2298 = vmatpush.bf16.msra.mxu0 %v2229
      %2299 = vmatmul.bf16.gmra.mxu0 %v2238
      %v2300 = vpop.f32.mrf.mxu0
      %v2301 = vadd.f32 0.0, %v2300
      %v2302 = vpop.f32.mrf.mxu0
      %v2303 = vadd.f32 0.0, %v2302
      %2304 = vmatmul.bf16.gmra.mxu0 %v2241
      %v2305 = vpop.f32.mrf.mxu0
      %v2306 = vadd.f32 0.0, %v2305
      %v2307 = vpop.f32.mrf.mxu0
      %v2308 = vadd.f32 0.0, %v2307
      %2309 = vmatmul.bf16.gmra.mxu0 %v2244
      %v2310 = vpop.f32.mrf.mxu0
      %v2311 = vadd.f32 0.0, %v2310
      %v2312 = vpop.f32.mrf.mxu0
      %v2313 = vadd.f32 0.0, %v2312
      %2314 = vmatmul.bf16.gmra.mxu0 %v2247
      %v2315 = vpop.f32.mrf.mxu0
      %v2316 = vadd.f32 0.0, %v2315
      %v2317 = vpop.f32.mrf.mxu0
      %v2318 = vadd.f32 0.0, %v2317
      %2319 = vmatmul.bf16.gmra.mxu0 %v2250
      %v2320 = vpop.f32.mrf.mxu0
      %v2321 = vadd.f32 0.0, %v2320
      %v2322 = vpop.f32.mrf.mxu0
      %v2323 = vadd.f32 0.0, %v2322
      %2324 = vmatmul.bf16.gmra.mxu0 %v2253
      %v2325 = vpop.f32.mrf.mxu0
      %v2326 = vadd.f32 0.0, %v2325
      %v2327 = vpop.f32.mrf.mxu0
      %v2328 = vadd.f32 0.0, %v2327
      %2329 = vmatmul.bf16.gmra.mxu0 %v2256
      %v2330 = vpop.f32.mrf.mxu0
      %v2331 = vadd.f32 0.0, %v2330
      %v2332 = vpop.f32.mrf.mxu0
      %v2333 = vadd.f32 0.0, %v2332
      %2334 = vmatmul.bf16.gmra.mxu0 %v2259
      %v2335 = vpop.f32.mrf.mxu0
      %v2336 = vadd.f32 0.0, %v2335
      %v2337 = vpop.f32.mrf.mxu0
      %v2338 = vadd.f32 0.0, %v2337
      %2339 = vmatmul.bf16.gmra.mxu0 %v2262
      %v2340 = vpop.f32.mrf.mxu0
      %v2341 = vadd.f32 0.0, %v2340
      %v2342 = vpop.f32.mrf.mxu0
      %v2343 = vadd.f32 0.0, %v2342
      %2344 = vmatmul.bf16.gmra.mxu0 %v2265
      %v2345 = vpop.f32.mrf.mxu0
      %v2346 = vadd.f32 0.0, %v2345
      %v2347 = vpop.f32.mrf.mxu0
      %v2348 = vadd.f32 0.0, %v2347
      %2349 = vmatmul.bf16.gmra.mxu0 %v2268
      %v2350 = vpop.f32.mrf.mxu0
      %v2351 = vadd.f32 0.0, %v2350
      %v2352 = vpop.f32.mrf.mxu0
      %v2353 = vadd.f32 0.0, %v2352
      %2354 = vmatmul.bf16.gmra.mxu0 %v2271
      %v2355 = vpop.f32.mrf.mxu0
      %v2356 = vadd.f32 0.0, %v2355
      %v2357 = vpop.f32.mrf.mxu0
      %v2358 = vadd.f32 0.0, %v2357
      %2359 = vmatmul.bf16.gmra.mxu0 %v2274
      %v2360 = vpop.f32.mrf.mxu0
      %v2361 = vadd.f32 0.0, %v2360
      %v2362 = vpop.f32.mrf.mxu0
      %v2363 = vadd.f32 0.0, %v2362
      %2364 = vmatmul.bf16.gmra.mxu0 %v2277
      %v2365 = vpop.f32.mrf.mxu0
      %v2366 = vadd.f32 0.0, %v2365
      %v2367 = vpop.f32.mrf.mxu0
      %v2368 = vadd.f32 0.0, %v2367
      %2369 = vmatmul.bf16.gmra.mxu0 %v2280
      %v2370 = vpop.f32.mrf.mxu0
      %v2371 = vadd.f32 0.0, %v2370
      %v2372 = vpop.f32.mrf.mxu0
      %v2373 = vadd.f32 0.0, %v2372
      %2374 = vmatmul.bf16.gmra.mxu0 %v2283
      %v2375 = vpop.f32.mrf.mxu0
      %v2376 = vadd.f32 0.0, %v2375
      %v2377 = vpop.f32.mrf.mxu0
      %v2378 = vadd.f32 0.0, %v2377
      %2379 = vmatmul.bf16.gmra.mxu0 %v2286
      %v2380 = vpop.f32.mrf.mxu0
      %v2381 = vadd.f32 0.0, %v2380
      %v2382 = vpop.f32.mrf.mxu0
      %v2383 = vadd.f32 0.0, %v2382
      %2384 = vmatmul.bf16.gmra.mxu0 %v2289
      %v2385 = vpop.f32.mrf.mxu0
      %v2386 = vadd.f32 0.0, %v2385
      %v2387 = vpop.f32.mrf.mxu0
      %v2388 = vadd.f32 0.0, %v2387
      %2389 = vdwg.mxu0
      %v2390 = vadd.f32 %v2078, %v2301
      %v2391 = vadd.f32 %v2079, %v2303
      %v2392 = vadd.f32 %v2080, %v2306
      %v2393 = vadd.f32 %v2081, %v2308
      %v2394 = vadd.f32 %v2082, %v2311
      %v2395 = vadd.f32 %v2083, %v2313
      %v2396 = vadd.f32 %v2084, %v2316
      %v2397 = vadd.f32 %v2085, %v2318
      %v2398 = vadd.f32 %v2086, %v2321
      %v2399 = vadd.f32 %v2087, %v2323
      %v2400 = vadd.f32 %v2088, %v2326
      %v2401 = vadd.f32 %v2089, %v2328
      %v2402 = vadd.f32 %v2090, %v2331
      %v2403 = vadd.f32 %v2091, %v2333
      %v2404 = vadd.f32 %v2092, %v2336
      %v2405 = vadd.f32 %v2093, %v2338
      %v2406 = vadd.f32 %v2094, %v2341
      %v2407 = vadd.f32 %v2095, %v2343
      %v2408 = vadd.f32 %v2096, %v2346
      %v2409 = vadd.f32 %v2097, %v2348
      %v2410 = vadd.f32 %v2098, %v2351
      %v2411 = vadd.f32 %v2099, %v2353
      %v2412 = vadd.f32 %v2100, %v2356
      %v2413 = vadd.f32 %v2101, %v2358
      %v2414 = vadd.f32 %v2102, %v2361
      %v2415 = vadd.f32 %v2103, %v2363
      %v2416 = vadd.f32 %v2104, %v2366
      %v2417 = vadd.f32 %v2105, %v2368
      %v2418 = vadd.f32 %v2106, %v2371
      %v2419 = vadd.f32 %v2107, %v2373
      %v2420 = vadd.f32 %v2108, %v2376
      %v2421 = vadd.f32 %v2109, %v2378
      %v2422 = vadd.f32 %v2110, %v2381
      %v2423 = vadd.f32 %v2111, %v2383
      %v2424 = vadd.f32 %v2112, %v2386
      %v2425 = vadd.f32 %v2113, %v2388
      %2426 = vst.msk [vmem:[#allocation3] sm:$0xff] %vm948, %v2390
      %2427 = vst.msk [vmem:[#allocation3 + $0x8] sm:$0xff] %vm948, %v2391
      %2428 = vst.msk [vmem:[#allocation3 + $0x10] sm:$0xff] %vm948, %v2392
      %2429 = vst.msk [vmem:[#allocation3 + $0x18] sm:$0xff] %vm948, %v2393
      %2430 = vst.msk [vmem:[#allocation3 + $0x20] sm:$0xff] %vm948, %v2394
      %2431 = vst.msk [vmem:[#allocation3 + $0x28] sm:$0xff] %vm948, %v2395
      %2432 = vst.msk [vmem:[#allocation3 + $0x30] sm:$0xff] %vm948, %v2396
      %2433 = vst.msk [vmem:[#allocation3 + $0x38] sm:$0xff] %vm948, %v2397
      %2434 = vst.msk [vmem:[#allocation3 + $0x40] sm:$0xff] %vm948, %v2398
      %2435 = vst.msk [vmem:[#allocation3 + $0x48] sm:$0xff] %vm948, %v2399
      %2436 = vst.msk [vmem:[#allocation3 + $0x50] sm:$0xff] %vm948, %v2400
      %2437 = vst.msk [vmem:[#allocation3 + $0x58] sm:$0xff] %vm948, %v2401
      %2438 = vst.msk [vmem:[#allocation3 + $0x60] sm:$0xff] %vm948, %v2402
      %2439 = vst.msk [vmem:[#allocation3 + $0x68] sm:$0xff] %vm948, %v2403
      %2440 = vst.msk [vmem:[#allocation3 + $0x70] sm:$0xff] %vm948, %v2404
      %2441 = vst.msk [vmem:[#allocation3 + $0x78] sm:$0xff] %vm948, %v2405
      %2442 = vst.msk [vmem:[#allocation3 + $0x80] sm:$0xff] %vm948, %v2406
      %2443 = vst.msk [vmem:[#allocation3 + $0x88] sm:$0xff] %vm948, %v2407
      %2444 = vst.msk [vmem:[#allocation3 + $0x90] sm:$0xff] %vm948, %v2408
      %2445 = vst.msk [vmem:[#allocation3 + $0x98] sm:$0xff] %vm948, %v2409
      %2446 = vst.msk [vmem:[#allocation3 + $0xa0] sm:$0xff] %vm948, %v2410
      %2447 = vst.msk [vmem:[#allocation3 + $0xa8] sm:$0xff] %vm948, %v2411
      %2448 = vst.msk [vmem:[#allocation3 + $0xb0] sm:$0xff] %vm948, %v2412
      %2449 = vst.msk [vmem:[#allocation3 + $0xb8] sm:$0xff] %vm948, %v2413
      %2450 = vst.msk [vmem:[#allocation3 + $0xc0] sm:$0xff] %vm948, %v2414
      %2451 = vst.msk [vmem:[#allocation3 + $0xc8] sm:$0xff] %vm948, %v2415
      %2452 = vst.msk [vmem:[#allocation3 + $0xd0] sm:$0xff] %vm948, %v2416
      %2453 = vst.msk [vmem:[#allocation3 + $0xd8] sm:$0xff] %vm948, %v2417
      %2454 = vst.msk [vmem:[#allocation3 + $0xe0] sm:$0xff] %vm948, %v2418
      %2455 = vst.msk [vmem:[#allocation3 + $0xe8] sm:$0xff] %vm948, %v2419
      %2456 = vst.msk [vmem:[#allocation3 + $0xf0] sm:$0xff] %vm948, %v2420
      %2457 = vst.msk [vmem:[#allocation3 + $0xf8] sm:$0xff] %vm948, %v2421
      %2458 = vst.msk [vmem:[#allocation3 + $0x100] sm:$0xff] %vm948, %v2422
      %2459 = vst.msk [vmem:[#allocation3 + $0x108] sm:$0xff] %vm948, %v2423
      %2460 = vst.msk [vmem:[#allocation3 + $0x110] sm:$0xff] %vm948, %v2424
      %2461 = vst.msk [vmem:[#allocation3 + $0x118] sm:$0xff] %vm948, %v2425
      %v2462 = vld [vmem:[#allocation2 + $0x10] sm:$0xf]
      %v2463 = vld [vmem:[#allocation2 + $0x14] sm:$0xf]
      %v2464 = vld [vmem:[#allocation2 + $0x18] sm:$0xf]
      %v2465 = vld [vmem:[#allocation2 + $0x1c] sm:$0xf]
      %v2466 = vld [vmem:[#allocation2 + $0x20] sm:$0xf]
      %v2467 = vld [vmem:[#allocation2 + $0x24] sm:$0xf]
      %v2468 = vld [vmem:[#allocation2 + $0x28] sm:$0xf]
      %v2469 = vld [vmem:[#allocation2 + $0x2c] sm:$0xf]
      %v2470 = vld [vmem:[#allocation2 + $0x30] sm:$0xf]
      %v2471 = vld [vmem:[#allocation2 + $0x34] sm:$0xf]
      %v2472 = vld [vmem:[#allocation2 + $0x38] sm:$0xf]
      %v2473 = vld [vmem:[#allocation2 + $0x3c] sm:$0xf]
      %v2474 = vld [vmem:[#allocation2 + $0x40] sm:$0xf]
      %v2475 = vld [vmem:[#allocation2 + $0x44] sm:$0xf]
      %v2476 = vld [vmem:[#allocation2 + $0x48] sm:$0xf]
      %v2477 = vld [vmem:[#allocation2 + $0x4c] sm:$0xf]
      %v2478 = vld [vmem:[#allocation2 + $0x50] sm:$0xf]
      %v2479 = vld [vmem:[#allocation2 + $0x54] sm:$0xf]
      %v2480 = vld [vmem:[#allocation2 + $0x58] sm:$0xf]
      %v2481 = vld [vmem:[#allocation2 + $0x5c] sm:$0xf]
      %v2482 = vld [vmem:[#allocation2 + $0x60] sm:$0xf]
      %v2483 = vld [vmem:[#allocation2 + $0x64] sm:$0xf]
      %v2484 = vld [vmem:[#allocation2 + $0x68] sm:$0xf]
      %v2485 = vld [vmem:[#allocation2 + $0x6c] sm:$0xf]
      %v2486 = vld [vmem:[#allocation2 + $0x70] sm:$0xf]
      %v2487 = vld [vmem:[#allocation2 + $0x74] sm:$0xf]
      %v2488 = vld [vmem:[#allocation2 + $0x78] sm:$0xf]
      %v2489 = vld [vmem:[#allocation2 + $0x7c] sm:$0xf]
      %v2490 = vld [vmem:[#allocation2 + $0x80] sm:$0xf]
      %v2491 = vld [vmem:[#allocation2 + $0x84] sm:$0xf]
      %v2492 = vld [vmem:[#allocation2 + $0x88] sm:$0xf]
      %v2493 = vld [vmem:[#allocation2 + $0x8c] sm:$0xf]
      %v2494 = vld [vmem:[#allocation2 + $0x90] sm:$0xf]
      %v2495 = vld [vmem:[#allocation2 + $0x94] sm:$0xf]
      %v2496 = vld [vmem:[#allocation2 + $0x98] sm:$0xf]
      %v2497 = vld [vmem:[#allocation2 + $0x9c] sm:$0xf]
      %v2498 = vld [vmem:[#allocation3] sm:$0xff]
      %v2499 = vld [vmem:[#allocation3 + $0x8] sm:$0xff]
      %v2500 = vld [vmem:[#allocation3 + $0x10] sm:$0xff]
      %v2501 = vld [vmem:[#allocation3 + $0x18] sm:$0xff]
      %v2502 = vld [vmem:[#allocation3 + $0x20] sm:$0xff]
      %v2503 = vld [vmem:[#allocation3 + $0x28] sm:$0xff]
      %v2504 = vld [vmem:[#allocation3 + $0x30] sm:$0xff]
      %v2505 = vld [vmem:[#allocation3 + $0x38] sm:$0xff]
      %v2506 = vld [vmem:[#allocation3 + $0x40] sm:$0xff]
      %v2507 = vld [vmem:[#allocation3 + $0x48] sm:$0xff]
      %v2508 = vld [vmem:[#allocation3 + $0x50] sm:$0xff]
      %v2509 = vld [vmem:[#allocation3 + $0x58] sm:$0xff]
      %v2510 = vld [vmem:[#allocation3 + $0x60] sm:$0xff]
      %v2511 = vld [vmem:[#allocation3 + $0x68] sm:$0xff]
      %v2512 = vld [vmem:[#allocation3 + $0x70] sm:$0xff]
      %v2513 = vld [vmem:[#allocation3 + $0x78] sm:$0xff]
      %v2514 = vld [vmem:[#allocation3 + $0x80] sm:$0xff]
      %v2515 = vld [vmem:[#allocation3 + $0x88] sm:$0xff]
      %v2516 = vld [vmem:[#allocation3 + $0x90] sm:$0xff]
      %v2517 = vld [vmem:[#allocation3 + $0x98] sm:$0xff]
      %v2518 = vld [vmem:[#allocation3 + $0xa0] sm:$0xff]
      %v2519 = vld [vmem:[#allocation3 + $0xa8] sm:$0xff]
      %v2520 = vld [vmem:[#allocation3 + $0xb0] sm:$0xff]
      %v2521 = vld [vmem:[#allocation3 + $0xb8] sm:$0xff]
      %v2522 = vld [vmem:[#allocation3 + $0xc0] sm:$0xff]
      %v2523 = vld [vmem:[#allocation3 + $0xc8] sm:$0xff]
      %v2524 = vld [vmem:[#allocation3 + $0xd0] sm:$0xff]
      %v2525 = vld [vmem:[#allocation3 + $0xd8] sm:$0xff]
      %v2526 = vld [vmem:[#allocation3 + $0xe0] sm:$0xff]
      %v2527 = vld [vmem:[#allocation3 + $0xe8] sm:$0xff]
      %v2528 = vld [vmem:[#allocation3 + $0xf0] sm:$0xff]
      %v2529 = vld [vmem:[#allocation3 + $0xf8] sm:$0xff]
      %v2530 = vld [vmem:[#allocation3 + $0x100] sm:$0xff]
      %v2531 = vld [vmem:[#allocation3 + $0x108] sm:$0xff]
      %v2532 = vld [vmem:[#allocation3 + $0x110] sm:$0xff]
      %v2533 = vld [vmem:[#allocation3 + $0x118] sm:$0xff]
      %s2534 = scalar_lea.vmem %s4, 96
      %v2535 = vld [vmem:[%s2534] sm:$0xf]
      %v2536 = vld [vmem:[%s2534 + $0x4] sm:$0xf]
      %v2537 = vld [vmem:[%s2534 + $0x8] sm:$0xf]
      %v2538 = vld [vmem:[%s2534 + $0xc] sm:$0xf]
      %v2539 = vld [vmem:[%s2534 + $0x10] sm:$0xf]
      %v2540 = vld [vmem:[%s2534 + $0x14] sm:$0xf]
      %v2541 = vld [vmem:[%s2534 + $0x18] sm:$0xf]
      %v2542 = vld [vmem:[%s2534 + $0x1c] sm:$0xf]
      %v2579 = vunpack.c.l.b16 %v2462
      %v2580 = vunpack.c.l.b16 %v2463
      %v2581 = vunpack.c.l.b16 %v2464
      %v2582 = vunpack.c.l.b16 %v2465
      %v2583 = vunpack.c.l.b16 %v2466
      %v2584 = vunpack.c.l.b16 %v2467
      %v2585 = vunpack.c.l.b16 %v2468
      %v2586 = vunpack.c.l.b16 %v2469
      %v2587 = vunpack.c.l.b16 %v2470
      %v2588 = vunpack.c.l.b16 %v2471
      %v2589 = vunpack.c.l.b16 %v2472
      %v2590 = vunpack.c.l.b16 %v2473
      %v2591 = vunpack.c.l.b16 %v2474
      %v2592 = vunpack.c.l.b16 %v2475
      %v2593 = vunpack.c.l.b16 %v2476
      %v2594 = vunpack.c.l.b16 %v2477
      %v2595 = vunpack.c.l.b16 %v2478
      %v2596 = vunpack.c.l.b16 %v2479
      %v2597 = vunpack.c.l.b16 %v2480
      %v2598 = vunpack.c.l.b16 %v2481
      %v2599 = vunpack.c.l.b16 %v2482
      %v2600 = vunpack.c.l.b16 %v2483
      %v2601 = vunpack.c.l.b16 %v2484
      %v2602 = vunpack.c.l.b16 %v2485
      %v2603 = vunpack.c.l.b16 %v2486
      %v2604 = vunpack.c.l.b16 %v2487
      %v2605 = vunpack.c.l.b16 %v2488
      %v2606 = vunpack.c.l.b16 %v2489
      %v2607 = vunpack.c.l.b16 %v2490
      %v2608 = vunpack.c.l.b16 %v2491
      %v2609 = vunpack.c.l.b16 %v2492
      %v2610 = vunpack.c.l.b16 %v2493
      %v2611 = vunpack.c.l.b16 %v2494
      %v2612 = vunpack.c.l.b16 %v2495
      %v2613 = vunpack.c.l.b16 %v2496
      %v2614 = vunpack.c.l.b16 %v2497
      %v2615 = vpack.c.b16 %v2580, %v2579
      %v2616 = vpack.c.b16 %v2582, %v2581
      %v2617 = vpack.c.b16 %v2584, %v2583
      %v2618 = vpack.c.b16 %v2586, %v2585
      %v2619 = vpack.c.b16 %v2588, %v2587
      %v2620 = vpack.c.b16 %v2590, %v2589
      %v2621 = vpack.c.b16 %v2592, %v2591
      %v2622 = vpack.c.b16 %v2594, %v2593
      %v2623 = vpack.c.b16 %v2596, %v2595
      %v2624 = vpack.c.b16 %v2598, %v2597
      %v2625 = vpack.c.b16 %v2600, %v2599
      %v2626 = vpack.c.b16 %v2602, %v2601
      %v2627 = vpack.c.b16 %v2604, %v2603
      %v2628 = vpack.c.b16 %v2606, %v2605
      %v2629 = vpack.c.b16 %v2608, %v2607
      %v2630 = vpack.c.b16 %v2610, %v2609
      %v2631 = vpack.c.b16 %v2612, %v2611
      %v2632 = vpack.c.b16 %v2614, %v2613
      %v2641 = vunpack.c.l.b16 %v2535
      %v2642 = vunpack.c.l.b16 %v2536
      %v2643 = vunpack.c.l.b16 %v2537
      %v2644 = vunpack.c.l.b16 %v2538
      %v2645 = vunpack.c.l.b16 %v2539
      %v2646 = vunpack.c.l.b16 %v2540
      %v2647 = vunpack.c.l.b16 %v2541
      %v2648 = vunpack.c.l.b16 %v2542
      %v2649 = vpack.c.b16 %v2642, %v2641
      %v2650 = vpack.c.b16 %v2644, %v2643
      %v2651 = vpack.c.b16 %v2646, %v2645
      %v2652 = vpack.c.b16 %v2648, %v2647
      %v2658 = vsel %vm1221, %v2615, 0
      %v2661 = vsel %vm1221, %v2616, 0
      %v2664 = vsel %vm1221, %v2617, 0
      %v2667 = vsel %vm1221, %v2618, 0
      %v2670 = vsel %vm1221, %v2619, 0
      %v2673 = vsel %vm1221, %v2620, 0
      %v2676 = vsel %vm1221, %v2621, 0
      %v2679 = vsel %vm1221, %v2622, 0
      %v2682 = vsel %vm1221, %v2623, 0
      %v2685 = vsel %vm1221, %v2624, 0
      %v2688 = vsel %vm1221, %v2625, 0
      %v2691 = vsel %vm1221, %v2626, 0
      %v2694 = vsel %vm1221, %v2627, 0
      %v2697 = vsel %vm1221, %v2628, 0
      %v2700 = vsel %vm1221, %v2629, 0
      %v2703 = vsel %vm1221, %v2630, 0
      %v2706 = vsel %vm1221, %v2631, 0
      %v2709 = vsel %vm1221, %v2632, 0
      %2711 = vmatpush.bf16.msra.mxu0 0
      %2712 = vmatpush.bf16.msra.mxu0 0
      %2713 = vmatpush.bf16.msra.mxu0 0
      %2714 = vmatpush.bf16.msra.mxu0 0
      %2715 = vmatpush.bf16.msra.mxu0 %v2652
      %2716 = vmatpush.bf16.msra.mxu0 %v2651
      %2717 = vmatpush.bf16.msra.mxu0 %v2650
      %2718 = vmatpush.bf16.msra.mxu0 %v2649
      %2719 = vmatmul.bf16.gmra.mxu0 %v2658
      %v2720 = vpop.f32.mrf.mxu0
      %v2721 = vadd.f32 0.0, %v2720
      %v2722 = vpop.f32.mrf.mxu0
      %v2723 = vadd.f32 0.0, %v2722
      %2724 = vmatmul.bf16.gmra.mxu0 %v2661
      %v2725 = vpop.f32.mrf.mxu0
      %v2726 = vadd.f32 0.0, %v2725
      %v2727 = vpop.f32.mrf.mxu0
      %v2728 = vadd.f32 0.0, %v2727
      %2729 = vmatmul.bf16.gmra.mxu0 %v2664
      %v2730 = vpop.f32.mrf.mxu0
      %v2731 = vadd.f32 0.0, %v2730
      %v2732 = vpop.f32.mrf.mxu0
      %v2733 = vadd.f32 0.0, %v2732
      %2734 = vmatmul.bf16.gmra.mxu0 %v2667
      %v2735 = vpop.f32.mrf.mxu0
      %v2736 = vadd.f32 0.0, %v2735
      %v2737 = vpop.f32.mrf.mxu0
      %v2738 = vadd.f32 0.0, %v2737
      %2739 = vmatmul.bf16.gmra.mxu0 %v2670
      %v2740 = vpop.f32.mrf.mxu0
      %v2741 = vadd.f32 0.0, %v2740
      %v2742 = vpop.f32.mrf.mxu0
      %v2743 = vadd.f32 0.0, %v2742
      %2744 = vmatmul.bf16.gmra.mxu0 %v2673
      %v2745 = vpop.f32.mrf.mxu0
      %v2746 = vadd.f32 0.0, %v2745
      %v2747 = vpop.f32.mrf.mxu0
      %v2748 = vadd.f32 0.0, %v2747
      %2749 = vmatmul.bf16.gmra.mxu0 %v2676
      %v2750 = vpop.f32.mrf.mxu0
      %v2751 = vadd.f32 0.0, %v2750
      %v2752 = vpop.f32.mrf.mxu0
      %v2753 = vadd.f32 0.0, %v2752
      %2754 = vmatmul.bf16.gmra.mxu0 %v2679
      %v2755 = vpop.f32.mrf.mxu0
      %v2756 = vadd.f32 0.0, %v2755
      %v2757 = vpop.f32.mrf.mxu0
      %v2758 = vadd.f32 0.0, %v2757
      %2759 = vmatmul.bf16.gmra.mxu0 %v2682
      %v2760 = vpop.f32.mrf.mxu0
      %v2761 = vadd.f32 0.0, %v2760
      %v2762 = vpop.f32.mrf.mxu0
      %v2763 = vadd.f32 0.0, %v2762
      %2764 = vmatmul.bf16.gmra.mxu0 %v2685
      %v2765 = vpop.f32.mrf.mxu0
      %v2766 = vadd.f32 0.0, %v2765
      %v2767 = vpop.f32.mrf.mxu0
      %v2768 = vadd.f32 0.0, %v2767
      %2769 = vmatmul.bf16.gmra.mxu0 %v2688
      %v2770 = vpop.f32.mrf.mxu0
      %v2771 = vadd.f32 0.0, %v2770
      %v2772 = vpop.f32.mrf.mxu0
      %v2773 = vadd.f32 0.0, %v2772
      %2774 = vmatmul.bf16.gmra.mxu0 %v2691
      %v2775 = vpop.f32.mrf.mxu0
      %v2776 = vadd.f32 0.0, %v2775
      %v2777 = vpop.f32.mrf.mxu0
      %v2778 = vadd.f32 0.0, %v2777
      %2779 = vmatmul.bf16.gmra.mxu0 %v2694
      %v2780 = vpop.f32.mrf.mxu0
      %v2781 = vadd.f32 0.0, %v2780
      %v2782 = vpop.f32.mrf.mxu0
      %v2783 = vadd.f32 0.0, %v2782
      %2784 = vmatmul.bf16.gmra.mxu0 %v2697
      %v2785 = vpop.f32.mrf.mxu0
      %v2786 = vadd.f32 0.0, %v2785
      %v2787 = vpop.f32.mrf.mxu0
      %v2788 = vadd.f32 0.0, %v2787
      %2789 = vmatmul.bf16.gmra.mxu0 %v2700
      %v2790 = vpop.f32.mrf.mxu0
      %v2791 = vadd.f32 0.0, %v2790
      %v2792 = vpop.f32.mrf.mxu0
      %v2793 = vadd.f32 0.0, %v2792
      %2794 = vmatmul.bf16.gmra.mxu0 %v2703
      %v2795 = vpop.f32.mrf.mxu0
      %v2796 = vadd.f32 0.0, %v2795
      %v2797 = vpop.f32.mrf.mxu0
      %v2798 = vadd.f32 0.0, %v2797
      %2799 = vmatmul.bf16.gmra.mxu0 %v2706
      %v2800 = vpop.f32.mrf.mxu0
      %v2801 = vadd.f32 0.0, %v2800
      %v2802 = vpop.f32.mrf.mxu0
      %v2803 = vadd.f32 0.0, %v2802
      %2804 = vmatmul.bf16.gmra.mxu0 %v2709
      %v2805 = vpop.f32.mrf.mxu0
      %v2806 = vadd.f32 0.0, %v2805
      %v2807 = vpop.f32.mrf.mxu0
      %v2808 = vadd.f32 0.0, %v2807
      %2809 = vdwg.mxu0
      %v2810 = vadd.f32 %v2498, %v2721
      %v2811 = vadd.f32 %v2499, %v2723
      %v2812 = vadd.f32 %v2500, %v2726
      %v2813 = vadd.f32 %v2501, %v2728
      %v2814 = vadd.f32 %v2502, %v2731
      %v2815 = vadd.f32 %v2503, %v2733
      %v2816 = vadd.f32 %v2504, %v2736
      %v2817 = vadd.f32 %v2505, %v2738
      %v2818 = vadd.f32 %v2506, %v2741
      %v2819 = vadd.f32 %v2507, %v2743
      %v2820 = vadd.f32 %v2508, %v2746
      %v2821 = vadd.f32 %v2509, %v2748
      %v2822 = vadd.f32 %v2510, %v2751
      %v2823 = vadd.f32 %v2511, %v2753
      %v2824 = vadd.f32 %v2512, %v2756
      %v2825 = vadd.f32 %v2513, %v2758
      %v2826 = vadd.f32 %v2514, %v2761
      %v2827 = vadd.f32 %v2515, %v2763
      %v2828 = vadd.f32 %v2516, %v2766
      %v2829 = vadd.f32 %v2517, %v2768
      %v2830 = vadd.f32 %v2518, %v2771
      %v2831 = vadd.f32 %v2519, %v2773
      %v2832 = vadd.f32 %v2520, %v2776
      %v2833 = vadd.f32 %v2521, %v2778
      %v2834 = vadd.f32 %v2522, %v2781
      %v2835 = vadd.f32 %v2523, %v2783
      %v2836 = vadd.f32 %v2524, %v2786
      %v2837 = vadd.f32 %v2525, %v2788
      %v2838 = vadd.f32 %v2526, %v2791
      %v2839 = vadd.f32 %v2527, %v2793
      %v2840 = vadd.f32 %v2528, %v2796
      %v2841 = vadd.f32 %v2529, %v2798
      %v2842 = vadd.f32 %v2530, %v2801
      %v2843 = vadd.f32 %v2531, %v2803
      %v2844 = vadd.f32 %v2532, %v2806
      %v2845 = vadd.f32 %v2533, %v2808
      %2846 = vst.msk [vmem:[#allocation3] sm:$0xff] %vm948, %v2810
      %2847 = vst.msk [vmem:[#allocation3 + $0x8] sm:$0xff] %vm948, %v2811
      %2848 = vst.msk [vmem:[#allocation3 + $0x10] sm:$0xff] %vm948, %v2812
      %2849 = vst.msk [vmem:[#allocation3 + $0x18] sm:$0xff] %vm948, %v2813
      %2850 = vst.msk [vmem:[#allocation3 + $0x20] sm:$0xff] %vm948, %v2814
      %2851 = vst.msk [vmem:[#allocation3 + $0x28] sm:$0xff] %vm948, %v2815
      %2852 = vst.msk [vmem:[#allocation3 + $0x30] sm:$0xff] %vm948, %v2816
      %2853 = vst.msk [vmem:[#allocation3 + $0x38] sm:$0xff] %vm948, %v2817
      %2854 = vst.msk [vmem:[#allocation3 + $0x40] sm:$0xff] %vm948, %v2818
      %2855 = vst.msk [vmem:[#allocation3 + $0x48] sm:$0xff] %vm948, %v2819
      %2856 = vst.msk [vmem:[#allocation3 + $0x50] sm:$0xff] %vm948, %v2820
      %2857 = vst.msk [vmem:[#allocation3 + $0x58] sm:$0xff] %vm948, %v2821
      %2858 = vst.msk [vmem:[#allocation3 + $0x60] sm:$0xff] %vm948, %v2822
      %2859 = vst.msk [vmem:[#allocation3 + $0x68] sm:$0xff] %vm948, %v2823
      %2860 = vst.msk [vmem:[#allocation3 + $0x70] sm:$0xff] %vm948, %v2824
      %2861 = vst.msk [vmem:[#allocation3 + $0x78] sm:$0xff] %vm948, %v2825
      %2862 = vst.msk [vmem:[#allocation3 + $0x80] sm:$0xff] %vm948, %v2826
      %2863 = vst.msk [vmem:[#allocation3 + $0x88] sm:$0xff] %vm948, %v2827
      %2864 = vst.msk [vmem:[#allocation3 + $0x90] sm:$0xff] %vm948, %v2828
      %2865 = vst.msk [vmem:[#allocation3 + $0x98] sm:$0xff] %vm948, %v2829
      %2866 = vst.msk [vmem:[#allocation3 + $0xa0] sm:$0xff] %vm948, %v2830
      %2867 = vst.msk [vmem:[#allocation3 + $0xa8] sm:$0xff] %vm948, %v2831
      %2868 = vst.msk [vmem:[#allocation3 + $0xb0] sm:$0xff] %vm948, %v2832
      %2869 = vst.msk [vmem:[#allocation3 + $0xb8] sm:$0xff] %vm948, %v2833
      %2870 = vst.msk [vmem:[#allocation3 + $0xc0] sm:$0xff] %vm948, %v2834
      %2871 = vst.msk [vmem:[#allocation3 + $0xc8] sm:$0xff] %vm948, %v2835
      %2872 = vst.msk [vmem:[#allocation3 + $0xd0] sm:$0xff] %vm948, %v2836
      %2873 = vst.msk [vmem:[#allocation3 + $0xd8] sm:$0xff] %vm948, %v2837
      %2874 = vst.msk [vmem:[#allocation3 + $0xe0] sm:$0xff] %vm948, %v2838
      %2875 = vst.msk [vmem:[#allocation3 + $0xe8] sm:$0xff] %vm948, %v2839
      %2876 = vst.msk [vmem:[#allocation3 + $0xf0] sm:$0xff] %vm948, %v2840
      %2877 = vst.msk [vmem:[#allocation3 + $0xf8] sm:$0xff] %vm948, %v2841
      %2878 = vst.msk [vmem:[#allocation3 + $0x100] sm:$0xff] %vm948, %v2842
      %2879 = vst.msk [vmem:[#allocation3 + $0x108] sm:$0xff] %vm948, %v2843
      %2880 = vst.msk [vmem:[#allocation3 + $0x110] sm:$0xff] %vm948, %v2844
      %2881 = vst.msk [vmem:[#allocation3 + $0x118] sm:$0xff] %vm948, %v2845
      %v2882 = vld [vmem:[#allocation2 + $0x10] sm:$0xf]
      %v2883 = vld [vmem:[#allocation2 + $0x14] sm:$0xf]
      %v2884 = vld [vmem:[#allocation2 + $0x18] sm:$0xf]
      %v2885 = vld [vmem:[#allocation2 + $0x1c] sm:$0xf]
      %v2886 = vld [vmem:[#allocation2 + $0x20] sm:$0xf]
      %v2887 = vld [vmem:[#allocation2 + $0x24] sm:$0xf]
      %v2888 = vld [vmem:[#allocation2 + $0x28] sm:$0xf]
      %v2889 = vld [vmem:[#allocation2 + $0x2c] sm:$0xf]
      %v2890 = vld [vmem:[#allocation2 + $0x30] sm:$0xf]
      %v2891 = vld [vmem:[#allocation2 + $0x34] sm:$0xf]
      %v2892 = vld [vmem:[#allocation2 + $0x38] sm:$0xf]
      %v2893 = vld [vmem:[#allocation2 + $0x3c] sm:$0xf]
      %v2894 = vld [vmem:[#allocation2 + $0x40] sm:$0xf]
      %v2895 = vld [vmem:[#allocation2 + $0x44] sm:$0xf]
      %v2896 = vld [vmem:[#allocation2 + $0x48] sm:$0xf]
      %v2897 = vld [vmem:[#allocation2 + $0x4c] sm:$0xf]
      %v2898 = vld [vmem:[#allocation2 + $0x50] sm:$0xf]
      %v2899 = vld [vmem:[#allocation2 + $0x54] sm:$0xf]
      %v2900 = vld [vmem:[#allocation2 + $0x58] sm:$0xf]
      %v2901 = vld [vmem:[#allocation2 + $0x5c] sm:$0xf]
      %v2902 = vld [vmem:[#allocation2 + $0x60] sm:$0xf]
      %v2903 = vld [vmem:[#allocation2 + $0x64] sm:$0xf]
      %v2904 = vld [vmem:[#allocation2 + $0x68] sm:$0xf]
      %v2905 = vld [vmem:[#allocation2 + $0x6c] sm:$0xf]
      %v2906 = vld [vmem:[#allocation2 + $0x70] sm:$0xf]
      %v2907 = vld [vmem:[#allocation2 + $0x74] sm:$0xf]
      %v2908 = vld [vmem:[#allocation2 + $0x78] sm:$0xf]
      %v2909 = vld [vmem:[#allocation2 + $0x7c] sm:$0xf]
      %v2910 = vld [vmem:[#allocation2 + $0x80] sm:$0xf]
      %v2911 = vld [vmem:[#allocation2 + $0x84] sm:$0xf]
      %v2912 = vld [vmem:[#allocation2 + $0x88] sm:$0xf]
      %v2913 = vld [vmem:[#allocation2 + $0x8c] sm:$0xf]
      %v2914 = vld [vmem:[#allocation2 + $0x90] sm:$0xf]
      %v2915 = vld [vmem:[#allocation2 + $0x94] sm:$0xf]
      %v2916 = vld [vmem:[#allocation2 + $0x98] sm:$0xf]
      %v2917 = vld [vmem:[#allocation2 + $0x9c] sm:$0xf]
      %v2918 = vld [vmem:[#allocation2 + $0xa0] sm:$0x1]
      %v2919 = vld [vmem:[#allocation3] sm:$0xff]
      %v2920 = vld [vmem:[#allocation3 + $0x8] sm:$0xff]
      %v2921 = vld [vmem:[#allocation3 + $0x10] sm:$0xff]
      %v2922 = vld [vmem:[#allocation3 + $0x18] sm:$0xff]
      %v2923 = vld [vmem:[#allocation3 + $0x20] sm:$0xff]
      %v2924 = vld [vmem:[#allocation3 + $0x28] sm:$0xff]
      %v2925 = vld [vmem:[#allocation3 + $0x30] sm:$0xff]
      %v2926 = vld [vmem:[#allocation3 + $0x38] sm:$0xff]
      %v2927 = vld [vmem:[#allocation3 + $0x40] sm:$0xff]
      %v2928 = vld [vmem:[#allocation3 + $0x48] sm:$0xff]
      %v2929 = vld [vmem:[#allocation3 + $0x50] sm:$0xff]
      %v2930 = vld [vmem:[#allocation3 + $0x58] sm:$0xff]
      %v2931 = vld [vmem:[#allocation3 + $0x60] sm:$0xff]
      %v2932 = vld [vmem:[#allocation3 + $0x68] sm:$0xff]
      %v2933 = vld [vmem:[#allocation3 + $0x70] sm:$0xff]
      %v2934 = vld [vmem:[#allocation3 + $0x78] sm:$0xff]
      %v2935 = vld [vmem:[#allocation3 + $0x80] sm:$0xff]
      %v2936 = vld [vmem:[#allocation3 + $0x88] sm:$0xff]
      %v2937 = vld [vmem:[#allocation3 + $0x90] sm:$0xff]
      %v2938 = vld [vmem:[#allocation3 + $0x98] sm:$0xff]
      %v2939 = vld [vmem:[#allocation3 + $0xa0] sm:$0xff]
      %v2940 = vld [vmem:[#allocation3 + $0xa8] sm:$0xff]
      %v2941 = vld [vmem:[#allocation3 + $0xb0] sm:$0xff]
      %v2942 = vld [vmem:[#allocation3 + $0xb8] sm:$0xff]
      %v2943 = vld [vmem:[#allocation3 + $0xc0] sm:$0xff]
      %v2944 = vld [vmem:[#allocation3 + $0xc8] sm:$0xff]
      %v2945 = vld [vmem:[#allocation3 + $0xd0] sm:$0xff]
      %v2946 = vld [vmem:[#allocation3 + $0xd8] sm:$0xff]
      %v2947 = vld [vmem:[#allocation3 + $0xe0] sm:$0xff]
      %v2948 = vld [vmem:[#allocation3 + $0xe8] sm:$0xff]
      %v2949 = vld [vmem:[#allocation3 + $0xf0] sm:$0xff]
      %v2950 = vld [vmem:[#allocation3 + $0xf8] sm:$0xff]
      %v2951 = vld [vmem:[#allocation3 + $0x100] sm:$0xff]
      %v2952 = vld [vmem:[#allocation3 + $0x108] sm:$0xff]
      %v2953 = vld [vmem:[#allocation3 + $0x110] sm:$0xff]
      %v2954 = vld [vmem:[#allocation3 + $0x118] sm:$0xff]
      %s2955 = scalar_lea.vmem %s4, 128
      %v2956 = vld [vmem:[%s2955] sm:$0xf]
      %v2957 = vld [vmem:[%s2955 + $0x4] sm:$0xf]
      %v2958 = vld [vmem:[%s2955 + $0x8] sm:$0xf]
      %v2959 = vld [vmem:[%s2955 + $0xc] sm:$0xf]
      %v2960 = vld [vmem:[%s2955 + $0x10] sm:$0xf]
      %v2961 = vld [vmem:[%s2955 + $0x14] sm:$0xf]
      %v2962 = vld [vmem:[%s2955 + $0x18] sm:$0xf]
      %v2963 = vld [vmem:[%s2955 + $0x1c] sm:$0xf]
      %v3001 = vunpack.c.l.b16 %v2882
      %v3002 = vunpack.c.l.b16 %v2883
      %v3003 = vunpack.c.l.b16 %v2884
      %v3004 = vunpack.c.l.b16 %v2885
      %v3005 = vunpack.c.l.b16 %v2886
      %v3006 = vunpack.c.l.b16 %v2887
      %v3007 = vunpack.c.l.b16 %v2888
      %v3008 = vunpack.c.l.b16 %v2889
      %v3009 = vunpack.c.l.b16 %v2890
      %v3010 = vunpack.c.l.b16 %v2891
      %v3011 = vunpack.c.l.b16 %v2892
      %v3012 = vunpack.c.l.b16 %v2893
      %v3013 = vunpack.c.l.b16 %v2894
      %v3014 = vunpack.c.l.b16 %v2895
      %v3015 = vunpack.c.l.b16 %v2896
      %v3016 = vunpack.c.l.b16 %v2897
      %v3017 = vunpack.c.l.b16 %v2898
      %v3018 = vunpack.c.l.b16 %v2899
      %v3019 = vunpack.c.l.b16 %v2900
      %v3020 = vunpack.c.l.b16 %v2901
      %v3021 = vunpack.c.l.b16 %v2902
      %v3022 = vunpack.c.l.b16 %v2903
      %v3023 = vunpack.c.l.b16 %v2904
      %v3024 = vunpack.c.l.b16 %v2905
      %v3025 = vunpack.c.l.b16 %v2906
      %v3026 = vunpack.c.l.b16 %v2907
      %v3027 = vunpack.c.l.b16 %v2908
      %v3028 = vunpack.c.l.b16 %v2909
      %v3029 = vunpack.c.l.b16 %v2910
      %v3030 = vunpack.c.l.b16 %v2911
      %v3031 = vunpack.c.l.b16 %v2912
      %v3032 = vunpack.c.l.b16 %v2913
      %v3033 = vunpack.c.l.b16 %v2914
      %v3034 = vunpack.c.l.b16 %v2915
      %v3035 = vunpack.c.l.b16 %v2916
      %v3036 = vunpack.c.l.b16 %v2917
      %v3037 = vunpack.c.l.b16 %v2918
      %v3038 = vpack.c.b16 %v3002, %v3001
      %v3039 = vpack.c.b16 %v3004, %v3003
      %v3040 = vpack.c.b16 %v3006, %v3005
      %v3041 = vpack.c.b16 %v3008, %v3007
      %v3042 = vpack.c.b16 %v3010, %v3009
      %v3043 = vpack.c.b16 %v3012, %v3011
      %v3044 = vpack.c.b16 %v3014, %v3013
      %v3045 = vpack.c.b16 %v3016, %v3015
      %v3046 = vpack.c.b16 %v3018, %v3017
      %v3047 = vpack.c.b16 %v3020, %v3019
      %v3048 = vpack.c.b16 %v3022, %v3021
      %v3049 = vpack.c.b16 %v3024, %v3023
      %v3050 = vpack.c.b16 %v3026, %v3025
      %v3051 = vpack.c.b16 %v3028, %v3027
      %v3052 = vpack.c.b16 %v3030, %v3029
      %v3053 = vpack.c.b16 %v3032, %v3031
      %v3054 = vpack.c.b16 %v3034, %v3033
      %v3055 = vpack.c.b16 %v3036, %v3035
      %v3056 = vpack.c.b16 %v3037, %v3037
      %vm3057 = vsmask.f32 7424
      %v3059 = vshrl.u32 %v3038, 16
      %v3061 = vshll.u32 %v3038, 16
      %v3063 = vrot.slane %v3061, 1
      %v3064 = vor.u32 %v3059, %v3063
      %v3066 = vshll.u32 %v3039, 16
      %v3068 = vrot.slane %v3066, 1
      %v3069 = vsel %vm3057, %v3064, %v3068
      %v3070 = vshrl.u32 %v3039, 16
      %v3072 = vor.u32 %v3070, %v3068
      %v3074 = vshll.u32 %v3040, 16
      %v3076 = vrot.slane %v3074, 1
      %v3077 = vsel %vm3057, %v3072, %v3076
      %v3078 = vshrl.u32 %v3040, 16
      %v3080 = vor.u32 %v3078, %v3076
      %v3082 = vshll.u32 %v3041, 16
      %v3084 = vrot.slane %v3082, 1
      %v3085 = vsel %vm3057, %v3080, %v3084
      %v3086 = vshrl.u32 %v3041, 16
      %v3088 = vor.u32 %v3086, %v3084
      %v3090 = vshll.u32 %v3042, 16
      %v3092 = vrot.slane %v3090, 1
      %v3093 = vsel %vm3057, %v3088, %v3092
      %v3094 = vshrl.u32 %v3042, 16
      %v3096 = vor.u32 %v3094, %v3092
      %v3098 = vshll.u32 %v3043, 16
      %v3100 = vrot.slane %v3098, 1
      %v3101 = vsel %vm3057, %v3096, %v3100
      %v3102 = vshrl.u32 %v3043, 16
      %v3104 = vor.u32 %v3102, %v3100
      %v3106 = vshll.u32 %v3044, 16
      %v3108 = vrot.slane %v3106, 1
      %v3109 = vsel %vm3057, %v3104, %v3108
      %v3110 = vshrl.u32 %v3044, 16
      %v3112 = vor.u32 %v3110, %v3108
      %v3114 = vshll.u32 %v3045, 16
      %v3116 = vrot.slane %v3114, 1
      %v3117 = vsel %vm3057, %v3112, %v3116
      %v3118 = vshrl.u32 %v3045, 16
      %v3120 = vor.u32 %v3118, %v3116
      %v3122 = vshll.u32 %v3046, 16
      %v3124 = vrot.slane %v3122, 1
      %v3125 = vsel %vm3057, %v3120, %v3124
      %v3126 = vshrl.u32 %v3046, 16
      %v3128 = vor.u32 %v3126, %v3124
      %v3130 = vshll.u32 %v3047, 16
      %v3132 = vrot.slane %v3130, 1
      %v3133 = vsel %vm3057, %v3128, %v3132
      %v3134 = vshrl.u32 %v3047, 16
      %v3136 = vor.u32 %v3134, %v3132
      %v3138 = vshll.u32 %v3048, 16
      %v3140 = vrot.slane %v3138, 1
      %v3141 = vsel %vm3057, %v3136, %v3140
      %v3142 = vshrl.u32 %v3048, 16
      %v3144 = vor.u32 %v3142, %v3140
      %v3146 = vshll.u32 %v3049, 16
      %v3148 = vrot.slane %v3146, 1
      %v3149 = vsel %vm3057, %v3144, %v3148
      %v3150 = vshrl.u32 %v3049, 16
      %v3152 = vor.u32 %v3150, %v3148
      %v3154 = vshll.u32 %v3050, 16
      %v3156 = vrot.slane %v3154, 1
      %v3157 = vsel %vm3057, %v3152, %v3156
      %v3158 = vshrl.u32 %v3050, 16
      %v3160 = vor.u32 %v3158, %v3156
      %v3162 = vshll.u32 %v3051, 16
      %v3164 = vrot.slane %v3162, 1
      %v3165 = vsel %vm3057, %v3160, %v3164
      %v3166 = vshrl.u32 %v3051, 16
      %v3168 = vor.u32 %v3166, %v3164
      %v3170 = vshll.u32 %v3052, 16
      %v3172 = vrot.slane %v3170, 1
      %v3173 = vsel %vm3057, %v3168, %v3172
      %v3174 = vshrl.u32 %v3052, 16
      %v3176 = vor.u32 %v3174, %v3172
      %v3178 = vshll.u32 %v3053, 16
      %v3180 = vrot.slane %v3178, 1
      %v3181 = vsel %vm3057, %v3176, %v3180
      %v3182 = vshrl.u32 %v3053, 16
      %v3184 = vor.u32 %v3182, %v3180
      %v3186 = vshll.u32 %v3054, 16
      %v3188 = vrot.slane %v3186, 1
      %v3189 = vsel %vm3057, %v3184, %v3188
      %v3190 = vshrl.u32 %v3054, 16
      %v3192 = vor.u32 %v3190, %v3188
      %v3194 = vshll.u32 %v3055, 16
      %v3196 = vrot.slane %v3194, 1
      %v3197 = vsel %vm3057, %v3192, %v3196
      %v3198 = vshrl.u32 %v3055, 16
      %v3200 = vor.u32 %v3198, %v3196
      %v3202 = vshll.u32 %v3056, 16
      %v3204 = vrot.slane %v3202, 1
      %v3205 = vsel %vm3057, %v3200, %v3204
      %v3214 = vunpack.c.l.b16 %v2956
      %v3215 = vunpack.c.l.b16 %v2957
      %v3216 = vunpack.c.l.b16 %v2958
      %v3217 = vunpack.c.l.b16 %v2959
      %v3218 = vunpack.c.l.b16 %v2960
      %v3219 = vunpack.c.l.b16 %v2961
      %v3220 = vunpack.c.l.b16 %v2962
      %v3221 = vunpack.c.l.b16 %v2963
      %v3222 = vpack.c.b16 %v3215, %v3214
      %v3223 = vpack.c.b16 %v3217, %v3216
      %v3224 = vpack.c.b16 %v3219, %v3218
      %v3225 = vpack.c.b16 %v3221, %v3220
      %v3231 = vsel %vm1221, %v3069, 0
      %v3234 = vsel %vm1221, %v3077, 0
      %v3237 = vsel %vm1221, %v3085, 0
      %v3240 = vsel %vm1221, %v3093, 0
      %v3243 = vsel %vm1221, %v3101, 0
      %v3246 = vsel %vm1221, %v3109, 0
      %v3249 = vsel %vm1221, %v3117, 0
      %v3252 = vsel %vm1221, %v3125, 0
      %v3255 = vsel %vm1221, %v3133, 0
      %v3258 = vsel %vm1221, %v3141, 0
      %v3261 = vsel %vm1221, %v3149, 0
      %v3264 = vsel %vm1221, %v3157, 0
      %v3267 = vsel %vm1221, %v3165, 0
      %v3270 = vsel %vm1221, %v3173, 0
      %v3273 = vsel %vm1221, %v3181, 0
      %v3276 = vsel %vm1221, %v3189, 0
      %v3279 = vsel %vm1221, %v3197, 0
      %v3282 = vsel %vm1221, %v3205, 0
      %3284 = vmatpush.bf16.msra.mxu0 0
      %3285 = vmatpush.bf16.msra.mxu0 0
      %3286 = vmatpush.bf16.msra.mxu0 0
      %3287 = vmatpush.bf16.msra.mxu0 0
      %3288 = vmatpush.bf16.msra.mxu0 %v3225
      %3289 = vmatpush.bf16.msra.mxu0 %v3224
      %3290 = vmatpush.bf16.msra.mxu0 %v3223
      %3291 = vmatpush.bf16.msra.mxu0 %v3222
      %3292 = vmatmul.bf16.gmra.mxu0 %v3231
      %v3293 = vpop.f32.mrf.mxu0
      %v3294 = vadd.f32 0.0, %v3293
      %v3295 = vpop.f32.mrf.mxu0
      %v3296 = vadd.f32 0.0, %v3295
      %3297 = vmatmul.bf16.gmra.mxu0 %v3234
      %v3298 = vpop.f32.mrf.mxu0
      %v3299 = vadd.f32 0.0, %v3298
      %v3300 = vpop.f32.mrf.mxu0
      %v3301 = vadd.f32 0.0, %v3300
      %3302 = vmatmul.bf16.gmra.mxu0 %v3237
      %v3303 = vpop.f32.mrf.mxu0
      %v3304 = vadd.f32 0.0, %v3303
      %v3305 = vpop.f32.mrf.mxu0
      %v3306 = vadd.f32 0.0, %v3305
      %3307 = vmatmul.bf16.gmra.mxu0 %v3240
      %v3308 = vpop.f32.mrf.mxu0
      %v3309 = vadd.f32 0.0, %v3308
      %v3310 = vpop.f32.mrf.mxu0
      %v3311 = vadd.f32 0.0, %v3310
      %3312 = vmatmul.bf16.gmra.mxu0 %v3243
      %v3313 = vpop.f32.mrf.mxu0
      %v3314 = vadd.f32 0.0, %v3313
      %v3315 = vpop.f32.mrf.mxu0
      %v3316 = vadd.f32 0.0, %v3315
      %3317 = vmatmul.bf16.gmra.mxu0 %v3246
      %v3318 = vpop.f32.mrf.mxu0
      %v3319 = vadd.f32 0.0, %v3318
      %v3320 = vpop.f32.mrf.mxu0
      %v3321 = vadd.f32 0.0, %v3320
      %3322 = vmatmul.bf16.gmra.mxu0 %v3249
      %v3323 = vpop.f32.mrf.mxu0
      %v3324 = vadd.f32 0.0, %v3323
      %v3325 = vpop.f32.mrf.mxu0
      %v3326 = vadd.f32 0.0, %v3325
      %3327 = vmatmul.bf16.gmra.mxu0 %v3252
      %v3328 = vpop.f32.mrf.mxu0
      %v3329 = vadd.f32 0.0, %v3328
      %v3330 = vpop.f32.mrf.mxu0
      %v3331 = vadd.f32 0.0, %v3330
      %3332 = vmatmul.bf16.gmra.mxu0 %v3255
      %v3333 = vpop.f32.mrf.mxu0
      %v3334 = vadd.f32 0.0, %v3333
      %v3335 = vpop.f32.mrf.mxu0
      %v3336 = vadd.f32 0.0, %v3335
      %3337 = vmatmul.bf16.gmra.mxu0 %v3258
      %v3338 = vpop.f32.mrf.mxu0
      %v3339 = vadd.f32 0.0, %v3338
      %v3340 = vpop.f32.mrf.mxu0
      %v3341 = vadd.f32 0.0, %v3340
      %3342 = vmatmul.bf16.gmra.mxu0 %v3261
      %v3343 = vpop.f32.mrf.mxu0
      %v3344 = vadd.f32 0.0, %v3343
      %v3345 = vpop.f32.mrf.mxu0
      %v3346 = vadd.f32 0.0, %v3345
      %3347 = vmatmul.bf16.gmra.mxu0 %v3264
      %v3348 = vpop.f32.mrf.mxu0
      %v3349 = vadd.f32 0.0, %v3348
      %v3350 = vpop.f32.mrf.mxu0
      %v3351 = vadd.f32 0.0, %v3350
      %3352 = vmatmul.bf16.gmra.mxu0 %v3267
      %v3353 = vpop.f32.mrf.mxu0
      %v3354 = vadd.f32 0.0, %v3353
      %v3355 = vpop.f32.mrf.mxu0
      %v3356 = vadd.f32 0.0, %v3355
      %3357 = vmatmul.bf16.gmra.mxu0 %v3270
      %v3358 = vpop.f32.mrf.mxu0
      %v3359 = vadd.f32 0.0, %v3358
      %v3360 = vpop.f32.mrf.mxu0
      %v3361 = vadd.f32 0.0, %v3360
      %3362 = vmatmul.bf16.gmra.mxu0 %v3273
      %v3363 = vpop.f32.mrf.mxu0
      %v3364 = vadd.f32 0.0, %v3363
      %v3365 = vpop.f32.mrf.mxu0
      %v3366 = vadd.f32 0.0, %v3365
      %3367 = vmatmul.bf16.gmra.mxu0 %v3276
      %v3368 = vpop.f32.mrf.mxu0
      %v3369 = vadd.f32 0.0, %v3368
      %v3370 = vpop.f32.mrf.mxu0
      %v3371 = vadd.f32 0.0, %v3370
      %3372 = vmatmul.bf16.gmra.mxu0 %v3279
      %v3373 = vpop.f32.mrf.mxu0
      %v3374 = vadd.f32 0.0, %v3373
      %v3375 = vpop.f32.mrf.mxu0
      %v3376 = vadd.f32 0.0, %v3375
      %3377 = vmatmul.bf16.gmra.mxu0 %v3282
      %v3378 = vpop.f32.mrf.mxu0
      %v3379 = vadd.f32 0.0, %v3378
      %v3380 = vpop.f32.mrf.mxu0
      %v3381 = vadd.f32 0.0, %v3380
      %3382 = vdwg.mxu0
      %v3383 = vadd.f32 %v2919, %v3294
      %v3384 = vadd.f32 %v2920, %v3296
      %v3385 = vadd.f32 %v2921, %v3299
      %v3386 = vadd.f32 %v2922, %v3301
      %v3387 = vadd.f32 %v2923, %v3304
      %v3388 = vadd.f32 %v2924, %v3306
      %v3389 = vadd.f32 %v2925, %v3309
      %v3390 = vadd.f32 %v2926, %v3311
      %v3391 = vadd.f32 %v2927, %v3314
      %v3392 = vadd.f32 %v2928, %v3316
      %v3393 = vadd.f32 %v2929, %v3319
      %v3394 = vadd.f32 %v2930, %v3321
      %v3395 = vadd.f32 %v2931, %v3324
      %v3396 = vadd.f32 %v2932, %v3326
      %v3397 = vadd.f32 %v2933, %v3329
      %v3398 = vadd.f32 %v2934, %v3331
      %v3399 = vadd.f32 %v2935, %v3334
      %v3400 = vadd.f32 %v2936, %v3336
      %v3401 = vadd.f32 %v2937, %v3339
      %v3402 = vadd.f32 %v2938, %v3341
      %v3403 = vadd.f32 %v2939, %v3344
      %v3404 = vadd.f32 %v2940, %v3346
      %v3405 = vadd.f32 %v2941, %v3349
      %v3406 = vadd.f32 %v2942, %v3351
      %v3407 = vadd.f32 %v2943, %v3354
      %v3408 = vadd.f32 %v2944, %v3356
      %v3409 = vadd.f32 %v2945, %v3359
      %v3410 = vadd.f32 %v2946, %v3361
      %v3411 = vadd.f32 %v2947, %v3364
      %v3412 = vadd.f32 %v2948, %v3366
      %v3413 = vadd.f32 %v2949, %v3369
      %v3414 = vadd.f32 %v2950, %v3371
      %v3415 = vadd.f32 %v2951, %v3374
      %v3416 = vadd.f32 %v2952, %v3376
      %v3417 = vadd.f32 %v2953, %v3379
      %v3418 = vadd.f32 %v2954, %v3381
      %3419 = vst.msk [vmem:[#allocation3] sm:$0xff] %vm948, %v3383
      %3420 = vst.msk [vmem:[#allocation3 + $0x8] sm:$0xff] %vm948, %v3384
      %3421 = vst.msk [vmem:[#allocation3 + $0x10] sm:$0xff] %vm948, %v3385
      %3422 = vst.msk [vmem:[#allocation3 + $0x18] sm:$0xff] %vm948, %v3386
      %3423 = vst.msk [vmem:[#allocation3 + $0x20] sm:$0xff] %vm948, %v3387
      %3424 = vst.msk [vmem:[#allocation3 + $0x28] sm:$0xff] %vm948, %v3388
      %3425 = vst.msk [vmem:[#allocation3 + $0x30] sm:$0xff] %vm948, %v3389
      %3426 = vst.msk [vmem:[#allocation3 + $0x38] sm:$0xff] %vm948, %v3390
      %3427 = vst.msk [vmem:[#allocation3 + $0x40] sm:$0xff] %vm948, %v3391
      %3428 = vst.msk [vmem:[#allocation3 + $0x48] sm:$0xff] %vm948, %v3392
      %3429 = vst.msk [vmem:[#allocation3 + $0x50] sm:$0xff] %vm948, %v3393
      %3430 = vst.msk [vmem:[#allocation3 + $0x58] sm:$0xff] %vm948, %v3394
      %3431 = vst.msk [vmem:[#allocation3 + $0x60] sm:$0xff] %vm948, %v3395
      %3432 = vst.msk [vmem:[#allocation3 + $0x68] sm:$0xff] %vm948, %v3396
      %3433 = vst.msk [vmem:[#allocation3 + $0x70] sm:$0xff] %vm948, %v3397
      %3434 = vst.msk [vmem:[#allocation3 + $0x78] sm:$0xff] %vm948, %v3398
      %3435 = vst.msk [vmem:[#allocation3 + $0x80] sm:$0xff] %vm948, %v3399
      %3436 = vst.msk [vmem:[#allocation3 + $0x88] sm:$0xff] %vm948, %v3400
      %3437 = vst.msk [vmem:[#allocation3 + $0x90] sm:$0xff] %vm948, %v3401
      %3438 = vst.msk [vmem:[#allocation3 + $0x98] sm:$0xff] %vm948, %v3402
      %3439 = vst.msk [vmem:[#allocation3 + $0xa0] sm:$0xff] %vm948, %v3403
      %3440 = vst.msk [vmem:[#allocation3 + $0xa8] sm:$0xff] %vm948, %v3404
      %3441 = vst.msk [vmem:[#allocation3 + $0xb0] sm:$0xff] %vm948, %v3405
      %3442 = vst.msk [vmem:[#allocation3 + $0xb8] sm:$0xff] %vm948, %v3406
      %3443 = vst.msk [vmem:[#allocation3 + $0xc0] sm:$0xff] %vm948, %v3407
      %3444 = vst.msk [vmem:[#allocation3 + $0xc8] sm:$0xff] %vm948, %v3408
      %3445 = vst.msk [vmem:[#allocation3 + $0xd0] sm:$0xff] %vm948, %v3409
      %3446 = vst.msk [vmem:[#allocation3 + $0xd8] sm:$0xff] %vm948, %v3410
      %3447 = vst.msk [vmem:[#allocation3 + $0xe0] sm:$0xff] %vm948, %v3411
      %3448 = vst.msk [vmem:[#allocation3 + $0xe8] sm:$0xff] %vm948, %v3412
      %3449 = vst.msk [vmem:[#allocation3 + $0xf0] sm:$0xff] %vm948, %v3413
      %3450 = vst.msk [vmem:[#allocation3 + $0xf8] sm:$0xff] %vm948, %v3414
      %3451 = vst.msk [vmem:[#allocation3 + $0x100] sm:$0xff] %vm948, %v3415
      %3452 = vst.msk [vmem:[#allocation3 + $0x108] sm:$0xff] %vm948, %v3416
      %3453 = vst.msk [vmem:[#allocation3 + $0x110] sm:$0xff] %vm948, %v3417
      %3454 = vst.msk [vmem:[#allocation3 + $0x118] sm:$0xff] %vm948, %v3418
      %v3455 = vld [vmem:[#allocation2 + $0x10] sm:$0xe]
      %v3456 = vld [vmem:[#allocation2 + $0x14] sm:$0xf]
      %v3457 = vld [vmem:[#allocation2 + $0x18] sm:$0xf]
      %v3458 = vld [vmem:[#allocation2 + $0x1c] sm:$0xf]
      %v3459 = vld [vmem:[#allocation2 + $0x20] sm:$0xf]
      %v3460 = vld [vmem:[#allocation2 + $0x24] sm:$0xf]
      %v3461 = vld [vmem:[#allocation2 + $0x28] sm:$0xf]
      %v3462 = vld [vmem:[#allocation2 + $0x2c] sm:$0xf]
      %v3463 = vld [vmem:[#allocation2 + $0x30] sm:$0xf]
      %v3464 = vld [vmem:[#allocation2 + $0x34] sm:$0xf]
      %v3465 = vld [vmem:[#allocation2 + $0x38] sm:$0xf]
      %v3466 = vld [vmem:[#allocation2 + $0x3c] sm:$0xf]
      %v3467 = vld [vmem:[#allocation2 + $0x40] sm:$0xf]
      %v3468 = vld [vmem:[#allocation2 + $0x44] sm:$0xf]
      %v3469 = vld [vmem:[#allocation2 + $0x48] sm:$0xf]
      %v3470 = vld [vmem:[#allocation2 + $0x4c] sm:$0xf]
      %v3471 = vld [vmem:[#allocation2 + $0x50] sm:$0xf]
      %v3472 = vld [vmem:[#allocation2 + $0x54] sm:$0xf]
      %v3473 = vld [vmem:[#allocation2 + $0x58] sm:$0xf]
      %v3474 = vld [vmem:[#allocation2 + $0x5c] sm:$0xf]
      %v3475 = vld [vmem:[#allocation2 + $0x60] sm:$0xf]
      %v3476 = vld [vmem:[#allocation2 + $0x64] sm:$0xf]
      %v3477 = vld [vmem:[#allocation2 + $0x68] sm:$0xf]
      %v3478 = vld [vmem:[#allocation2 + $0x6c] sm:$0xf]
      %v3479 = vld [vmem:[#allocation2 + $0x70] sm:$0xf]
      %v3480 = vld [vmem:[#allocation2 + $0x74] sm:$0xf]
      %v3481 = vld [vmem:[#allocation2 + $0x78] sm:$0xf]
      %v3482 = vld [vmem:[#allocation2 + $0x7c] sm:$0xf]
      %v3483 = vld [vmem:[#allocation2 + $0x80] sm:$0xf]
      %v3484 = vld [vmem:[#allocation2 + $0x84] sm:$0xf]
      %v3485 = vld [vmem:[#allocation2 + $0x88] sm:$0xf]
      %v3486 = vld [vmem:[#allocation2 + $0x8c] sm:$0xf]
      %v3487 = vld [vmem:[#allocation2 + $0x90] sm:$0xf]
      %v3488 = vld [vmem:[#allocation2 + $0x94] sm:$0xf]
      %v3489 = vld [vmem:[#allocation2 + $0x98] sm:$0xf]
      %v3490 = vld [vmem:[#allocation2 + $0x9c] sm:$0xf]
      %v3491 = vld [vmem:[#allocation2 + $0xa0] sm:$0x1]
      %v3492 = vld [vmem:[#allocation3] sm:$0xff]
      %v3493 = vld [vmem:[#allocation3 + $0x8] sm:$0xff]
      %v3494 = vld [vmem:[#allocation3 + $0x10] sm:$0xff]
      %v3495 = vld [vmem:[#allocation3 + $0x18] sm:$0xff]
      %v3496 = vld [vmem:[#allocation3 + $0x20] sm:$0xff]
      %v3497 = vld [vmem:[#allocation3 + $0x28] sm:$0xff]
      %v3498 = vld [vmem:[#allocation3 + $0x30] sm:$0xff]
      %v3499 = vld [vmem:[#allocation3 + $0x38] sm:$0xff]
      %v3500 = vld [vmem:[#allocation3 + $0x40] sm:$0xff]
      %v3501 = vld [vmem:[#allocation3 + $0x48] sm:$0xff]
      %v3502 = vld [vmem:[#allocation3 + $0x50] sm:$0xff]
      %v3503 = vld [vmem:[#allocation3 + $0x58] sm:$0xff]
      %v3504 = vld [vmem:[#allocation3 + $0x60] sm:$0xff]
      %v3505 = vld [vmem:[#allocation3 + $0x68] sm:$0xff]
      %v3506 = vld [vmem:[#allocation3 + $0x70] sm:$0xff]
      %v3507 = vld [vmem:[#allocation3 + $0x78] sm:$0xff]
      %v3508 = vld [vmem:[#allocation3 + $0x80] sm:$0xff]
      %v3509 = vld [vmem:[#allocation3 + $0x88] sm:$0xff]
      %v3510 = vld [vmem:[#allocation3 + $0x90] sm:$0xff]
      %v3511 = vld [vmem:[#allocation3 + $0x98] sm:$0xff]
      %v3512 = vld [vmem:[#allocation3 + $0xa0] sm:$0xff]
      %v3513 = vld [vmem:[#allocation3 + $0xa8] sm:$0xff]
      %v3514 = vld [vmem:[#allocation3 + $0xb0] sm:$0xff]
      %v3515 = vld [vmem:[#allocation3 + $0xb8] sm:$0xff]
      %v3516 = vld [vmem:[#allocation3 + $0xc0] sm:$0xff]
      %v3517 = vld [vmem:[#allocation3 + $0xc8] sm:$0xff]
      %v3518 = vld [vmem:[#allocation3 + $0xd0] sm:$0xff]
      %v3519 = vld [vmem:[#allocation3 + $0xd8] sm:$0xff]
      %v3520 = vld [vmem:[#allocation3 + $0xe0] sm:$0xff]
      %v3521 = vld [vmem:[#allocation3 + $0xe8] sm:$0xff]
      %v3522 = vld [vmem:[#allocation3 + $0xf0] sm:$0xff]
      %v3523 = vld [vmem:[#allocation3 + $0xf8] sm:$0xff]
      %v3524 = vld [vmem:[#allocation3 + $0x100] sm:$0xff]
      %v3525 = vld [vmem:[#allocation3 + $0x108] sm:$0xff]
      %v3526 = vld [vmem:[#allocation3 + $0x110] sm:$0xff]
      %v3527 = vld [vmem:[#allocation3 + $0x118] sm:$0xff]
      %s3528 = scalar_lea.vmem %s4, 160
      %v3529 = vld [vmem:[%s3528] sm:$0xf]
      %v3530 = vld [vmem:[%s3528 + $0x4] sm:$0xf]
      %v3531 = vld [vmem:[%s3528 + $0x8] sm:$0xf]
      %v3532 = vld [vmem:[%s3528 + $0xc] sm:$0xf]
      %v3533 = vld [vmem:[%s3528 + $0x10] sm:$0xf]
      %v3534 = vld [vmem:[%s3528 + $0x14] sm:$0xf]
      %v3535 = vld [vmem:[%s3528 + $0x18] sm:$0xf]
      %v3536 = vld [vmem:[%s3528 + $0x1c] sm:$0xf]
      %v3574 = vunpack.c.l.b16 %v3455
      %v3575 = vunpack.c.l.b16 %v3456
      %v3576 = vunpack.c.l.b16 %v3457
      %v3577 = vunpack.c.l.b16 %v3458
      %v3578 = vunpack.c.l.b16 %v3459
      %v3579 = vunpack.c.l.b16 %v3460
      %v3580 = vunpack.c.l.b16 %v3461
      %v3581 = vunpack.c.l.b16 %v3462
      %v3582 = vunpack.c.l.b16 %v3463
      %v3583 = vunpack.c.l.b16 %v3464
      %v3584 = vunpack.c.l.b16 %v3465
      %v3585 = vunpack.c.l.b16 %v3466
      %v3586 = vunpack.c.l.b16 %v3467
      %v3587 = vunpack.c.l.b16 %v3468
      %v3588 = vunpack.c.l.b16 %v3469
      %v3589 = vunpack.c.l.b16 %v3470
      %v3590 = vunpack.c.l.b16 %v3471
      %v3591 = vunpack.c.l.b16 %v3472
      %v3592 = vunpack.c.l.b16 %v3473
      %v3593 = vunpack.c.l.b16 %v3474
      %v3594 = vunpack.c.l.b16 %v3475
      %v3595 = vunpack.c.l.b16 %v3476
      %v3596 = vunpack.c.l.b16 %v3477
      %v3597 = vunpack.c.l.b16 %v3478
      %v3598 = vunpack.c.l.b16 %v3479
      %v3599 = vunpack.c.l.b16 %v3480
      %v3600 = vunpack.c.l.b16 %v3481
      %v3601 = vunpack.c.l.b16 %v3482
      %v3602 = vunpack.c.l.b16 %v3483
      %v3603 = vunpack.c.l.b16 %v3484
      %v3604 = vunpack.c.l.b16 %v3485
      %v3605 = vunpack.c.l.b16 %v3486
      %v3606 = vunpack.c.l.b16 %v3487
      %v3607 = vunpack.c.l.b16 %v3488
      %v3608 = vunpack.c.l.b16 %v3489
      %v3609 = vunpack.c.l.b16 %v3490
      %v3610 = vunpack.c.l.b16 %v3491
      %v3611 = vpack.c.b16 %v3575, %v3574
      %v3612 = vpack.c.b16 %v3577, %v3576
      %v3613 = vpack.c.b16 %v3579, %v3578
      %v3614 = vpack.c.b16 %v3581, %v3580
      %v3615 = vpack.c.b16 %v3583, %v3582
      %v3616 = vpack.c.b16 %v3585, %v3584
      %v3617 = vpack.c.b16 %v3587, %v3586
      %v3618 = vpack.c.b16 %v3589, %v3588
      %v3619 = vpack.c.b16 %v3591, %v3590
      %v3620 = vpack.c.b16 %v3593, %v3592
      %v3621 = vpack.c.b16 %v3595, %v3594
      %v3622 = vpack.c.b16 %v3597, %v3596
      %v3623 = vpack.c.b16 %v3599, %v3598
      %v3624 = vpack.c.b16 %v3601, %v3600
      %v3625 = vpack.c.b16 %v3603, %v3602
      %v3626 = vpack.c.b16 %v3605, %v3604
      %v3627 = vpack.c.b16 %v3607, %v3606
      %v3628 = vpack.c.b16 %v3609, %v3608
      %v3629 = vpack.c.b16 %v3610, %v3610
      %vm3630 = vcmask 1046528
      %v3631 = vrot.slane %v3611, 1
      %v3632 = vrot.slane %v3612, 1
      %v3633 = vsel %vm3630, %v3631, %v3632
      %v3634 = vrot.slane %v3613, 1
      %v3635 = vsel %vm3630, %v3632, %v3634
      %v3636 = vrot.slane %v3614, 1
      %v3637 = vsel %vm3630, %v3634, %v3636
      %v3638 = vrot.slane %v3615, 1
      %v3639 = vsel %vm3630, %v3636, %v3638
      %v3640 = vrot.slane %v3616, 1
      %v3641 = vsel %vm3630, %v3638, %v3640
      %v3642 = vrot.slane %v3617, 1
      %v3643 = vsel %vm3630, %v3640, %v3642
      %v3644 = vrot.slane %v3618, 1
      %v3645 = vsel %vm3630, %v3642, %v3644
      %v3646 = vrot.slane %v3619, 1
      %v3647 = vsel %vm3630, %v3644, %v3646
      %v3648 = vrot.slane %v3620, 1
      %v3649 = vsel %vm3630, %v3646, %v3648
      %v3650 = vrot.slane %v3621, 1
      %v3651 = vsel %vm3630, %v3648, %v3650
      %v3652 = vrot.slane %v3622, 1
      %v3653 = vsel %vm3630, %v3650, %v3652
      %v3654 = vrot.slane %v3623, 1
      %v3655 = vsel %vm3630, %v3652, %v3654
      %v3656 = vrot.slane %v3624, 1
      %v3657 = vsel %vm3630, %v3654, %v3656
      %v3658 = vrot.slane %v3625, 1
      %v3659 = vsel %vm3630, %v3656, %v3658
      %v3660 = vrot.slane %v3626, 1
      %v3661 = vsel %vm3630, %v3658, %v3660
      %v3662 = vrot.slane %v3627, 1
      %v3663 = vsel %vm3630, %v3660, %v3662
      %v3664 = vrot.slane %v3628, 1
      %v3665 = vsel %vm3630, %v3662, %v3664
      %v3666 = vrot.slane %v3629, 1
      %v3667 = vsel %vm3630, %v3664, %v3666
      %v3676 = vunpack.c.l.b16 %v3529
      %v3677 = vunpack.c.l.b16 %v3530
      %v3678 = vunpack.c.l.b16 %v3531
      %v3679 = vunpack.c.l.b16 %v3532
      %v3680 = vunpack.c.l.b16 %v3533
      %v3681 = vunpack.c.l.b16 %v3534
      %v3682 = vunpack.c.l.b16 %v3535
      %v3683 = vunpack.c.l.b16 %v3536
      %v3684 = vpack.c.b16 %v3677, %v3676
      %v3685 = vpack.c.b16 %v3679, %v3678
      %v3686 = vpack.c.b16 %v3681, %v3680
      %v3687 = vpack.c.b16 %v3683, %v3682
      %v3693 = vsel %vm1221, %v3633, 0
      %v3696 = vsel %vm1221, %v3635, 0
      %v3699 = vsel %vm1221, %v3637, 0
      %v3702 = vsel %vm1221, %v3639, 0
      %v3705 = vsel %vm1221, %v3641, 0
      %v3708 = vsel %vm1221, %v3643, 0
      %v3711 = vsel %vm1221, %v3645, 0
      %v3714 = vsel %vm1221, %v3647, 0
      %v3717 = vsel %vm1221, %v3649, 0
      %v3720 = vsel %vm1221, %v3651, 0
      %v3723 = vsel %vm1221, %v3653, 0
      %v3726 = vsel %vm1221, %v3655, 0
      %v3729 = vsel %vm1221, %v3657, 0
      %v3732 = vsel %vm1221, %v3659, 0
      %v3735 = vsel %vm1221, %v3661, 0
      %v3738 = vsel %vm1221, %v3663, 0
      %v3741 = vsel %vm1221, %v3665, 0
      %v3744 = vsel %vm1221, %v3667, 0
      %3746 = vmatpush.bf16.msra.mxu0 0
      %3747 = vmatpush.bf16.msra.mxu0 0
      %3748 = vmatpush.bf16.msra.mxu0 0
      %3749 = vmatpush.bf16.msra.mxu0 0
      %3750 = vmatpush.bf16.msra.mxu0 %v3687
      %3751 = vmatpush.bf16.msra.mxu0 %v3686
      %3752 = vmatpush.bf16.msra.mxu0 %v3685
      %3753 = vmatpush.bf16.msra.mxu0 %v3684
      %3754 = vmatmul.bf16.gmra.mxu0 %v3693
      %v3755 = vpop.f32.mrf.mxu0
      %v3756 = vadd.f32 0.0, %v3755
      %v3757 = vpop.f32.mrf.mxu0
      %v3758 = vadd.f32 0.0, %v3757
      %3759 = vmatmul.bf16.gmra.mxu0 %v3696
      %v3760 = vpop.f32.mrf.mxu0
      %v3761 = vadd.f32 0.0, %v3760
      %v3762 = vpop.f32.mrf.mxu0
      %v3763 = vadd.f32 0.0, %v3762
      %3764 = vmatmul.bf16.gmra.mxu0 %v3699
      %v3765 = vpop.f32.mrf.mxu0
      %v3766 = vadd.f32 0.0, %v3765
      %v3767 = vpop.f32.mrf.mxu0
      %v3768 = vadd.f32 0.0, %v3767
      %3769 = vmatmul.bf16.gmra.mxu0 %v3702
      %v3770 = vpop.f32.mrf.mxu0
      %v3771 = vadd.f32 0.0, %v3770
      %v3772 = vpop.f32.mrf.mxu0
      %v3773 = vadd.f32 0.0, %v3772
      %3774 = vmatmul.bf16.gmra.mxu0 %v3705
      %v3775 = vpop.f32.mrf.mxu0
      %v3776 = vadd.f32 0.0, %v3775
      %v3777 = vpop.f32.mrf.mxu0
      %v3778 = vadd.f32 0.0, %v3777
      %3779 = vmatmul.bf16.gmra.mxu0 %v3708
      %v3780 = vpop.f32.mrf.mxu0
      %v3781 = vadd.f32 0.0, %v3780
      %v3782 = vpop.f32.mrf.mxu0
      %v3783 = vadd.f32 0.0, %v3782
      %3784 = vmatmul.bf16.gmra.mxu0 %v3711
      %v3785 = vpop.f32.mrf.mxu0
      %v3786 = vadd.f32 0.0, %v3785
      %v3787 = vpop.f32.mrf.mxu0
      %v3788 = vadd.f32 0.0, %v3787
      %3789 = vmatmul.bf16.gmra.mxu0 %v3714
      %v3790 = vpop.f32.mrf.mxu0
      %v3791 = vadd.f32 0.0, %v3790
      %v3792 = vpop.f32.mrf.mxu0
      %v3793 = vadd.f32 0.0, %v3792
      %3794 = vmatmul.bf16.gmra.mxu0 %v3717
      %v3795 = vpop.f32.mrf.mxu0
      %v3796 = vadd.f32 0.0, %v3795
      %v3797 = vpop.f32.mrf.mxu0
      %v3798 = vadd.f32 0.0, %v3797
      %3799 = vmatmul.bf16.gmra.mxu0 %v3720
      %v3800 = vpop.f32.mrf.mxu0
      %v3801 = vadd.f32 0.0, %v3800
      %v3802 = vpop.f32.mrf.mxu0
      %v3803 = vadd.f32 0.0, %v3802
      %3804 = vmatmul.bf16.gmra.mxu0 %v3723
      %v3805 = vpop.f32.mrf.mxu0
      %v3806 = vadd.f32 0.0, %v3805
      %v3807 = vpop.f32.mrf.mxu0
      %v3808 = vadd.f32 0.0, %v3807
      %3809 = vmatmul.bf16.gmra.mxu0 %v3726
      %v3810 = vpop.f32.mrf.mxu0
      %v3811 = vadd.f32 0.0, %v3810
      %v3812 = vpop.f32.mrf.mxu0
      %v3813 = vadd.f32 0.0, %v3812
      %3814 = vmatmul.bf16.gmra.mxu0 %v3729
      %v3815 = vpop.f32.mrf.mxu0
      %v3816 = vadd.f32 0.0, %v3815
      %v3817 = vpop.f32.mrf.mxu0
      %v3818 = vadd.f32 0.0, %v3817
      %3819 = vmatmul.bf16.gmra.mxu0 %v3732
      %v3820 = vpop.f32.mrf.mxu0
      %v3821 = vadd.f32 0.0, %v3820
      %v3822 = vpop.f32.mrf.mxu0
      %v3823 = vadd.f32 0.0, %v3822
      %3824 = vmatmul.bf16.gmra.mxu0 %v3735
      %v3825 = vpop.f32.mrf.mxu0
      %v3826 = vadd.f32 0.0, %v3825
      %v3827 = vpop.f32.mrf.mxu0
      %v3828 = vadd.f32 0.0, %v3827
      %3829 = vmatmul.bf16.gmra.mxu0 %v3738
      %v3830 = vpop.f32.mrf.mxu0
      %v3831 = vadd.f32 0.0, %v3830
      %v3832 = vpop.f32.mrf.mxu0
      %v3833 = vadd.f32 0.0, %v3832
      %3834 = vmatmul.bf16.gmra.mxu0 %v3741
      %v3835 = vpop.f32.mrf.mxu0
      %v3836 = vadd.f32 0.0, %v3835
      %v3837 = vpop.f32.mrf.mxu0
      %v3838 = vadd.f32 0.0, %v3837
      %3839 = vmatmul.bf16.gmra.mxu0 %v3744
      %v3840 = vpop.f32.mrf.mxu0
      %v3841 = vadd.f32 0.0, %v3840
      %v3842 = vpop.f32.mrf.mxu0
      %v3843 = vadd.f32 0.0, %v3842
      %3844 = vdwg.mxu0
      %v3845 = vadd.f32 %v3492, %v3756
      %v3846 = vadd.f32 %v3493, %v3758
      %v3847 = vadd.f32 %v3494, %v3761
      %v3848 = vadd.f32 %v3495, %v3763
      %v3849 = vadd.f32 %v3496, %v3766
      %v3850 = vadd.f32 %v3497, %v3768
      %v3851 = vadd.f32 %v3498, %v3771
      %v3852 = vadd.f32 %v3499, %v3773
      %v3853 = vadd.f32 %v3500, %v3776
      %v3854 = vadd.f32 %v3501, %v3778
      %v3855 = vadd.f32 %v3502, %v3781
      %v3856 = vadd.f32 %v3503, %v3783
      %v3857 = vadd.f32 %v3504, %v3786
      %v3858 = vadd.f32 %v3505, %v3788
      %v3859 = vadd.f32 %v3506, %v3791
      %v3860 = vadd.f32 %v3507, %v3793
      %v3861 = vadd.f32 %v3508, %v3796
      %v3862 = vadd.f32 %v3509, %v3798
      %v3863 = vadd.f32 %v3510, %v3801
      %v3864 = vadd.f32 %v3511, %v3803
      %v3865 = vadd.f32 %v3512, %v3806
      %v3866 = vadd.f32 %v3513, %v3808
      %v3867 = vadd.f32 %v3514, %v3811
      %v3868 = vadd.f32 %v3515, %v3813
      %v3869 = vadd.f32 %v3516, %v3816
      %v3870 = vadd.f32 %v3517, %v3818
      %v3871 = vadd.f32 %v3518, %v3821
      %v3872 = vadd.f32 %v3519, %v3823
      %v3873 = vadd.f32 %v3520, %v3826
      %v3874 = vadd.f32 %v3521, %v3828
      %v3875 = vadd.f32 %v3522, %v3831
      %v3876 = vadd.f32 %v3523, %v3833
      %v3877 = vadd.f32 %v3524, %v3836
      %v3878 = vadd.f32 %v3525, %v3838
      %v3879 = vadd.f32 %v3526, %v3841
      %v3880 = vadd.f32 %v3527, %v3843
      %3881 = vst.msk [vmem:[#allocation3] sm:$0xff] %vm948, %v3845
      %3882 = vst.msk [vmem:[#allocation3 + $0x8] sm:$0xff] %vm948, %v3846
      %3883 = vst.msk [vmem:[#allocation3 + $0x10] sm:$0xff] %vm948, %v3847
      %3884 = vst.msk [vmem:[#allocation3 + $0x18] sm:$0xff] %vm948, %v3848
      %3885 = vst.msk [vmem:[#allocation3 + $0x20] sm:$0xff] %vm948, %v3849
      %3886 = vst.msk [vmem:[#allocation3 + $0x28] sm:$0xff] %vm948, %v3850
      %3887 = vst.msk [vmem:[#allocation3 + $0x30] sm:$0xff] %vm948, %v3851
      %3888 = vst.msk [vmem:[#allocation3 + $0x38] sm:$0xff] %vm948, %v3852
      %3889 = vst.msk [vmem:[#allocation3 + $0x40] sm:$0xff] %vm948, %v3853
      %3890 = vst.msk [vmem:[#allocation3 + $0x48] sm:$0xff] %vm948, %v3854
      %3891 = vst.msk [vmem:[#allocation3 + $0x50] sm:$0xff] %vm948, %v3855
      %3892 = vst.msk [vmem:[#allocation3 + $0x58] sm:$0xff] %vm948, %v3856
      %3893 = vst.msk [vmem:[#allocation3 + $0x60] sm:$0xff] %vm948, %v3857
      %3894 = vst.msk [vmem:[#allocation3 + $0x68] sm:$0xff] %vm948, %v3858
      %3895 = vst.msk [vmem:[#allocation3 + $0x70] sm:$0xff] %vm948, %v3859
      %3896 = vst.msk [vmem:[#allocation3 + $0x78] sm:$0xff] %vm948, %v3860
      %3897 = vst.msk [vmem:[#allocation3 + $0x80] sm:$0xff] %vm948, %v3861
      %3898 = vst.msk [vmem:[#allocation3 + $0x88] sm:$0xff] %vm948, %v3862
      %3899 = vst.msk [vmem:[#allocation3 + $0x90] sm:$0xff] %vm948, %v3863
      %3900 = vst.msk [vmem:[#allocation3 + $0x98] sm:$0xff] %vm948, %v3864
      %3901 = vst.msk [vmem:[#allocation3 + $0xa0] sm:$0xff] %vm948, %v3865
      %3902 = vst.msk [vmem:[#allocation3 + $0xa8] sm:$0xff] %vm948, %v3866
      %3903 = vst.msk [vmem:[#allocation3 + $0xb0] sm:$0xff] %vm948, %v3867
      %3904 = vst.msk [vmem:[#allocation3 + $0xb8] sm:$0xff] %vm948, %v3868
      %3905 = vst.msk [vmem:[#allocation3 + $0xc0] sm:$0xff] %vm948, %v3869
      %3906 = vst.msk [vmem:[#allocation3 + $0xc8] sm:$0xff] %vm948, %v3870
      %3907 = vst.msk [vmem:[#allocation3 + $0xd0] sm:$0xff] %vm948, %v3871
      %3908 = vst.msk [vmem:[#allocation3 + $0xd8] sm:$0xff] %vm948, %v3872
      %3909 = vst.msk [vmem:[#allocation3 + $0xe0] sm:$0xff] %vm948, %v3873
      %3910 = vst.msk [vmem:[#allocation3 + $0xe8] sm:$0xff] %vm948, %v3874
      %3911 = vst.msk [vmem:[#allocation3 + $0xf0] sm:$0xff] %vm948, %v3875
      %3912 = vst.msk [vmem:[#allocation3 + $0xf8] sm:$0xff] %vm948, %v3876
      %3913 = vst.msk [vmem:[#allocation3 + $0x100] sm:$0xff] %vm948, %v3877
      %3914 = vst.msk [vmem:[#allocation3 + $0x108] sm:$0xff] %vm948, %v3878
      %3915 = vst.msk [vmem:[#allocation3 + $0x110] sm:$0xff] %vm948, %v3879
      %3916 = vst.msk [vmem:[#allocation3 + $0x118] sm:$0xff] %vm948, %v3880
      %v3917 = vld [vmem:[#allocation2 + $0x18] sm:$0xe]
      %v3918 = vld [vmem:[#allocation2 + $0x1c] sm:$0xf]
      %v3919 = vld [vmem:[#allocation2 + $0x20] sm:$0xf]
      %v3920 = vld [vmem:[#allocation2 + $0x24] sm:$0xf]
      %v3921 = vld [vmem:[#allocation2 + $0x28] sm:$0xf]
      %v3922 = vld [vmem:[#allocation2 + $0x2c] sm:$0xf]
      %v3923 = vld [vmem:[#allocation2 + $0x30] sm:$0xf]
      %v3924 = vld [vmem:[#allocation2 + $0x34] sm:$0xf]
      %v3925 = vld [vmem:[#allocation2 + $0x38] sm:$0xf]
      %v3926 = vld [vmem:[#allocation2 + $0x3c] sm:$0xf]
      %v3927 = vld [vmem:[#allocation2 + $0x40] sm:$0xf]
      %v3928 = vld [vmem:[#allocation2 + $0x44] sm:$0xf]
      %v3929 = vld [vmem:[#allocation2 + $0x48] sm:$0xf]
      %v3930 = vld [vmem:[#allocation2 + $0x4c] sm:$0xf]
      %v3931 = vld [vmem:[#allocation2 + $0x50] sm:$0xf]
      %v3932 = vld [vmem:[#allocation2 + $0x54] sm:$0xf]
      %v3933 = vld [vmem:[#allocation2 + $0x58] sm:$0xf]
      %v3934 = vld [vmem:[#allocation2 + $0x5c] sm:$0xf]
      %v3935 = vld [vmem:[#allocation2 + $0x60] sm:$0xf]
      %v3936 = vld [vmem:[#allocation2 + $0x64] sm:$0xf]
      %v3937 = vld [vmem:[#allocation2 + $0x68] sm:$0xf]
      %v3938 = vld [vmem:[#allocation2 + $0x6c] sm:$0xf]
      %v3939 = vld [vmem:[#allocation2 + $0x70] sm:$0xf]
      %v3940 = vld [vmem:[#allocation2 + $0x74] sm:$0xf]
      %v3941 = vld [vmem:[#allocation2 + $0x78] sm:$0xf]
      %v3942 = vld [vmem:[#allocation2 + $0x7c] sm:$0xf]
      %v3943 = vld [vmem:[#allocation2 + $0x80] sm:$0xf]
      %v3944 = vld [vmem:[#allocation2 + $0x84] sm:$0xf]
      %v3945 = vld [vmem:[#allocation2 + $0x88] sm:$0xf]
      %v3946 = vld [vmem:[#allocation2 + $0x8c] sm:$0xf]
      %v3947 = vld [vmem:[#allocation2 + $0x90] sm:$0xf]
      %v3948 = vld [vmem:[#allocation2 + $0x94] sm:$0xf]
      %v3949 = vld [vmem:[#allocation2 + $0x98] sm:$0xf]
      %v3950 = vld [vmem:[#allocation2 + $0x9c] sm:$0xf]
      %v3951 = vld [vmem:[#allocation2 + $0xa0] sm:$0xf]
      %v3952 = vld [vmem:[#allocation2 + $0xa4] sm:$0xf]
      %v3953 = vld [vmem:[#allocation2 + $0xa8] sm:$0x1]
      %v3954 = vld [vmem:[#allocation3] sm:$0xff]
      %v3955 = vld [vmem:[#allocation3 + $0x8] sm:$0xff]
      %v3956 = vld [vmem:[#allocation3 + $0x10] sm:$0xff]
      %v3957 = vld [vmem:[#allocation3 + $0x18] sm:$0xff]
      %v3958 = vld [vmem:[#allocation3 + $0x20] sm:$0xff]
      %v3959 = vld [vmem:[#allocation3 + $0x28] sm:$0xff]
      %v3960 = vld [vmem:[#allocation3 + $0x30] sm:$0xff]
      %v3961 = vld [vmem:[#allocation3 + $0x38] sm:$0xff]
      %v3962 = vld [vmem:[#allocation3 + $0x40] sm:$0xff]
      %v3963 = vld [vmem:[#allocation3 + $0x48] sm:$0xff]
      %v3964 = vld [vmem:[#allocation3 + $0x50] sm:$0xff]
      %v3965 = vld [vmem:[#allocation3 + $0x58] sm:$0xff]
      %v3966 = vld [vmem:[#allocation3 + $0x60] sm:$0xff]
      %v3967 = vld [vmem:[#allocation3 + $0x68] sm:$0xff]
      %v3968 = vld [vmem:[#allocation3 + $0x70] sm:$0xff]
      %v3969 = vld [vmem:[#allocation3 + $0x78] sm:$0xff]
      %v3970 = vld [vmem:[#allocation3 + $0x80] sm:$0xff]
      %v3971 = vld [vmem:[#allocation3 + $0x88] sm:$0xff]
      %v3972 = vld [vmem:[#allocation3 + $0x90] sm:$0xff]
      %v3973 = vld [vmem:[#allocation3 + $0x98] sm:$0xff]
      %v3974 = vld [vmem:[#allocation3 + $0xa0] sm:$0xff]
      %v3975 = vld [vmem:[#allocation3 + $0xa8] sm:$0xff]
      %v3976 = vld [vmem:[#allocation3 + $0xb0] sm:$0xff]
      %v3977 = vld [vmem:[#allocation3 + $0xb8] sm:$0xff]
      %v3978 = vld [vmem:[#allocation3 + $0xc0] sm:$0xff]
      %v3979 = vld [vmem:[#allocation3 + $0xc8] sm:$0xff]
      %v3980 = vld [vmem:[#allocation3 + $0xd0] sm:$0xff]
      %v3981 = vld [vmem:[#allocation3 + $0xd8] sm:$0xff]
      %v3982 = vld [vmem:[#allocation3 + $0xe0] sm:$0xff]
      %v3983 = vld [vmem:[#allocation3 + $0xe8] sm:$0xff]
      %v3984 = vld [vmem:[#allocation3 + $0xf0] sm:$0xff]
      %v3985 = vld [vmem:[#allocation3 + $0xf8] sm:$0xff]
      %v3986 = vld [vmem:[#allocation3 + $0x100] sm:$0xff]
      %v3987 = vld [vmem:[#allocation3 + $0x108] sm:$0xff]
      %v3988 = vld [vmem:[#allocation3 + $0x110] sm:$0xff]
      %v3989 = vld [vmem:[#allocation3 + $0x118] sm:$0xff]
      %s3990 = scalar_lea.vmem %s4, 192
      %v3991 = vld [vmem:[%s3990] sm:$0xf]
      %v3992 = vld [vmem:[%s3990 + $0x4] sm:$0xf]
      %v3993 = vld [vmem:[%s3990 + $0x8] sm:$0xf]
      %v3994 = vld [vmem:[%s3990 + $0xc] sm:$0xf]
      %v3995 = vld [vmem:[%s3990 + $0x10] sm:$0xf]
      %v3996 = vld [vmem:[%s3990 + $0x14] sm:$0xf]
      %v3997 = vld [vmem:[%s3990 + $0x18] sm:$0xf]
      %v3998 = vld [vmem:[%s3990 + $0x1c] sm:$0xf]
      %v4036 = vunpack.c.l.b16 %v3917
      %v4037 = vunpack.c.l.b16 %v3918
      %v4038 = vunpack.c.l.b16 %v3919
      %v4039 = vunpack.c.l.b16 %v3920
      %v4040 = vunpack.c.l.b16 %v3921
      %v4041 = vunpack.c.l.b16 %v3922
      %v4042 = vunpack.c.l.b16 %v3923
      %v4043 = vunpack.c.l.b16 %v3924
      %v4044 = vunpack.c.l.b16 %v3925
      %v4045 = vunpack.c.l.b16 %v3926
      %v4046 = vunpack.c.l.b16 %v3927
      %v4047 = vunpack.c.l.b16 %v3928
      %v4048 = vunpack.c.l.b16 %v3929
      %v4049 = vunpack.c.l.b16 %v3930
      %v4050 = vunpack.c.l.b16 %v3931
      %v4051 = vunpack.c.l.b16 %v3932
      %v4052 = vunpack.c.l.b16 %v3933
      %v4053 = vunpack.c.l.b16 %v3934
      %v4054 = vunpack.c.l.b16 %v3935
      %v4055 = vunpack.c.l.b16 %v3936
      %v4056 = vunpack.c.l.b16 %v3937
      %v4057 = vunpack.c.l.b16 %v3938
      %v4058 = vunpack.c.l.b16 %v3939
      %v4059 = vunpack.c.l.b16 %v3940
      %v4060 = vunpack.c.l.b16 %v3941
      %v4061 = vunpack.c.l.b16 %v3942
      %v4062 = vunpack.c.l.b16 %v3943
      %v4063 = vunpack.c.l.b16 %v3944
      %v4064 = vunpack.c.l.b16 %v3945
      %v4065 = vunpack.c.l.b16 %v3946
      %v4066 = vunpack.c.l.b16 %v3947
      %v4067 = vunpack.c.l.b16 %v3948
      %v4068 = vunpack.c.l.b16 %v3949
      %v4069 = vunpack.c.l.b16 %v3950
      %v4070 = vunpack.c.l.b16 %v3951
      %v4071 = vunpack.c.l.b16 %v3952
      %v4072 = vunpack.c.l.b16 %v3953
      %v4073 = vpack.c.b16 %v4037, %v4036
      %v4074 = vpack.c.b16 %v4039, %v4038
      %v4075 = vpack.c.b16 %v4041, %v4040
      %v4076 = vpack.c.b16 %v4043, %v4042
      %v4077 = vpack.c.b16 %v4045, %v4044
      %v4078 = vpack.c.b16 %v4047, %v4046
      %v4079 = vpack.c.b16 %v4049, %v4048
      %v4080 = vpack.c.b16 %v4051, %v4050
      %v4081 = vpack.c.b16 %v4053, %v4052
      %v4082 = vpack.c.b16 %v4055, %v4054
      %v4083 = vpack.c.b16 %v4057, %v4056
      %v4084 = vpack.c.b16 %v4059, %v4058
      %v4085 = vpack.c.b16 %v4061, %v4060
      %v4086 = vpack.c.b16 %v4063, %v4062
      %v4087 = vpack.c.b16 %v4065, %v4064
      %v4088 = vpack.c.b16 %v4067, %v4066
      %v4089 = vpack.c.b16 %v4069, %v4068
      %v4090 = vpack.c.b16 %v4071, %v4070
      %v4091 = vpack.c.b16 %v4072, %v4072
      %v4092 = vrot.slane %v4073, 1
      %v4093 = vrot.slane %v4074, 1
      %v4094 = vsel %vm3630, %v4092, %v4093
      %v4095 = vrot.slane %v4075, 1
      %v4096 = vsel %vm3630, %v4093, %v4095
      %v4097 = vrot.slane %v4076, 1
      %v4098 = vsel %vm3630, %v4095, %v4097
      %v4099 = vrot.slane %v4077, 1
      %v4100 = vsel %vm3630, %v4097, %v4099
      %v4101 = vrot.slane %v4078, 1
      %v4102 = vsel %vm3630, %v4099, %v4101
      %v4103 = vrot.slane %v4079, 1
      %v4104 = vsel %vm3630, %v4101, %v4103
      %v4105 = vrot.slane %v4080, 1
      %v4106 = vsel %vm3630, %v4103, %v4105
      %v4107 = vrot.slane %v4081, 1
      %v4108 = vsel %vm3630, %v4105, %v4107
      %v4109 = vrot.slane %v4082, 1
      %v4110 = vsel %vm3630, %v4107, %v4109
      %v4111 = vrot.slane %v4083, 1
      %v4112 = vsel %vm3630, %v4109, %v4111
      %v4113 = vrot.slane %v4084, 1
      %v4114 = vsel %vm3630, %v4111, %v4113
      %v4115 = vrot.slane %v4085, 1
      %v4116 = vsel %vm3630, %v4113, %v4115
      %v4117 = vrot.slane %v4086, 1
      %v4118 = vsel %vm3630, %v4115, %v4117
      %v4119 = vrot.slane %v4087, 1
      %v4120 = vsel %vm3630, %v4117, %v4119
      %v4121 = vrot.slane %v4088, 1
      %v4122 = vsel %vm3630, %v4119, %v4121
      %v4123 = vrot.slane %v4089, 1
      %v4124 = vsel %vm3630, %v4121, %v4123
      %v4125 = vrot.slane %v4090, 1
      %v4126 = vsel %vm3630, %v4123, %v4125
      %v4127 = vrot.slane %v4091, 1
      %v4128 = vsel %vm3630, %v4125, %v4127
      %v4137 = vunpack.c.l.b16 %v3991
      %v4138 = vunpack.c.l.b16 %v3992
      %v4139 = vunpack.c.l.b16 %v3993
      %v4140 = vunpack.c.l.b16 %v3994
      %v4141 = vunpack.c.l.b16 %v3995
      %v4142 = vunpack.c.l.b16 %v3996
      %v4143 = vunpack.c.l.b16 %v3997
      %v4144 = vunpack.c.l.b16 %v3998
      %v4145 = vpack.c.b16 %v4138, %v4137
      %v4146 = vpack.c.b16 %v4140, %v4139
      %v4147 = vpack.c.b16 %v4142, %v4141
      %v4148 = vpack.c.b16 %v4144, %v4143
      %v4154 = vsel %vm1221, %v4094, 0
      %v4157 = vsel %vm1221, %v4096, 0
      %v4160 = vsel %vm1221, %v4098, 0
      %v4163 = vsel %vm1221, %v4100, 0
      %v4166 = vsel %vm1221, %v4102, 0
      %v4169 = vsel %vm1221, %v4104, 0
      %v4172 = vsel %vm1221, %v4106, 0
      %v4175 = vsel %vm1221, %v4108, 0
      %v4178 = vsel %vm1221, %v4110, 0
      %v4181 = vsel %vm1221, %v4112, 0
      %v4184 = vsel %vm1221, %v4114, 0
      %v4187 = vsel %vm1221, %v4116, 0
      %v4190 = vsel %vm1221, %v4118, 0
      %v4193 = vsel %vm1221, %v4120, 0
      %v4196 = vsel %vm1221, %v4122, 0
      %v4199 = vsel %vm1221, %v4124, 0
      %v4202 = vsel %vm1221, %v4126, 0
      %v4205 = vsel %vm1221, %v4128, 0
      %4207 = vmatpush.bf16.msra.mxu0 0
      %4208 = vmatpush.bf16.msra.mxu0 0
      %4209 = vmatpush.bf16.msra.mxu0 0
      %4210 = vmatpush.bf16.msra.mxu0 0
      %4211 = vmatpush.bf16.msra.mxu0 %v4148
      %4212 = vmatpush.bf16.msra.mxu0 %v4147
      %4213 = vmatpush.bf16.msra.mxu0 %v4146
      %4214 = vmatpush.bf16.msra.mxu0 %v4145
      %4215 = vmatmul.bf16.gmra.mxu0 %v4154
      %v4216 = vpop.f32.mrf.mxu0
      %v4217 = vadd.f32 0.0, %v4216
      %v4218 = vpop.f32.mrf.mxu0
      %v4219 = vadd.f32 0.0, %v4218
      %4220 = vmatmul.bf16.gmra.mxu0 %v4157
      %v4221 = vpop.f32.mrf.mxu0
      %v4222 = vadd.f32 0.0, %v4221
      %v4223 = vpop.f32.mrf.mxu0
      %v4224 = vadd.f32 0.0, %v4223
      %4225 = vmatmul.bf16.gmra.mxu0 %v4160
      %v4226 = vpop.f32.mrf.mxu0
      %v4227 = vadd.f32 0.0, %v4226
      %v4228 = vpop.f32.mrf.mxu0
      %v4229 = vadd.f32 0.0, %v4228
      %4230 = vmatmul.bf16.gmra.mxu0 %v4163
      %v4231 = vpop.f32.mrf.mxu0
      %v4232 = vadd.f32 0.0, %v4231
      %v4233 = vpop.f32.mrf.mxu0
      %v4234 = vadd.f32 0.0, %v4233
      %4235 = vmatmul.bf16.gmra.mxu0 %v4166
      %v4236 = vpop.f32.mrf.mxu0
      %v4237 = vadd.f32 0.0, %v4236
      %v4238 = vpop.f32.mrf.mxu0
      %v4239 = vadd.f32 0.0, %v4238
      %4240 = vmatmul.bf16.gmra.mxu0 %v4169
      %v4241 = vpop.f32.mrf.mxu0
      %v4242 = vadd.f32 0.0, %v4241
      %v4243 = vpop.f32.mrf.mxu0
      %v4244 = vadd.f32 0.0, %v4243
      %4245 = vmatmul.bf16.gmra.mxu0 %v4172
      %v4246 = vpop.f32.mrf.mxu0
      %v4247 = vadd.f32 0.0, %v4246
      %v4248 = vpop.f32.mrf.mxu0
      %v4249 = vadd.f32 0.0, %v4248
      %4250 = vmatmul.bf16.gmra.mxu0 %v4175
      %v4251 = vpop.f32.mrf.mxu0
      %v4252 = vadd.f32 0.0, %v4251
      %v4253 = vpop.f32.mrf.mxu0
      %v4254 = vadd.f32 0.0, %v4253
      %4255 = vmatmul.bf16.gmra.mxu0 %v4178
      %v4256 = vpop.f32.mrf.mxu0
      %v4257 = vadd.f32 0.0, %v4256
      %v4258 = vpop.f32.mrf.mxu0
      %v4259 = vadd.f32 0.0, %v4258
      %4260 = vmatmul.bf16.gmra.mxu0 %v4181
      %v4261 = vpop.f32.mrf.mxu0
      %v4262 = vadd.f32 0.0, %v4261
      %v4263 = vpop.f32.mrf.mxu0
      %v4264 = vadd.f32 0.0, %v4263
      %4265 = vmatmul.bf16.gmra.mxu0 %v4184
      %v4266 = vpop.f32.mrf.mxu0
      %v4267 = vadd.f32 0.0, %v4266
      %v4268 = vpop.f32.mrf.mxu0
      %v4269 = vadd.f32 0.0, %v4268
      %4270 = vmatmul.bf16.gmra.mxu0 %v4187
      %v4271 = vpop.f32.mrf.mxu0
      %v4272 = vadd.f32 0.0, %v4271
      %v4273 = vpop.f32.mrf.mxu0
      %v4274 = vadd.f32 0.0, %v4273
      %4275 = vmatmul.bf16.gmra.mxu0 %v4190
      %v4276 = vpop.f32.mrf.mxu0
      %v4277 = vadd.f32 0.0, %v4276
      %v4278 = vpop.f32.mrf.mxu0
      %v4279 = vadd.f32 0.0, %v4278
      %4280 = vmatmul.bf16.gmra.mxu0 %v4193
      %v4281 = vpop.f32.mrf.mxu0
      %v4282 = vadd.f32 0.0, %v4281
      %v4283 = vpop.f32.mrf.mxu0
      %v4284 = vadd.f32 0.0, %v4283
      %4285 = vmatmul.bf16.gmra.mxu0 %v4196
      %v4286 = vpop.f32.mrf.mxu0
      %v4287 = vadd.f32 0.0, %v4286
      %v4288 = vpop.f32.mrf.mxu0
      %v4289 = vadd.f32 0.0, %v4288
      %4290 = vmatmul.bf16.gmra.mxu0 %v4199
      %v4291 = vpop.f32.mrf.mxu0
      %v4292 = vadd.f32 0.0, %v4291
      %v4293 = vpop.f32.mrf.mxu0
      %v4294 = vadd.f32 0.0, %v4293
      %4295 = vmatmul.bf16.gmra.mxu0 %v4202
      %v4296 = vpop.f32.mrf.mxu0
      %v4297 = vadd.f32 0.0, %v4296
      %v4298 = vpop.f32.mrf.mxu0
      %v4299 = vadd.f32 0.0, %v4298
      %4300 = vmatmul.bf16.gmra.mxu0 %v4205
      %v4301 = vpop.f32.mrf.mxu0
      %v4302 = vadd.f32 0.0, %v4301
      %v4303 = vpop.f32.mrf.mxu0
      %v4304 = vadd.f32 0.0, %v4303
      %4305 = vdwg.mxu0
      %v4306 = vadd.f32 %v3954, %v4217
      %v4307 = vadd.f32 %v3955, %v4219
      %v4308 = vadd.f32 %v3956, %v4222
      %v4309 = vadd.f32 %v3957, %v4224
      %v4310 = vadd.f32 %v3958, %v4227
      %v4311 = vadd.f32 %v3959, %v4229
      %v4312 = vadd.f32 %v3960, %v4232
      %v4313 = vadd.f32 %v3961, %v4234
      %v4314 = vadd.f32 %v3962, %v4237
      %v4315 = vadd.f32 %v3963, %v4239
      %v4316 = vadd.f32 %v3964, %v4242
      %v4317 = vadd.f32 %v3965, %v4244
      %v4318 = vadd.f32 %v3966, %v4247
      %v4319 = vadd.f32 %v3967, %v4249
      %v4320 = vadd.f32 %v3968, %v4252
      %v4321 = vadd.f32 %v3969, %v4254
      %v4322 = vadd.f32 %v3970, %v4257
      %v4323 = vadd.f32 %v3971, %v4259
      %v4324 = vadd.f32 %v3972, %v4262
      %v4325 = vadd.f32 %v3973, %v4264
      %v4326 = vadd.f32 %v3974, %v4267
      %v4327 = vadd.f32 %v3975, %v4269
      %v4328 = vadd.f32 %v3976, %v4272
      %v4329 = vadd.f32 %v3977, %v4274
      %v4330 = vadd.f32 %v3978, %v4277
      %v4331 = vadd.f32 %v3979, %v4279
      %v4332 = vadd.f32 %v3980, %v4282
      %v4333 = vadd.f32 %v3981, %v4284
      %v4334 = vadd.f32 %v3982, %v4287
      %v4335 = vadd.f32 %v3983, %v4289
      %v4336 = vadd.f32 %v3984, %v4292
      %v4337 = vadd.f32 %v3985, %v4294
      %v4338 = vadd.f32 %v3986, %v4297
      %v4339 = vadd.f32 %v3987, %v4299
      %v4340 = vadd.f32 %v3988, %v4302
      %v4341 = vadd.f32 %v3989, %v4304
      %4342 = vst.msk [vmem:[#allocation3] sm:$0xff] %vm948, %v4306
      %4343 = vst.msk [vmem:[#allocation3 + $0x8] sm:$0xff] %vm948, %v4307
      %4344 = vst.msk [vmem:[#allocation3 + $0x10] sm:$0xff] %vm948, %v4308
      %4345 = vst.msk [vmem:[#allocation3 + $0x18] sm:$0xff] %vm948, %v4309
      %4346 = vst.msk [vmem:[#allocation3 + $0x20] sm:$0xff] %vm948, %v4310
      %4347 = vst.msk [vmem:[#allocation3 + $0x28] sm:$0xff] %vm948, %v4311
      %4348 = vst.msk [vmem:[#allocation3 + $0x30] sm:$0xff] %vm948, %v4312
      %4349 = vst.msk [vmem:[#allocation3 + $0x38] sm:$0xff] %vm948, %v4313
      %4350 = vst.msk [vmem:[#allocation3 + $0x40] sm:$0xff] %vm948, %v4314
      %4351 = vst.msk [vmem:[#allocation3 + $0x48] sm:$0xff] %vm948, %v4315
      %4352 = vst.msk [vmem:[#allocation3 + $0x50] sm:$0xff] %vm948, %v4316
      %4353 = vst.msk [vmem:[#allocation3 + $0x58] sm:$0xff] %vm948, %v4317
      %4354 = vst.msk [vmem:[#allocation3 + $0x60] sm:$0xff] %vm948, %v4318
      %4355 = vst.msk [vmem:[#allocation3 + $0x68] sm:$0xff] %vm948, %v4319
      %4356 = vst.msk [vmem:[#allocation3 + $0x70] sm:$0xff] %vm948, %v4320
      %4357 = vst.msk [vmem:[#allocation3 + $0x78] sm:$0xff] %vm948, %v4321
      %4358 = vst.msk [vmem:[#allocation3 + $0x80] sm:$0xff] %vm948, %v4322
      %4359 = vst.msk [vmem:[#allocation3 + $0x88] sm:$0xff] %vm948, %v4323
      %4360 = vst.msk [vmem:[#allocation3 + $0x90] sm:$0xff] %vm948, %v4324
      %4361 = vst.msk [vmem:[#allocation3 + $0x98] sm:$0xff] %vm948, %v4325
      %4362 = vst.msk [vmem:[#allocation3 + $0xa0] sm:$0xff] %vm948, %v4326
      %4363 = vst.msk [vmem:[#allocation3 + $0xa8] sm:$0xff] %vm948, %v4327
      %4364 = vst.msk [vmem:[#allocation3 + $0xb0] sm:$0xff] %vm948, %v4328
      %4365 = vst.msk [vmem:[#allocation3 + $0xb8] sm:$0xff] %vm948, %v4329
      %4366 = vst.msk [vmem:[#allocation3 + $0xc0] sm:$0xff] %vm948, %v4330
      %4367 = vst.msk [vmem:[#allocation3 + $0xc8] sm:$0xff] %vm948, %v4331
      %4368 = vst.msk [vmem:[#allocation3 + $0xd0] sm:$0xff] %vm948, %v4332
      %4369 = vst.msk [vmem:[#allocation3 + $0xd8] sm:$0xff] %vm948, %v4333
      %4370 = vst.msk [vmem:[#allocation3 + $0xe0] sm:$0xff] %vm948, %v4334
      %4371 = vst.msk [vmem:[#allocation3 + $0xe8] sm:$0xff] %vm948, %v4335
      %4372 = vst.msk [vmem:[#allocation3 + $0xf0] sm:$0xff] %vm948, %v4336
      %4373 = vst.msk [vmem:[#allocation3 + $0xf8] sm:$0xff] %vm948, %v4337
      %4374 = vst.msk [vmem:[#allocation3 + $0x100] sm:$0xff] %vm948, %v4338
      %4375 = vst.msk [vmem:[#allocation3 + $0x108] sm:$0xff] %vm948, %v4339
      %4376 = vst.msk [vmem:[#allocation3 + $0x110] sm:$0xff] %vm948, %v4340
      %4377 = vst.msk [vmem:[#allocation3 + $0x118] sm:$0xff] %vm948, %v4341
      %v4378 = vld [vmem:[#allocation2 + $0x18] sm:$0xe]
      %v4379 = vld [vmem:[#allocation2 + $0x1c] sm:$0xf]
      %v4380 = vld [vmem:[#allocation2 + $0x20] sm:$0xf]
      %v4381 = vld [vmem:[#allocation2 + $0x24] sm:$0xf]
      %v4382 = vld [vmem:[#allocation2 + $0x28] sm:$0xf]
      %v4383 = vld [vmem:[#allocation2 + $0x2c] sm:$0xf]
      %v4384 = vld [vmem:[#allocation2 + $0x30] sm:$0xf]
      %v4385 = vld [vmem:[#allocation2 + $0x34] sm:$0xf]
      %v4386 = vld [vmem:[#allocation2 + $0x38] sm:$0xf]
      %v4387 = vld [vmem:[#allocation2 + $0x3c] sm:$0xf]
      %v4388 = vld [vmem:[#allocation2 + $0x40] sm:$0xf]
      %v4389 = vld [vmem:[#allocation2 + $0x44] sm:$0xf]
      %v4390 = vld [vmem:[#allocation2 + $0x48] sm:$0xf]
      %v4391 = vld [vmem:[#allocation2 + $0x4c] sm:$0xf]
      %v4392 = vld [vmem:[#allocation2 + $0x50] sm:$0xf]
      %v4393 = vld [vmem:[#allocation2 + $0x54] sm:$0xf]
      %v4394 = vld [vmem:[#allocation2 + $0x58] sm:$0xf]
      %v4395 = vld [vmem:[#allocation2 + $0x5c] sm:$0xf]
      %v4396 = vld [vmem:[#allocation2 + $0x60] sm:$0xf]
      %v4397 = vld [vmem:[#allocation2 + $0x64] sm:$0xf]
      %v4398 = vld [vmem:[#allocation2 + $0x68] sm:$0xf]
      %v4399 = vld [vmem:[#allocation2 + $0x6c] sm:$0xf]
      %v4400 = vld [vmem:[#allocation2 + $0x70] sm:$0xf]
      %v4401 = vld [vmem:[#allocation2 + $0x74] sm:$0xf]
      %v4402 = vld [vmem:[#allocation2 + $0x78] sm:$0xf]
      %v4403 = vld [vmem:[#allocation2 + $0x7c] sm:$0xf]
      %v4404 = vld [vmem:[#allocation2 + $0x80] sm:$0xf]
      %v4405 = vld [vmem:[#allocation2 + $0x84] sm:$0xf]
      %v4406 = vld [vmem:[#allocation2 + $0x88] sm:$0xf]
      %v4407 = vld [vmem:[#allocation2 + $0x8c] sm:$0xf]
      %v4408 = vld [vmem:[#allocation2 + $0x90] sm:$0xf]
      %v4409 = vld [vmem:[#allocation2 + $0x94] sm:$0xf]
      %v4410 = vld [vmem:[#allocation2 + $0x98] sm:$0xf]
      %v4411 = vld [vmem:[#allocation2 + $0x9c] sm:$0xf]
      %v4412 = vld [vmem:[#allocation2 + $0xa0] sm:$0xf]
      %v4413 = vld [vmem:[#allocation2 + $0xa4] sm:$0xf]
      %v4414 = vld [vmem:[#allocation2 + $0xa8] sm:$0x3]
      %v4415 = vld [vmem:[#allocation3] sm:$0xff]
      %v4416 = vld [vmem:[#allocation3 + $0x8] sm:$0xff]
      %v4417 = vld [vmem:[#allocation3 + $0x10] sm:$0xff]
      %v4418 = vld [vmem:[#allocation3 + $0x18] sm:$0xff]
      %v4419 = vld [vmem:[#allocation3 + $0x20] sm:$0xff]
      %v4420 = vld [vmem:[#allocation3 + $0x28] sm:$0xff]
      %v4421 = vld [vmem:[#allocation3 + $0x30] sm:$0xff]
      %v4422 = vld [vmem:[#allocation3 + $0x38] sm:$0xff]
      %v4423 = vld [vmem:[#allocation3 + $0x40] sm:$0xff]
      %v4424 = vld [vmem:[#allocation3 + $0x48] sm:$0xff]
      %v4425 = vld [vmem:[#allocation3 + $0x50] sm:$0xff]
      %v4426 = vld [vmem:[#allocation3 + $0x58] sm:$0xff]
      %v4427 = vld [vmem:[#allocation3 + $0x60] sm:$0xff]
      %v4428 = vld [vmem:[#allocation3 + $0x68] sm:$0xff]
      %v4429 = vld [vmem:[#allocation3 + $0x70] sm:$0xff]
      %v4430 = vld [vmem:[#allocation3 + $0x78] sm:$0xff]
      %v4431 = vld [vmem:[#allocation3 + $0x80] sm:$0xff]
      %v4432 = vld [vmem:[#allocation3 + $0x88] sm:$0xff]
      %v4433 = vld [vmem:[#allocation3 + $0x90] sm:$0xff]
      %v4434 = vld [vmem:[#allocation3 + $0x98] sm:$0xff]
      %v4435 = vld [vmem:[#allocation3 + $0xa0] sm:$0xff]
      %v4436 = vld [vmem:[#allocation3 + $0xa8] sm:$0xff]
      %v4437 = vld [vmem:[#allocation3 + $0xb0] sm:$0xff]
      %v4438 = vld [vmem:[#allocation3 + $0xb8] sm:$0xff]
      %v4439 = vld [vmem:[#allocation3 + $0xc0] sm:$0xff]
      %v4440 = vld [vmem:[#allocation3 + $0xc8] sm:$0xff]
      %v4441 = vld [vmem:[#allocation3 + $0xd0] sm:$0xff]
      %v4442 = vld [vmem:[#allocation3 + $0xd8] sm:$0xff]
      %v4443 = vld [vmem:[#allocation3 + $0xe0] sm:$0xff]
      %v4444 = vld [vmem:[#allocation3 + $0xe8] sm:$0xff]
      %v4445 = vld [vmem:[#allocation3 + $0xf0] sm:$0xff]
      %v4446 = vld [vmem:[#allocation3 + $0xf8] sm:$0xff]
      %v4447 = vld [vmem:[#allocation3 + $0x100] sm:$0xff]
      %v4448 = vld [vmem:[#allocation3 + $0x108] sm:$0xff]
      %v4449 = vld [vmem:[#allocation3 + $0x110] sm:$0xff]
      %v4450 = vld [vmem:[#allocation3 + $0x118] sm:$0xff]
      %s4451 = scalar_lea.vmem %s4, 224
      %v4452 = vld [vmem:[%s4451] sm:$0xf]
      %v4453 = vld [vmem:[%s4451 + $0x4] sm:$0xf]
      %v4454 = vld [vmem:[%s4451 + $0x8] sm:$0xf]
      %v4455 = vld [vmem:[%s4451 + $0xc] sm:$0xf]
      %v4456 = vld [vmem:[%s4451 + $0x10] sm:$0xf]
      %v4457 = vld [vmem:[%s4451 + $0x14] sm:$0xf]
      %v4458 = vld [vmem:[%s4451 + $0x18] sm:$0xf]
      %v4459 = vld [vmem:[%s4451 + $0x1c] sm:$0xf]
      %v4497 = vunpack.c.l.b16 %v4378
      %v4498 = vunpack.c.l.b16 %v4379
      %v4499 = vunpack.c.l.b16 %v4380
      %v4500 = vunpack.c.l.b16 %v4381
      %v4501 = vunpack.c.l.b16 %v4382
      %v4502 = vunpack.c.l.b16 %v4383
      %v4503 = vunpack.c.l.b16 %v4384
      %v4504 = vunpack.c.l.b16 %v4385
      %v4505 = vunpack.c.l.b16 %v4386
      %v4506 = vunpack.c.l.b16 %v4387
      %v4507 = vunpack.c.l.b16 %v4388
      %v4508 = vunpack.c.l.b16 %v4389
      %v4509 = vunpack.c.l.b16 %v4390
      %v4510 = vunpack.c.l.b16 %v4391
      %v4511 = vunpack.c.l.b16 %v4392
      %v4512 = vunpack.c.l.b16 %v4393
      %v4513 = vunpack.c.l.b16 %v4394
      %v4514 = vunpack.c.l.b16 %v4395
      %v4515 = vunpack.c.l.b16 %v4396
      %v4516 = vunpack.c.l.b16 %v4397
      %v4517 = vunpack.c.l.b16 %v4398
      %v4518 = vunpack.c.l.b16 %v4399
      %v4519 = vunpack.c.l.b16 %v4400
      %v4520 = vunpack.c.l.b16 %v4401
      %v4521 = vunpack.c.l.b16 %v4402
      %v4522 = vunpack.c.l.b16 %v4403
      %v4523 = vunpack.c.l.b16 %v4404
      %v4524 = vunpack.c.l.b16 %v4405
      %v4525 = vunpack.c.l.b16 %v4406
      %v4526 = vunpack.c.l.b16 %v4407
      %v4527 = vunpack.c.l.b16 %v4408
      %v4528 = vunpack.c.l.b16 %v4409
      %v4529 = vunpack.c.l.b16 %v4410
      %v4530 = vunpack.c.l.b16 %v4411
      %v4531 = vunpack.c.l.b16 %v4412
      %v4532 = vunpack.c.l.b16 %v4413
      %v4533 = vunpack.c.l.b16 %v4414
      %v4534 = vpack.c.b16 %v4498, %v4497
      %v4535 = vpack.c.b16 %v4500, %v4499
      %v4536 = vpack.c.b16 %v4502, %v4501
      %v4537 = vpack.c.b16 %v4504, %v4503
      %v4538 = vpack.c.b16 %v4506, %v4505
      %v4539 = vpack.c.b16 %v4508, %v4507
      %v4540 = vpack.c.b16 %v4510, %v4509
      %v4541 = vpack.c.b16 %v4512, %v4511
      %v4542 = vpack.c.b16 %v4514, %v4513
      %v4543 = vpack.c.b16 %v4516, %v4515
      %v4544 = vpack.c.b16 %v4518, %v4517
      %v4545 = vpack.c.b16 %v4520, %v4519
      %v4546 = vpack.c.b16 %v4522, %v4521
      %v4547 = vpack.c.b16 %v4524, %v4523
      %v4548 = vpack.c.b16 %v4526, %v4525
      %v4549 = vpack.c.b16 %v4528, %v4527
      %v4550 = vpack.c.b16 %v4530, %v4529
      %v4551 = vpack.c.b16 %v4532, %v4531
      %v4552 = vpack.c.b16 %v4533, %v4533
      %vm4553 = vsmask.f32 6400
      %v4555 = vshrl.u32 %v4534, 16
      %v4557 = vrot.slane %v4555, 1
      %v4558 = vshll.u32 %v4534, 16
      %v4560 = vrot.slane %v4558, 2
      %v4561 = vor.u32 %v4557, %v4560
      %v4563 = vshrl.u32 %v4535, 16
      %v4565 = vrot.slane %v4563, 1
      %v4566 = vshll.u32 %v4535, 16
      %v4568 = vrot.slane %v4566, 2
      %v4569 = vor.u32 %v4565, %v4568
      %v4570 = vsel %vm4553, %v4561, %v4569
      %v4572 = vshrl.u32 %v4536, 16
      %v4574 = vrot.slane %v4572, 1
      %v4575 = vshll.u32 %v4536, 16
      %v4577 = vrot.slane %v4575, 2
      %v4578 = vor.u32 %v4574, %v4577
      %v4579 = vsel %vm4553, %v4569, %v4578
      %v4581 = vshrl.u32 %v4537, 16
      %v4583 = vrot.slane %v4581, 1
      %v4584 = vshll.u32 %v4537, 16
      %v4586 = vrot.slane %v4584, 2
      %v4587 = vor.u32 %v4583, %v4586
      %v4588 = vsel %vm4553, %v4578, %v4587
      %v4590 = vshrl.u32 %v4538, 16
      %v4592 = vrot.slane %v4590, 1
      %v4593 = vshll.u32 %v4538, 16
      %v4595 = vrot.slane %v4593, 2
      %v4596 = vor.u32 %v4592, %v4595
      %v4597 = vsel %vm4553, %v4587, %v4596
      %v4599 = vshrl.u32 %v4539, 16
      %v4601 = vrot.slane %v4599, 1
      %v4602 = vshll.u32 %v4539, 16
      %v4604 = vrot.slane %v4602, 2
      %v4605 = vor.u32 %v4601, %v4604
      %v4606 = vsel %vm4553, %v4596, %v4605
      %v4608 = vshrl.u32 %v4540, 16
      %v4610 = vrot.slane %v4608, 1
      %v4611 = vshll.u32 %v4540, 16
      %v4613 = vrot.slane %v4611, 2
      %v4614 = vor.u32 %v4610, %v4613
      %v4615 = vsel %vm4553, %v4605, %v4614
      %v4617 = vshrl.u32 %v4541, 16
      %v4619 = vrot.slane %v4617, 1
      %v4620 = vshll.u32 %v4541, 16
      %v4622 = vrot.slane %v4620, 2
      %v4623 = vor.u32 %v4619, %v4622
      %v4624 = vsel %vm4553, %v4614, %v4623
      %v4626 = vshrl.u32 %v4542, 16
      %v4628 = vrot.slane %v4626, 1
      %v4629 = vshll.u32 %v4542, 16
      %v4631 = vrot.slane %v4629, 2
      %v4632 = vor.u32 %v4628, %v4631
      %v4633 = vsel %vm4553, %v4623, %v4632
      %v4635 = vshrl.u32 %v4543, 16
      %v4637 = vrot.slane %v4635, 1
      %v4638 = vshll.u32 %v4543, 16
      %v4640 = vrot.slane %v4638, 2
      %v4641 = vor.u32 %v4637, %v4640
      %v4642 = vsel %vm4553, %v4632, %v4641
      %v4644 = vshrl.u32 %v4544, 16
      %v4646 = vrot.slane %v4644, 1
      %v4647 = vshll.u32 %v4544, 16
      %v4649 = vrot.slane %v4647, 2
      %v4650 = vor.u32 %v4646, %v4649
      %v4651 = vsel %vm4553, %v4641, %v4650
      %v4653 = vshrl.u32 %v4545, 16
      %v4655 = vrot.slane %v4653, 1
      %v4656 = vshll.u32 %v4545, 16
      %v4658 = vrot.slane %v4656, 2
      %v4659 = vor.u32 %v4655, %v4658
      %v4660 = vsel %vm4553, %v4650, %v4659
      %v4662 = vshrl.u32 %v4546, 16
      %v4664 = vrot.slane %v4662, 1
      %v4665 = vshll.u32 %v4546, 16
      %v4667 = vrot.slane %v4665, 2
      %v4668 = vor.u32 %v4664, %v4667
      %v4669 = vsel %vm4553, %v4659, %v4668
      %v4671 = vshrl.u32 %v4547, 16
      %v4673 = vrot.slane %v4671, 1
      %v4674 = vshll.u32 %v4547, 16
      %v4676 = vrot.slane %v4674, 2
      %v4677 = vor.u32 %v4673, %v4676
      %v4678 = vsel %vm4553, %v4668, %v4677
      %v4680 = vshrl.u32 %v4548, 16
      %v4682 = vrot.slane %v4680, 1
      %v4683 = vshll.u32 %v4548, 16
      %v4685 = vrot.slane %v4683, 2
      %v4686 = vor.u32 %v4682, %v4685
      %v4687 = vsel %vm4553, %v4677, %v4686
      %v4689 = vshrl.u32 %v4549, 16
      %v4691 = vrot.slane %v4689, 1
      %v4692 = vshll.u32 %v4549, 16
      %v4694 = vrot.slane %v4692, 2
      %v4695 = vor.u32 %v4691, %v4694
      %v4696 = vsel %vm4553, %v4686, %v4695
      %v4698 = vshrl.u32 %v4550, 16
      %v4700 = vrot.slane %v4698, 1
      %v4701 = vshll.u32 %v4550, 16
      %v4703 = vrot.slane %v4701, 2
      %v4704 = vor.u32 %v4700, %v4703
      %v4705 = vsel %vm4553, %v4695, %v4704
      %v4707 = vshrl.u32 %v4551, 16
      %v4709 = vrot.slane %v4707, 1
      %v4710 = vshll.u32 %v4551, 16
      %v4712 = vrot.slane %v4710, 2
      %v4713 = vor.u32 %v4709, %v4712
      %v4714 = vsel %vm4553, %v4704, %v4713
      %v4716 = vshrl.u32 %v4552, 16
      %v4718 = vrot.slane %v4716, 1
      %v4719 = vshll.u32 %v4552, 16
      %v4721 = vrot.slane %v4719, 2
      %v4722 = vor.u32 %v4718, %v4721
      %v4723 = vsel %vm4553, %v4713, %v4722
      %v4732 = vunpack.c.l.b16 %v4452
      %v4733 = vunpack.c.l.b16 %v4453
      %v4734 = vunpack.c.l.b16 %v4454
      %v4735 = vunpack.c.l.b16 %v4455
      %v4736 = vunpack.c.l.b16 %v4456
      %v4737 = vunpack.c.l.b16 %v4457
      %v4738 = vunpack.c.l.b16 %v4458
      %v4739 = vunpack.c.l.b16 %v4459
      %v4740 = vpack.c.b16 %v4733, %v4732
      %v4741 = vpack.c.b16 %v4735, %v4734
      %v4742 = vpack.c.b16 %v4737, %v4736
      %v4743 = vpack.c.b16 %v4739, %v4738
      %v4749 = vsel %vm1221, %v4570, 0
      %v4752 = vsel %vm1221, %v4579, 0
      %v4755 = vsel %vm1221, %v4588, 0
      %v4758 = vsel %vm1221, %v4597, 0
      %v4761 = vsel %vm1221, %v4606, 0
      %v4764 = vsel %vm1221, %v4615, 0
      %v4767 = vsel %vm1221, %v4624, 0
      %v4770 = vsel %vm1221, %v4633, 0
      %v4773 = vsel %vm1221, %v4642, 0
      %v4776 = vsel %vm1221, %v4651, 0
      %v4779 = vsel %vm1221, %v4660, 0
      %v4782 = vsel %vm1221, %v4669, 0
      %v4785 = vsel %vm1221, %v4678, 0
      %v4788 = vsel %vm1221, %v4687, 0
      %v4791 = vsel %vm1221, %v4696, 0
      %v4794 = vsel %vm1221, %v4705, 0
      %v4797 = vsel %vm1221, %v4714, 0
      %v4800 = vsel %vm1221, %v4723, 0
      %4802 = vmatpush.bf16.msra.mxu0 0
      %4803 = vmatpush.bf16.msra.mxu0 0
      %4804 = vmatpush.bf16.msra.mxu0 0
      %4805 = vmatpush.bf16.msra.mxu0 0
      %4806 = vmatpush.bf16.msra.mxu0 %v4743
      %4807 = vmatpush.bf16.msra.mxu0 %v4742
      %4808 = vmatpush.bf16.msra.mxu0 %v4741
      %4809 = vmatpush.bf16.msra.mxu0 %v4740
      %4810 = vmatmul.bf16.gmra.mxu0 %v4749
      %v4811 = vpop.f32.mrf.mxu0
      %v4812 = vadd.f32 0.0, %v4811
      %v4813 = vpop.f32.mrf.mxu0
      %v4814 = vadd.f32 0.0, %v4813
      %4815 = vmatmul.bf16.gmra.mxu0 %v4752
      %v4816 = vpop.f32.mrf.mxu0
      %v4817 = vadd.f32 0.0, %v4816
      %v4818 = vpop.f32.mrf.mxu0
      %v4819 = vadd.f32 0.0, %v4818
      %4820 = vmatmul.bf16.gmra.mxu0 %v4755
      %v4821 = vpop.f32.mrf.mxu0
      %v4822 = vadd.f32 0.0, %v4821
      %v4823 = vpop.f32.mrf.mxu0
      %v4824 = vadd.f32 0.0, %v4823
      %4825 = vmatmul.bf16.gmra.mxu0 %v4758
      %v4826 = vpop.f32.mrf.mxu0
      %v4827 = vadd.f32 0.0, %v4826
      %v4828 = vpop.f32.mrf.mxu0
      %v4829 = vadd.f32 0.0, %v4828
      %4830 = vmatmul.bf16.gmra.mxu0 %v4761
      %v4831 = vpop.f32.mrf.mxu0
      %v4832 = vadd.f32 0.0, %v4831
      %v4833 = vpop.f32.mrf.mxu0
      %v4834 = vadd.f32 0.0, %v4833
      %4835 = vmatmul.bf16.gmra.mxu0 %v4764
      %v4836 = vpop.f32.mrf.mxu0
      %v4837 = vadd.f32 0.0, %v4836
      %v4838 = vpop.f32.mrf.mxu0
      %v4839 = vadd.f32 0.0, %v4838
      %4840 = vmatmul.bf16.gmra.mxu0 %v4767
      %v4841 = vpop.f32.mrf.mxu0
      %v4842 = vadd.f32 0.0, %v4841
      %v4843 = vpop.f32.mrf.mxu0
      %v4844 = vadd.f32 0.0, %v4843
      %4845 = vmatmul.bf16.gmra.mxu0 %v4770
      %v4846 = vpop.f32.mrf.mxu0
      %v4847 = vadd.f32 0.0, %v4846
      %v4848 = vpop.f32.mrf.mxu0
      %v4849 = vadd.f32 0.0, %v4848
      %4850 = vmatmul.bf16.gmra.mxu0 %v4773
      %v4851 = vpop.f32.mrf.mxu0
      %v4852 = vadd.f32 0.0, %v4851
      %v4853 = vpop.f32.mrf.mxu0
      %v4854 = vadd.f32 0.0, %v4853
      %4855 = vmatmul.bf16.gmra.mxu0 %v4776
      %v4856 = vpop.f32.mrf.mxu0
      %v4857 = vadd.f32 0.0, %v4856
      %v4858 = vpop.f32.mrf.mxu0
      %v4859 = vadd.f32 0.0, %v4858
      %4860 = vmatmul.bf16.gmra.mxu0 %v4779
      %v4861 = vpop.f32.mrf.mxu0
      %v4862 = vadd.f32 0.0, %v4861
      %v4863 = vpop.f32.mrf.mxu0
      %v4864 = vadd.f32 0.0, %v4863
      %4865 = vmatmul.bf16.gmra.mxu0 %v4782
      %v4866 = vpop.f32.mrf.mxu0
      %v4867 = vadd.f32 0.0, %v4866
      %v4868 = vpop.f32.mrf.mxu0
      %v4869 = vadd.f32 0.0, %v4868
      %4870 = vmatmul.bf16.gmra.mxu0 %v4785
      %v4871 = vpop.f32.mrf.mxu0
      %v4872 = vadd.f32 0.0, %v4871
      %v4873 = vpop.f32.mrf.mxu0
      %v4874 = vadd.f32 0.0, %v4873
      %4875 = vmatmul.bf16.gmra.mxu0 %v4788
      %v4876 = vpop.f32.mrf.mxu0
      %v4877 = vadd.f32 0.0, %v4876
      %v4878 = vpop.f32.mrf.mxu0
      %v4879 = vadd.f32 0.0, %v4878
      %4880 = vmatmul.bf16.gmra.mxu0 %v4791
      %v4881 = vpop.f32.mrf.mxu0
      %v4882 = vadd.f32 0.0, %v4881
      %v4883 = vpop.f32.mrf.mxu0
      %v4884 = vadd.f32 0.0, %v4883
      %4885 = vmatmul.bf16.gmra.mxu0 %v4794
      %v4886 = vpop.f32.mrf.mxu0
      %v4887 = vadd.f32 0.0, %v4886
      %v4888 = vpop.f32.mrf.mxu0
      %v4889 = vadd.f32 0.0, %v4888
      %4890 = vmatmul.bf16.gmra.mxu0 %v4797
      %v4891 = vpop.f32.mrf.mxu0
      %v4892 = vadd.f32 0.0, %v4891
      %v4893 = vpop.f32.mrf.mxu0
      %v4894 = vadd.f32 0.0, %v4893
      %4895 = vmatmul.bf16.gmra.mxu0 %v4800
      %v4896 = vpop.f32.mrf.mxu0
      %v4897 = vadd.f32 0.0, %v4896
      %v4898 = vpop.f32.mrf.mxu0
      %v4899 = vadd.f32 0.0, %v4898
      %4900 = vdwg.mxu0
      %v4901 = vadd.f32 %v4415, %v4812
      %v4902 = vadd.f32 %v4416, %v4814
      %v4903 = vadd.f32 %v4417, %v4817
      %v4904 = vadd.f32 %v4418, %v4819
      %v4905 = vadd.f32 %v4419, %v4822
      %v4906 = vadd.f32 %v4420, %v4824
      %v4907 = vadd.f32 %v4421, %v4827
      %v4908 = vadd.f32 %v4422, %v4829
      %v4909 = vadd.f32 %v4423, %v4832
      %v4910 = vadd.f32 %v4424, %v4834
      %v4911 = vadd.f32 %v4425, %v4837
      %v4912 = vadd.f32 %v4426, %v4839
      %v4913 = vadd.f32 %v4427, %v4842
      %v4914 = vadd.f32 %v4428, %v4844
      %v4915 = vadd.f32 %v4429, %v4847
      %v4916 = vadd.f32 %v4430, %v4849
      %v4917 = vadd.f32 %v4431, %v4852
      %v4918 = vadd.f32 %v4432, %v4854
      %v4919 = vadd.f32 %v4433, %v4857
      %v4920 = vadd.f32 %v4434, %v4859
      %v4921 = vadd.f32 %v4435, %v4862
      %v4922 = vadd.f32 %v4436, %v4864
      %v4923 = vadd.f32 %v4437, %v4867
      %v4924 = vadd.f32 %v4438, %v4869
      %v4925 = vadd.f32 %v4439, %v4872
      %v4926 = vadd.f32 %v4440, %v4874
      %v4927 = vadd.f32 %v4441, %v4877
      %v4928 = vadd.f32 %v4442, %v4879
      %v4929 = vadd.f32 %v4443, %v4882
      %v4930 = vadd.f32 %v4444, %v4884
      %v4931 = vadd.f32 %v4445, %v4887
      %v4932 = vadd.f32 %v4446, %v4889
      %v4933 = vadd.f32 %v4447, %v4892
      %v4934 = vadd.f32 %v4448, %v4894
      %v4935 = vadd.f32 %v4449, %v4897
      %v4936 = vadd.f32 %v4450, %v4899
      %4937 = vst.msk [vmem:[#allocation3] sm:$0xff] %vm948, %v4901
      %4938 = vst.msk [vmem:[#allocation3 + $0x8] sm:$0xff] %vm948, %v4902
      %4939 = vst.msk [vmem:[#allocation3 + $0x10] sm:$0xff] %vm948, %v4903
      %4940 = vst.msk [vmem:[#allocation3 + $0x18] sm:$0xff] %vm948, %v4904
      %4941 = vst.msk [vmem:[#allocation3 + $0x20] sm:$0xff] %vm948, %v4905
      %4942 = vst.msk [vmem:[#allocation3 + $0x28] sm:$0xff] %vm948, %v4906
      %4943 = vst.msk [vmem:[#allocation3 + $0x30] sm:$0xff] %vm948, %v4907
      %4944 = vst.msk [vmem:[#allocation3 + $0x38] sm:$0xff] %vm948, %v4908
      %4945 = vst.msk [vmem:[#allocation3 + $0x40] sm:$0xff] %vm948, %v4909
      %4946 = vst.msk [vmem:[#allocation3 + $0x48] sm:$0xff] %vm948, %v4910
      %4947 = vst.msk [vmem:[#allocation3 + $0x50] sm:$0xff] %vm948, %v4911
      %4948 = vst.msk [vmem:[#allocation3 + $0x58] sm:$0xff] %vm948, %v4912
      %4949 = vst.msk [vmem:[#allocation3 + $0x60] sm:$0xff] %vm948, %v4913
      %4950 = vst.msk [vmem:[#allocation3 + $0x68] sm:$0xff] %vm948, %v4914
      %4951 = vst.msk [vmem:[#allocation3 + $0x70] sm:$0xff] %vm948, %v4915
      %4952 = vst.msk [vmem:[#allocation3 + $0x78] sm:$0xff] %vm948, %v4916
      %4953 = vst.msk [vmem:[#allocation3 + $0x80] sm:$0xff] %vm948, %v4917
      %4954 = vst.msk [vmem:[#allocation3 + $0x88] sm:$0xff] %vm948, %v4918
      %4955 = vst.msk [vmem:[#allocation3 + $0x90] sm:$0xff] %vm948, %v4919
      %4956 = vst.msk [vmem:[#allocation3 + $0x98] sm:$0xff] %vm948, %v4920
      %4957 = vst.msk [vmem:[#allocation3 + $0xa0] sm:$0xff] %vm948, %v4921
      %4958 = vst.msk [vmem:[#allocation3 + $0xa8] sm:$0xff] %vm948, %v4922
      %4959 = vst.msk [vmem:[#allocation3 + $0xb0] sm:$0xff] %vm948, %v4923
      %4960 = vst.msk [vmem:[#allocation3 + $0xb8] sm:$0xff] %vm948, %v4924
      %4961 = vst.msk [vmem:[#allocation3 + $0xc0] sm:$0xff] %vm948, %v4925
      %4962 = vst.msk [vmem:[#allocation3 + $0xc8] sm:$0xff] %vm948, %v4926
      %4963 = vst.msk [vmem:[#allocation3 + $0xd0] sm:$0xff] %vm948, %v4927
      %4964 = vst.msk [vmem:[#allocation3 + $0xd8] sm:$0xff] %vm948, %v4928
      %4965 = vst.msk [vmem:[#allocation3 + $0xe0] sm:$0xff] %vm948, %v4929
      %4966 = vst.msk [vmem:[#allocation3 + $0xe8] sm:$0xff] %vm948, %v4930
      %4967 = vst.msk [vmem:[#allocation3 + $0xf0] sm:$0xff] %vm948, %v4931
      %4968 = vst.msk [vmem:[#allocation3 + $0xf8] sm:$0xff] %vm948, %v4932
      %4969 = vst.msk [vmem:[#allocation3 + $0x100] sm:$0xff] %vm948, %v4933
      %4970 = vst.msk [vmem:[#allocation3 + $0x108] sm:$0xff] %vm948, %v4934
      %4971 = vst.msk [vmem:[#allocation3 + $0x110] sm:$0xff] %vm948, %v4935
      %4972 = vst.msk [vmem:[#allocation3 + $0x118] sm:$0xff] %vm948, %v4936
      %v4973 = vld [vmem:[#allocation2 + $0x18] sm:$0xc]
      %v4974 = vld [vmem:[#allocation2 + $0x1c] sm:$0xf]
      %v4975 = vld [vmem:[#allocation2 + $0x20] sm:$0xf]
      %v4976 = vld [vmem:[#allocation2 + $0x24] sm:$0xf]
      %v4977 = vld [vmem:[#allocation2 + $0x28] sm:$0xf]
      %v4978 = vld [vmem:[#allocation2 + $0x2c] sm:$0xf]
      %v4979 = vld [vmem:[#allocation2 + $0x30] sm:$0xf]
      %v4980 = vld [vmem:[#allocation2 + $0x34] sm:$0xf]
      %v4981 = vld [vmem:[#allocation2 + $0x38] sm:$0xf]
      %v4982 = vld [vmem:[#allocation2 + $0x3c] sm:$0xf]
      %v4983 = vld [vmem:[#allocation2 + $0x40] sm:$0xf]
      %v4984 = vld [vmem:[#allocation2 + $0x44] sm:$0xf]
      %v4985 = vld [vmem:[#allocation2 + $0x48] sm:$0xf]
      %v4986 = vld [vmem:[#allocation2 + $0x4c] sm:$0xf]
      %v4987 = vld [vmem:[#allocation2 + $0x50] sm:$0xf]
      %v4988 = vld [vmem:[#allocation2 + $0x54] sm:$0xf]
      %v4989 = vld [vmem:[#allocation2 + $0x58] sm:$0xf]
      %v4990 = vld [vmem:[#allocation2 + $0x5c] sm:$0xf]
      %v4991 = vld [vmem:[#allocation2 + $0x60] sm:$0xf]
      %v4992 = vld [vmem:[#allocation2 + $0x64] sm:$0xf]
      %v4993 = vld [vmem:[#allocation2 + $0x68] sm:$0xf]
      %v4994 = vld [vmem:[#allocation2 + $0x6c] sm:$0xf]
      %v4995 = vld [vmem:[#allocation2 + $0x70] sm:$0xf]
      %v4996 = vld [vmem:[#allocation2 + $0x74] sm:$0xf]
      %v4997 = vld [vmem:[#allocation2 + $0x78] sm:$0xf]
      %v4998 = vld [vmem:[#allocation2 + $0x7c] sm:$0xf]
      %v4999 = vld [vmem:[#allocation2 + $0x80] sm:$0xf]
      %v5000 = vld [vmem:[#allocation2 + $0x84] sm:$0xf]
      %v5001 = vld [vmem:[#allocation2 + $0x88] sm:$0xf]
      %v5002 = vld [vmem:[#allocation2 + $0x8c] sm:$0xf]
      %v5003 = vld [vmem:[#allocation2 + $0x90] sm:$0xf]
      %v5004 = vld [vmem:[#allocation2 + $0x94] sm:$0xf]
      %v5005 = vld [vmem:[#allocation2 + $0x98] sm:$0xf]
      %v5006 = vld [vmem:[#allocation2 + $0x9c] sm:$0xf]
      %v5007 = vld [vmem:[#allocation2 + $0xa0] sm:$0xf]
      %v5008 = vld [vmem:[#allocation2 + $0xa4] sm:$0xf]
      %v5009 = vld [vmem:[#allocation2 + $0xa8] sm:$0x3]
      %v5010 = vld [vmem:[#allocation3] sm:$0xff]
      %v5011 = vld [vmem:[#allocation3 + $0x8] sm:$0xff]
      %v5012 = vld [vmem:[#allocation3 + $0x10] sm:$0xff]
      %v5013 = vld [vmem:[#allocation3 + $0x18] sm:$0xff]
      %v5014 = vld [vmem:[#allocation3 + $0x20] sm:$0xff]
      %v5015 = vld [vmem:[#allocation3 + $0x28] sm:$0xff]
      %v5016 = vld [vmem:[#allocation3 + $0x30] sm:$0xff]
      %v5017 = vld [vmem:[#allocation3 + $0x38] sm:$0xff]
      %v5018 = vld [vmem:[#allocation3 + $0x40] sm:$0xff]
      %v5019 = vld [vmem:[#allocation3 + $0x48] sm:$0xff]
      %v5020 = vld [vmem:[#allocation3 + $0x50] sm:$0xff]
      %v5021 = vld [vmem:[#allocation3 + $0x58] sm:$0xff]
      %v5022 = vld [vmem:[#allocation3 + $0x60] sm:$0xff]
      %v5023 = vld [vmem:[#allocation3 + $0x68] sm:$0xff]
      %v5024 = vld [vmem:[#allocation3 + $0x70] sm:$0xff]
      %v5025 = vld [vmem:[#allocation3 + $0x78] sm:$0xff]
      %v5026 = vld [vmem:[#allocation3 + $0x80] sm:$0xff]
      %v5027 = vld [vmem:[#allocation3 + $0x88] sm:$0xff]
      %v5028 = vld [vmem:[#allocation3 + $0x90] sm:$0xff]
      %v5029 = vld [vmem:[#allocation3 + $0x98] sm:$0xff]
      %v5030 = vld [vmem:[#allocation3 + $0xa0] sm:$0xff]
      %v5031 = vld [vmem:[#allocation3 + $0xa8] sm:$0xff]
      %v5032 = vld [vmem:[#allocation3 + $0xb0] sm:$0xff]
      %v5033 = vld [vmem:[#allocation3 + $0xb8] sm:$0xff]
      %v5034 = vld [vmem:[#allocation3 + $0xc0] sm:$0xff]
      %v5035 = vld [vmem:[#allocation3 + $0xc8] sm:$0xff]
      %v5036 = vld [vmem:[#allocation3 + $0xd0] sm:$0xff]
      %v5037 = vld [vmem:[#allocation3 + $0xd8] sm:$0xff]
      %v5038 = vld [vmem:[#allocation3 + $0xe0] sm:$0xff]
      %v5039 = vld [vmem:[#allocation3 + $0xe8] sm:$0xff]
      %v5040 = vld [vmem:[#allocation3 + $0xf0] sm:$0xff]
      %v5041 = vld [vmem:[#allocation3 + $0xf8] sm:$0xff]
      %v5042 = vld [vmem:[#allocation3 + $0x100] sm:$0xff]
      %v5043 = vld [vmem:[#allocation3 + $0x108] sm:$0xff]
      %v5044 = vld [vmem:[#allocation3 + $0x110] sm:$0xff]
      %v5045 = vld [vmem:[#allocation3 + $0x118] sm:$0xff]
      %s5046 = scalar_lea.vmem %s4, 256
      %v5047 = vld [vmem:[%s5046] sm:$0xf]
      %v5048 = vld [vmem:[%s5046 + $0x4] sm:$0xf]
      %v5049 = vld [vmem:[%s5046 + $0x8] sm:$0xf]
      %v5050 = vld [vmem:[%s5046 + $0xc] sm:$0xf]
      %v5051 = vld [vmem:[%s5046 + $0x10] sm:$0xf]
      %v5052 = vld [vmem:[%s5046 + $0x14] sm:$0xf]
      %v5053 = vld [vmem:[%s5046 + $0x18] sm:$0xf]
      %v5054 = vld [vmem:[%s5046 + $0x1c] sm:$0xf]
      %v5092 = vunpack.c.l.b16 %v4973
      %v5093 = vunpack.c.l.b16 %v4974
      %v5094 = vunpack.c.l.b16 %v4975
      %v5095 = vunpack.c.l.b16 %v4976
      %v5096 = vunpack.c.l.b16 %v4977
      %v5097 = vunpack.c.l.b16 %v4978
      %v5098 = vunpack.c.l.b16 %v4979
      %v5099 = vunpack.c.l.b16 %v4980
      %v5100 = vunpack.c.l.b16 %v4981
      %v5101 = vunpack.c.l.b16 %v4982
      %v5102 = vunpack.c.l.b16 %v4983
      %v5103 = vunpack.c.l.b16 %v4984
      %v5104 = vunpack.c.l.b16 %v4985
      %v5105 = vunpack.c.l.b16 %v4986
      %v5106 = vunpack.c.l.b16 %v4987
      %v5107 = vunpack.c.l.b16 %v4988
      %v5108 = vunpack.c.l.b16 %v4989
      %v5109 = vunpack.c.l.b16 %v4990
      %v5110 = vunpack.c.l.b16 %v4991
      %v5111 = vunpack.c.l.b16 %v4992
      %v5112 = vunpack.c.l.b16 %v4993
      %v5113 = vunpack.c.l.b16 %v4994
      %v5114 = vunpack.c.l.b16 %v4995
      %v5115 = vunpack.c.l.b16 %v4996
      %v5116 = vunpack.c.l.b16 %v4997
      %v5117 = vunpack.c.l.b16 %v4998
      %v5118 = vunpack.c.l.b16 %v4999
      %v5119 = vunpack.c.l.b16 %v5000
      %v5120 = vunpack.c.l.b16 %v5001
      %v5121 = vunpack.c.l.b16 %v5002
      %v5122 = vunpack.c.l.b16 %v5003
      %v5123 = vunpack.c.l.b16 %v5004
      %v5124 = vunpack.c.l.b16 %v5005
      %v5125 = vunpack.c.l.b16 %v5006
      %v5126 = vunpack.c.l.b16 %v5007
      %v5127 = vunpack.c.l.b16 %v5008
      %v5128 = vunpack.c.l.b16 %v5009
      %v5129 = vpack.c.b16 %v5093, %v5092
      %v5130 = vpack.c.b16 %v5095, %v5094
      %v5131 = vpack.c.b16 %v5097, %v5096
      %v5132 = vpack.c.b16 %v5099, %v5098
      %v5133 = vpack.c.b16 %v5101, %v5100
      %v5134 = vpack.c.b16 %v5103, %v5102
      %v5135 = vpack.c.b16 %v5105, %v5104
      %v5136 = vpack.c.b16 %v5107, %v5106
      %v5137 = vpack.c.b16 %v5109, %v5108
      %v5138 = vpack.c.b16 %v5111, %v5110
      %v5139 = vpack.c.b16 %v5113, %v5112
      %v5140 = vpack.c.b16 %v5115, %v5114
      %v5141 = vpack.c.b16 %v5117, %v5116
      %v5142 = vpack.c.b16 %v5119, %v5118
      %v5143 = vpack.c.b16 %v5121, %v5120
      %v5144 = vpack.c.b16 %v5123, %v5122
      %v5145 = vpack.c.b16 %v5125, %v5124
      %v5146 = vpack.c.b16 %v5127, %v5126
      %v5147 = vpack.c.b16 %v5128, %v5128
      %vm5148 = vcmask 1045504
      %v5149 = vrot.slane %v5129, 2
      %v5150 = vrot.slane %v5130, 2
      %v5151 = vsel %vm5148, %v5149, %v5150
      %v5152 = vrot.slane %v5131, 2
      %v5153 = vsel %vm5148, %v5150, %v5152
      %v5154 = vrot.slane %v5132, 2
      %v5155 = vsel %vm5148, %v5152, %v5154
      %v5156 = vrot.slane %v5133, 2
      %v5157 = vsel %vm5148, %v5154, %v5156
      %v5158 = vrot.slane %v5134, 2
      %v5159 = vsel %vm5148, %v5156, %v5158
      %v5160 = vrot.slane %v5135, 2
      %v5161 = vsel %vm5148, %v5158, %v5160
      %v5162 = vrot.slane %v5136, 2
      %v5163 = vsel %vm5148, %v5160, %v5162
      %v5164 = vrot.slane %v5137, 2
      %v5165 = vsel %vm5148, %v5162, %v5164
      %v5166 = vrot.slane %v5138, 2
      %v5167 = vsel %vm5148, %v5164, %v5166
      %v5168 = vrot.slane %v5139, 2
      %v5169 = vsel %vm5148, %v5166, %v5168
      %v5170 = vrot.slane %v5140, 2
      %v5171 = vsel %vm5148, %v5168, %v5170
      %v5172 = vrot.slane %v5141, 2
      %v5173 = vsel %vm5148, %v5170, %v5172
      %v5174 = vrot.slane %v5142, 2
      %v5175 = vsel %vm5148, %v5172, %v5174
      %v5176 = vrot.slane %v5143, 2
      %v5177 = vsel %vm5148, %v5174, %v5176
      %v5178 = vrot.slane %v5144, 2
      %v5179 = vsel %vm5148, %v5176, %v5178
      %v5180 = vrot.slane %v5145, 2
      %v5181 = vsel %vm5148, %v5178, %v5180
      %v5182 = vrot.slane %v5146, 2
      %v5183 = vsel %vm5148, %v5180, %v5182
      %v5184 = vrot.slane %v5147, 2
      %v5185 = vsel %vm5148, %v5182, %v5184
      %v5194 = vunpack.c.l.b16 %v5047
      %v5195 = vunpack.c.l.b16 %v5048
      %v5196 = vunpack.c.l.b16 %v5049
      %v5197 = vunpack.c.l.b16 %v5050
      %v5198 = vunpack.c.l.b16 %v5051
      %v5199 = vunpack.c.l.b16 %v5052
      %v5200 = vunpack.c.l.b16 %v5053
      %v5201 = vunpack.c.l.b16 %v5054
      %v5202 = vpack.c.b16 %v5195, %v5194
      %v5203 = vpack.c.b16 %v5197, %v5196
      %v5204 = vpack.c.b16 %v5199, %v5198
      %v5205 = vpack.c.b16 %v5201, %v5200
      %v5211 = vsel %vm1221, %v5151, 0
      %v5214 = vsel %vm1221, %v5153, 0
      %v5217 = vsel %vm1221, %v5155, 0
      %v5220 = vsel %vm1221, %v5157, 0
      %v5223 = vsel %vm1221, %v5159, 0
      %v5226 = vsel %vm1221, %v5161, 0
      %v5229 = vsel %vm1221, %v5163, 0
      %v5232 = vsel %vm1221, %v5165, 0
      %v5235 = vsel %vm1221, %v5167, 0
      %v5238 = vsel %vm1221, %v5169, 0
      %v5241 = vsel %vm1221, %v5171, 0
      %v5244 = vsel %vm1221, %v5173, 0
      %v5247 = vsel %vm1221, %v5175, 0
      %v5250 = vsel %vm1221, %v5177, 0
      %v5253 = vsel %vm1221, %v5179, 0
      %v5256 = vsel %vm1221, %v5181, 0
      %v5259 = vsel %vm1221, %v5183, 0
      %v5262 = vsel %vm1221, %v5185, 0
      %5264 = vmatpush.bf16.msra.mxu0 0
      %5265 = vmatpush.bf16.msra.mxu0 0
      %5266 = vmatpush.bf16.msra.mxu0 0
      %5267 = vmatpush.bf16.msra.mxu0 0
      %5268 = vmatpush.bf16.msra.mxu0 %v5205
      %5269 = vmatpush.bf16.msra.mxu0 %v5204
      %5270 = vmatpush.bf16.msra.mxu0 %v5203
      %5271 = vmatpush.bf16.msra.mxu0 %v5202
      %5272 = vmatmul.bf16.gmra.mxu0 %v5211
      %v5273 = vpop.f32.mrf.mxu0
      %v5274 = vadd.f32 0.0, %v5273
      %v5275 = vpop.f32.mrf.mxu0
      %v5276 = vadd.f32 0.0, %v5275
      %5277 = vmatmul.bf16.gmra.mxu0 %v5214
      %v5278 = vpop.f32.mrf.mxu0
      %v5279 = vadd.f32 0.0, %v5278
      %v5280 = vpop.f32.mrf.mxu0
      %v5281 = vadd.f32 0.0, %v5280
      %5282 = vmatmul.bf16.gmra.mxu0 %v5217
      %v5283 = vpop.f32.mrf.mxu0
      %v5284 = vadd.f32 0.0, %v5283
      %v5285 = vpop.f32.mrf.mxu0
      %v5286 = vadd.f32 0.0, %v5285
      %5287 = vmatmul.bf16.gmra.mxu0 %v5220
      %v5288 = vpop.f32.mrf.mxu0
      %v5289 = vadd.f32 0.0, %v5288
      %v5290 = vpop.f32.mrf.mxu0
      %v5291 = vadd.f32 0.0, %v5290
      %5292 = vmatmul.bf16.gmra.mxu0 %v5223
      %v5293 = vpop.f32.mrf.mxu0
      %v5294 = vadd.f32 0.0, %v5293
      %v5295 = vpop.f32.mrf.mxu0
      %v5296 = vadd.f32 0.0, %v5295
      %5297 = vmatmul.bf16.gmra.mxu0 %v5226
      %v5298 = vpop.f32.mrf.mxu0
      %v5299 = vadd.f32 0.0, %v5298
      %v5300 = vpop.f32.mrf.mxu0
      %v5301 = vadd.f32 0.0, %v5300
      %5302 = vmatmul.bf16.gmra.mxu0 %v5229
      %v5303 = vpop.f32.mrf.mxu0
      %v5304 = vadd.f32 0.0, %v5303
      %v5305 = vpop.f32.mrf.mxu0
      %v5306 = vadd.f32 0.0, %v5305
      %5307 = vmatmul.bf16.gmra.mxu0 %v5232
      %v5308 = vpop.f32.mrf.mxu0
      %v5309 = vadd.f32 0.0, %v5308
      %v5310 = vpop.f32.mrf.mxu0
      %v5311 = vadd.f32 0.0, %v5310
      %5312 = vmatmul.bf16.gmra.mxu0 %v5235
      %v5313 = vpop.f32.mrf.mxu0
      %v5314 = vadd.f32 0.0, %v5313
      %v5315 = vpop.f32.mrf.mxu0
      %v5316 = vadd.f32 0.0, %v5315
      %5317 = vmatmul.bf16.gmra.mxu0 %v5238
      %v5318 = vpop.f32.mrf.mxu0
      %v5319 = vadd.f32 0.0, %v5318
      %v5320 = vpop.f32.mrf.mxu0
      %v5321 = vadd.f32 0.0, %v5320
      %5322 = vmatmul.bf16.gmra.mxu0 %v5241
      %v5323 = vpop.f32.mrf.mxu0
      %v5324 = vadd.f32 0.0, %v5323
      %v5325 = vpop.f32.mrf.mxu0
      %v5326 = vadd.f32 0.0, %v5325
      %5327 = vmatmul.bf16.gmra.mxu0 %v5244
      %v5328 = vpop.f32.mrf.mxu0
      %v5329 = vadd.f32 0.0, %v5328
      %v5330 = vpop.f32.mrf.mxu0
      %v5331 = vadd.f32 0.0, %v5330
      %5332 = vmatmul.bf16.gmra.mxu0 %v5247
      %v5333 = vpop.f32.mrf.mxu0
      %v5334 = vadd.f32 0.0, %v5333
      %v5335 = vpop.f32.mrf.mxu0
      %v5336 = vadd.f32 0.0, %v5335
      %5337 = vmatmul.bf16.gmra.mxu0 %v5250
      %v5338 = vpop.f32.mrf.mxu0
      %v5339 = vadd.f32 0.0, %v5338
      %v5340 = vpop.f32.mrf.mxu0
      %v5341 = vadd.f32 0.0, %v5340
      %5342 = vmatmul.bf16.gmra.mxu0 %v5253
      %v5343 = vpop.f32.mrf.mxu0
      %v5344 = vadd.f32 0.0, %v5343
      %v5345 = vpop.f32.mrf.mxu0
      %v5346 = vadd.f32 0.0, %v5345
      %5347 = vmatmul.bf16.gmra.mxu0 %v5256
      %v5348 = vpop.f32.mrf.mxu0
      %v5349 = vadd.f32 0.0, %v5348
      %v5350 = vpop.f32.mrf.mxu0
      %v5351 = vadd.f32 0.0, %v5350
      %5352 = vmatmul.bf16.gmra.mxu0 %v5259
      %v5353 = vpop.f32.mrf.mxu0
      %v5354 = vadd.f32 0.0, %v5353
      %v5355 = vpop.f32.mrf.mxu0
      %v5356 = vadd.f32 0.0, %v5355
      %5357 = vmatmul.bf16.gmra.mxu0 %v5262
      %v5358 = vpop.f32.mrf.mxu0
      %v5359 = vadd.f32 0.0, %v5358
      %v5360 = vpop.f32.mrf.mxu0
      %v5361 = vadd.f32 0.0, %v5360
      %5362 = vdwg.mxu0
      %v5363 = vadd.f32 %v5010, %v5274
      %v5364 = vadd.f32 %v5011, %v5276
      %v5365 = vadd.f32 %v5012, %v5279
      %v5366 = vadd.f32 %v5013, %v5281
      %v5367 = vadd.f32 %v5014, %v5284
      %v5368 = vadd.f32 %v5015, %v5286
      %v5369 = vadd.f32 %v5016, %v5289
      %v5370 = vadd.f32 %v5017, %v5291
      %v5371 = vadd.f32 %v5018, %v5294
      %v5372 = vadd.f32 %v5019, %v5296
      %v5373 = vadd.f32 %v5020, %v5299
      %v5374 = vadd.f32 %v5021, %v5301
      %v5375 = vadd.f32 %v5022, %v5304
      %v5376 = vadd.f32 %v5023, %v5306
      %v5377 = vadd.f32 %v5024, %v5309
      %v5378 = vadd.f32 %v5025, %v5311
      %v5379 = vadd.f32 %v5026, %v5314
      %v5380 = vadd.f32 %v5027, %v5316
      %v5381 = vadd.f32 %v5028, %v5319
      %v5382 = vadd.f32 %v5029, %v5321
      %v5383 = vadd.f32 %v5030, %v5324
      %v5384 = vadd.f32 %v5031, %v5326
      %v5385 = vadd.f32 %v5032, %v5329
      %v5386 = vadd.f32 %v5033, %v5331
      %v5387 = vadd.f32 %v5034, %v5334
      %v5388 = vadd.f32 %v5035, %v5336
      %v5389 = vadd.f32 %v5036, %v5339
      %v5390 = vadd.f32 %v5037, %v5341
      %v5391 = vadd.f32 %v5038, %v5344
      %v5392 = vadd.f32 %v5039, %v5346
      %v5393 = vadd.f32 %v5040, %v5349
      %v5394 = vadd.f32 %v5041, %v5351
      %v5395 = vadd.f32 %v5042, %v5354
      %v5396 = vadd.f32 %v5043, %v5356
      %v5397 = vadd.f32 %v5044, %v5359
      %v5398 = vadd.f32 %v5045, %v5361
      %5399 = vst.msk [vmem:[#allocation3] sm:$0xff] %vm948, %v5363
      %5400 = vst.msk [vmem:[#allocation3 + $0x8] sm:$0xff] %vm948, %v5364
      %5401 = vst.msk [vmem:[#allocation3 + $0x10] sm:$0xff] %vm948, %v5365
      %5402 = vst.msk [vmem:[#allocation3 + $0x18] sm:$0xff] %vm948, %v5366
      %5403 = vst.msk [vmem:[#allocation3 + $0x20] sm:$0xff] %vm948, %v5367
      %5404 = vst.msk [vmem:[#allocation3 + $0x28] sm:$0xff] %vm948, %v5368
      %5405 = vst.msk [vmem:[#allocation3 + $0x30] sm:$0xff] %vm948, %v5369
      %5406 = vst.msk [vmem:[#allocation3 + $0x38] sm:$0xff] %vm948, %v5370
      %5407 = vst.msk [vmem:[#allocation3 + $0x40] sm:$0xff] %vm948, %v5371
      %5408 = vst.msk [vmem:[#allocation3 + $0x48] sm:$0xff] %vm948, %v5372
      %5409 = vst.msk [vmem:[#allocation3 + $0x50] sm:$0xff] %vm948, %v5373
      %5410 = vst.msk [vmem:[#allocation3 + $0x58] sm:$0xff] %vm948, %v5374
      %5411 = vst.msk [vmem:[#allocation3 + $0x60] sm:$0xff] %vm948, %v5375
      %5412 = vst.msk [vmem:[#allocation3 + $0x68] sm:$0xff] %vm948, %v5376
      %5413 = vst.msk [vmem:[#allocation3 + $0x70] sm:$0xff] %vm948, %v5377
      %5414 = vst.msk [vmem:[#allocation3 + $0x78] sm:$0xff] %vm948, %v5378
      %5415 = vst.msk [vmem:[#allocation3 + $0x80] sm:$0xff] %vm948, %v5379
      %5416 = vst.msk [vmem:[#allocation3 + $0x88] sm:$0xff] %vm948, %v5380
      %5417 = vst.msk [vmem:[#allocation3 + $0x90] sm:$0xff] %vm948, %v5381
      %5418 = vst.msk [vmem:[#allocation3 + $0x98] sm:$0xff] %vm948, %v5382
      %5419 = vst.msk [vmem:[#allocation3 + $0xa0] sm:$0xff] %vm948, %v5383
      %5420 = vst.msk [vmem:[#allocation3 + $0xa8] sm:$0xff] %vm948, %v5384
      %5421 = vst.msk [vmem:[#allocation3 + $0xb0] sm:$0xff] %vm948, %v5385
      %5422 = vst.msk [vmem:[#allocation3 + $0xb8] sm:$0xff] %vm948, %v5386
      %5423 = vst.msk [vmem:[#allocation3 + $0xc0] sm:$0xff] %vm948, %v5387
      %5424 = vst.msk [vmem:[#allocation3 + $0xc8] sm:$0xff] %vm948, %v5388
      %5425 = vst.msk [vmem:[#allocation3 + $0xd0] sm:$0xff] %vm948, %v5389
      %5426 = vst.msk [vmem:[#allocation3 + $0xd8] sm:$0xff] %vm948, %v5390
      %5427 = vst.msk [vmem:[#allocation3 + $0xe0] sm:$0xff] %vm948, %v5391
      %5428 = vst.msk [vmem:[#allocation3 + $0xe8] sm:$0xff] %vm948, %v5392
      %5429 = vst.msk [vmem:[#allocation3 + $0xf0] sm:$0xff] %vm948, %v5393
      %5430 = vst.msk [vmem:[#allocation3 + $0xf8] sm:$0xff] %vm948, %v5394
      %5431 = vst.msk [vmem:[#allocation3 + $0x100] sm:$0xff] %vm948, %v5395
      %5432 = vst.msk [vmem:[#allocation3 + $0x108] sm:$0xff] %vm948, %v5396
      %5433 = vst.msk [vmem:[#allocation3 + $0x110] sm:$0xff] %vm948, %v5397
      %5434 = vst.msk [vmem:[#allocation3 + $0x118] sm:$0xff] %vm948, %v5398
      %v5435 = vld [vmem:[#allocation3] sm:$0xff]
      %v5436 = vld [vmem:[#allocation3 + $0x8] sm:$0xff]
      %v5437 = vld [vmem:[#allocation3 + $0x10] sm:$0xff]
      %v5438 = vld [vmem:[#allocation3 + $0x18] sm:$0xff]
      %v5439 = vld [vmem:[#allocation3 + $0x20] sm:$0xff]
      %v5440 = vld [vmem:[#allocation3 + $0x28] sm:$0xff]
      %v5441 = vld [vmem:[#allocation3 + $0x30] sm:$0xff]
      %v5442 = vld [vmem:[#allocation3 + $0x38] sm:$0xff]
      %v5443 = vld [vmem:[#allocation3 + $0x40] sm:$0xff]
      %v5444 = vld [vmem:[#allocation3 + $0x48] sm:$0xff]
      %v5445 = vld [vmem:[#allocation3 + $0x50] sm:$0xff]
      %v5446 = vld [vmem:[#allocation3 + $0x58] sm:$0xff]
      %v5447 = vld [vmem:[#allocation3 + $0x60] sm:$0xff]
      %v5448 = vld [vmem:[#allocation3 + $0x68] sm:$0xff]
      %v5449 = vld [vmem:[#allocation3 + $0x70] sm:$0xff]
      %v5450 = vld [vmem:[#allocation3 + $0x78] sm:$0xff]
      %v5451 = vld [vmem:[#allocation3 + $0x80] sm:$0xff]
      %v5452 = vld [vmem:[#allocation3 + $0x88] sm:$0xff]
      %v5453 = vld [vmem:[#allocation3 + $0x90] sm:$0xff]
      %v5454 = vld [vmem:[#allocation3 + $0x98] sm:$0xff]
      %v5455 = vld [vmem:[#allocation3 + $0xa0] sm:$0xff]
      %v5456 = vld [vmem:[#allocation3 + $0xa8] sm:$0xff]
      %v5457 = vld [vmem:[#allocation3 + $0xb0] sm:$0xff]
      %v5458 = vld [vmem:[#allocation3 + $0xb8] sm:$0xff]
      %v5459 = vld [vmem:[#allocation3 + $0xc0] sm:$0xff]
      %v5460 = vld [vmem:[#allocation3 + $0xc8] sm:$0xff]
      %v5461 = vld [vmem:[#allocation3 + $0xd0] sm:$0xff]
      %v5462 = vld [vmem:[#allocation3 + $0xd8] sm:$0xff]
      %v5463 = vld [vmem:[#allocation3 + $0xe0] sm:$0xff]
      %v5464 = vld [vmem:[#allocation3 + $0xe8] sm:$0xff]
      %v5465 = vld [vmem:[#allocation3 + $0xf0] sm:$0xff]
      %v5466 = vld [vmem:[#allocation3 + $0xf8] sm:$0xff]
      %v5467 = vld [vmem:[#allocation3 + $0x100] sm:$0xff]
      %v5468 = vld [vmem:[#allocation3 + $0x108] sm:$0xff]
      %v5469 = vld [vmem:[#allocation3 + $0x110] sm:$0xff]
      %v5470 = vld [vmem:[#allocation3 + $0x118] sm:$0xff]
      %v5471 = vld [vmem:[%s5] sm:$0x1]
      %v5473 = vperm.slane %v5471, 0
      %v5475 = vadd.f32 %v5435, %v5473
      %v5476 = vadd.f32 %v5436, %v5473
      %v5477 = vadd.f32 %v5437, %v5473
      %v5478 = vadd.f32 %v5438, %v5473
      %v5479 = vadd.f32 %v5439, %v5473
      %v5480 = vadd.f32 %v5440, %v5473
      %v5481 = vadd.f32 %v5441, %v5473
      %v5482 = vadd.f32 %v5442, %v5473
      %v5483 = vadd.f32 %v5443, %v5473
      %v5484 = vadd.f32 %v5444, %v5473
      %v5485 = vadd.f32 %v5445, %v5473
      %v5486 = vadd.f32 %v5446, %v5473
      %v5487 = vadd.f32 %v5447, %v5473
      %v5488 = vadd.f32 %v5448, %v5473
      %v5489 = vadd.f32 %v5449, %v5473
      %v5490 = vadd.f32 %v5450, %v5473
      %v5491 = vadd.f32 %v5451, %v5473
      %v5492 = vadd.f32 %v5452, %v5473
      %v5493 = vadd.f32 %v5453, %v5473
      %v5494 = vadd.f32 %v5454, %v5473
      %v5495 = vadd.f32 %v5455, %v5473
      %v5496 = vadd.f32 %v5456, %v5473
      %v5497 = vadd.f32 %v5457, %v5473
      %v5498 = vadd.f32 %v5458, %v5473
      %v5499 = vadd.f32 %v5459, %v5473
      %v5500 = vadd.f32 %v5460, %v5473
      %v5501 = vadd.f32 %v5461, %v5473
      %v5502 = vadd.f32 %v5462, %v5473
      %v5503 = vadd.f32 %v5463, %v5473
      %v5504 = vadd.f32 %v5464, %v5473
      %v5505 = vadd.f32 %v5465, %v5473
      %v5506 = vadd.f32 %v5466, %v5473
      %v5507 = vadd.f32 %v5467, %v5473
      %v5508 = vadd.f32 %v5468, %v5473
      %v5509 = vadd.f32 %v5469, %v5473
      %v5510 = vadd.f32 %v5470, %v5473
      %v5511 = vmax.f32 %v5475, 0.0
      %v5512 = vmax.f32 %v5476, 0.0
      %v5513 = vmax.f32 %v5477, 0.0
      %v5514 = vmax.f32 %v5478, 0.0
      %v5515 = vmax.f32 %v5479, 0.0
      %v5516 = vmax.f32 %v5480, 0.0
      %v5517 = vmax.f32 %v5481, 0.0
      %v5518 = vmax.f32 %v5482, 0.0
      %v5519 = vmax.f32 %v5483, 0.0
      %v5520 = vmax.f32 %v5484, 0.0
      %v5521 = vmax.f32 %v5485, 0.0
      %v5522 = vmax.f32 %v5486, 0.0
      %v5523 = vmax.f32 %v5487, 0.0
      %v5524 = vmax.f32 %v5488, 0.0
      %v5525 = vmax.f32 %v5489, 0.0
      %v5526 = vmax.f32 %v5490, 0.0
      %v5527 = vmax.f32 %v5491, 0.0
      %v5528 = vmax.f32 %v5492, 0.0
      %v5529 = vmax.f32 %v5493, 0.0
      %v5530 = vmax.f32 %v5494, 0.0
      %v5531 = vmax.f32 %v5495, 0.0
      %v5532 = vmax.f32 %v5496, 0.0
      %v5533 = vmax.f32 %v5497, 0.0
      %v5534 = vmax.f32 %v5498, 0.0
      %v5535 = vmax.f32 %v5499, 0.0
      %v5536 = vmax.f32 %v5500, 0.0
      %v5537 = vmax.f32 %v5501, 0.0
      %v5538 = vmax.f32 %v5502, 0.0
      %v5539 = vmax.f32 %v5503, 0.0
      %v5540 = vmax.f32 %v5504, 0.0
      %v5541 = vmax.f32 %v5505, 0.0
      %v5542 = vmax.f32 %v5506, 0.0
      %v5543 = vmax.f32 %v5507, 0.0
      %v5544 = vmax.f32 %v5508, 0.0
      %v5545 = vmax.f32 %v5509, 0.0
      %v5546 = vmax.f32 %v5510, 0.0
      %v5547 = vpack.c.bf16 %v5511, %v5511
      %v5548 = vpack.c.bf16 %v5512, %v5512
      %v5549 = vpack.c.bf16 %v5513, %v5513
      %v5550 = vpack.c.bf16 %v5514, %v5514
      %v5551 = vpack.c.bf16 %v5515, %v5515
      %v5552 = vpack.c.bf16 %v5516, %v5516
      %v5553 = vpack.c.bf16 %v5517, %v5517
      %v5554 = vpack.c.bf16 %v5518, %v5518
      %v5555 = vpack.c.bf16 %v5519, %v5519
      %v5556 = vpack.c.bf16 %v5520, %v5520
      %v5557 = vpack.c.bf16 %v5521, %v5521
      %v5558 = vpack.c.bf16 %v5522, %v5522
      %v5559 = vpack.c.bf16 %v5523, %v5523
      %v5560 = vpack.c.bf16 %v5524, %v5524
      %v5561 = vpack.c.bf16 %v5525, %v5525
      %v5562 = vpack.c.bf16 %v5526, %v5526
      %v5563 = vpack.c.bf16 %v5527, %v5527
      %v5564 = vpack.c.bf16 %v5528, %v5528
      %v5565 = vpack.c.bf16 %v5529, %v5529
      %v5566 = vpack.c.bf16 %v5530, %v5530
      %v5567 = vpack.c.bf16 %v5531, %v5531
      %v5568 = vpack.c.bf16 %v5532, %v5532
      %v5569 = vpack.c.bf16 %v5533, %v5533
      %v5570 = vpack.c.bf16 %v5534, %v5534
      %v5571 = vpack.c.bf16 %v5535, %v5535
      %v5572 = vpack.c.bf16 %v5536, %v5536
      %v5573 = vpack.c.bf16 %v5537, %v5537
      %v5574 = vpack.c.bf16 %v5538, %v5538
      %v5575 = vpack.c.bf16 %v5539, %v5539
      %v5576 = vpack.c.bf16 %v5540, %v5540
      %v5577 = vpack.c.bf16 %v5541, %v5541
      %v5578 = vpack.c.bf16 %v5542, %v5542
      %v5579 = vpack.c.bf16 %v5543, %v5543
      %v5580 = vpack.c.bf16 %v5544, %v5544
      %v5581 = vpack.c.bf16 %v5545, %v5545
      %v5582 = vpack.c.bf16 %v5546, %v5546
      %vm5583 = vcmask 781312
      %5584 = vst.msk [vmem:[%s251] sm:$0xf] %vm5583, %v5547
      %5585 = vst.msk [vmem:[%s251 + $0x4] sm:$0xf] %vm5583, %v5548
      %5586 = vst.msk [vmem:[%s251 + $0x8] sm:$0xf] %vm5583, %v5549
      %5587 = vst.msk [vmem:[%s251 + $0xc] sm:$0xf] %vm5583, %v5550
      %5588 = vst.msk [vmem:[%s251 + $0x10] sm:$0xf] %vm5583, %v5551
      %5589 = vst.msk [vmem:[%s251 + $0x14] sm:$0xf] %vm5583, %v5552
      %5590 = vst.msk [vmem:[%s251 + $0x18] sm:$0xf] %vm5583, %v5553
      %5591 = vst.msk [vmem:[%s251 + $0x1c] sm:$0xf] %vm5583, %v5554
      %5592 = vst.msk [vmem:[%s251 + $0x20] sm:$0xf] %vm5583, %v5555
      %5593 = vst.msk [vmem:[%s251 + $0x24] sm:$0xf] %vm5583, %v5556
      %5594 = vst.msk [vmem:[%s251 + $0x28] sm:$0xf] %vm5583, %v5557
      %5595 = vst.msk [vmem:[%s251 + $0x2c] sm:$0xf] %vm5583, %v5558
      %5596 = vst.msk [vmem:[%s251 + $0x30] sm:$0xf] %vm5583, %v5559
      %5597 = vst.msk [vmem:[%s251 + $0x34] sm:$0xf] %vm5583, %v5560
      %5598 = vst.msk [vmem:[%s251 + $0x38] sm:$0xf] %vm5583, %v5561
      %5599 = vst.msk [vmem:[%s251 + $0x3c] sm:$0xf] %vm5583, %v5562
      %5600 = vst.msk [vmem:[%s251 + $0x40] sm:$0xf] %vm5583, %v5563
      %5601 = vst.msk [vmem:[%s251 + $0x44] sm:$0xf] %vm5583, %v5564
      %5602 = vst.msk [vmem:[%s251 + $0x48] sm:$0xf] %vm5583, %v5565
      %5603 = vst.msk [vmem:[%s251 + $0x4c] sm:$0xf] %vm5583, %v5566
      %5604 = vst.msk [vmem:[%s251 + $0x50] sm:$0xf] %vm5583, %v5567
      %5605 = vst.msk [vmem:[%s251 + $0x54] sm:$0xf] %vm5583, %v5568
      %5606 = vst.msk [vmem:[%s251 + $0x58] sm:$0xf] %vm5583, %v5569
      %5607 = vst.msk [vmem:[%s251 + $0x5c] sm:$0xf] %vm5583, %v5570
      %5608 = vst.msk [vmem:[%s251 + $0x60] sm:$0xf] %vm5583, %v5571
      %5609 = vst.msk [vmem:[%s251 + $0x64] sm:$0xf] %vm5583, %v5572
      %5610 = vst.msk [vmem:[%s251 + $0x68] sm:$0xf] %vm5583, %v5573
      %5611 = vst.msk [vmem:[%s251 + $0x6c] sm:$0xf] %vm5583, %v5574
      %5612 = vst.msk [vmem:[%s251 + $0x70] sm:$0xf] %vm5583, %v5575
      %5613 = vst.msk [vmem:[%s251 + $0x74] sm:$0xf] %vm5583, %v5576
      %5614 = vst.msk [vmem:[%s251 + $0x78] sm:$0xf] %vm5583, %v5577
      %5615 = vst.msk [vmem:[%s251 + $0x7c] sm:$0xf] %vm5583, %v5578
      %5616 = vst.msk [vmem:[%s251 + $0x80] sm:$0xf] %vm5583, %v5579
      %5617 = vst.msk [vmem:[%s251 + $0x84] sm:$0xf] %vm5583, %v5580
      %5618 = vst.msk [vmem:[%s251 + $0x88] sm:$0xf] %vm5583, %v5581
      %5619 = vst.msk [vmem:[%s251 + $0x8c] sm:$0xf] %vm5583, %v5582
      %p5620 = scmp.lt.s32.totalorder %s17, 1
      %s5621 = scalar_select %p5620, %s17, 1
      %s5622 = smul.addr %s5621, 36
      %s5623 = smul.addr %s5622, 4
      %s5624 = scalar_lea.vmem %s6, %s5623
      // Predicated region
      $region45: #{inception_b_forward.2} parent=43 // pred_check
        %p5625 = pneg %p166
      $region46: #{inception_b_forward.2} parent=43 // pred_check_branch
        %5627 = sbr.rel (%p5625) target = $region48
      $region47: #{inception_b_forward.2} parent=43 // pred_region
        _
      $region48: #{inception_b_forward.2} parent=43 // pred_fallthru
        _
    $region44: #{inception_b_forward.2} parent=5 // pred_fallthru
      _
    %p5628 = scmp.le.s32.totalorder 2, %s12
    // Predicated region
    $region49: #{inception_b_forward.2} parent=5 // pred_check
      %p5629 = pneg %p5628
    $region50: #{inception_b_forward.2} parent=5 // pred_check_branch
      %5631 = sbr.rel (%p5629) target = $region52
    $region51: #{inception_b_forward.2} parent=5 // pred_region
      %s5632 = ssub.s32 %s12, 2
      // Predicated region
      $region53: #{inception_b_forward.2} parent=51 // pred_check
        %p5633 = pneg %p172
      $region54: #{inception_b_forward.2} parent=51 // pred_check_branch
        %5635 = sbr.rel (%p5633) target = $region56
      $region55: #{inception_b_forward.2} parent=51 // pred_region
        %p5636 = scmp.lt.s32.totalorder %s18, 1
        %s5637 = scalar_select %p5636, %s18, 1
        %s5638 = smul.addr %s5637, 36
        %s5639 = smul.addr %s5638, 4
        %s5640 = scalar_lea.vmem %s6, %s5639
      $region56: #{inception_b_forward.2} parent=51 // pred_fallthru
        _
    $region52: #{inception_b_forward.2} parent=5 // pred_fallthru
      _
  $region6: #{inception_b_forward.2} parent=0 // loop_footer
    %s16 = sadd.s32 1, %s12
  $region7: #{inception_b_forward.2} parent=0 // loop_footer_branch
    %11 = sbr.rel target = $region3
  $region8: #{inception_b_forward.2} parent=0 // loop_exit
    _

</llo_original>
